<compile_context>
chip_gen: v5e
topology: v5e:2x2
jax: 0.10.0
libtpu: 0.0.40
codegen_flags: <defaults>
</compile_context>

<pallas_src>
import numpy as np
import jax
import jax.numpy as jnp
from jax.experimental import pallas as pl
from jax.experimental.pallas import tpu as pltpu

# ---- scaled-down config of xrv DenseNet-121 (real: growth=32, blocks=(6,12,24,16),
# ---- init_features=64, 1-channel 224x224 input) ----------------------------------
GROWTH = 8
BN_SIZE = 4
BLOCK_CONFIG = (2, 2)
INIT_FEATURES = 16
NUM_CLASSES = 2
BN_EPS = 1e-5

LANE = 128          # TPU lane width: every channel axis is padded to this
_TM_CAP = 256       # matmul row-tile cap (per-step VMEM stays <2 MiB on v5e/v6e/v7x)
_TK_CAP = 512       # matmul K-tile cap


def _round_up(x, m):
    return (x + m - 1) // m * m


# --------------------------- tiled matmul kernel -----------------------------------
def _make_mm_kernel(m_true, prologue, stats):
    """o = [relu(a*scale+shift)] @ w, K-tiled with a VMEM f32 accumulator; optionally
    emits (mean, var) of the output columns over the first m_true rows."""
    inv_m = 1.0 / float(m_true)

    def kernel(*refs):
        i = 0
        aff_ref = None
        if prologue:
            aff_ref = refs[i]; i += 1
        a_ref, w_ref = refs[i], refs[i + 1]; i += 2
        o_ref = refs[i]; i += 1
        stat_ref = None
        if stats:
            stat_ref = refs[i]; i += 1
        acc_ref = refs[i]; i += 1
        sacc_ref = refs[i] if stats else None

        m, k = pl.program_id(0), pl.program_id(1)
        nm, nk = pl.num_programs(0), pl.num_programs(1)

        @pl.when(k == 0)
        def _():
            acc_ref[...] = jnp.zeros_like(acc_ref)

        if stats:
            @pl.when((m == 0) & (k == 0))
            def _():
                sacc_ref[...] = jnp.zeros_like(sacc_ref)

        a = a_ref[...]
        if prologue:   # fused training-mode BatchNorm + ReLU of the matmul input
            a = jnp.maximum(a * aff_ref[0:1, :] + aff_ref[1:2, :], 0.0)
        acc_ref[...] += jnp.dot(a.astype(jnp.bfloat16), w_ref[...],
                                preferred_element_type=jnp.float32)

        @pl.when(k == nk - 1)
        def _():
            y = acc_ref[...]
            o_ref[...] = y
            if stats:   # batch-stat epilogue for the *next* BatchNorm
                sacc_ref[0:1, :] += jnp.sum(y, axis=0, keepdims=True)
                sacc_ref[1:2, :] += jnp.sum(y * y, axis=0, keepdims=True)

                @pl.when(m == nm - 1)
                def _():
                    mean = sacc_ref[0:1, :] * inv_m
                    var = sacc_ref[1:2, :] * inv_m - mean * mean
                    stat_ref[0:1, :] = mean
                    stat_ref[1:2, :] = var

    return kernel


def matmul_fused(a, w16, aff=None, *, compute_stats=False):
    """a: (M, K) f32 with K % 128 == 0; w16: (K, 128) bf16 (lane-dense output).
    aff: optional (2, K) f32 [scale; shift] applied (+ReLU) to `a` inside the kernel.
    Returns (o[:M], stat) where stat = (2, 128) [mean; var] of o, or None."""
    M, K = a.shape
    assert K % LANE == 0 and w16.shape == (K, LANE)
    tm = min(_TM_CAP, _round_up(M, 8))
    Mp = _round_up(M, tm)
    tk = LANE
    for cand in (_TK_CAP, 384, 256, LANE):
        if K % cand == 0:
            tk = cand
            break
    if Mp > M:
        if aff is not None:
            # pad rows with values the fused affine+ReLU maps to exactly 0, so padded
            # rows contribute nothing to the output nor to the batch statistics.
            scale, shift = aff[0], aff[1]
            neutral = -(shift + 1.0) / jnp.where(scale == 0.0, 1.0, scale)
            pad = jnp.broadcast_to(neutral, (Mp - M, K)).astype(a.dtype)
        else:
            pad = jnp.zeros((Mp - M, K), a.dtype)
        a = jnp.concatenate([a, pad], axis=0)
    nm, nk = Mp // tm, K // tk

    in_specs, args = [], []
    if aff is not None:
        in_specs.append(pl.BlockSpec((2, tk), lambda mi, ki: (0, ki)))
        args.append(aff)
    in_specs += [pl.BlockSpec((tm, tk), lambda mi, ki: (mi, ki)),
                 pl.BlockSpec((tk, LANE), lambda mi, ki: (ki, 0))]
    args += [a, w16]

    out_shape = [jax.ShapeDtypeStruct((Mp, LANE), jnp.float32)]
    out_specs = [pl.BlockSpec((tm, LANE), lambda mi, ki: (mi, 0))]
    scratch = [pltpu.VMEM((tm, LANE), jnp.float32)]
    if compute_stats:
        out_shape.append(jax.ShapeDtypeStruct((2, LANE), jnp.float32))
        out_specs.append(pl.BlockSpec((2, LANE), lambda mi, ki: (0, 0)))
        scratch.append(pltpu.VMEM((2, LANE), jnp.float32))

    # stats accumulate across M tiles -> M axis must stay sequential; otherwise it
    # is independent work that v7x megacore may split across cores.
    dims = ("arbitrary" if compute_stats else "parallel", "arbitrary")
    outs = pl.pallas_call(
        _make_mm_kernel(M, aff is not None, compute_stats),
        grid=(nm, nk),
        in_specs=in_specs,
        out_specs=out_specs,
        out_shape=out_shape,
        scratch_shapes=scratch,
        compiler_params=pltpu.CompilerParams(dimension_semantics=dims),
    )(*args)
    o = outs[0][:M]
    return (o, outs[1]) if compute_stats else (o, None)


# --------------------------- 3x3 "growth" conv kernel ------------------------------
def _make_conv3_kernel(m_true, w_out, c_slab):
    inv_m = 1.0 / float(m_true)

    def kernel(aff_ref, x0_ref, x1_ref, x2_ref, w_ref, r_ref,
               o_ref, stat_ref, sacc_ref):
        n, h = pl.program_id(0), pl.program_id(1)
        nn, nh = pl.num_programs(0), pl.num_programs(1)

        @pl.when((n == 0) & (h == 0))
        def _():
            sacc_ref[...] = jnp.zeros_like(sacc_ref)

        scale, shift = aff_ref[0:1, :], aff_ref[1:2, :]
        acc = r_ref[0, 0]                      # dense "concat" == add into the slab
        for d, x_ref in enumerate((x0_ref, x1_ref, x2_ref)):    # kh via 3 row views
            row = jnp.maximum(x_ref[0, 0] * scale + shift, 0.0)  # fused BN + ReLU
            row = row.astype(jnp.bfloat16)
            for dw in range(3):                                  # kw via static slices
                acc = acc + jnp.dot(row[dw:dw + w_out, :],
                                    w_ref[d, dw * c_slab:(dw + 1) * c_slab, :],
                                    preferred_element_type=jnp.float32)
        o_ref[0, 0] = acc
        sacc_ref[0:1, :] += jnp.sum(acc, axis=0, keepdims=True)
        sacc_ref[1:2, :] += jnp.sum(acc * acc, axis=0, keepdims=True)

        @pl.when((n == nn - 1) & (h == nh - 1))
        def _():
            mean = sacc_ref[0:1, :] * inv_m
            var = sacc_ref[1:2, :] * inv_m - mean * mean
            stat_ref[0:1, :] = mean
            stat_ref[1:2, :] = var

    return kernel


def conv3x3_grow(u_slab, w_real, aff, x_slab, ch_offset):
    """BN+ReLU (via `aff`) -> 3x3/s1/p1 conv of `u_slab`; the result is written into
    channels [ch_offset, ch_offset+cout) on top of `x_slab` (DenseNet concat).
    Also returns (mean, var) of the new slab for the next BatchNorm."""
    N, H, W, C = u_slab.shape
    kh, kw, cin, cout = w_real.shape
    assert (kh, kw) == (3, 3) and cin <= C and ch_offset + cout <= C
    w = jnp.zeros((3, 3, C, LANE), jnp.float32)
    w = w.at[:, :, :cin, ch_offset:ch_offset + cout].set(w_real)
    w = w.reshape(3, 3 * C, LANE).astype(jnp.bfloat16)

    # spatial padding value that the fused affine+ReLU maps to exactly 0
    scale, shift = aff[0], aff[1]
    neutral = -(shift + 1.0) / jnp.where(scale == 0.0, 1.0, scale)
    up = jnp.broadcast_to(neutral, (N, H + 2, W + 2, C)).astype(u_slab.dtype)
    up = up.at[:, 1:H + 1, 1:W + 1, :].set(u_slab)

    row_specs = [pl.BlockSpec((1, 1, W + 2, C), lambda n, h, d=d: (n, h + d, 0, 0))
                 for d in range(3)]
    out, stat = pl.pallas_call(
        _make_conv3_kernel(N * H * W, W, C),
        grid=(N, H),
        in_specs=[pl.BlockSpec((2, C), lambda n, h: (0, 0))] + row_specs + [
            pl.BlockSpec((3, 3 * C, LANE), lambda n, h: (0, 0, 0)),  # weights resident
            pl.BlockSpec((1, 1, W, C), lambda n, h: (n, h, 0, 0)),   # residual slab row
        ],
        out_specs=[pl.BlockSpec((1, 1, W, C), lambda n, h: (n, h, 0, 0)),
                   pl.BlockSpec((2, C), lambda n, h: (0, 0))],
        out_shape=[jax.ShapeDtypeStruct((N, H, W, C), jnp.float32),
                   jax.ShapeDtypeStruct((2, C), jnp.float32)],
        scratch_shapes=[pltpu.VMEM((2, LANE), jnp.float32)],
        compiler_params=pltpu.CompilerParams(
            dimension_semantics=("arbitrary", "arbitrary")),
    )(aff, up, up, up, w, x_slab)
    return out, stat


# ------------------------------- pooling kernels -----------------------------------
def _make_maxpool_kernel(m_true, ho, wo):
    inv_m = 1.0 / float(m_true)

    def kernel(aff_ref, ee_ref, eo_ref, oe_ref, oo_ref, o_ref, stat_ref, sacc_ref):
        n, nn = pl.program_id(0), pl.num_programs(0)

        @pl.when(n == 0)
        def _():
            sacc_ref[...] = jnp.zeros_like(sacc_ref)

        scale, shift = aff_ref[0:1, :], aff_ref[1:2, :]

        def act(ref):   # fused norm0 + relu0 prologue
            return jnp.maximum(ref[0] * scale + shift, 0.0)

        ee, eo, oe, oo = act(ee_ref), act(eo_ref), act(oe_ref), act(oo_ref)
        # 3x3/s2 window == 9 phase taps; a tree of maximums keeps the VPU chain short
        m1 = jnp.maximum(ee[:ho, :wo], ee[:ho, 1:wo + 1])
        m2 = jnp.maximum(ee[1:ho + 1, :wo], ee[1:ho + 1, 1:wo + 1])
        m3 = jnp.maximum(eo[:ho, :wo], eo[1:ho + 1, :wo])
        m4 = jnp.maximum(oe[:ho, :wo], oe[:ho, 1:wo + 1])
        y = jnp.maximum(jnp.maximum(jnp.maximum(m1, m2), jnp.maximum(m3, m4)),
                        oo[:ho, :wo])
        o_ref[0] = y
        sacc_ref[0:1, :] += jnp.sum(jnp.sum(y, axis=0), axis=0, keepdims=True)
        sacc_ref[1:2, :] += jnp.sum(jnp.sum(y * y, axis=0), axis=0, keepdims=True)

        @pl.when(n == nn - 1)
        def _():
            mean = sacc_ref[0:1, :] * inv_m
            var = sacc_ref[1:2, :] * inv_m - mean * mean
            stat_ref[0:1, :] = mean
            stat_ref[1:2, :] = var

    return kernel


def maxpool3x3_s2_fused_bnrelu(x, aff):
    """relu(bn(x)) -> maxpool(3, stride=2, pad=1); BN+ReLU fused as pool prologue.
    Returns (pooled, (mean, var) of the pooled output)."""
    N, H, W, C = x.shape
    Ho, Wo = H // 2, W // 2
    scale, shift = aff[0], aff[1]
    neutral = -(shift + 1.0) / jnp.where(scale == 0.0, 1.0, scale)  # -> 0 after affine+ReLU
    xp = jnp.broadcast_to(neutral, (N, H + 2, W + 2, C)).astype(x.dtype)
    xp = xp.at[:, 1:H + 1, 1:W + 1, :].set(x)
    # even/odd phase views: stride-2 window reads become unit-stride in-kernel slices
    ee, eo = xp[:, 0::2, 0::2, :], xp[:, 0::2, 1::2, :]
    oe, oo = xp[:, 1::2, 0::2, :], xp[:, 1::2, 1::2, :]
    phase_spec = pl.BlockSpec((1, Ho + 1, Wo + 1, C), lambda n: (n, 0, 0, 0))
    out, stat = pl.pallas_call(
        _make_maxpool_kernel(N * Ho * Wo, Ho, Wo),
        grid=(N,),
        in_specs=[pl.BlockSpec((2, C), lambda n: (0, 0))] + [phase_spec] * 4,
        out_specs=[pl.BlockSpec((1, Ho, Wo, C), lambda n: (n, 0, 0, 0)),
                   pl.BlockSpec((2, C), lambda n: (0, 0))],
        out_shape=[jax.ShapeDtypeStruct((N, Ho, Wo, C), jnp.float32),
                   jax.ShapeDtypeStruct((2, C), jnp.float32)],
        scratch_shapes=[pltpu.VMEM((2, LANE), jnp.float32)],
        compiler_params=pltpu.CompilerParams(dimension_semantics=("arbitrary",)),
    )(aff, ee, eo, oe, oo)
    return out, stat


def _make_avgpool_kernel(m_true):
    inv_m = 1.0 / float(m_true)

    def kernel(ee_ref, eo_ref, oe_ref, oo_ref, o_ref, stat_ref, sacc_ref):
        n, nn = pl.program_id(0), pl.num_programs(0)

        @pl.when(n == 0)
        def _():
            sacc_ref[...] = jnp.zeros_like(sacc_ref)

        y = (ee_ref[0] + eo_ref[0] + oe_ref[0] + oo_ref[0]) * 0.25
        o_ref[0] = y
        sacc_ref[0:1, :] += jnp.sum(jnp.sum(y, axis=0), axis=0, keepdims=True)
        sacc_ref[1:2, :] += jnp.sum(jnp.sum(y * y, axis=0), axis=0, keepdims=True)

        @pl.when(n == nn - 1)
        def _():
            mean = sacc_ref[0:1, :] * inv_m
            var = sacc_ref[1:2, :] * inv_m - mean * mean
            stat_ref[0:1, :] = mean
            stat_ref[1:2, :] = var

    return kernel


def avgpool2x2(x):
    """2x2/s2 average pool via 4 even/odd phase views; emits batch stats."""
    N, H, W, C = x.shape
    Ho, Wo = H // 2, W // 2
    ee, eo = x[:, 0::2, 0::2, :], x[:, 0::2, 1::2, :]
    oe, oo = x[:, 1::2, 0::2, :], x[:, 1::2, 1::2, :]
    phase_spec = pl.BlockSpec((1, Ho, Wo, C), lambda n: (n, 0, 0, 0))
    out, stat = pl.pallas_call(
        _make_avgpool_kernel(N * Ho * Wo),
        grid=(N,),
        in_specs=[phase_spec] * 4,
        out_specs=[pl.BlockSpec((1, Ho, Wo, C), lambda n: (n, 0, 0, 0)),
                   pl.BlockSpec((2, C), lambda n: (0, 0))],
        out_shape=[jax.ShapeDtypeStruct((N, Ho, Wo, C), jnp.float32),
                   jax.ShapeDtypeStruct((2, C), jnp.float32)],
        scratch_shapes=[pltpu.VMEM((2, LANE), jnp.float32)],
        compiler_params=pltpu.CompilerParams(dimension_semantics=("arbitrary",)),
    )(ee, eo, oe, oo)
    return out, stat


# --------------------------------- head kernel -------------------------------------
def _make_head_kernel(hw):
    inv_hw = 1.0 / float(hw)

    def kernel(x_ref, aff_ref, w_ref, b_ref, o_ref):
        x = x_ref[...]                                               # (N, HW, C)
        y = jnp.maximum(x * aff_ref[0:1, :] + aff_ref[1:2, :], 0.0)  # norm5 + relu
        g = jnp.sum(y, axis=1) * inv_hw                              # global avg pool
        o_ref[...] = (jnp.dot(g.astype(jnp.bfloat16), w_ref[...],
                              preferred_element_type=jnp.float32) + b_ref[...])

    return kernel


def head(x_slab, aff, fc_w, fc_b):
    """Fused norm5 + relu + adaptive_avg_pool2d(1,1) + classifier (lane-padded)."""
    N, H, W, C = x_slab.shape
    feats, nc = fc_w.shape
    w = jnp.zeros((C, LANE), jnp.float32).at[:feats, :nc].set(fc_w)
    b = jnp.zeros((1, LANE), jnp.float32).at[0, :nc].set(fc_b)
    out = pl.pallas_call(
        _make_head_kernel(H * W),
        out_shape=jax.ShapeDtypeStruct((N, LANE), jnp.float32),
    )(x_slab.reshape(N, H * W, C), aff, w.astype(jnp.bfloat16), b)
    return out[:, :nc]


# ------------------------------- conv wrappers --------------------------------------
def conv0_7x7_s2(x, w_real):
    """Stem 7x7/s2/p3 conv on the raw 1-channel input via wrapper-side im2col + the
    tiled matmul kernel; emits batch stats for norm0.
    # TODO(synk): for real resolutions the stem im2col should also move in-kernel.
    """
    N, H, W, cin = x.shape
    kh, kw, _, cout = w_real.shape
    xp = jnp.pad(x, ((0, 0), (3, 3), (3, 3), (0, 0)))
    Ho, Wo = (H + 6 - kh) // 2 + 1, (W + 6 - kw) // 2 + 1
    cols = [xp[:, i:i + 2 * Ho:2, j:j + 2 * Wo:2, :]
            for i in range(kh) for j in range(kw)]
    a = jnp.concatenate(cols, axis=-1).reshape(N * Ho * Wo, kh * kw * cin)
    kp = _round_up(kh * kw * cin, LANE)
    a = jnp.pad(a, ((0, 0), (0, kp - kh * kw * cin)))
    w = jnp.zeros((kp, LANE), jnp.float32)
    w = w.at[:kh * kw * cin, :cout].set(w_real.reshape(kh * kw * cin, cout))
    o, stat = matmul_fused(a, w.astype(jnp.bfloat16), None, compute_stats=True)
    return o.reshape(N, Ho, Wo, LANE), stat


def conv1x1_fused_bnrelu(x_slab, w_real, aff, *, compute_stats):
    """BN+ReLU (prologue) -> 1x1 conv; output lane-padded to 128 channels."""
    N, H, W, C = x_slab.shape
    cin, cout = w_real.shape
    w = jnp.zeros((C, LANE), jnp.float32).at[:cin, :cout].set(w_real)
    o, stat = matmul_fused(x_slab.reshape(N * H * W, C), w.astype(jnp.bfloat16),
                           aff, compute_stats=compute_stats)
    return o.reshape(N, H, W, LANE), stat


def _affine_from_stats(stat, gamma, beta):
    """Fold training-mode BatchNorm (batch mean / biased var from the producing
    kernel) + gamma/beta into a per-channel (scale, shift); padded channels get
    gamma=1, beta=0 and therefore stay exactly zero."""
    c = gamma.shape[0]
    g = jnp.concatenate([gamma, jnp.ones((LANE - c,), jnp.float32)])
    b = jnp.concatenate([beta, jnp.zeros((LANE - c,), jnp.float32)])
    scale = g * jax.lax.rsqrt(stat[1] + BN_EPS)
    shift = b - stat[0] * scale
    return jnp.stack([scale, shift], axis=0)          # (2, LANE)


# ------------------------------------ params ----------------------------------------
def init_params(key):
    cnt = [0]

    def nk():
        cnt[0] += 1
        return jax.random.fold_in(key, cnt[0])

    def conv_w(kh, kw, cin, cout):
        fan_in = kh * kw * cin
        return (jax.random.normal(nk(), (kh, kw, cin, cout), jnp.float32)
                * np.sqrt(2.0 / fan_in))

    def bn(c):
        return (jnp.ones((c,), jnp.float32), jnp.zeros((c,), jnp.float32))

    params = {}
    params['conv0'] = conv_w(7, 7, 1, INIT_FEATURES)     # xrv DenseNet: 1-channel input
    params['bn0'] = bn(INIT_FEATURES)
    feats = INIT_FEATURES
    for bi, nlayers in enumerate(BLOCK_CONFIG):
        layers = []
        for li in range(nlayers):
            cin = feats + li * GROWTH
            layers.append({
                'bn1': bn(cin),
                'conv1': conv_w(1, 1, cin, BN_SIZE * GROWTH)[0, 0],   # (cin, 4*growth)
                'bn2': bn(BN_SIZE * GROWTH),
                'conv2': conv_w(3, 3, BN_SIZE * GROWTH, GROWTH),
            })
        params['block%d' % bi] = layers
        feats += nlayers * GROWTH
        if bi != len(BLOCK_CONFIG) - 1:
            params['trans%d' % bi] = {'bn': bn(feats),
                                      'conv': conv_w(1, 1, feats, feats // 2)[0, 0]}
            feats //= 2
    params['bn5'] = bn(feats)
    bound = 1.0 / np.sqrt(feats)
    params['fc_w'] = jax.random.uniform(nk(), (feats, NUM_CLASSES), jnp.float32,
                                        -bound, bound)
    params['fc_b'] = jax.random.uniform(nk(), (NUM_CLASSES,), jnp.float32,
                                        -bound, bound)
    return params


# ---------------------------------- forward pass ------------------------------------
def forward(params, x_nchw):
    # TODO(synk): xrv's fix_resolution (bilinear resize to 224x224) and the input-range
    # normalization warning are skipped; input is processed at its native resolution.
    x = jnp.transpose(x_nchw, (0, 2, 3, 1)).astype(jnp.float32)      # NCHW -> NHWC

    h, stat = conv0_7x7_s2(x, params['conv0'])                       # conv0 (+ stats)
    aff = _affine_from_stats(stat, *params['bn0'])
    slab, stat = maxpool3x3_s2_fused_bnrelu(h, aff)                  # norm0+relu0+pool0

    feats = INIT_FEATURES
    for bi, nlayers in enumerate(BLOCK_CONFIG):
        for li in range(nlayers):
            p = params['block%d' % bi][li]
            cin = feats + li * GROWTH
            aff1 = _affine_from_stats(stat, *p['bn1'])
            u, stat_u = conv1x1_fused_bnrelu(slab, p['conv1'], aff1,
                                             compute_stats=True)     # norm1+relu1+conv1
            aff2 = _affine_from_stats(stat_u, *p['bn2'])
            slab, stat = conv3x3_grow(u, p['conv2'], aff2, slab, cin)  # norm2+relu2+conv2+concat
        feats += nlayers * GROWTH
        if bi != len(BLOCK_CONFIG) - 1:
            t = params['trans%d' % bi]
            afft = _affine_from_stats(stat, *t['bn'])
            y, _ = conv1x1_fused_bnrelu(slab, t['conv'], afft,
                                        compute_stats=False)          # transition conv
            slab, stat = avgpool2x2(y)                                # transition pool
            feats //= 2

    aff5 = _affine_from_stats(stat, *params['bn5'])
    return head(slab, aff5, params['fc_w'], params['fc_b'])           # norm5+relu+GAP+fc


if __name__ == "__main__":
    key = jax.random.PRNGKey(0)
    kp, kx = jax.random.split(key)
    params = init_params(kp)
    x = jax.random.normal(kx, (2, 1, 32, 32), jnp.float32)            # NCHW, 1-channel input
    logits = jax.jit(forward)(params, x)
    jax.block_until_ready(logits)
    assert logits.shape == (2, NUM_CLASSES) and logits.dtype == jnp.float32
    assert bool(jnp.all(jnp.isfinite(logits)))
    print("KERNEL_OK")
</pallas_src>

<mosaic_0001>
module attributes {stable_mosaic.version = 11 : i64} {
  func.func @kernel(%arg0: i32, %arg1: i32, %arg2: memref<256x128xf32, #tpu.memory_space<vmem>>, %arg3: memref<128x128xbf16, #tpu.memory_space<vmem>>, %arg4: memref<256x128xf32, #tpu.memory_space<vmem>>, %arg5: memref<2x128xf32, #tpu.memory_space<vmem>>, %arg6: memref<256x128xf32, #tpu.memory_space<vmem>>, %arg7: memref<2x128xf32, #tpu.memory_space<vmem>>) attributes {dimension_semantics = [#tpu.dimension_semantics<arbitrary>, #tpu.dimension_semantics<arbitrary>], iteration_bounds = array<i64: 2, 1>, scalar_prefetch = 0 : i64, scratch_operands = 2 : i64, tpu.core_type = #tpu.core_type<tc>, window_params = [{transform_indices = @transform_0, window_bounds = array<i64: 256, 128>}, {transform_indices = @transform_1, window_bounds = array<i64: 128, 128>}, {transform_indices = @transform_2, window_bounds = array<i64: 256, 128>}, {pipeline_mode = #tpu.pipeline_mode<synchronous>, transform_indices = @transform_3, window_bounds = array<i64: 2, 128>}]} {
    %c0_i32 = arith.constant 0 : i32
    %0 = arith.cmpi eq, %arg1, %c0_i32 : i32
    %1 = arith.extui %0 : i1 to i32
    %c0_i32_0 = arith.constant 0 : i32
    %2 = arith.cmpi ne, %1, %c0_i32_0 : i32
    scf.if %2 {
      %cst_13 = arith.constant 0.000000e+00 : f32
      %18 = vector.broadcast %cst_13 : f32 to vector<256x128xf32>
      %c0_14 = arith.constant 0 : index
      %c0_15 = arith.constant 0 : index
      %19 = vector.load %arg6[%c0_14, %c0_15] : memref<256x128xf32, #tpu.memory_space<vmem>>, vector<256x128xf32>
      tpu.vector_store %arg6[%c0_14, %c0_15], %18 {strides = array<i32>} : memref<256x128xf32, #tpu.memory_space<vmem>>, vector<256x128xf32>,
    } else {
    }
    %c0_i32_1 = arith.constant 0 : i32
    %3 = arith.cmpi eq, %arg0, %c0_i32_1 : i32
    %c0_i32_2 = arith.constant 0 : i32
    %4 = arith.cmpi eq, %arg1, %c0_i32_2 : i32
    %5 = arith.andi %3, %4 : i1
    %6 = arith.extui %5 : i1 to i32
    %c0_i32_3 = arith.constant 0 : i32
    %7 = arith.cmpi ne, %6, %c0_i32_3 : i32
    scf.if %7 {
      %cst_13 = arith.constant 0.000000e+00 : f32
      %18 = vector.broadcast %cst_13 : f32 to vector<2x128xf32>
      %c0_14 = arith.constant 0 : index
      %c0_15 = arith.constant 0 : index
      %19 = vector.load %arg7[%c0_14, %c0_15] : memref<2x128xf32, #tpu.memory_space<vmem>>, vector<2x128xf32>
      tpu.vector_store %arg7[%c0_14, %c0_15], %18 {strides = array<i32>} : memref<2x128xf32, #tpu.memory_space<vmem>>, vector<2x128xf32>,
    } else {
    }
    %c0 = arith.constant 0 : index
    %c0_4 = arith.constant 0 : index
    %8 = vector.load %arg2[%c0, %c0_4] : memref<256x128xf32, #tpu.memory_space<vmem>>, vector<256x128xf32>
    %c0_5 = arith.constant 0 : index
    %c0_6 = arith.constant 0 : index
    %9 = vector.load %arg6[%c0_5, %c0_6] : memref<256x128xf32, #tpu.memory_space<vmem>>, vector<256x128xf32>
    %10 = arith.truncf %8 : vector<256x128xf32> to vector<256x128xbf16>
    %c0_7 = arith.constant 0 : index
    %c0_8 = arith.constant 0 : index
    %11 = vector.load %arg3[%c0_7, %c0_8] : memref<128x128xbf16, #tpu.memory_space<vmem>>, vector<128x128xbf16>
    %cst = arith.constant dense<0.000000e+00> : vector<256x128xf32>
    %12 = tpu.matmul %10, %11, %cst {dimension_numbers = #tpu.dot_dimension_numbers<[1], [0], [0], [1], [0, 0, 1, 1], [], []>} : vector<256x128xbf16>, vector<128x128xbf16>, vector<256x128xf32> -> vector<256x128xf32>
    %13 = arith.addf %9, %12 : vector<256x128xf32>
    %c0_9 = arith.constant 0 : index
    %c0_10 = arith.constant 0 : index
    %14 = vector.load %arg6[%c0_9, %c0_10] : memref<256x128xf32, #tpu.memory_space<vmem>>, vector<256x128xf32>
    tpu.vector_store %arg6[%c0_9, %c0_10], %13 {strides = array<i32>} : memref<256x128xf32, #tpu.memory_space<vmem>>, vector<256x128xf32>,
    %c0_i32_11 = arith.constant 0 : i32
    %15 = arith.cmpi eq, %arg1, %c0_i32_11 : i32
    %16 = arith.extui %15 : i1 to i32
    %c0_i32_12 = arith.constant 0 : i32
    %17 = arith.cmpi ne, %16, %c0_i32_12 : i32
    scf.if %17 {
      %c0_13 = arith.constant 0 : index
      %c0_14 = arith.constant 0 : index
      %18 = vector.load %arg6[%c0_13, %c0_14] : memref<256x128xf32, #tpu.memory_space<vmem>>, vector<256x128xf32>
      %c0_15 = arith.constant 0 : index
      %c0_16 = arith.constant 0 : index
      %19 = vector.load %arg4[%c0_15, %c0_16] : memref<256x128xf32, #tpu.memory_space<vmem>>, vector<256x128xf32>
      tpu.vector_store %arg4[%c0_15, %c0_16], %18 {strides = array<i32>} : memref<256x128xf32, #tpu.memory_space<vmem>>, vector<256x128xf32>,
      %c0_17 = arith.constant 0 : index
      %c0_18 = arith.constant 0 : index
      %20 = vector.load %arg7[%c0_17, %c0_18] : memref<2x128xf32, #tpu.memory_space<vmem>>, vector<1x128xf32>
      %cst_19 = arith.constant dense<0.000000e+00> : vector<128xf32>
      %21 = vector.multi_reduction <add>, %18, %cst_19 [0] : vector<256x128xf32> to vector<128xf32>
      %22 = vector.shape_cast %21 : vector<128xf32> to vector<1x128xf32>
      %23 = arith.addf %20, %22 : vector<1x128xf32>
      %c0_20 = arith.constant 0 : index
      %c0_21 = arith.constant 0 : index
      %24 = vector.load %arg7[%c0_20, %c0_21] : memref<2x128xf32, #tpu.memory_space<vmem>>, vector<1x128xf32>
      tpu.vector_store %arg7[%c0_20, %c0_21], %23 {strides = array<i32>} : memref<2x128xf32, #tpu.memory_space<vmem>>, vector<1x128xf32>,
      %c1 = arith.constant 1 : index
      %c0_22 = arith.constant 0 : index
      %25 = vector.load %arg7[%c1, %c0_22] : memref<2x128xf32, #tpu.memory_space<vmem>>, vector<1x128xf32>
      %26 = arith.mulf %18, %18 : vector<256x128xf32>
      %cst_23 = arith.constant dense<0.000000e+00> : vector<128xf32>
      %27 = vector.multi_reduction <add>, %26, %cst_23 [0] : vector<256x128xf32> to vector<128xf32>
      %28 = vector.shape_cast %27 : vector<128xf32> to vector<1x128xf32>
      %29 = arith.addf %25, %28 : vector<1x128xf32>
      %c1_24 = arith.constant 1 : index
      %c0_25 = arith.constant 0 : index
      %30 = vector.load %arg7[%c1_24, %c0_25] : memref<2x128xf32, #tpu.memory_space<vmem>>, vector<1x128xf32>
      tpu.vector_store %arg7[%c1_24, %c0_25], %29 {strides = array<i32>} : memref<2x128xf32, #tpu.memory_space<vmem>>, vector<1x128xf32>,
      %c1_i32 = arith.constant 1 : i32
      %31 = arith.cmpi eq, %arg0, %c1_i32 : i32
      %32 = arith.extui %31 : i1 to i32
      %c0_i32_26 = arith.constant 0 : i32
      %33 = arith.cmpi ne, %32, %c0_i32_26 : i32
      scf.if %33 {
        %c0_27 = arith.constant 0 : index
        %c0_28 = arith.constant 0 : index
        %34 = vector.load %arg7[%c0_27, %c0_28] : memref<2x128xf32, #tpu.memory_space<vmem>>, vector<1x128xf32>
        %cst_29 = arith.constant 0.001953125 : f32
        %35 = vector.broadcast %cst_29 : f32 to vector<1x128xf32>
        %36 = arith.mulf %34, %35 : vector<1x128xf32>
        %c1_30 = arith.constant 1 : index
        %c0_31 = arith.constant 0 : index
        %37 = vector.load %arg7[%c1_30, %c0_31] : memref<2x128xf32, #tpu.memory_space<vmem>>, vector<1x128xf32>
        %cst_32 = arith.constant 0.001953125 : f32
        %38 = vector.broadcast %cst_32 : f32 to vector<1x128xf32>
        %39 = arith.mulf %37, %38 : vector<1x128xf32>
        %40 = arith.mulf %36, %36 : vector<1x128xf32>
        %41 = arith.subf %39, %40 : vector<1x128xf32>
        %c0_33 = arith.constant 0 : index
        %c0_34 = arith.constant 0 : index
        %42 = vector.load %arg5[%c0_33, %c0_34] : memref<2x128xf32, #tpu.memory_space<vmem>>, vector<1x128xf32>
        tpu.vector_store %arg5[%c0_33, %c0_34], %36 {strides = array<i32>} : memref<2x128xf32, #tpu.memory_space<vmem>>, vector<1x128xf32>,
        %c1_35 = arith.constant 1 : index
        %c0_36 = arith.constant 0 : index
        %43 = vector.load %arg5[%c1_35, %c0_36] : memref<2x128xf32, #tpu.memory_space<vmem>>, vector<1x128xf32>
        tpu.vector_store %arg5[%c1_35, %c0_36], %41 {strides = array<i32>} : memref<2x128xf32, #tpu.memory_space<vmem>>, vector<1x128xf32>,
      } else {
      }
    } else {
    }
    return
  }
  func.func @transform_0(%arg0: i32, %arg1: i32) -> (i32, i32) {
    %c0_i32 = arith.constant 0 : i32
    return %arg0, %arg1 : i32, i32
  }
  func.func @transform_1(%arg0: i32, %arg1: i32) -> (i32, i32) {
    %c0_i32 = arith.constant 0 : i32
    %c0_i32_0 = arith.constant 0 : i32
    return %arg1, %c0_i32 : i32, i32
  }
  func.func @transform_2(%arg0: i32, %arg1: i32) -> (i32, i32) {
    %c0_i32 = arith.constant 0 : i32
    %c0_i32_0 = arith.constant 0 : i32
    return %arg0, %c0_i32 : i32, i32
  }
  func.func @transform_3(%arg0: i32, %arg1: i32) -> (i32, i32) {
    %c0_i32 = arith.constant 0 : i32
    %c0_i32_0 = arith.constant 0 : i32
    %c0_i32_1 = arith.constant 0 : i32
    return %c0_i32, %c0_i32_0 : i32, i32
  }
}

module attributes {stable_mosaic.version = 11 : i64} {
  func.func @kernel(%arg0: i32, %arg1: memref<2x128xf32, #tpu.memory_space<vmem>>, %arg2: memref<1x9x9x128xf32, #tpu.memory_space<vmem>>, %arg3: memref<1x9x9x128xf32, #tpu.memory_space<vmem>>, %arg4: memref<1x9x9x128xf32, #tpu.memory_space<vmem>>, %arg5: memref<1x9x9x128xf32, #tpu.memory_space<vmem>>, %arg6: memref<1x8x8x128xf32, #tpu.memory_space<vmem>>, %arg7: memref<2x128xf32, #tpu.memory_space<vmem>>, %arg8: memref<2x128xf32, #tpu.memory_space<vmem>>) attributes {dimension_semantics = [#tpu.dimension_semantics<arbitrary>], iteration_bounds = array<i64: 2>, scalar_prefetch = 0 : i64, scratch_operands = 1 : i64, tpu.core_type = #tpu.core_type<tc>, window_params = [{pipeline_mode = #tpu.pipeline_mode<synchronous>, transform_indices = @transform_0, window_bounds = array<i64: 2, 128>}, {transform_indices = @transform_1, window_bounds = array<i64: 1, 9, 9, 128>}, {transform_indices = @transform_2, window_bounds = array<i64: 1, 9, 9, 128>}, {transform_indices = @transform_3, window_bounds = array<i64: 1, 9, 9, 128>}, {transform_indices = @transform_4, window_bounds = array<i64: 1, 9, 9, 128>}, {transform_indices = @transform_5, window_bounds = array<i64: 1, 8, 8, 128>}, {pipeline_mode = #tpu.pipeline_mode<synchronous>, transform_indices = @transform_6, window_bounds = array<i64: 2, 128>}]} {
    %c0_i32 = arith.constant 0 : i32
    %0 = arith.cmpi eq, %arg0, %c0_i32 : i32
    %1 = arith.extui %0 : i1 to i32
    %c0_i32_0 = arith.constant 0 : i32
    %2 = arith.cmpi ne, %1, %c0_i32_0 : i32
    scf.if %2 {
      %cst_39 = arith.constant 0.000000e+00 : f32
      %81 = vector.broadcast %cst_39 : f32 to vector<2x128xf32>
      %c0_40 = arith.constant 0 : index
      %c0_41 = arith.constant 0 : index
      %82 = vector.load %arg8[%c0_40, %c0_41] : memref<2x128xf32, #tpu.memory_space<vmem>>, vector<2x128xf32>
      tpu.vector_store %arg8[%c0_40, %c0_41], %81 {strides = array<i32>} : memref<2x128xf32, #tpu.memory_space<vmem>>, vector<2x128xf32>,
    } else {
    }
    %c0 = arith.constant 0 : index
    %c0_1 = arith.constant 0 : index
    %3 = vector.load %arg1[%c0, %c0_1] : memref<2x128xf32, #tpu.memory_space<vmem>>, vector<1x128xf32>
    %c1 = arith.constant 1 : index
    %c0_2 = arith.constant 0 : index
    %4 = vector.load %arg1[%c1, %c0_2] : memref<2x128xf32, #tpu.memory_space<vmem>>, vector<1x128xf32>
    %c0_3 = arith.constant 0 : index
    %c0_4 = arith.constant 0 : index
    %c0_5 = arith.constant 0 : index
    %c0_6 = arith.constant 0 : index
    %5 = vector.load %arg2[%c0_3, %c0_4, %c0_5, %c0_6] : memref<1x9x9x128xf32, #tpu.memory_space<vmem>>, vector<1x9x9x128xf32>
    %6 = vector.shape_cast %5 : vector<1x9x9x128xf32> to vector<9x9x128xf32>
    %7 = vector.shape_cast %3 : vector<1x128xf32> to vector<1x1x128xf32>
    %8 = vector.broadcast %7 : vector<1x1x128xf32> to vector<9x9x128xf32>
    %9 = arith.mulf %6, %8 : vector<9x9x128xf32>
    %10 = vector.shape_cast %4 : vector<1x128xf32> to vector<1x1x128xf32>
    %11 = vector.broadcast %10 : vector<1x1x128xf32> to vector<9x9x128xf32>
    %12 = arith.addf %9, %11 : vector<9x9x128xf32>
    %cst = arith.constant 0.000000e+00 : f32
    %13 = vector.broadcast %cst : f32 to vector<9x9x128xf32>
    %14 = arith.maximumf %12, %13 : vector<9x9x128xf32>
    %c0_7 = arith.constant 0 : index
    %c0_8 = arith.constant 0 : index
    %c0_9 = arith.constant 0 : index
    %c0_10 = arith.constant 0 : index
    %15 = vector.load %arg3[%c0_7, %c0_8, %c0_9, %c0_10] : memref<1x9x9x128xf32, #tpu.memory_space<vmem>>, vector<1x9x9x128xf32>
    %16 = vector.shape_cast %15 : vector<1x9x9x128xf32> to vector<9x9x128xf32>
    %17 = vector.shape_cast %3 : vector<1x128xf32> to vector<1x1x128xf32>
    %18 = vector.broadcast %17 : vector<1x1x128xf32> to vector<9x9x128xf32>
    %19 = arith.mulf %16, %18 : vector<9x9x128xf32>
    %20 = vector.shape_cast %4 : vector<1x128xf32> to vector<1x1x128xf32>
    %21 = vector.broadcast %20 : vector<1x1x128xf32> to vector<9x9x128xf32>
    %22 = arith.addf %19, %21 : vector<9x9x128xf32>
    %cst_11 = arith.constant 0.000000e+00 : f32
    %23 = vector.broadcast %cst_11 : f32 to vector<9x9x128xf32>
    %24 = arith.maximumf %22, %23 : vector<9x9x128xf32>
    %c0_12 = arith.constant 0 : index
    %c0_13 = arith.constant 0 : index
    %c0_14 = arith.constant 0 : index
    %c0_15 = arith.constant 0 : index
    %25 = vector.load %arg4[%c0_12, %c0_13, %c0_14, %c0_15] : memref<1x9x9x128xf32, #tpu.memory_space<vmem>>, vector<1x9x9x128xf32>
    %26 = vector.shape_cast %25 : vector<1x9x9x128xf32> to vector<9x9x128xf32>
    %27 = vector.shape_cast %3 : vector<1x128xf32> to vector<1x1x128xf32>
    %28 = vector.broadcast %27 : vector<1x1x128xf32> to vector<9x9x128xf32>
    %29 = arith.mulf %26, %28 : vector<9x9x128xf32>
    %30 = vector.shape_cast %4 : vector<1x128xf32> to vector<1x1x128xf32>
    %31 = vector.broadcast %30 : vector<1x1x128xf32> to vector<9x9x128xf32>
    %32 = arith.addf %29, %31 : vector<9x9x128xf32>
    %cst_16 = arith.constant 0.000000e+00 : f32
    %33 = vector.broadcast %cst_16 : f32 to vector<9x9x128xf32>
    %34 = arith.maximumf %32, %33 : vector<9x9x128xf32>
    %c0_17 = arith.constant 0 : index
    %c0_18 = arith.constant 0 : index
    %c0_19 = arith.constant 0 : index
    %c0_20 = arith.constant 0 : index
    %35 = vector.load %arg5[%c0_17, %c0_18, %c0_19, %c0_20] : memref<1x9x9x128xf32, #tpu.memory_space<vmem>>, vector<1x9x9x128xf32>
    %36 = vector.shape_cast %35 : vector<1x9x9x128xf32> to vector<9x9x128xf32>
    %37 = vector.shape_cast %3 : vector<1x128xf32> to vector<1x1x128xf32>
    %38 = vector.broadcast %37 : vector<1x1x128xf32> to vector<9x9x128xf32>
    %39 = arith.mulf %36, %38 : vector<9x9x128xf32>
    %40 = vector.shape_cast %4 : vector<1x128xf32> to vector<1x1x128xf32>
    %41 = vector.broadcast %40 : vector<1x1x128xf32> to vector<9x9x128xf32>
    %42 = arith.addf %39, %41 : vector<9x9x128xf32>
    %cst_21 = arith.constant 0.000000e+00 : f32
    %43 = vector.broadcast %cst_21 : f32 to vector<9x9x128xf32>
    %44 = arith.maximumf %42, %43 : vector<9x9x128xf32>
    %45 = vector.extract_strided_slice %14 {offsets = [0, 0, 0], sizes = [8, 8, 128], strides = [1, 1, 1]} : vector<9x9x128xf32> to vector<8x8x128xf32>
    %46 = vector.extract_strided_slice %14 {offsets = [0, 1, 0], sizes = [8, 8, 128], strides = [1, 1, 1]} : vector<9x9x128xf32> to vector<8x8x128xf32>
    %47 = arith.maximumf %45, %46 : vector<8x8x128xf32>
    %48 = vector.extract_strided_slice %14 {offsets = [1, 0, 0], sizes = [8, 8, 128], strides = [1, 1, 1]} : vector<9x9x128xf32> to vector<8x8x128xf32>
    %49 = vector.extract_strided_slice %14 {offsets = [1, 1, 0], sizes = [8, 8, 128], strides = [1, 1, 1]} : vector<9x9x128xf32> to vector<8x8x128xf32>
    %50 = arith.maximumf %48, %49 : vector<8x8x128xf32>
    %51 = vector.extract_strided_slice %24 {offsets = [0, 0, 0], sizes = [8, 8, 128], strides = [1, 1, 1]} : vector<9x9x128xf32> to vector<8x8x128xf32>
    %52 = vector.extract_strided_slice %24 {offsets = [1, 0, 0], sizes = [8, 8, 128], strides = [1, 1, 1]} : vector<9x9x128xf32> to vector<8x8x128xf32>
    %53 = arith.maximumf %51, %52 : vector<8x8x128xf32>
    %54 = vector.extract_strided_slice %34 {offsets = [0, 0, 0], sizes = [8, 8, 128], strides = [1, 1, 1]} : vector<9x9x128xf32> to vector<8x8x128xf32>
    %55 = vector.extract_strided_slice %34 {offsets = [0, 1, 0], sizes = [8, 8, 128], strides = [1, 1, 1]} : vector<9x9x128xf32> to vector<8x8x128xf32>
    %56 = arith.maximumf %54, %55 : vector<8x8x128xf32>
    %57 = arith.maximumf %47, %50 : vector<8x8x128xf32>
    %58 = arith.maximumf %53, %56 : vector<8x8x128xf32>
    %59 = arith.maximumf %57, %58 : vector<8x8x128xf32>
    %60 = vector.extract_strided_slice %44 {offsets = [0, 0, 0], sizes = [8, 8, 128], strides = [1, 1, 1]} : vector<9x9x128xf32> to vector<8x8x128xf32>
    %61 = arith.maximumf %59, %60 : vector<8x8x128xf32>
    %c0_22 = arith.constant 0 : index
    %c0_23 = arith.constant 0 : index
    %c0_24 = arith.constant 0 : index
    %c0_25 = arith.constant 0 : index
    %62 = vector.load %arg6[%c0_22, %c0_23, %c0_24, %c0_25] : memref<1x8x8x128xf32, #tpu.memory_space<vmem>>, vector<1x8x8x128xf32>
    %63 = vector.shape_cast %62 : vector<1x8x8x128xf32> to vector<8x8x128xf32>
    %64 = vector.shape_cast %61 : vector<8x8x128xf32> to vector<1x8x8x128xf32>
    tpu.vector_store %arg6[%c0_22, %c0_23, %c0_24, %c0_25], %64 {strides = array<i32>} : memref<1x8x8x128xf32, #tpu.memory_space<vmem>>, vector<1x8x8x128xf32>,
    %c0_26 = arith.constant 0 : index
    %c0_27 = arith.constant 0 : index
    %65 = vector.load %arg8[%c0_26, %c0_27] : memref<2x128xf32, #tpu.memory_space<vmem>>, vector<1x128xf32>
    %cst_28 = arith.constant dense<0.000000e+00> : vector<8x128xf32>
    %66 = vector.multi_reduction <add>, %61, %cst_28 [0] : vector<8x8x128xf32> to vector<8x128xf32>
    %cst_29 = arith.constant dense<0.000000e+00> : vector<128xf32>
    %67 = vector.multi_reduction <add>, %66, %cst_29 [0] : vector<8x128xf32> to vector<128xf32>
    %68 = vector.shape_cast %67 : vector<128xf32> to vector<1x128xf32>
    %69 = arith.addf %65, %68 : vector<1x128xf32>
    %c0_30 = arith.constant 0 : index
    %c0_31 = arith.constant 0 : index
    %70 = vector.load %arg8[%c0_30, %c0_31] : memref<2x128xf32, #tpu.memory_space<vmem>>, vector<1x128xf32>
    tpu.vector_store %arg8[%c0_30, %c0_31], %69 {strides = array<i32>} : memref<2x128xf32, #tpu.memory_space<vmem>>, vector<1x128xf32>,
    %c1_32 = arith.constant 1 : index
    %c0_33 = arith.constant 0 : index
    %71 = vector.load %arg8[%c1_32, %c0_33] : memref<2x128xf32, #tpu.memory_space<vmem>>, vector<1x128xf32>
    %72 = arith.mulf %61, %61 : vector<8x8x128xf32>
    %cst_34 = arith.constant dense<0.000000e+00> : vector<8x128xf32>
    %73 = vector.multi_reduction <add>, %72, %cst_34 [0] : vector<8x8x128xf32> to vector<8x128xf32>
    %cst_35 = arith.constant dense<0.000000e+00> : vector<128xf32>
    %74 = vector.multi_reduction <add>, %73, %cst_35 [0] : vector<8x128xf32> to vector<128xf32>
    %75 = vector.shape_cast %74 : vector<128xf32> to vector<1x128xf32>
    %76 = arith.addf %71, %75 : vector<1x128xf32>
    %c1_36 = arith.constant 1 : index
    %c0_37 = arith.constant 0 : index
    %77 = vector.load %arg8[%c1_36, %c0_37] : memref<2x128xf32, #tpu.memory_space<vmem>>, vector<1x128xf32>
    tpu.vector_store %arg8[%c1_36, %c0_37], %76 {strides = array<i32>} : memref<2x128xf32, #tpu.memory_space<vmem>>, vector<1x128xf32>,
    %c1_i32 = arith.constant 1 : i32
    %78 = arith.cmpi eq, %arg0, %c1_i32 : i32
    %79 = arith.extui %78 : i1 to i32
    %c0_i32_38 = arith.constant 0 : i32
    %80 = arith.cmpi ne, %79, %c0_i32_38 : i32
    scf.if %80 {
      %c0_39 = arith.constant 0 : index
      %c0_40 = arith.constant 0 : index
      %81 = vector.load %arg8[%c0_39, %c0_40] : memref<2x128xf32, #tpu.memory_space<vmem>>, vector<1x128xf32>
      %cst_41 = arith.constant 7.812500e-03 : f32
      %82 = vector.broadcast %cst_41 : f32 to vector<1x128xf32>
      %83 = arith.mulf %81, %82 : vector<1x128xf32>
      %c1_42 = arith.constant 1 : index
      %c0_43 = arith.constant 0 : index
      %84 = vector.load %arg8[%c1_42, %c0_43] : memref<2x128xf32, #tpu.memory_space<vmem>>, vector<1x128xf32>
      %cst_44 = arith.constant 7.812500e-03 : f32
      %85 = vector.broadcast %cst_44 : f32 to vector<1x128xf32>
      %86 = arith.mulf %84, %85 : vector<1x128xf32>
      %87 = arith.mulf %83, %83 : vector<1x128xf32>
      %88 = arith.subf %86, %87 : vector<1x128xf32>
      %c0_45 = arith.constant 0 : index
      %c0_46 = arith.constant 0 : index
      %89 = vector.load %arg7[%c0_45, %c0_46] : memref<2x128xf32, #tpu.memory_space<vmem>>, vector<1x128xf32>
      tpu.vector_store %arg7[%c0_45, %c0_46], %83 {strides = array<i32>} : memref<2x128xf32, #tpu.memory_space<vmem>>, vector<1x128xf32>,
      %c1_47 = arith.constant 1 : index
      %c0_48 = arith.constant 0 : index
      %90 = vector.load %arg7[%c1_47, %c0_48] : memref<2x128xf32, #tpu.memory_space<vmem>>, vector<1x128xf32>
      tpu.vector_store %arg7[%c1_47, %c0_48], %88 {strides = array<i32>} : memref<2x128xf32, #tpu.memory_space<vmem>>, vector<1x128xf32>,
    } else {
    }
    return
  }
  func.func @transform_0(%arg0: i32) -> (i32, i32) {
    %c0_i32 = arith.constant 0 : i32
    %c0_i32_0 = arith.constant 0 : i32
    %c0_i32_1 = arith.constant 0 : i32
    return %c0_i32, %c0_i32_0 : i32, i32
  }
  func.func @transform_1(%arg0: i32) -> (i32, i32, i32, i32) {
    %c0_i32 = arith.constant 0 : i32
    %c0_i32_0 = arith.constant 0 : i32
    %c0_i32_1 = arith.constant 0 : i32
    %c0_i32_2 = arith.constant 0 : i32
    return %arg0, %c0_i32, %c0_i32_0, %c0_i32_1 : i32, i32, i32, i32
  }
  func.func @transform_2(%arg0: i32) -> (i32, i32, i32, i32) {
    %c0_i32 = arith.constant 0 : i32
    %c0_i32_0 = arith.constant 0 : i32
    %c0_i32_1 = arith.constant 0 : i32
    %c0_i32_2 = arith.constant 0 : i32
    return %arg0, %c0_i32, %c0_i32_0, %c0_i32_1 : i32, i32, i32, i32
  }
  func.func @transform_3(%arg0: i32) -> (i32, i32, i32, i32) {
    %c0_i32 = arith.constant 0 : i32
    %c0_i32_0 = arith.constant 0 : i32
    %c0_i32_1 = arith.constant 0 : i32
    %c0_i32_2 = arith.constant 0 : i32
    return %arg0, %c0_i32, %c0_i32_0, %c0_i32_1 : i32, i32, i32, i32
  }
  func.func @transform_4(%arg0: i32) -> (i32, i32, i32, i32) {
    %c0_i32 = arith.constant 0 : i32
    %c0_i32_0 = arith.constant 0 : i32
    %c0_i32_1 = arith.constant 0 : i32
    %c0_i32_2 = arith.constant 0 : i32
    return %arg0, %c0_i32, %c0_i32_0, %c0_i32_1 : i32, i32, i32, i32
  }
  func.func @transform_5(%arg0: i32) -> (i32, i32, i32, i32) {
    %c0_i32 = arith.constant 0 : i32
    %c0_i32_0 = arith.constant 0 : i32
    %c0_i32_1 = arith.constant 0 : i32
    %c0_i32_2 = arith.constant 0 : i32
    return %arg0, %c0_i32, %c0_i32_0, %c0_i32_1 : i32, i32, i32, i32
  }
  func.func @transform_6(%arg0: i32) -> (i32, i32) {
    %c0_i32 = arith.constant 0 : i32
    %c0_i32_0 = arith.constant 0 : i32
    %c0_i32_1 = arith.constant 0 : i32
    return %c0_i32, %c0_i32_0 : i32, i32
  }
}

module attributes {stable_mosaic.version = 11 : i64} {
  func.func @kernel(%arg0: i32, %arg1: i32, %arg2: memref<2x128xf32, #tpu.memory_space<vmem>>, %arg3: memref<128x128xf32, #tpu.memory_space<vmem>>, %arg4: memref<128x128xbf16, #tpu.memory_space<vmem>>, %arg5: memref<128x128xf32, #tpu.memory_space<vmem>>, %arg6: memref<2x128xf32, #tpu.memory_space<vmem>>, %arg7: memref<128x128xf32, #tpu.memory_space<vmem>>, %arg8: memref<2x128xf32, #tpu.memory_space<vmem>>) attributes {dimension_semantics = [#tpu.dimension_semantics<arbitrary>, #tpu.dimension_semantics<arbitrary>], iteration_bounds = array<i64: 1, 1>, scalar_prefetch = 0 : i64, scratch_operands = 2 : i64, tpu.core_type = #tpu.core_type<tc>, window_params = [{transform_indices = @transform_0, window_bounds = array<i64: 2, 128>}, {transform_indices = @transform_1, window_bounds = array<i64: 128, 128>}, {transform_indices = @transform_2, window_bounds = array<i64: 128, 128>}, {transform_indices = @transform_3, window_bounds = array<i64: 128, 128>}, {pipeline_mode = #tpu.pipeline_mode<synchronous>, transform_indices = @transform_4, window_bounds = array<i64: 2, 128>}]} {
    %c0_i32 = arith.constant 0 : i32
    %0 = arith.cmpi eq, %arg1, %c0_i32 : i32
    %1 = arith.extui %0 : i1 to i32
    %c0_i32_0 = arith.constant 0 : i32
    %2 = arith.cmpi ne, %1, %c0_i32_0 : i32
    scf.if %2 {
      %cst_17 = arith.constant 0.000000e+00 : f32
      %26 = vector.broadcast %cst_17 : f32 to vector<128x128xf32>
      %c0_18 = arith.constant 0 : index
      %c0_19 = arith.constant 0 : index
      %27 = vector.load %arg7[%c0_18, %c0_19] : memref<128x128xf32, #tpu.memory_space<vmem>>, vector<128x128xf32>
      tpu.vector_store %arg7[%c0_18, %c0_19], %26 {strides = array<i32>} : memref<128x128xf32, #tpu.memory_space<vmem>>, vector<128x128xf32>,
    } else {
    }
    %c0_i32_1 = arith.constant 0 : i32
    %3 = arith.cmpi eq, %arg0, %c0_i32_1 : i32
    %c0_i32_2 = arith.constant 0 : i32
    %4 = arith.cmpi eq, %arg1, %c0_i32_2 : i32
    %5 = arith.andi %3, %4 : i1
    %6 = arith.extui %5 : i1 to i32
    %c0_i32_3 = arith.constant 0 : i32
    %7 = arith.cmpi ne, %6, %c0_i32_3 : i32
    scf.if %7 {
      %cst_17 = arith.constant 0.000000e+00 : f32
      %26 = vector.broadcast %cst_17 : f32 to vector<2x128xf32>
      %c0_18 = arith.constant 0 : index
      %c0_19 = arith.constant 0 : index
      %27 = vector.load %arg8[%c0_18, %c0_19] : memref<2x128xf32, #tpu.memory_space<vmem>>, vector<2x128xf32>
      tpu.vector_store %arg8[%c0_18, %c0_19], %26 {strides = array<i32>} : memref<2x128xf32, #tpu.memory_space<vmem>>, vector<2x128xf32>,
    } else {
    }
    %c0 = arith.constant 0 : index
    %c0_4 = arith.constant 0 : index
    %8 = vector.load %arg3[%c0, %c0_4] : memref<128x128xf32, #tpu.memory_space<vmem>>, vector<128x128xf32>
    %c0_5 = arith.constant 0 : index
    %c0_6 = arith.constant 0 : index
    %9 = vector.load %arg2[%c0_5, %c0_6] : memref<2x128xf32, #tpu.memory_space<vmem>>, vector<1x128xf32>
    %10 = vector.broadcast %9 : vector<1x128xf32> to vector<128x128xf32>
    %11 = arith.mulf %8, %10 : vector<128x128xf32>
    %c1 = arith.constant 1 : index
    %c0_7 = arith.constant 0 : index
    %12 = vector.load %arg2[%c1, %c0_7] : memref<2x128xf32, #tpu.memory_space<vmem>>, vector<1x128xf32>
    %13 = vector.broadcast %12 : vector<1x128xf32> to vector<128x128xf32>
    %14 = arith.addf %11, %13 : vector<128x128xf32>
    %cst = arith.constant 0.000000e+00 : f32
    %15 = vector.broadcast %cst : f32 to vector<128x128xf32>
    %16 = arith.maximumf %14, %15 : vector<128x128xf32>
    %c0_8 = arith.constant 0 : index
    %c0_9 = arith.constant 0 : index
    %17 = vector.load %arg7[%c0_8, %c0_9] : memref<128x128xf32, #tpu.memory_space<vmem>>, vector<128x128xf32>
    %18 = arith.truncf %16 : vector<128x128xf32> to vector<128x128xbf16>
    %c0_10 = arith.constant 0 : index
    %c0_11 = arith.constant 0 : index
    %19 = vector.load %arg4[%c0_10, %c0_11] : memref<128x128xbf16, #tpu.memory_space<vmem>>, vector<128x128xbf16>
    %cst_12 = arith.constant dense<0.000000e+00> : vector<128x128xf32>
    %20 = tpu.matmul %18, %19, %cst_12 {dimension_numbers = #tpu.dot_dimension_numbers<[1], [0], [0], [1], [0, 0, 1, 1], [], []>} : vector<128x128xbf16>, vector<128x128xbf16>, vector<128x128xf32> -> vector<128x128xf32>
    %21 = arith.addf %17, %20 : vector<128x128xf32>
    %c0_13 = arith.constant 0 : index
    %c0_14 = arith.constant 0 : index
    %22 = vector.load %arg7[%c0_13, %c0_14] : memref<128x128xf32, #tpu.memory_space<vmem>>, vector<128x128xf32>
    tpu.vector_store %arg7[%c0_13, %c0_14], %21 {strides = array<i32>} : memref<128x128xf32, #tpu.memory_space<vmem>>, vector<128x128xf32>,
    %c0_i32_15 = arith.constant 0 : i32
    %23 = arith.cmpi eq, %arg1, %c0_i32_15 : i32
    %24 = arith.extui %23 : i1 to i32
    %c0_i32_16 = arith.constant 0 : i32
    %25 = arith.cmpi ne, %24, %c0_i32_16 : i32
    scf.if %25 {
      %c0_17 = arith.constant 0 : index
      %c0_18 = arith.constant 0 : index
      %26 = vector.load %arg7[%c0_17, %c0_18] : memref<128x128xf32, #tpu.memory_space<vmem>>, vector<128x128xf32>
      %c0_19 = arith.constant 0 : index
      %c0_20 = arith.constant 0 : index
      %27 = vector.load %arg5[%c0_19, %c0_20] : memref<128x128xf32, #tpu.memory_space<vmem>>, vector<128x128xf32>
      tpu.vector_store %arg5[%c0_19, %c0_20], %26 {strides = array<i32>} : memref<128x128xf32, #tpu.memory_space<vmem>>, vector<128x128xf32>,
      %c0_21 = arith.constant 0 : index
      %c0_22 = arith.constant 0 : index
      %28 = vector.load %arg8[%c0_21, %c0_22] : memref<2x128xf32, #tpu.memory_space<vmem>>, vector<1x128xf32>
      %cst_23 = arith.constant dense<0.000000e+00> : vector<128xf32>
      %29 = vector.multi_reduction <add>, %26, %cst_23 [0] : vector<128x128xf32> to vector<128xf32>
      %30 = vector.shape_cast %29 : vector<128xf32> to vector<1x128xf32>
      %31 = arith.addf %28, %30 : vector<1x128xf32>
      %c0_24 = arith.constant 0 : index
      %c0_25 = arith.constant 0 : index
      %32 = vector.load %arg8[%c0_24, %c0_25] : memref<2x128xf32, #tpu.memory_space<vmem>>, vector<1x128xf32>
      tpu.vector_store %arg8[%c0_24, %c0_25], %31 {strides = array<i32>} : memref<2x128xf32, #tpu.memory_space<vmem>>, vector<1x128xf32>,
      %c1_26 = arith.constant 1 : index
      %c0_27 = arith.constant 0 : index
      %33 = vector.load %arg8[%c1_26, %c0_27] : memref<2x128xf32, #tpu.memory_space<vmem>>, vector<1x128xf32>
      %34 = arith.mulf %26, %26 : vector<128x128xf32>
      %cst_28 = arith.constant dense<0.000000e+00> : vector<128xf32>
      %35 = vector.multi_reduction <add>, %34, %cst_28 [0] : vector<128x128xf32> to vector<128xf32>
      %36 = vector.shape_cast %35 : vector<128xf32> to vector<1x128xf32>
      %37 = arith.addf %33, %36 : vector<1x128xf32>
      %c1_29 = arith.constant 1 : index
      %c0_30 = arith.constant 0 : index
      %38 = vector.load %arg8[%c1_29, %c0_30] : memref<2x128xf32, #tpu.memory_space<vmem>>, vector<1x128xf32>
      tpu.vector_store %arg8[%c1_29, %c0_30], %37 {strides = array<i32>} : memref<2x128xf32, #tpu.memory_space<vmem>>, vector<1x128xf32>,
      %c0_i32_31 = arith.constant 0 : i32
      %39 = arith.cmpi eq, %arg0, %c0_i32_31 : i32
      %40 = arith.extui %39 : i1 to i32
      %c0_i32_32 = arith.constant 0 : i32
      %41 = arith.cmpi ne, %40, %c0_i32_32 : i32
      scf.if %41 {
        %c0_33 = arith.constant 0 : index
        %c0_34 = arith.constant 0 : index
        %42 = vector.load %arg8[%c0_33, %c0_34] : memref<2x128xf32, #tpu.memory_space<vmem>>, vector<1x128xf32>
        %cst_35 = arith.constant 7.812500e-03 : f32
        %43 = vector.broadcast %cst_35 : f32 to vector<1x128xf32>
        %44 = arith.mulf %42, %43 : vector<1x128xf32>
        %c1_36 = arith.constant 1 : index
        %c0_37 = arith.constant 0 : index
        %45 = vector.load %arg8[%c1_36, %c0_37] : memref<2x128xf32, #tpu.memory_space<vmem>>, vector<1x128xf32>
        %cst_38 = arith.constant 7.812500e-03 : f32
        %46 = vector.broadcast %cst_38 : f32 to vector<1x128xf32>
        %47 = arith.mulf %45, %46 : vector<1x128xf32>
        %48 = arith.mulf %44, %44 : vector<1x128xf32>
        %49 = arith.subf %47, %48 : vector<1x128xf32>
        %c0_39 = arith.constant 0 : index
        %c0_40 = arith.constant 0 : index
        %50 = vector.load %arg6[%c0_39, %c0_40] : memref<2x128xf32, #tpu.memory_space<vmem>>, vector<1x128xf32>
        tpu.vector_store %arg6[%c0_39, %c0_40], %44 {strides = array<i32>} : memref<2x128xf32, #tpu.memory_space<vmem>>, vector<1x128xf32>,
        %c1_41 = arith.constant 1 : index
        %c0_42 = arith.constant 0 : index
        %51 = vector.load %arg6[%c1_41, %c0_42] : memref<2x128xf32, #tpu.memory_space<vmem>>, vector<1x128xf32>
        tpu.vector_store %arg6[%c1_41, %c0_42], %49 {strides = array<i32>} : memref<2x128xf32, #tpu.memory_space<vmem>>, vector<1x128xf32>,
      } else {
      }
    } else {
    }
    return
  }
  func.func @transform_0(%arg0: i32, %arg1: i32) -> (i32, i32) {
    %c0_i32 = arith.constant 0 : i32
    %c0_i32_0 = arith.constant 0 : i32
    return %c0_i32, %arg1 : i32, i32
  }
  func.func @transform_1(%arg0: i32, %arg1: i32) -> (i32, i32) {
    %c0_i32 = arith.constant 0 : i32
    return %arg0, %arg1 : i32, i32
  }
  func.func @transform_2(%arg0: i32, %arg1: i32) -> (i32, i32) {
    %c0_i32 = arith.constant 0 : i32
    %c0_i32_0 = arith.constant 0 : i32
    return %arg1, %c0_i32 : i32, i32
  }
  func.func @transform_3(%arg0: i32, %arg1: i32) -> (i32, i32) {
    %c0_i32 = arith.constant 0 : i32
    %c0_i32_0 = arith.constant 0 : i32
    return %arg0, %c0_i32 : i32, i32
  }
  func.func @transform_4(%arg0: i32, %arg1: i32) -> (i32, i32) {
    %c0_i32 = arith.constant 0 : i32
    %c0_i32_0 = arith.constant 0 : i32
    %c0_i32_1 = arith.constant 0 : i32
    return %c0_i32, %c0_i32_0 : i32, i32
  }
}

module attributes {stable_mosaic.version = 11 : i64} {
  func.func @kernel(%arg0: i32, %arg1: i32, %arg2: memref<2x128xf32, #tpu.memory_space<vmem>>, %arg3: memref<1x1x10x128xf32, #tpu.memory_space<vmem>>, %arg4: memref<1x1x10x128xf32, #tpu.memory_space<vmem>>, %arg5: memref<1x1x10x128xf32, #tpu.memory_space<vmem>>, %arg6: memref<3x384x128xbf16, #tpu.memory_space<vmem>>, %arg7: memref<1x1x8x128xf32, #tpu.memory_space<vmem>>, %arg8: memref<1x1x8x128xf32, #tpu.memory_space<vmem>>, %arg9: memref<2x128xf32, #tpu.memory_space<vmem>>, %arg10: memref<2x128xf32, #tpu.memory_space<vmem>>) attributes {dimension_semantics = [#tpu.dimension_semantics<arbitrary>, #tpu.dimension_semantics<arbitrary>], iteration_bounds = array<i64: 2, 8>, scalar_prefetch = 0 : i64, scratch_operands = 1 : i64, tpu.core_type = #tpu.core_type<tc>, window_params = [{pipeline_mode = #tpu.pipeline_mode<synchronous>, transform_indices = @transform_0, window_bounds = array<i64: 2, 128>}, {transform_indices = @transform_1, window_bounds = array<i64: 1, 1, 10, 128>}, {transform_indices = @transform_2, window_bounds = array<i64: 1, 1, 10, 128>}, {transform_indices = @transform_3, window_bounds = array<i64: 1, 1, 10, 128>}, {pipeline_mode = #tpu.pipeline_mode<synchronous>, transform_indices = @transform_4, window_bounds = array<i64: 3, 384, 128>}, {transform_indices = @transform_5, window_bounds = array<i64: 1, 1, 8, 128>}, {transform_indices = @transform_6, window_bounds = array<i64: 1, 1, 8, 128>}, {pipeline_mode = #tpu.pipeline_mode<synchronous>, transform_indices = @transform_7, window_bounds = array<i64: 2, 128>}]} {
    %c0_i32 = arith.constant 0 : i32
    %0 = arith.cmpi eq, %arg0, %c0_i32 : i32
    %c0_i32_0 = arith.constant 0 : i32
    %1 = arith.cmpi eq, %arg1, %c0_i32_0 : i32
    %2 = arith.andi %0, %1 : i1
    %3 = arith.extui %2 : i1 to i32
    %c0_i32_1 = arith.constant 0 : i32
    %4 = arith.cmpi ne, %3, %c0_i32_1 : i32
    scf.if %4 {
      %cst_70 = arith.constant 0.000000e+00 : f32
      %100 = vector.broadcast %cst_70 : f32 to vector<2x128xf32>
      %c0_71 = arith.constant 0 : index
      %c0_72 = arith.constant 0 : index
      %101 = vector.load %arg10[%c0_71, %c0_72] : memref<2x128xf32, #tpu.memory_space<vmem>>, vector<2x128xf32>
      tpu.vector_store %arg10[%c0_71, %c0_72], %100 {strides = array<i32>} : memref<2x128xf32, #tpu.memory_space<vmem>>, vector<2x128xf32>,
    } else {
    }
    %c0 = arith.constant 0 : index
    %c0_2 = arith.constant 0 : index
    %5 = vector.load %arg2[%c0, %c0_2] : memref<2x128xf32, #tpu.memory_space<vmem>>, vector<1x128xf32>
    %c1 = arith.constant 1 : index
    %c0_3 = arith.constant 0 : index
    %6 = vector.load %arg2[%c1, %c0_3] : memref<2x128xf32, #tpu.memory_space<vmem>>, vector<1x128xf32>
    %c0_4 = arith.constant 0 : index
    %c0_5 = arith.constant 0 : index
    %c0_6 = arith.constant 0 : index
    %c0_7 = arith.constant 0 : index
    %7 = vector.load %arg7[%c0_4, %c0_5, %c0_6, %c0_7] : memref<1x1x8x128xf32, #tpu.memory_space<vmem>>, vector<1x1x8x128xf32>
    %8 = vector.shape_cast %7 : vector<1x1x8x128xf32> to vector<8x128xf32>
    %c0_8 = arith.constant 0 : index
    %c0_9 = arith.constant 0 : index
    %c0_10 = arith.constant 0 : index
    %c0_11 = arith.constant 0 : index
    %9 = vector.load %arg3[%c0_8, %c0_9, %c0_10, %c0_11] : memref<1x1x10x128xf32, #tpu.memory_space<vmem>>, vector<1x1x10x128xf32>
    %10 = vector.shape_cast %9 : vector<1x1x10x128xf32> to vector<10x128xf32>
    %11 = vector.broadcast %5 : vector<1x128xf32> to vector<10x128xf32>
    %12 = arith.mulf %10, %11 : vector<10x128xf32>
    %13 = vector.broadcast %6 : vector<1x128xf32> to vector<10x128xf32>
    %14 = arith.addf %12, %13 : vector<10x128xf32>
    %cst = arith.constant 0.000000e+00 : f32
    %15 = vector.broadcast %cst : f32 to vector<10x128xf32>
    %16 = arith.maximumf %14, %15 : vector<10x128xf32>
    %17 = arith.truncf %16 : vector<10x128xf32> to vector<10x128xbf16>
    %18 = vector.extract_strided_slice %17 {offsets = [0, 0], sizes = [8, 128], strides = [1, 1]} : vector<10x128xbf16> to vector<8x128xbf16>
    %c0_12 = arith.constant 0 : index
    %c0_13 = arith.constant 0 : index
    %c0_14 = arith.constant 0 : index
    %19 = vector.load %arg6[%c0_12, %c0_13, %c0_14] : memref<3x384x128xbf16, #tpu.memory_space<vmem>>, vector<1x128x128xbf16>
    %20 = vector.shape_cast %19 : vector<1x128x128xbf16> to vector<128x128xbf16>
    %cst_15 = arith.constant dense<0.000000e+00> : vector<8x128xf32>
    %21 = tpu.matmul %18, %20, %cst_15 {dimension_numbers = #tpu.dot_dimension_numbers<[1], [0], [0], [1], [0, 0, 1, 1], [], []>} : vector<8x128xbf16>, vector<128x128xbf16>, vector<8x128xf32> -> vector<8x128xf32>
    %22 = arith.addf %8, %21 : vector<8x128xf32>
    %23 = vector.extract_strided_slice %17 {offsets = [1, 0], sizes = [8, 128], strides = [1, 1]} : vector<10x128xbf16> to vector<8x128xbf16>
    %c0_16 = arith.constant 0 : index
    %c128 = arith.constant 128 : index
    %c0_17 = arith.constant 0 : index
    %24 = vector.load %arg6[%c0_16, %c128, %c0_17] : memref<3x384x128xbf16, #tpu.memory_space<vmem>>, vector<1x128x128xbf16>
    %25 = vector.shape_cast %24 : vector<1x128x128xbf16> to vector<128x128xbf16>
    %cst_18 = arith.constant dense<0.000000e+00> : vector<8x128xf32>
    %26 = tpu.matmul %23, %25, %cst_18 {dimension_numbers = #tpu.dot_dimension_numbers<[1], [0], [0], [1], [0, 0, 1, 1], [], []>} : vector<8x128xbf16>, vector<128x128xbf16>, vector<8x128xf32> -> vector<8x128xf32>
    %27 = arith.addf %22, %26 : vector<8x128xf32>
    %28 = vector.extract_strided_slice %17 {offsets = [2, 0], sizes = [8, 128], strides = [1, 1]} : vector<10x128xbf16> to vector<8x128xbf16>
    %c0_19 = arith.constant 0 : index
    %c256 = arith.constant 256 : index
    %c0_20 = arith.constant 0 : index
    %29 = vector.load %arg6[%c0_19, %c256, %c0_20] : memref<3x384x128xbf16, #tpu.memory_space<vmem>>, vector<1x128x128xbf16>
    %30 = vector.shape_cast %29 : vector<1x128x128xbf16> to vector<128x128xbf16>
    %cst_21 = arith.constant dense<0.000000e+00> : vector<8x128xf32>
    %31 = tpu.matmul %28, %30, %cst_21 {dimension_numbers = #tpu.dot_dimension_numbers<[1], [0], [0], [1], [0, 0, 1, 1], [], []>} : vector<8x128xbf16>, vector<128x128xbf16>, vector<8x128xf32> -> vector<8x128xf32>
    %32 = arith.addf %27, %31 : vector<8x128xf32>
    %c0_22 = arith.constant 0 : index
    %c0_23 = arith.constant 0 : index
    %c0_24 = arith.constant 0 : index
    %c0_25 = arith.constant 0 : index
    %33 = vector.load %arg4[%c0_22, %c0_23, %c0_24, %c0_25] : memref<1x1x10x128xf32, #tpu.memory_space<vmem>>, vector<1x1x10x128xf32>
    %34 = vector.shape_cast %33 : vector<1x1x10x128xf32> to vector<10x128xf32>
    %35 = vector.broadcast %5 : vector<1x128xf32> to vector<10x128xf32>
    %36 = arith.mulf %34, %35 : vector<10x128xf32>
    %37 = vector.broadcast %6 : vector<1x128xf32> to vector<10x128xf32>
    %38 = arith.addf %36, %37 : vector<10x128xf32>
    %cst_26 = arith.constant 0.000000e+00 : f32
    %39 = vector.broadcast %cst_26 : f32 to vector<10x128xf32>
    %40 = arith.maximumf %38, %39 : vector<10x128xf32>
    %41 = arith.truncf %40 : vector<10x128xf32> to vector<10x128xbf16>
    %42 = vector.extract_strided_slice %41 {offsets = [0, 0], sizes = [8, 128], strides = [1, 1]} : vector<10x128xbf16> to vector<8x128xbf16>
    %c1_27 = arith.constant 1 : index
    %c0_28 = arith.constant 0 : index
    %c0_29 = arith.constant 0 : index
    %43 = vector.load %arg6[%c1_27, %c0_28, %c0_29] : memref<3x384x128xbf16, #tpu.memory_space<vmem>>, vector<1x128x128xbf16>
    %44 = vector.shape_cast %43 : vector<1x128x128xbf16> to vector<128x128xbf16>
    %cst_30 = arith.constant dense<0.000000e+00> : vector<8x128xf32>
    %45 = tpu.matmul %42, %44, %cst_30 {dimension_numbers = #tpu.dot_dimension_numbers<[1], [0], [0], [1], [0, 0, 1, 1], [], []>} : vector<8x128xbf16>, vector<128x128xbf16>, vector<8x128xf32> -> vector<8x128xf32>
    %46 = arith.addf %32, %45 : vector<8x128xf32>
    %47 = vector.extract_strided_slice %41 {offsets = [1, 0], sizes = [8, 128], strides = [1, 1]} : vector<10x128xbf16> to vector<8x128xbf16>
    %c1_31 = arith.constant 1 : index
    %c128_32 = arith.constant 128 : index
    %c0_33 = arith.constant 0 : index
    %48 = vector.load %arg6[%c1_31, %c128_32, %c0_33] : memref<3x384x128xbf16, #tpu.memory_space<vmem>>, vector<1x128x128xbf16>
    %49 = vector.shape_cast %48 : vector<1x128x128xbf16> to vector<128x128xbf16>
    %cst_34 = arith.constant dense<0.000000e+00> : vector<8x128xf32>
    %50 = tpu.matmul %47, %49, %cst_34 {dimension_numbers = #tpu.dot_dimension_numbers<[1], [0], [0], [1], [0, 0, 1, 1], [], []>} : vector<8x128xbf16>, vector<128x128xbf16>, vector<8x128xf32> -> vector<8x128xf32>
    %51 = arith.addf %46, %50 : vector<8x128xf32>
    %52 = vector.extract_strided_slice %41 {offsets = [2, 0], sizes = [8, 128], strides = [1, 1]} : vector<10x128xbf16> to vector<8x128xbf16>
    %c1_35 = arith.constant 1 : index
    %c256_36 = arith.constant 256 : index
    %c0_37 = arith.constant 0 : index
    %53 = vector.load %arg6[%c1_35, %c256_36, %c0_37] : memref<3x384x128xbf16, #tpu.memory_space<vmem>>, vector<1x128x128xbf16>
    %54 = vector.shape_cast %53 : vector<1x128x128xbf16> to vector<128x128xbf16>
    %cst_38 = arith.constant dense<0.000000e+00> : vector<8x128xf32>
    %55 = tpu.matmul %52, %54, %cst_38 {dimension_numbers = #tpu.dot_dimension_numbers<[1], [0], [0], [1], [0, 0, 1, 1], [], []>} : vector<8x128xbf16>, vector<128x128xbf16>, vector<8x128xf32> -> vector<8x128xf32>
    %56 = arith.addf %51, %55 : vector<8x128xf32>
    %c0_39 = arith.constant 0 : index
    %c0_40 = arith.constant 0 : index
    %c0_41 = arith.constant 0 : index
    %c0_42 = arith.constant 0 : index
    %57 = vector.load %arg5[%c0_39, %c0_40, %c0_41, %c0_42] : memref<1x1x10x128xf32, #tpu.memory_space<vmem>>, vector<1x1x10x128xf32>
    %58 = vector.shape_cast %57 : vector<1x1x10x128xf32> to vector<10x128xf32>
    %59 = vector.broadcast %5 : vector<1x128xf32> to vector<10x128xf32>
    %60 = arith.mulf %58, %59 : vector<10x128xf32>
    %61 = vector.broadcast %6 : vector<1x128xf32> to vector<10x128xf32>
    %62 = arith.addf %60, %61 : vector<10x128xf32>
    %cst_43 = arith.constant 0.000000e+00 : f32
    %63 = vector.broadcast %cst_43 : f32 to vector<10x128xf32>
    %64 = arith.maximumf %62, %63 : vector<10x128xf32>
    %65 = arith.truncf %64 : vector<10x128xf32> to vector<10x128xbf16>
    %66 = vector.extract_strided_slice %65 {offsets = [0, 0], sizes = [8, 128], strides = [1, 1]} : vector<10x128xbf16> to vector<8x128xbf16>
    %c2 = arith.constant 2 : index
    %c0_44 = arith.constant 0 : index
    %c0_45 = arith.constant 0 : index
    %67 = vector.load %arg6[%c2, %c0_44, %c0_45] : memref<3x384x128xbf16, #tpu.memory_space<vmem>>, vector<1x128x128xbf16>
    %68 = vector.shape_cast %67 : vector<1x128x128xbf16> to vector<128x128xbf16>
    %cst_46 = arith.constant dense<0.000000e+00> : vector<8x128xf32>
    %69 = tpu.matmul %66, %68, %cst_46 {dimension_numbers = #tpu.dot_dimension_numbers<[1], [0], [0], [1], [0, 0, 1, 1], [], []>} : vector<8x128xbf16>, vector<128x128xbf16>, vector<8x128xf32> -> vector<8x128xf32>
    %70 = arith.addf %56, %69 : vector<8x128xf32>
    %71 = vector.extract_strided_slice %65 {offsets = [1, 0], sizes = [8, 128], strides = [1, 1]} : vector<10x128xbf16> to vector<8x128xbf16>
    %c2_47 = arith.constant 2 : index
    %c128_48 = arith.constant 128 : index
    %c0_49 = arith.constant 0 : index
    %72 = vector.load %arg6[%c2_47, %c128_48, %c0_49] : memref<3x384x128xbf16, #tpu.memory_space<vmem>>, vector<1x128x128xbf16>
    %73 = vector.shape_cast %72 : vector<1x128x128xbf16> to vector<128x128xbf16>
    %cst_50 = arith.constant dense<0.000000e+00> : vector<8x128xf32>
    %74 = tpu.matmul %71, %73, %cst_50 {dimension_numbers = #tpu.dot_dimension_numbers<[1], [0], [0], [1], [0, 0, 1, 1], [], []>} : vector<8x128xbf16>, vector<128x128xbf16>, vector<8x128xf32> -> vector<8x128xf32>
    %75 = arith.addf %70, %74 : vector<8x128xf32>
    %76 = vector.extract_strided_slice %65 {offsets = [2, 0], sizes = [8, 128], strides = [1, 1]} : vector<10x128xbf16> to vector<8x128xbf16>
    %c2_51 = arith.constant 2 : index
    %c256_52 = arith.constant 256 : index
    %c0_53 = arith.constant 0 : index
    %77 = vector.load %arg6[%c2_51, %c256_52, %c0_53] : memref<3x384x128xbf16, #tpu.memory_space<vmem>>, vector<1x128x128xbf16>
    %78 = vector.shape_cast %77 : vector<1x128x128xbf16> to vector<128x128xbf16>
    %cst_54 = arith.constant dense<0.000000e+00> : vector<8x128xf32>
    %79 = tpu.matmul %76, %78, %cst_54 {dimension_numbers = #tpu.dot_dimension_numbers<[1], [0], [0], [1], [0, 0, 1, 1], [], []>} : vector<8x128xbf16>, vector<128x128xbf16>, vector<8x128xf32> -> vector<8x128xf32>
    %80 = arith.addf %75, %79 : vector<8x128xf32>
    %c0_55 = arith.constant 0 : index
    %c0_56 = arith.constant 0 : index
    %c0_57 = arith.constant 0 : index
    %c0_58 = arith.constant 0 : index
    %81 = vector.load %arg8[%c0_55, %c0_56, %c0_57, %c0_58] : memref<1x1x8x128xf32, #tpu.memory_space<vmem>>, vector<1x1x8x128xf32>
    %82 = vector.shape_cast %81 : vector<1x1x8x128xf32> to vector<8x128xf32>
    %83 = vector.shape_cast %80 : vector<8x128xf32> to vector<1x1x8x128xf32>
    tpu.vector_store %arg8[%c0_55, %c0_56, %c0_57, %c0_58], %83 {strides = array<i32>} : memref<1x1x8x128xf32, #tpu.memory_space<vmem>>, vector<1x1x8x128xf32>,
    %c0_59 = arith.constant 0 : index
    %c0_60 = arith.constant 0 : index
    %84 = vector.load %arg10[%c0_59, %c0_60] : memref<2x128xf32, #tpu.memory_space<vmem>>, vector<1x128xf32>
    %cst_61 = arith.constant dense<0.000000e+00> : vector<128xf32>
    %85 = vector.multi_reduction <add>, %80, %cst_61 [0] : vector<8x128xf32> to vector<128xf32>
    %86 = vector.shape_cast %85 : vector<128xf32> to vector<1x128xf32>
    %87 = arith.addf %84, %86 : vector<1x128xf32>
    %c0_62 = arith.constant 0 : index
    %c0_63 = arith.constant 0 : index
    %88 = vector.load %arg10[%c0_62, %c0_63] : memref<2x128xf32, #tpu.memory_space<vmem>>, vector<1x128xf32>
    tpu.vector_store %arg10[%c0_62, %c0_63], %87 {strides = array<i32>} : memref<2x128xf32, #tpu.memory_space<vmem>>, vector<1x128xf32>,
    %c1_64 = arith.constant 1 : index
    %c0_65 = arith.constant 0 : index
    %89 = vector.load %arg10[%c1_64, %c0_65] : memref<2x128xf32, #tpu.memory_space<vmem>>, vector<1x128xf32>
    %90 = arith.mulf %80, %80 : vector<8x128xf32>
    %cst_66 = arith.constant dense<0.000000e+00> : vector<128xf32>
    %91 = vector.multi_reduction <add>, %90, %cst_66 [0] : vector<8x128xf32> to vector<128xf32>
    %92 = vector.shape_cast %91 : vector<128xf32> to vector<1x128xf32>
    %93 = arith.addf %89, %92 : vector<1x128xf32>
    %c1_67 = arith.constant 1 : index
    %c0_68 = arith.constant 0 : index
    %94 = vector.load %arg10[%c1_67, %c0_68] : memref<2x128xf32, #tpu.memory_space<vmem>>, vector<1x128xf32>
    tpu.vector_store %arg10[%c1_67, %c0_68], %93 {strides = array<i32>} : memref<2x128xf32, #tpu.memory_space<vmem>>, vector<1x128xf32>,
    %c1_i32 = arith.constant 1 : i32
    %95 = arith.cmpi eq, %arg0, %c1_i32 : i32
    %c7_i32 = arith.constant 7 : i32
    %96 = arith.cmpi eq, %arg1, %c7_i32 : i32
    %97 = arith.andi %95, %96 : i1
    %98 = arith.extui %97 : i1 to i32
    %c0_i32_69 = arith.constant 0 : i32
    %99 = arith.cmpi ne, %98, %c0_i32_69 : i32
    scf.if %99 {
      %c0_70 = arith.constant 0 : index
      %c0_71 = arith.constant 0 : index
      %100 = vector.load %arg10[%c0_70, %c0_71] : memref<2x128xf32, #tpu.memory_space<vmem>>, vector<1x128xf32>
      %cst_72 = arith.constant 7.812500e-03 : f32
      %101 = vector.broadcast %cst_72 : f32 to vector<1x128xf32>
      %102 = arith.mulf %100, %101 : vector<1x128xf32>
      %c1_73 = arith.constant 1 : index
      %c0_74 = arith.constant 0 : index
      %103 = vector.load %arg10[%c1_73, %c0_74] : memref<2x128xf32, #tpu.memory_space<vmem>>, vector<1x128xf32>
      %cst_75 = arith.constant 7.812500e-03 : f32
      %104 = vector.broadcast %cst_75 : f32 to vector<1x128xf32>
      %105 = arith.mulf %103, %104 : vector<1x128xf32>
      %106 = arith.mulf %102, %102 : vector<1x128xf32>
      %107 = arith.subf %105, %106 : vector<1x128xf32>
      %c0_76 = arith.constant 0 : index
      %c0_77 = arith.constant 0 : index
      %108 = vector.load %arg9[%c0_76, %c0_77] : memref<2x128xf32, #tpu.memory_space<vmem>>, vector<1x128xf32>
      tpu.vector_store %arg9[%c0_76, %c0_77], %102 {strides = array<i32>} : memref<2x128xf32, #tpu.memory_space<vmem>>, vector<1x128xf32>,
      %c1_78 = arith.constant 1 : index
      %c0_79 = arith.constant 0 : index
      %109 = vector.load %arg9[%c1_78, %c0_79] : memref<2x128xf32, #tpu.memory_space<vmem>>, vector<1x128xf32>
      tpu.vector_store %arg9[%c1_78, %c0_79], %107 {strides = array<i32>} : memref<2x128xf32, #tpu.memory_space<vmem>>, vector<1x128xf32>,
    } else {
    }
    return
  }
  func.func @transform_0(%arg0: i32, %arg1: i32) -> (i32, i32) {
    %c0_i32 = arith.constant 0 : i32
    %c0_i32_0 = arith.constant 0 : i32
    %c0_i32_1 = arith.constant 0 : i32
    return %c0_i32, %c0_i32_0 : i32, i32
  }
  func.func @transform_1(%arg0: i32, %arg1: i32) -> (i32, i32, i32, i32) {
    %c0_i32 = arith.constant 0 : i32
    %0 = arith.addi %arg1, %c0_i32 : i32
    %c0_i32_0 = arith.constant 0 : i32
    %c0_i32_1 = arith.constant 0 : i32
    %c0_i32_2 = arith.constant 0 : i32
    return %arg0, %0, %c0_i32_0, %c0_i32_1 : i32, i32, i32, i32
  }
  func.func @transform_2(%arg0: i32, %arg1: i32) -> (i32, i32, i32, i32) {
    %c1_i32 = arith.constant 1 : i32
    %0 = arith.addi %arg1, %c1_i32 : i32
    %c0_i32 = arith.constant 0 : i32
    %c0_i32_0 = arith.constant 0 : i32
    %c0_i32_1 = arith.constant 0 : i32
    return %arg0, %0, %c0_i32, %c0_i32_0 : i32, i32, i32, i32
  }
  func.func @transform_3(%arg0: i32, %arg1: i32) -> (i32, i32, i32, i32) {
    %c2_i32 = arith.constant 2 : i32
    %0 = arith.addi %arg1, %c2_i32 : i32
    %c0_i32 = arith.constant 0 : i32
    %c0_i32_0 = arith.constant 0 : i32
    %c0_i32_1 = arith.constant 0 : i32
    return %arg0, %0, %c0_i32, %c0_i32_0 : i32, i32, i32, i32
  }
  func.func @transform_4(%arg0: i32, %arg1: i32) -> (i32, i32, i32) {
    %c0_i32 = arith.constant 0 : i32
    %c0_i32_0 = arith.constant 0 : i32
    %c0_i32_1 = arith.constant 0 : i32
    %c0_i32_2 = arith.constant 0 : i32
    return %c0_i32, %c0_i32_0, %c0_i32_1 : i32, i32, i32
  }
  func.func @transform_5(%arg0: i32, %arg1: i32) -> (i32, i32, i32, i32) {
    %c0_i32 = arith.constant 0 : i32
    %c0_i32_0 = arith.constant 0 : i32
    %c0_i32_1 = arith.constant 0 : i32
    return %arg0, %arg1, %c0_i32, %c0_i32_0 : i32, i32, i32, i32
  }
  func.func @transform_6(%arg0: i32, %arg1: i32) -> (i32, i32, i32, i32) {
    %c0_i32 = arith.constant 0 : i32
    %c0_i32_0 = arith.constant 0 : i32
    %c0_i32_1 = arith.constant 0 : i32
    return %arg0, %arg1, %c0_i32, %c0_i32_0 : i32, i32, i32, i32
  }
  func.func @transform_7(%arg0: i32, %arg1: i32) -> (i32, i32) {
    %c0_i32 = arith.constant 0 : i32
    %c0_i32_0 = arith.constant 0 : i32
    %c0_i32_1 = arith.constant 0 : i32
    return %c0_i32, %c0_i32_0 : i32, i32
  }
}

module attributes {stable_mosaic.version = 11 : i64} {
  func.func @kernel(%arg0: i32, %arg1: i32, %arg2: memref<2x128xf32, #tpu.memory_space<vmem>>, %arg3: memref<128x128xf32, #tpu.memory_space<vmem>>, %arg4: memref<128x128xbf16, #tpu.memory_space<vmem>>, %arg5: memref<128x128xf32, #tpu.memory_space<vmem>>, %arg6: memref<128x128xf32, #tpu.memory_space<vmem>>) attributes {dimension_semantics = [#tpu.dimension_semantics<parallel>, #tpu.dimension_semantics<arbitrary>], iteration_bounds = array<i64: 1, 1>, scalar_prefetch = 0 : i64, scratch_operands = 1 : i64, tpu.core_type = #tpu.core_type<tc>, window_params = [{transform_indices = @transform_0, window_bounds = array<i64: 2, 128>}, {transform_indices = @transform_1, window_bounds = array<i64: 128, 128>}, {transform_indices = @transform_2, window_bounds = array<i64: 128, 128>}, {transform_indices = @transform_3, window_bounds = array<i64: 128, 128>}]} {
    %c0_i32 = arith.constant 0 : i32
    %0 = arith.cmpi eq, %arg1, %c0_i32 : i32
    %1 = arith.extui %0 : i1 to i32
    %c0_i32_0 = arith.constant 0 : i32
    %2 = arith.cmpi ne, %1, %c0_i32_0 : i32
    scf.if %2 {
      %cst_14 = arith.constant 0.000000e+00 : f32
      %21 = vector.broadcast %cst_14 : f32 to vector<128x128xf32>
      %c0_15 = arith.constant 0 : index
      %c0_16 = arith.constant 0 : index
      %22 = vector.load %arg6[%c0_15, %c0_16] : memref<128x128xf32, #tpu.memory_space<vmem>>, vector<128x128xf32>
      tpu.vector_store %arg6[%c0_15, %c0_16], %21 {strides = array<i32>} : memref<128x128xf32, #tpu.memory_space<vmem>>, vector<128x128xf32>,
    } else {
    }
    %c0 = arith.constant 0 : index
    %c0_1 = arith.constant 0 : index
    %3 = vector.load %arg3[%c0, %c0_1] : memref<128x128xf32, #tpu.memory_space<vmem>>, vector<128x128xf32>
    %c0_2 = arith.constant 0 : index
    %c0_3 = arith.constant 0 : index
    %4 = vector.load %arg2[%c0_2, %c0_3] : memref<2x128xf32, #tpu.memory_space<vmem>>, vector<1x128xf32>
    %5 = vector.broadcast %4 : vector<1x128xf32> to vector<128x128xf32>
    %6 = arith.mulf %3, %5 : vector<128x128xf32>
    %c1 = arith.constant 1 : index
    %c0_4 = arith.constant 0 : index
    %7 = vector.load %arg2[%c1, %c0_4] : memref<2x128xf32, #tpu.memory_space<vmem>>, vector<1x128xf32>
    %8 = vector.broadcast %7 : vector<1x128xf32> to vector<128x128xf32>
    %9 = arith.addf %6, %8 : vector<128x128xf32>
    %cst = arith.constant 0.000000e+00 : f32
    %10 = vector.broadcast %cst : f32 to vector<128x128xf32>
    %11 = arith.maximumf %9, %10 : vector<128x128xf32>
    %c0_5 = arith.constant 0 : index
    %c0_6 = arith.constant 0 : index
    %12 = vector.load %arg6[%c0_5, %c0_6] : memref<128x128xf32, #tpu.memory_space<vmem>>, vector<128x128xf32>
    %13 = arith.truncf %11 : vector<128x128xf32> to vector<128x128xbf16>
    %c0_7 = arith.constant 0 : index
    %c0_8 = arith.constant 0 : index
    %14 = vector.load %arg4[%c0_7, %c0_8] : memref<128x128xbf16, #tpu.memory_space<vmem>>, vector<128x128xbf16>
    %cst_9 = arith.constant dense<0.000000e+00> : vector<128x128xf32>
    %15 = tpu.matmul %13, %14, %cst_9 {dimension_numbers = #tpu.dot_dimension_numbers<[1], [0], [0], [1], [0, 0, 1, 1], [], []>} : vector<128x128xbf16>, vector<128x128xbf16>, vector<128x128xf32> -> vector<128x128xf32>
    %16 = arith.addf %12, %15 : vector<128x128xf32>
    %c0_10 = arith.constant 0 : index
    %c0_11 = arith.constant 0 : index
    %17 = vector.load %arg6[%c0_10, %c0_11] : memref<128x128xf32, #tpu.memory_space<vmem>>, vector<128x128xf32>
    tpu.vector_store %arg6[%c0_10, %c0_11], %16 {strides = array<i32>} : memref<128x128xf32, #tpu.memory_space<vmem>>, vector<128x128xf32>,
    %c0_i32_12 = arith.constant 0 : i32
    %18 = arith.cmpi eq, %arg1, %c0_i32_12 : i32
    %19 = arith.extui %18 : i1 to i32
    %c0_i32_13 = arith.constant 0 : i32
    %20 = arith.cmpi ne, %19, %c0_i32_13 : i32
    scf.if %20 {
      %c0_14 = arith.constant 0 : index
      %c0_15 = arith.constant 0 : index
      %21 = vector.load %arg6[%c0_14, %c0_15] : memref<128x128xf32, #tpu.memory_space<vmem>>, vector<128x128xf32>
      %c0_16 = arith.constant 0 : index
      %c0_17 = arith.constant 0 : index
      %22 = vector.load %arg5[%c0_16, %c0_17] : memref<128x128xf32, #tpu.memory_space<vmem>>, vector<128x128xf32>
      tpu.vector_store %arg5[%c0_16, %c0_17], %21 {strides = array<i32>} : memref<128x128xf32, #tpu.memory_space<vmem>>, vector<128x128xf32>,
    } else {
    }
    return
  }
  func.func @transform_0(%arg0: i32, %arg1: i32) -> (i32, i32) {
    %c0_i32 = arith.constant 0 : i32
    %c0_i32_0 = arith.constant 0 : i32
    return %c0_i32, %arg1 : i32, i32
  }
  func.func @transform_1(%arg0: i32, %arg1: i32) -> (i32, i32) {
    %c0_i32 = arith.constant 0 : i32
    return %arg0, %arg1 : i32, i32
  }
  func.func @transform_2(%arg0: i32, %arg1: i32) -> (i32, i32) {
    %c0_i32 = arith.constant 0 : i32
    %c0_i32_0 = arith.constant 0 : i32
    return %arg1, %c0_i32 : i32, i32
  }
  func.func @transform_3(%arg0: i32, %arg1: i32) -> (i32, i32) {
    %c0_i32 = arith.constant 0 : i32
    %c0_i32_0 = arith.constant 0 : i32
    return %arg0, %c0_i32 : i32, i32
  }
}

module attributes {stable_mosaic.version = 11 : i64} {
  func.func @kernel(%arg0: i32, %arg1: memref<1x4x4x128xf32, #tpu.memory_space<vmem>>, %arg2: memref<1x4x4x128xf32, #tpu.memory_space<vmem>>, %arg3: memref<1x4x4x128xf32, #tpu.memory_space<vmem>>, %arg4: memref<1x4x4x128xf32, #tpu.memory_space<vmem>>, %arg5: memref<1x4x4x128xf32, #tpu.memory_space<vmem>>, %arg6: memref<2x128xf32, #tpu.memory_space<vmem>>, %arg7: memref<2x128xf32, #tpu.memory_space<vmem>>) attributes {dimension_semantics = [#tpu.dimension_semantics<arbitrary>], iteration_bounds = array<i64: 2>, scalar_prefetch = 0 : i64, scratch_operands = 1 : i64, tpu.core_type = #tpu.core_type<tc>, window_params = [{transform_indices = @transform_0, window_bounds = array<i64: 1, 4, 4, 128>}, {transform_indices = @transform_1, window_bounds = array<i64: 1, 4, 4, 128>}, {transform_indices = @transform_2, window_bounds = array<i64: 1, 4, 4, 128>}, {transform_indices = @transform_3, window_bounds = array<i64: 1, 4, 4, 128>}, {transform_indices = @transform_4, window_bounds = array<i64: 1, 4, 4, 128>}, {pipeline_mode = #tpu.pipeline_mode<synchronous>, transform_indices = @transform_5, window_bounds = array<i64: 2, 128>}]} {
    %c0_i32 = arith.constant 0 : i32
    %0 = arith.cmpi eq, %arg0, %c0_i32 : i32
    %1 = arith.extui %0 : i1 to i32
    %c0_i32_0 = arith.constant 0 : i32
    %2 = arith.cmpi ne, %1, %c0_i32_0 : i32
    scf.if %2 {
      %cst_32 = arith.constant 0.000000e+00 : f32
      %35 = vector.broadcast %cst_32 : f32 to vector<2x128xf32>
      %c0_33 = arith.constant 0 : index
      %c0_34 = arith.constant 0 : index
      %36 = vector.load %arg7[%c0_33, %c0_34] : memref<2x128xf32, #tpu.memory_space<vmem>>, vector<2x128xf32>
      tpu.vector_store %arg7[%c0_33, %c0_34], %35 {strides = array<i32>} : memref<2x128xf32, #tpu.memory_space<vmem>>, vector<2x128xf32>,
    } else {
    }
    %c0 = arith.constant 0 : index
    %c0_1 = arith.constant 0 : index
    %c0_2 = arith.constant 0 : index
    %c0_3 = arith.constant 0 : index
    %3 = vector.load %arg1[%c0, %c0_1, %c0_2, %c0_3] : memref<1x4x4x128xf32, #tpu.memory_space<vmem>>, vector<1x4x4x128xf32>
    %4 = vector.shape_cast %3 : vector<1x4x4x128xf32> to vector<4x4x128xf32>
    %c0_4 = arith.constant 0 : index
    %c0_5 = arith.constant 0 : index
    %c0_6 = arith.constant 0 : index
    %c0_7 = arith.constant 0 : index
    %5 = vector.load %arg2[%c0_4, %c0_5, %c0_6, %c0_7] : memref<1x4x4x128xf32, #tpu.memory_space<vmem>>, vector<1x4x4x128xf32>
    %6 = vector.shape_cast %5 : vector<1x4x4x128xf32> to vector<4x4x128xf32>
    %7 = arith.addf %4, %6 : vector<4x4x128xf32>
    %c0_8 = arith.constant 0 : index
    %c0_9 = arith.constant 0 : index
    %c0_10 = arith.constant 0 : index
    %c0_11 = arith.constant 0 : index
    %8 = vector.load %arg3[%c0_8, %c0_9, %c0_10, %c0_11] : memref<1x4x4x128xf32, #tpu.memory_space<vmem>>, vector<1x4x4x128xf32>
    %9 = vector.shape_cast %8 : vector<1x4x4x128xf32> to vector<4x4x128xf32>
    %10 = arith.addf %7, %9 : vector<4x4x128xf32>
    %c0_12 = arith.constant 0 : index
    %c0_13 = arith.constant 0 : index
    %c0_14 = arith.constant 0 : index
    %c0_15 = arith.constant 0 : index
    %11 = vector.load %arg4[%c0_12, %c0_13, %c0_14, %c0_15] : memref<1x4x4x128xf32, #tpu.memory_space<vmem>>, vector<1x4x4x128xf32>
    %12 = vector.shape_cast %11 : vector<1x4x4x128xf32> to vector<4x4x128xf32>
    %13 = arith.addf %10, %12 : vector<4x4x128xf32>
    %cst = arith.constant 2.500000e-01 : f32
    %14 = vector.broadcast %cst : f32 to vector<4x4x128xf32>
    %15 = arith.mulf %13, %14 : vector<4x4x128xf32>
    %c0_16 = arith.constant 0 : index
    %c0_17 = arith.constant 0 : index
    %c0_18 = arith.constant 0 : index
    %c0_19 = arith.constant 0 : index
    %16 = vector.load %arg5[%c0_16, %c0_17, %c0_18, %c0_19] : memref<1x4x4x128xf32, #tpu.memory_space<vmem>>, vector<1x4x4x128xf32>
    %17 = vector.shape_cast %16 : vector<1x4x4x128xf32> to vector<4x4x128xf32>
    %18 = vector.shape_cast %15 : vector<4x4x128xf32> to vector<1x4x4x128xf32>
    tpu.vector_store %arg5[%c0_16, %c0_17, %c0_18, %c0_19], %18 {strides = array<i32>} : memref<1x4x4x128xf32, #tpu.memory_space<vmem>>, vector<1x4x4x128xf32>,
    %c0_20 = arith.constant 0 : index
    %c0_21 = arith.constant 0 : index
    %19 = vector.load %arg7[%c0_20, %c0_21] : memref<2x128xf32, #tpu.memory_space<vmem>>, vector<1x128xf32>
    %cst_22 = arith.constant dense<0.000000e+00> : vector<4x128xf32>
    %20 = vector.multi_reduction <add>, %15, %cst_22 [0] : vector<4x4x128xf32> to vector<4x128xf32>
    %cst_23 = arith.constant dense<0.000000e+00> : vector<128xf32>
    %21 = vector.multi_reduction <add>, %20, %cst_23 [0] : vector<4x128xf32> to vector<128xf32>
    %22 = vector.shape_cast %21 : vector<128xf32> to vector<1x128xf32>
    %23 = arith.addf %19, %22 : vector<1x128xf32>
    %c0_24 = arith.constant 0 : index
    %c0_25 = arith.constant 0 : index
    %24 = vector.load %arg7[%c0_24, %c0_25] : memref<2x128xf32, #tpu.memory_space<vmem>>, vector<1x128xf32>
    tpu.vector_store %arg7[%c0_24, %c0_25], %23 {strides = array<i32>} : memref<2x128xf32, #tpu.memory_space<vmem>>, vector<1x128xf32>,
    %c1 = arith.constant 1 : index
    %c0_26 = arith.constant 0 : index
    %25 = vector.load %arg7[%c1, %c0_26] : memref<2x128xf32, #tpu.memory_space<vmem>>, vector<1x128xf32>
    %26 = arith.mulf %15, %15 : vector<4x4x128xf32>
    %cst_27 = arith.constant dense<0.000000e+00> : vector<4x128xf32>
    %27 = vector.multi_reduction <add>, %26, %cst_27 [0] : vector<4x4x128xf32> to vector<4x128xf32>
    %cst_28 = arith.constant dense<0.000000e+00> : vector<128xf32>
    %28 = vector.multi_reduction <add>, %27, %cst_28 [0] : vector<4x128xf32> to vector<128xf32>
    %29 = vector.shape_cast %28 : vector<128xf32> to vector<1x128xf32>
    %30 = arith.addf %25, %29 : vector<1x128xf32>
    %c1_29 = arith.constant 1 : index
    %c0_30 = arith.constant 0 : index
    %31 = vector.load %arg7[%c1_29, %c0_30] : memref<2x128xf32, #tpu.memory_space<vmem>>, vector<1x128xf32>
    tpu.vector_store %arg7[%c1_29, %c0_30], %30 {strides = array<i32>} : memref<2x128xf32, #tpu.memory_space<vmem>>, vector<1x128xf32>,
    %c1_i32 = arith.constant 1 : i32
    %32 = arith.cmpi eq, %arg0, %c1_i32 : i32
    %33 = arith.extui %32 : i1 to i32
    %c0_i32_31 = arith.constant 0 : i32
    %34 = arith.cmpi ne, %33, %c0_i32_31 : i32
    scf.if %34 {
      %c0_32 = arith.constant 0 : index
      %c0_33 = arith.constant 0 : index
      %35 = vector.load %arg7[%c0_32, %c0_33] : memref<2x128xf32, #tpu.memory_space<vmem>>, vector<1x128xf32>
      %cst_34 = arith.constant 3.125000e-02 : f32
      %36 = vector.broadcast %cst_34 : f32 to vector<1x128xf32>
      %37 = arith.mulf %35, %36 : vector<1x128xf32>
      %c1_35 = arith.constant 1 : index
      %c0_36 = arith.constant 0 : index
      %38 = vector.load %arg7[%c1_35, %c0_36] : memref<2x128xf32, #tpu.memory_space<vmem>>, vector<1x128xf32>
      %cst_37 = arith.constant 3.125000e-02 : f32
      %39 = vector.broadcast %cst_37 : f32 to vector<1x128xf32>
      %40 = arith.mulf %38, %39 : vector<1x128xf32>
      %41 = arith.mulf %37, %37 : vector<1x128xf32>
      %42 = arith.subf %40, %41 : vector<1x128xf32>
      %c0_38 = arith.constant 0 : index
      %c0_39 = arith.constant 0 : index
      %43 = vector.load %arg6[%c0_38, %c0_39] : memref<2x128xf32, #tpu.memory_space<vmem>>, vector<1x128xf32>
      tpu.vector_store %arg6[%c0_38, %c0_39], %37 {strides = array<i32>} : memref<2x128xf32, #tpu.memory_space<vmem>>, vector<1x128xf32>,
      %c1_40 = arith.constant 1 : index
      %c0_41 = arith.constant 0 : index
      %44 = vector.load %arg6[%c1_40, %c0_41] : memref<2x128xf32, #tpu.memory_space<vmem>>, vector<1x128xf32>
      tpu.vector_store %arg6[%c1_40, %c0_41], %42 {strides = array<i32>} : memref<2x128xf32, #tpu.memory_space<vmem>>, vector<1x128xf32>,
    } else {
    }
    return
  }
  func.func @transform_0(%arg0: i32) -> (i32, i32, i32, i32) {
    %c0_i32 = arith.constant 0 : i32
    %c0_i32_0 = arith.constant 0 : i32
    %c0_i32_1 = arith.constant 0 : i32
    %c0_i32_2 = arith.constant 0 : i32
    return %arg0, %c0_i32, %c0_i32_0, %c0_i32_1 : i32, i32, i32, i32
  }
  func.func @transform_1(%arg0: i32) -> (i32, i32, i32, i32) {
    %c0_i32 = arith.constant 0 : i32
    %c0_i32_0 = arith.constant 0 : i32
    %c0_i32_1 = arith.constant 0 : i32
    %c0_i32_2 = arith.constant 0 : i32
    return %arg0, %c0_i32, %c0_i32_0, %c0_i32_1 : i32, i32, i32, i32
  }
  func.func @transform_2(%arg0: i32) -> (i32, i32, i32, i32) {
    %c0_i32 = arith.constant 0 : i32
    %c0_i32_0 = arith.constant 0 : i32
    %c0_i32_1 = arith.constant 0 : i32
    %c0_i32_2 = arith.constant 0 : i32
    return %arg0, %c0_i32, %c0_i32_0, %c0_i32_1 : i32, i32, i32, i32
  }
  func.func @transform_3(%arg0: i32) -> (i32, i32, i32, i32) {
    %c0_i32 = arith.constant 0 : i32
    %c0_i32_0 = arith.constant 0 : i32
    %c0_i32_1 = arith.constant 0 : i32
    %c0_i32_2 = arith.constant 0 : i32
    return %arg0, %c0_i32, %c0_i32_0, %c0_i32_1 : i32, i32, i32, i32
  }
  func.func @transform_4(%arg0: i32) -> (i32, i32, i32, i32) {
    %c0_i32 = arith.constant 0 : i32
    %c0_i32_0 = arith.constant 0 : i32
    %c0_i32_1 = arith.constant 0 : i32
    %c0_i32_2 = arith.constant 0 : i32
    return %arg0, %c0_i32, %c0_i32_0, %c0_i32_1 : i32, i32, i32, i32
  }
  func.func @transform_5(%arg0: i32) -> (i32, i32) {
    %c0_i32 = arith.constant 0 : i32
    %c0_i32_0 = arith.constant 0 : i32
    %c0_i32_1 = arith.constant 0 : i32
    return %c0_i32, %c0_i32_0 : i32, i32
  }
}

module attributes {stable_mosaic.version = 11 : i64} {
  func.func @kernel(%arg0: i32, %arg1: i32, %arg2: memref<2x128xf32, #tpu.memory_space<vmem>>, %arg3: memref<32x128xf32, #tpu.memory_space<vmem>>, %arg4: memref<128x128xbf16, #tpu.memory_space<vmem>>, %arg5: memref<32x128xf32, #tpu.memory_space<vmem>>, %arg6: memref<2x128xf32, #tpu.memory_space<vmem>>, %arg7: memref<32x128xf32, #tpu.memory_space<vmem>>, %arg8: memref<2x128xf32, #tpu.memory_space<vmem>>) attributes {dimension_semantics = [#tpu.dimension_semantics<arbitrary>, #tpu.dimension_semantics<arbitrary>], iteration_bounds = array<i64: 1, 1>, scalar_prefetch = 0 : i64, scratch_operands = 2 : i64, tpu.core_type = #tpu.core_type<tc>, window_params = [{transform_indices = @transform_0, window_bounds = array<i64: 2, 128>}, {transform_indices = @transform_1, window_bounds = array<i64: 32, 128>}, {transform_indices = @transform_2, window_bounds = array<i64: 128, 128>}, {transform_indices = @transform_3, window_bounds = array<i64: 32, 128>}, {pipeline_mode = #tpu.pipeline_mode<synchronous>, transform_indices = @transform_4, window_bounds = array<i64: 2, 128>}]} {
    %c0_i32 = arith.constant 0 : i32
    %0 = arith.cmpi eq, %arg1, %c0_i32 : i32
    %1 = arith.extui %0 : i1 to i32
    %c0_i32_0 = arith.constant 0 : i32
    %2 = arith.cmpi ne, %1, %c0_i32_0 : i32
    scf.if %2 {
      %cst_17 = arith.constant 0.000000e+00 : f32
      %26 = vector.broadcast %cst_17 : f32 to vector<32x128xf32>
      %c0_18 = arith.constant 0 : index
      %c0_19 = arith.constant 0 : index
      %27 = vector.load %arg7[%c0_18, %c0_19] : memref<32x128xf32, #tpu.memory_space<vmem>>, vector<32x128xf32>
      tpu.vector_store %arg7[%c0_18, %c0_19], %26 {strides = array<i32>} : memref<32x128xf32, #tpu.memory_space<vmem>>, vector<32x128xf32>,
    } else {
    }
    %c0_i32_1 = arith.constant 0 : i32
    %3 = arith.cmpi eq, %arg0, %c0_i32_1 : i32
    %c0_i32_2 = arith.constant 0 : i32
    %4 = arith.cmpi eq, %arg1, %c0_i32_2 : i32
    %5 = arith.andi %3, %4 : i1
    %6 = arith.extui %5 : i1 to i32
    %c0_i32_3 = arith.constant 0 : i32
    %7 = arith.cmpi ne, %6, %c0_i32_3 : i32
    scf.if %7 {
      %cst_17 = arith.constant 0.000000e+00 : f32
      %26 = vector.broadcast %cst_17 : f32 to vector<2x128xf32>
      %c0_18 = arith.constant 0 : index
      %c0_19 = arith.constant 0 : index
      %27 = vector.load %arg8[%c0_18, %c0_19] : memref<2x128xf32, #tpu.memory_space<vmem>>, vector<2x128xf32>
      tpu.vector_store %arg8[%c0_18, %c0_19], %26 {strides = array<i32>} : memref<2x128xf32, #tpu.memory_space<vmem>>, vector<2x128xf32>,
    } else {
    }
    %c0 = arith.constant 0 : index
    %c0_4 = arith.constant 0 : index
    %8 = vector.load %arg3[%c0, %c0_4] : memref<32x128xf32, #tpu.memory_space<vmem>>, vector<32x128xf32>
    %c0_5 = arith.constant 0 : index
    %c0_6 = arith.constant 0 : index
    %9 = vector.load %arg2[%c0_5, %c0_6] : memref<2x128xf32, #tpu.memory_space<vmem>>, vector<1x128xf32>
    %10 = vector.broadcast %9 : vector<1x128xf32> to vector<32x128xf32>
    %11 = arith.mulf %8, %10 : vector<32x128xf32>
    %c1 = arith.constant 1 : index
    %c0_7 = arith.constant 0 : index
    %12 = vector.load %arg2[%c1, %c0_7] : memref<2x128xf32, #tpu.memory_space<vmem>>, vector<1x128xf32>
    %13 = vector.broadcast %12 : vector<1x128xf32> to vector<32x128xf32>
    %14 = arith.addf %11, %13 : vector<32x128xf32>
    %cst = arith.constant 0.000000e+00 : f32
    %15 = vector.broadcast %cst : f32 to vector<32x128xf32>
    %16 = arith.maximumf %14, %15 : vector<32x128xf32>
    %c0_8 = arith.constant 0 : index
    %c0_9 = arith.constant 0 : index
    %17 = vector.load %arg7[%c0_8, %c0_9] : memref<32x128xf32, #tpu.memory_space<vmem>>, vector<32x128xf32>
    %18 = arith.truncf %16 : vector<32x128xf32> to vector<32x128xbf16>
    %c0_10 = arith.constant 0 : index
    %c0_11 = arith.constant 0 : index
    %19 = vector.load %arg4[%c0_10, %c0_11] : memref<128x128xbf16, #tpu.memory_space<vmem>>, vector<128x128xbf16>
    %cst_12 = arith.constant dense<0.000000e+00> : vector<32x128xf32>
    %20 = tpu.matmul %18, %19, %cst_12 {dimension_numbers = #tpu.dot_dimension_numbers<[1], [0], [0], [1], [0, 0, 1, 1], [], []>} : vector<32x128xbf16>, vector<128x128xbf16>, vector<32x128xf32> -> vector<32x128xf32>
    %21 = arith.addf %17, %20 : vector<32x128xf32>
    %c0_13 = arith.constant 0 : index
    %c0_14 = arith.constant 0 : index
    %22 = vector.load %arg7[%c0_13, %c0_14] : memref<32x128xf32, #tpu.memory_space<vmem>>, vector<32x128xf32>
    tpu.vector_store %arg7[%c0_13, %c0_14], %21 {strides = array<i32>} : memref<32x128xf32, #tpu.memory_space<vmem>>, vector<32x128xf32>,
    %c0_i32_15 = arith.constant 0 : i32
    %23 = arith.cmpi eq, %arg1, %c0_i32_15 : i32
    %24 = arith.extui %23 : i1 to i32
    %c0_i32_16 = arith.constant 0 : i32
    %25 = arith.cmpi ne, %24, %c0_i32_16 : i32
    scf.if %25 {
      %c0_17 = arith.constant 0 : index
      %c0_18 = arith.constant 0 : index
      %26 = vector.load %arg7[%c0_17, %c0_18] : memref<32x128xf32, #tpu.memory_space<vmem>>, vector<32x128xf32>
      %c0_19 = arith.constant 0 : index
      %c0_20 = arith.constant 0 : index
      %27 = vector.load %arg5[%c0_19, %c0_20] : memref<32x128xf32, #tpu.memory_space<vmem>>, vector<32x128xf32>
      tpu.vector_store %arg5[%c0_19, %c0_20], %26 {strides = array<i32>} : memref<32x128xf32, #tpu.memory_space<vmem>>, vector<32x128xf32>,
      %c0_21 = arith.constant 0 : index
      %c0_22 = arith.constant 0 : index
      %28 = vector.load %arg8[%c0_21, %c0_22] : memref<2x128xf32, #tpu.memory_space<vmem>>, vector<1x128xf32>
      %cst_23 = arith.constant dense<0.000000e+00> : vector<128xf32>
      %29 = vector.multi_reduction <add>, %26, %cst_23 [0] : vector<32x128xf32> to vector<128xf32>
      %30 = vector.shape_cast %29 : vector<128xf32> to vector<1x128xf32>
      %31 = arith.addf %28, %30 : vector<1x128xf32>
      %c0_24 = arith.constant 0 : index
      %c0_25 = arith.constant 0 : index
      %32 = vector.load %arg8[%c0_24, %c0_25] : memref<2x128xf32, #tpu.memory_space<vmem>>, vector<1x128xf32>
      tpu.vector_store %arg8[%c0_24, %c0_25], %31 {strides = array<i32>} : memref<2x128xf32, #tpu.memory_space<vmem>>, vector<1x128xf32>,
      %c1_26 = arith.constant 1 : index
      %c0_27 = arith.constant 0 : index
      %33 = vector.load %arg8[%c1_26, %c0_27] : memref<2x128xf32, #tpu.memory_space<vmem>>, vector<1x128xf32>
      %34 = arith.mulf %26, %26 : vector<32x128xf32>
      %cst_28 = arith.constant dense<0.000000e+00> : vector<128xf32>
      %35 = vector.multi_reduction <add>, %34, %cst_28 [0] : vector<32x128xf32> to vector<128xf32>
      %36 = vector.shape_cast %35 : vector<128xf32> to vector<1x128xf32>
      %37 = arith.addf %33, %36 : vector<1x128xf32>
      %c1_29 = arith.constant 1 : index
      %c0_30 = arith.constant 0 : index
      %38 = vector.load %arg8[%c1_29, %c0_30] : memref<2x128xf32, #tpu.memory_space<vmem>>, vector<1x128xf32>
      tpu.vector_store %arg8[%c1_29, %c0_30], %37 {strides = array<i32>} : memref<2x128xf32, #tpu.memory_space<vmem>>, vector<1x128xf32>,
      %c0_i32_31 = arith.constant 0 : i32
      %39 = arith.cmpi eq, %arg0, %c0_i32_31 : i32
      %40 = arith.extui %39 : i1 to i32
      %c0_i32_32 = arith.constant 0 : i32
      %41 = arith.cmpi ne, %40, %c0_i32_32 : i32
      scf.if %41 {
        %c0_33 = arith.constant 0 : index
        %c0_34 = arith.constant 0 : index
        %42 = vector.load %arg8[%c0_33, %c0_34] : memref<2x128xf32, #tpu.memory_space<vmem>>, vector<1x128xf32>
        %cst_35 = arith.constant 3.125000e-02 : f32
        %43 = vector.broadcast %cst_35 : f32 to vector<1x128xf32>
        %44 = arith.mulf %42, %43 : vector<1x128xf32>
        %c1_36 = arith.constant 1 : index
        %c0_37 = arith.constant 0 : index
        %45 = vector.load %arg8[%c1_36, %c0_37] : memref<2x128xf32, #tpu.memory_space<vmem>>, vector<1x128xf32>
        %cst_38 = arith.constant 3.125000e-02 : f32
        %46 = vector.broadcast %cst_38 : f32 to vector<1x128xf32>
        %47 = arith.mulf %45, %46 : vector<1x128xf32>
        %48 = arith.mulf %44, %44 : vector<1x128xf32>
        %49 = arith.subf %47, %48 : vector<1x128xf32>
        %c0_39 = arith.constant 0 : index
        %c0_40 = arith.constant 0 : index
        %50 = vector.load %arg6[%c0_39, %c0_40] : memref<2x128xf32, #tpu.memory_space<vmem>>, vector<1x128xf32>
        tpu.vector_store %arg6[%c0_39, %c0_40], %44 {strides = array<i32>} : memref<2x128xf32, #tpu.memory_space<vmem>>, vector<1x128xf32>,
        %c1_41 = arith.constant 1 : index
        %c0_42 = arith.constant 0 : index
        %51 = vector.load %arg6[%c1_41, %c0_42] : memref<2x128xf32, #tpu.memory_space<vmem>>, vector<1x128xf32>
        tpu.vector_store %arg6[%c1_41, %c0_42], %49 {strides = array<i32>} : memref<2x128xf32, #tpu.memory_space<vmem>>, vector<1x128xf32>,
      } else {
      }
    } else {
    }
    return
  }
  func.func @transform_0(%arg0: i32, %arg1: i32) -> (i32, i32) {
    %c0_i32 = arith.constant 0 : i32
    %c0_i32_0 = arith.constant 0 : i32
    return %c0_i32, %arg1 : i32, i32
  }
  func.func @transform_1(%arg0: i32, %arg1: i32) -> (i32, i32) {
    %c0_i32 = arith.constant 0 : i32
    return %arg0, %arg1 : i32, i32
  }
  func.func @transform_2(%arg0: i32, %arg1: i32) -> (i32, i32) {
    %c0_i32 = arith.constant 0 : i32
    %c0_i32_0 = arith.constant 0 : i32
    return %arg1, %c0_i32 : i32, i32
  }
  func.func @transform_3(%arg0: i32, %arg1: i32) -> (i32, i32) {
    %c0_i32 = arith.constant 0 : i32
    %c0_i32_0 = arith.constant 0 : i32
    return %arg0, %c0_i32 : i32, i32
  }
  func.func @transform_4(%arg0: i32, %arg1: i32) -> (i32, i32) {
    %c0_i32 = arith.constant 0 : i32
    %c0_i32_0 = arith.constant 0 : i32
    %c0_i32_1 = arith.constant 0 : i32
    return %c0_i32, %c0_i32_0 : i32, i32
  }
}

module attributes {stable_mosaic.version = 11 : i64} {
  func.func @kernel(%arg0: i32, %arg1: i32, %arg2: memref<2x128xf32, #tpu.memory_space<vmem>>, %arg3: memref<1x1x6x128xf32, #tpu.memory_space<vmem>>, %arg4: memref<1x1x6x128xf32, #tpu.memory_space<vmem>>, %arg5: memref<1x1x6x128xf32, #tpu.memory_space<vmem>>, %arg6: memref<3x384x128xbf16, #tpu.memory_space<vmem>>, %arg7: memref<1x1x4x128xf32, #tpu.memory_space<vmem>>, %arg8: memref<1x1x4x128xf32, #tpu.memory_space<vmem>>, %arg9: memref<2x128xf32, #tpu.memory_space<vmem>>, %arg10: memref<2x128xf32, #tpu.memory_space<vmem>>) attributes {dimension_semantics = [#tpu.dimension_semantics<arbitrary>, #tpu.dimension_semantics<arbitrary>], iteration_bounds = array<i64: 2, 4>, scalar_prefetch = 0 : i64, scratch_operands = 1 : i64, tpu.core_type = #tpu.core_type<tc>, window_params = [{pipeline_mode = #tpu.pipeline_mode<synchronous>, transform_indices = @transform_0, window_bounds = array<i64: 2, 128>}, {transform_indices = @transform_1, window_bounds = array<i64: 1, 1, 6, 128>}, {transform_indices = @transform_2, window_bounds = array<i64: 1, 1, 6, 128>}, {transform_indices = @transform_3, window_bounds = array<i64: 1, 1, 6, 128>}, {pipeline_mode = #tpu.pipeline_mode<synchronous>, transform_indices = @transform_4, window_bounds = array<i64: 3, 384, 128>}, {transform_indices = @transform_5, window_bounds = array<i64: 1, 1, 4, 128>}, {transform_indices = @transform_6, window_bounds = array<i64: 1, 1, 4, 128>}, {pipeline_mode = #tpu.pipeline_mode<synchronous>, transform_indices = @transform_7, window_bounds = array<i64: 2, 128>}]} {
    %c0_i32 = arith.constant 0 : i32
    %0 = arith.cmpi eq, %arg0, %c0_i32 : i32
    %c0_i32_0 = arith.constant 0 : i32
    %1 = arith.cmpi eq, %arg1, %c0_i32_0 : i32
    %2 = arith.andi %0, %1 : i1
    %3 = arith.extui %2 : i1 to i32
    %c0_i32_1 = arith.constant 0 : i32
    %4 = arith.cmpi ne, %3, %c0_i32_1 : i32
    scf.if %4 {
      %cst_70 = arith.constant 0.000000e+00 : f32
      %100 = vector.broadcast %cst_70 : f32 to vector<2x128xf32>
      %c0_71 = arith.constant 0 : index
      %c0_72 = arith.constant 0 : index
      %101 = vector.load %arg10[%c0_71, %c0_72] : memref<2x128xf32, #tpu.memory_space<vmem>>, vector<2x128xf32>
      tpu.vector_store %arg10[%c0_71, %c0_72], %100 {strides = array<i32>} : memref<2x128xf32, #tpu.memory_space<vmem>>, vector<2x128xf32>,
    } else {
    }
    %c0 = arith.constant 0 : index
    %c0_2 = arith.constant 0 : index
    %5 = vector.load %arg2[%c0, %c0_2] : memref<2x128xf32, #tpu.memory_space<vmem>>, vector<1x128xf32>
    %c1 = arith.constant 1 : index
    %c0_3 = arith.constant 0 : index
    %6 = vector.load %arg2[%c1, %c0_3] : memref<2x128xf32, #tpu.memory_space<vmem>>, vector<1x128xf32>
    %c0_4 = arith.constant 0 : index
    %c0_5 = arith.constant 0 : index
    %c0_6 = arith.constant 0 : index
    %c0_7 = arith.constant 0 : index
    %7 = vector.load %arg7[%c0_4, %c0_5, %c0_6, %c0_7] : memref<1x1x4x128xf32, #tpu.memory_space<vmem>>, vector<1x1x4x128xf32>
    %8 = vector.shape_cast %7 : vector<1x1x4x128xf32> to vector<4x128xf32>
    %c0_8 = arith.constant 0 : index
    %c0_9 = arith.constant 0 : index
    %c0_10 = arith.constant 0 : index
    %c0_11 = arith.constant 0 : index
    %9 = vector.load %arg3[%c0_8, %c0_9, %c0_10, %c0_11] : memref<1x1x6x128xf32, #tpu.memory_space<vmem>>, vector<1x1x6x128xf32>
    %10 = vector.shape_cast %9 : vector<1x1x6x128xf32> to vector<6x128xf32>
    %11 = vector.broadcast %5 : vector<1x128xf32> to vector<6x128xf32>
    %12 = arith.mulf %10, %11 : vector<6x128xf32>
    %13 = vector.broadcast %6 : vector<1x128xf32> to vector<6x128xf32>
    %14 = arith.addf %12, %13 : vector<6x128xf32>
    %cst = arith.constant 0.000000e+00 : f32
    %15 = vector.broadcast %cst : f32 to vector<6x128xf32>
    %16 = arith.maximumf %14, %15 : vector<6x128xf32>
    %17 = arith.truncf %16 : vector<6x128xf32> to vector<6x128xbf16>
    %18 = vector.extract_strided_slice %17 {offsets = [0, 0], sizes = [4, 128], strides = [1, 1]} : vector<6x128xbf16> to vector<4x128xbf16>
    %c0_12 = arith.constant 0 : index
    %c0_13 = arith.constant 0 : index
    %c0_14 = arith.constant 0 : index
    %19 = vector.load %arg6[%c0_12, %c0_13, %c0_14] : memref<3x384x128xbf16, #tpu.memory_space<vmem>>, vector<1x128x128xbf16>
    %20 = vector.shape_cast %19 : vector<1x128x128xbf16> to vector<128x128xbf16>
    %cst_15 = arith.constant dense<0.000000e+00> : vector<4x128xf32>
    %21 = tpu.matmul %18, %20, %cst_15 {dimension_numbers = #tpu.dot_dimension_numbers<[1], [0], [0], [1], [0, 0, 1, 1], [], []>} : vector<4x128xbf16>, vector<128x128xbf16>, vector<4x128xf32> -> vector<4x128xf32>
    %22 = arith.addf %8, %21 : vector<4x128xf32>
    %23 = vector.extract_strided_slice %17 {offsets = [1, 0], sizes = [4, 128], strides = [1, 1]} : vector<6x128xbf16> to vector<4x128xbf16>
    %c0_16 = arith.constant 0 : index
    %c128 = arith.constant 128 : index
    %c0_17 = arith.constant 0 : index
    %24 = vector.load %arg6[%c0_16, %c128, %c0_17] : memref<3x384x128xbf16, #tpu.memory_space<vmem>>, vector<1x128x128xbf16>
    %25 = vector.shape_cast %24 : vector<1x128x128xbf16> to vector<128x128xbf16>
    %cst_18 = arith.constant dense<0.000000e+00> : vector<4x128xf32>
    %26 = tpu.matmul %23, %25, %cst_18 {dimension_numbers = #tpu.dot_dimension_numbers<[1], [0], [0], [1], [0, 0, 1, 1], [], []>} : vector<4x128xbf16>, vector<128x128xbf16>, vector<4x128xf32> -> vector<4x128xf32>
    %27 = arith.addf %22, %26 : vector<4x128xf32>
    %28 = vector.extract_strided_slice %17 {offsets = [2, 0], sizes = [4, 128], strides = [1, 1]} : vector<6x128xbf16> to vector<4x128xbf16>
    %c0_19 = arith.constant 0 : index
    %c256 = arith.constant 256 : index
    %c0_20 = arith.constant 0 : index
    %29 = vector.load %arg6[%c0_19, %c256, %c0_20] : memref<3x384x128xbf16, #tpu.memory_space<vmem>>, vector<1x128x128xbf16>
    %30 = vector.shape_cast %29 : vector<1x128x128xbf16> to vector<128x128xbf16>
    %cst_21 = arith.constant dense<0.000000e+00> : vector<4x128xf32>
    %31 = tpu.matmul %28, %30, %cst_21 {dimension_numbers = #tpu.dot_dimension_numbers<[1], [0], [0], [1], [0, 0, 1, 1], [], []>} : vector<4x128xbf16>, vector<128x128xbf16>, vector<4x128xf32> -> vector<4x128xf32>
    %32 = arith.addf %27, %31 : vector<4x128xf32>
    %c0_22 = arith.constant 0 : index
    %c0_23 = arith.constant 0 : index
    %c0_24 = arith.constant 0 : index
    %c0_25 = arith.constant 0 : index
    %33 = vector.load %arg4[%c0_22, %c0_23, %c0_24, %c0_25] : memref<1x1x6x128xf32, #tpu.memory_space<vmem>>, vector<1x1x6x128xf32>
    %34 = vector.shape_cast %33 : vector<1x1x6x128xf32> to vector<6x128xf32>
    %35 = vector.broadcast %5 : vector<1x128xf32> to vector<6x128xf32>
    %36 = arith.mulf %34, %35 : vector<6x128xf32>
    %37 = vector.broadcast %6 : vector<1x128xf32> to vector<6x128xf32>
    %38 = arith.addf %36, %37 : vector<6x128xf32>
    %cst_26 = arith.constant 0.000000e+00 : f32
    %39 = vector.broadcast %cst_26 : f32 to vector<6x128xf32>
    %40 = arith.maximumf %38, %39 : vector<6x128xf32>
    %41 = arith.truncf %40 : vector<6x128xf32> to vector<6x128xbf16>
    %42 = vector.extract_strided_slice %41 {offsets = [0, 0], sizes = [4, 128], strides = [1, 1]} : vector<6x128xbf16> to vector<4x128xbf16>
    %c1_27 = arith.constant 1 : index
    %c0_28 = arith.constant 0 : index
    %c0_29 = arith.constant 0 : index
    %43 = vector.load %arg6[%c1_27, %c0_28, %c0_29] : memref<3x384x128xbf16, #tpu.memory_space<vmem>>, vector<1x128x128xbf16>
    %44 = vector.shape_cast %43 : vector<1x128x128xbf16> to vector<128x128xbf16>
    %cst_30 = arith.constant dense<0.000000e+00> : vector<4x128xf32>
    %45 = tpu.matmul %42, %44, %cst_30 {dimension_numbers = #tpu.dot_dimension_numbers<[1], [0], [0], [1], [0, 0, 1, 1], [], []>} : vector<4x128xbf16>, vector<128x128xbf16>, vector<4x128xf32> -> vector<4x128xf32>
    %46 = arith.addf %32, %45 : vector<4x128xf32>
    %47 = vector.extract_strided_slice %41 {offsets = [1, 0], sizes = [4, 128], strides = [1, 1]} : vector<6x128xbf16> to vector<4x128xbf16>
    %c1_31 = arith.constant 1 : index
    %c128_32 = arith.constant 128 : index
    %c0_33 = arith.constant 0 : index
    %48 = vector.load %arg6[%c1_31, %c128_32, %c0_33] : memref<3x384x128xbf16, #tpu.memory_space<vmem>>, vector<1x128x128xbf16>
    %49 = vector.shape_cast %48 : vector<1x128x128xbf16> to vector<128x128xbf16>
    %cst_34 = arith.constant dense<0.000000e+00> : vector<4x128xf32>
    %50 = tpu.matmul %47, %49, %cst_34 {dimension_numbers = #tpu.dot_dimension_numbers<[1], [0], [0], [1], [0, 0, 1, 1], [], []>} : vector<4x128xbf16>, vector<128x128xbf16>, vector<4x128xf32> -> vector<4x128xf32>
    %51 = arith.addf %46, %50 : vector<4x128xf32>
    %52 = vector.extract_strided_slice %41 {offsets = [2, 0], sizes = [4, 128], strides = [1, 1]} : vector<6x128xbf16> to vector<4x128xbf16>
    %c1_35 = arith.constant 1 : index
    %c256_36 = arith.constant 256 : index
    %c0_37 = arith.constant 0 : index
    %53 = vector.load %arg6[%c1_35, %c256_36, %c0_37] : memref<3x384x128xbf16, #tpu.memory_space<vmem>>, vector<1x128x128xbf16>
    %54 = vector.shape_cast %53 : vector<1x128x128xbf16> to vector<128x128xbf16>
    %cst_38 = arith.constant dense<0.000000e+00> : vector<4x128xf32>
    %55 = tpu.matmul %52, %54, %cst_38 {dimension_numbers = #tpu.dot_dimension_numbers<[1], [0], [0], [1], [0, 0, 1, 1], [], []>} : vector<4x128xbf16>, vector<128x128xbf16>, vector<4x128xf32> -> vector<4x128xf32>
    %56 = arith.addf %51, %55 : vector<4x128xf32>
    %c0_39 = arith.constant 0 : index
    %c0_40 = arith.constant 0 : index
    %c0_41 = arith.constant 0 : index
    %c0_42 = arith.constant 0 : index
    %57 = vector.load %arg5[%c0_39, %c0_40, %c0_41, %c0_42] : memref<1x1x6x128xf32, #tpu.memory_space<vmem>>, vector<1x1x6x128xf32>
    %58 = vector.shape_cast %57 : vector<1x1x6x128xf32> to vector<6x128xf32>
    %59 = vector.broadcast %5 : vector<1x128xf32> to vector<6x128xf32>
    %60 = arith.mulf %58, %59 : vector<6x128xf32>
    %61 = vector.broadcast %6 : vector<1x128xf32> to vector<6x128xf32>
    %62 = arith.addf %60, %61 : vector<6x128xf32>
    %cst_43 = arith.constant 0.000000e+00 : f32
    %63 = vector.broadcast %cst_43 : f32 to vector<6x128xf32>
    %64 = arith.maximumf %62, %63 : vector<6x128xf32>
    %65 = arith.truncf %64 : vector<6x128xf32> to vector<6x128xbf16>
    %66 = vector.extract_strided_slice %65 {offsets = [0, 0], sizes = [4, 128], strides = [1, 1]} : vector<6x128xbf16> to vector<4x128xbf16>
    %c2 = arith.constant 2 : index
    %c0_44 = arith.constant 0 : index
    %c0_45 = arith.constant 0 : index
    %67 = vector.load %arg6[%c2, %c0_44, %c0_45] : memref<3x384x128xbf16, #tpu.memory_space<vmem>>, vector<1x128x128xbf16>
    %68 = vector.shape_cast %67 : vector<1x128x128xbf16> to vector<128x128xbf16>
    %cst_46 = arith.constant dense<0.000000e+00> : vector<4x128xf32>
    %69 = tpu.matmul %66, %68, %cst_46 {dimension_numbers = #tpu.dot_dimension_numbers<[1], [0], [0], [1], [0, 0, 1, 1], [], []>} : vector<4x128xbf16>, vector<128x128xbf16>, vector<4x128xf32> -> vector<4x128xf32>
    %70 = arith.addf %56, %69 : vector<4x128xf32>
    %71 = vector.extract_strided_slice %65 {offsets = [1, 0], sizes = [4, 128], strides = [1, 1]} : vector<6x128xbf16> to vector<4x128xbf16>
    %c2_47 = arith.constant 2 : index
    %c128_48 = arith.constant 128 : index
    %c0_49 = arith.constant 0 : index
    %72 = vector.load %arg6[%c2_47, %c128_48, %c0_49] : memref<3x384x128xbf16, #tpu.memory_space<vmem>>, vector<1x128x128xbf16>
    %73 = vector.shape_cast %72 : vector<1x128x128xbf16> to vector<128x128xbf16>
    %cst_50 = arith.constant dense<0.000000e+00> : vector<4x128xf32>
    %74 = tpu.matmul %71, %73, %cst_50 {dimension_numbers = #tpu.dot_dimension_numbers<[1], [0], [0], [1], [0, 0, 1, 1], [], []>} : vector<4x128xbf16>, vector<128x128xbf16>, vector<4x128xf32> -> vector<4x128xf32>
    %75 = arith.addf %70, %74 : vector<4x128xf32>
    %76 = vector.extract_strided_slice %65 {offsets = [2, 0], sizes = [4, 128], strides = [1, 1]} : vector<6x128xbf16> to vector<4x128xbf16>
    %c2_51 = arith.constant 2 : index
    %c256_52 = arith.constant 256 : index
    %c0_53 = arith.constant 0 : index
    %77 = vector.load %arg6[%c2_51, %c256_52, %c0_53] : memref<3x384x128xbf16, #tpu.memory_space<vmem>>, vector<1x128x128xbf16>
    %78 = vector.shape_cast %77 : vector<1x128x128xbf16> to vector<128x128xbf16>
    %cst_54 = arith.constant dense<0.000000e+00> : vector<4x128xf32>
    %79 = tpu.matmul %76, %78, %cst_54 {dimension_numbers = #tpu.dot_dimension_numbers<[1], [0], [0], [1], [0, 0, 1, 1], [], []>} : vector<4x128xbf16>, vector<128x128xbf16>, vector<4x128xf32> -> vector<4x128xf32>
    %80 = arith.addf %75, %79 : vector<4x128xf32>
    %c0_55 = arith.constant 0 : index
    %c0_56 = arith.constant 0 : index
    %c0_57 = arith.constant 0 : index
    %c0_58 = arith.constant 0 : index
    %81 = vector.load %arg8[%c0_55, %c0_56, %c0_57, %c0_58] : memref<1x1x4x128xf32, #tpu.memory_space<vmem>>, vector<1x1x4x128xf32>
    %82 = vector.shape_cast %81 : vector<1x1x4x128xf32> to vector<4x128xf32>
    %83 = vector.shape_cast %80 : vector<4x128xf32> to vector<1x1x4x128xf32>
    tpu.vector_store %arg8[%c0_55, %c0_56, %c0_57, %c0_58], %83 {strides = array<i32>} : memref<1x1x4x128xf32, #tpu.memory_space<vmem>>, vector<1x1x4x128xf32>,
    %c0_59 = arith.constant 0 : index
    %c0_60 = arith.constant 0 : index
    %84 = vector.load %arg10[%c0_59, %c0_60] : memref<2x128xf32, #tpu.memory_space<vmem>>, vector<1x128xf32>
    %cst_61 = arith.constant dense<0.000000e+00> : vector<128xf32>
    %85 = vector.multi_reduction <add>, %80, %cst_61 [0] : vector<4x128xf32> to vector<128xf32>
    %86 = vector.shape_cast %85 : vector<128xf32> to vector<1x128xf32>
    %87 = arith.addf %84, %86 : vector<1x128xf32>
    %c0_62 = arith.constant 0 : index
    %c0_63 = arith.constant 0 : index
    %88 = vector.load %arg10[%c0_62, %c0_63] : memref<2x128xf32, #tpu.memory_space<vmem>>, vector<1x128xf32>
    tpu.vector_store %arg10[%c0_62, %c0_63], %87 {strides = array<i32>} : memref<2x128xf32, #tpu.memory_space<vmem>>, vector<1x128xf32>,
    %c1_64 = arith.constant 1 : index
    %c0_65 = arith.constant 0 : index
    %89 = vector.load %arg10[%c1_64, %c0_65] : memref<2x128xf32, #tpu.memory_space<vmem>>, vector<1x128xf32>
    %90 = arith.mulf %80, %80 : vector<4x128xf32>
    %cst_66 = arith.constant dense<0.000000e+00> : vector<128xf32>
    %91 = vector.multi_reduction <add>, %90, %cst_66 [0] : vector<4x128xf32> to vector<128xf32>
    %92 = vector.shape_cast %91 : vector<128xf32> to vector<1x128xf32>
    %93 = arith.addf %89, %92 : vector<1x128xf32>
    %c1_67 = arith.constant 1 : index
    %c0_68 = arith.constant 0 : index
    %94 = vector.load %arg10[%c1_67, %c0_68] : memref<2x128xf32, #tpu.memory_space<vmem>>, vector<1x128xf32>
    tpu.vector_store %arg10[%c1_67, %c0_68], %93 {strides = array<i32>} : memref<2x128xf32, #tpu.memory_space<vmem>>, vector<1x128xf32>,
    %c1_i32 = arith.constant 1 : i32
    %95 = arith.cmpi eq, %arg0, %c1_i32 : i32
    %c3_i32 = arith.constant 3 : i32
    %96 = arith.cmpi eq, %arg1, %c3_i32 : i32
    %97 = arith.andi %95, %96 : i1
    %98 = arith.extui %97 : i1 to i32
    %c0_i32_69 = arith.constant 0 : i32
    %99 = arith.cmpi ne, %98, %c0_i32_69 : i32
    scf.if %99 {
      %c0_70 = arith.constant 0 : index
      %c0_71 = arith.constant 0 : index
      %100 = vector.load %arg10[%c0_70, %c0_71] : memref<2x128xf32, #tpu.memory_space<vmem>>, vector<1x128xf32>
      %cst_72 = arith.constant 3.125000e-02 : f32
      %101 = vector.broadcast %cst_72 : f32 to vector<1x128xf32>
      %102 = arith.mulf %100, %101 : vector<1x128xf32>
      %c1_73 = arith.constant 1 : index
      %c0_74 = arith.constant 0 : index
      %103 = vector.load %arg10[%c1_73, %c0_74] : memref<2x128xf32, #tpu.memory_space<vmem>>, vector<1x128xf32>
      %cst_75 = arith.constant 3.125000e-02 : f32
      %104 = vector.broadcast %cst_75 : f32 to vector<1x128xf32>
      %105 = arith.mulf %103, %104 : vector<1x128xf32>
      %106 = arith.mulf %102, %102 : vector<1x128xf32>
      %107 = arith.subf %105, %106 : vector<1x128xf32>
      %c0_76 = arith.constant 0 : index
      %c0_77 = arith.constant 0 : index
      %108 = vector.load %arg9[%c0_76, %c0_77] : memref<2x128xf32, #tpu.memory_space<vmem>>, vector<1x128xf32>
      tpu.vector_store %arg9[%c0_76, %c0_77], %102 {strides = array<i32>} : memref<2x128xf32, #tpu.memory_space<vmem>>, vector<1x128xf32>,
      %c1_78 = arith.constant 1 : index
      %c0_79 = arith.constant 0 : index
      %109 = vector.load %arg9[%c1_78, %c0_79] : memref<2x128xf32, #tpu.memory_space<vmem>>, vector<1x128xf32>
      tpu.vector_store %arg9[%c1_78, %c0_79], %107 {strides = array<i32>} : memref<2x128xf32, #tpu.memory_space<vmem>>, vector<1x128xf32>,
    } else {
    }
    return
  }
  func.func @transform_0(%arg0: i32, %arg1: i32) -> (i32, i32) {
    %c0_i32 = arith.constant 0 : i32
    %c0_i32_0 = arith.constant 0 : i32
    %c0_i32_1 = arith.constant 0 : i32
    return %c0_i32, %c0_i32_0 : i32, i32
  }
  func.func @transform_1(%arg0: i32, %arg1: i32) -> (i32, i32, i32, i32) {
    %c0_i32 = arith.constant 0 : i32
    %0 = arith.addi %arg1, %c0_i32 : i32
    %c0_i32_0 = arith.constant 0 : i32
    %c0_i32_1 = arith.constant 0 : i32
    %c0_i32_2 = arith.constant 0 : i32
    return %arg0, %0, %c0_i32_0, %c0_i32_1 : i32, i32, i32, i32
  }
  func.func @transform_2(%arg0: i32, %arg1: i32) -> (i32, i32, i32, i32) {
    %c1_i32 = arith.constant 1 : i32
    %0 = arith.addi %arg1, %c1_i32 : i32
    %c0_i32 = arith.constant 0 : i32
    %c0_i32_0 = arith.constant 0 : i32
    %c0_i32_1 = arith.constant 0 : i32
    return %arg0, %0, %c0_i32, %c0_i32_0 : i32, i32, i32, i32
  }
  func.func @transform_3(%arg0: i32, %arg1: i32) -> (i32, i32, i32, i32) {
    %c2_i32 = arith.constant 2 : i32
    %0 = arith.addi %arg1, %c2_i32 : i32
    %c0_i32 = arith.constant 0 : i32
    %c0_i32_0 = arith.constant 0 : i32
    %c0_i32_1 = arith.constant 0 : i32
    return %arg0, %0, %c0_i32, %c0_i32_0 : i32, i32, i32, i32
  }
  func.func @transform_4(%arg0: i32, %arg1: i32) -> (i32, i32, i32) {
    %c0_i32 = arith.constant 0 : i32
    %c0_i32_0 = arith.constant 0 : i32
    %c0_i32_1 = arith.constant 0 : i32
    %c0_i32_2 = arith.constant 0 : i32
    return %c0_i32, %c0_i32_0, %c0_i32_1 : i32, i32, i32
  }
  func.func @transform_5(%arg0: i32, %arg1: i32) -> (i32, i32, i32, i32) {
    %c0_i32 = arith.constant 0 : i32
    %c0_i32_0 = arith.constant 0 : i32
    %c0_i32_1 = arith.constant 0 : i32
    return %arg0, %arg1, %c0_i32, %c0_i32_0 : i32, i32, i32, i32
  }
  func.func @transform_6(%arg0: i32, %arg1: i32) -> (i32, i32, i32, i32) {
    %c0_i32 = arith.constant 0 : i32
    %c0_i32_0 = arith.constant 0 : i32
    %c0_i32_1 = arith.constant 0 : i32
    return %arg0, %arg1, %c0_i32, %c0_i32_0 : i32, i32, i32, i32
  }
  func.func @transform_7(%arg0: i32, %arg1: i32) -> (i32, i32) {
    %c0_i32 = arith.constant 0 : i32
    %c0_i32_0 = arith.constant 0 : i32
    %c0_i32_1 = arith.constant 0 : i32
    return %c0_i32, %c0_i32_0 : i32, i32
  }
}

module attributes {stable_mosaic.version = 11 : i64} {
  func.func @kernel(%arg0: memref<2x16x128xf32, #tpu.memory_space<vmem>>, %arg1: memref<2x128xf32, #tpu.memory_space<vmem>>, %arg2: memref<128x128xbf16, #tpu.memory_space<vmem>>, %arg3: memref<1x128xf32, #tpu.memory_space<vmem>>, %arg4: memref<2x128xf32, #tpu.memory_space<vmem>>) attributes {dimension_semantics = [], scalar_prefetch = 0 : i64, scratch_operands = 0 : i64, tpu.core_type = #tpu.core_type<tc>} {
    %c0 = arith.constant 0 : index
    %c0_0 = arith.constant 0 : index
    %c0_1 = arith.constant 0 : index
    %0 = vector.load %arg0[%c0, %c0_0, %c0_1] : memref<2x16x128xf32, #tpu.memory_space<vmem>>, vector<2x16x128xf32>
    %c0_2 = arith.constant 0 : index
    %c0_3 = arith.constant 0 : index
    %1 = vector.load %arg1[%c0_2, %c0_3] : memref<2x128xf32, #tpu.memory_space<vmem>>, vector<1x128xf32>
    %2 = vector.shape_cast %1 : vector<1x128xf32> to vector<1x1x128xf32>
    %3 = vector.broadcast %2 : vector<1x1x128xf32> to vector<2x16x128xf32>
    %4 = arith.mulf %0, %3 : vector<2x16x128xf32>
    %c1 = arith.constant 1 : index
    %c0_4 = arith.constant 0 : index
    %5 = vector.load %arg1[%c1, %c0_4] : memref<2x128xf32, #tpu.memory_space<vmem>>, vector<1x128xf32>
    %6 = vector.shape_cast %5 : vector<1x128xf32> to vector<1x1x128xf32>
    %7 = vector.broadcast %6 : vector<1x1x128xf32> to vector<2x16x128xf32>
    %8 = arith.addf %4, %7 : vector<2x16x128xf32>
    %cst = arith.constant 0.000000e+00 : f32
    %9 = vector.broadcast %cst : f32 to vector<2x16x128xf32>
    %10 = arith.maximumf %8, %9 : vector<2x16x128xf32>
    %cst_5 = arith.constant dense<0.000000e+00> : vector<2x128xf32>
    %11 = vector.multi_reduction <add>, %10, %cst_5 [1] : vector<2x16x128xf32> to vector<2x128xf32>
    %cst_6 = arith.constant 6.250000e-02 : f32
    %12 = vector.broadcast %cst_6 : f32 to vector<2x128xf32>
    %13 = arith.mulf %11, %12 : vector<2x128xf32>
    %14 = arith.truncf %13 : vector<2x128xf32> to vector<2x128xbf16>
    %c0_7 = arith.constant 0 : index
    %c0_8 = arith.constant 0 : index
    %15 = vector.load %arg2[%c0_7, %c0_8] : memref<128x128xbf16, #tpu.memory_space<vmem>>, vector<128x128xbf16>
    %cst_9 = arith.constant dense<0.000000e+00> : vector<2x128xf32>
    %16 = tpu.matmul %14, %15, %cst_9 {dimension_numbers = #tpu.dot_dimension_numbers<[1], [0], [0], [1], [0, 0, 1, 1], [], []>} : vector<2x128xbf16>, vector<128x128xbf16>, vector<2x128xf32> -> vector<2x128xf32>
    %c0_10 = arith.constant 0 : index
    %c0_11 = arith.constant 0 : index
    %17 = vector.load %arg3[%c0_10, %c0_11] : memref<1x128xf32, #tpu.memory_space<vmem>>, vector<1x128xf32>
    %18 = vector.broadcast %17 : vector<1x128xf32> to vector<2x128xf32>
    %19 = arith.addf %16, %18 : vector<2x128xf32>
    %c0_12 = arith.constant 0 : index
    %c0_13 = arith.constant 0 : index
    %20 = vector.load %arg4[%c0_12, %c0_13] : memref<2x128xf32, #tpu.memory_space<vmem>>, vector<2x128xf32>
    tpu.vector_store %arg4[%c0_12, %c0_13], %19 {strides = array<i32>} : memref<2x128xf32, #tpu.memory_space<vmem>>, vector<2x128xf32>,
    return
  }
}

</mosaic_0001>

<llo_original>
// kernel: forward.13
$region0: #{forward.13}
  #allocation0 [shape = 'u32[]', space=smem, size = 0x4, offset = 0x4, fixed_abs, tag = 'smem constant byte address 0x4 - core index']
  #allocation1 [shape = 'u32[72,128]{1,0:T(1,128)}', space=vmem, size = 0x9000, scoped, tag = 'internal scratch']
  #allocation2 [shape = 'f32[256,128]{1,0:T(8,128)}', space=vmem, size = 0x20000, scoped, tag = 'scratch operand']
  #allocation3 [shape = 'f32[2,128]{1,0:T(2,128)}', space=vmem, size = 0x400, scoped, tag = 'scratch operand']
  %s0 = inlined_call_operand.vmem [shape: f32[512,128], index: 0, kind: input, shape index: {}]
  %s1 = inlined_call_operand.vmem [shape: bf16[128,128], index: 1, kind: input, shape index: {}]
  %s2 = inlined_call_operand.vmem [shape: f32[512,128], index: 2, kind: output, shape index: {0}]
  %s3 = inlined_call_operand.vmem [shape: f32[2,128], index: 3, kind: output, shape index: {1}]
  %4 = xla_tuple %s2, %s3
  %s5 = sld [smem:[#allocation0]]
  $region65: #{forward.13} parent=0
    _
  %s7 = ssub.s32 1, %s5
  %s8 = scalar_select 0, %s7, %s5
  loop: start=0, step=1, limit=4
  $region2: #{forward.13} parent=0 // loop_pre_header
    _
  $region3: #{forward.13} parent=0 // loop_header
    %s10 = sphi 0, %s14
    %p11 = scmp.ge.s32.totalorder %s10, 4
    %s17 = sphi 0, %s29
    %s18 = sphi 0, %s25
    %s19 = sphi 0, %s17
    %s20 = sphi 0, %s18
    %s21 = sphi 0, %s19
    %s22 = sphi 0, %s20
    %s34 = sphi 0, %s36
    %s37 = sphi 0, %s34
    %s38 = sphi 0, %s37
    %s54 = sphi 0, %s38
    %s60 = sphi 0, %s62
    %s63 = sphi 0, %s60
    %s64 = sphi 0, %s63
    %s80 = sphi 0, %s64
    %s86 = sphi 0, %s88
    %s89 = sphi 0, %s86
    %s90 = sphi 0, %s89
    %s106 = sphi 0, %s90
    %s110 = sphi 0, %s110
    %s112 = sphi 0, %s110
    %s113 = sphi 0, %s112
    %s127 = sphi 0, %s113
  $region4: #{forward.13} parent=0 // loop_header_branch
    %13 = sbr.rel (%p11) target = $region8
  $region5: #{forward.13} parent=0 // loop_body
    %s15 = ssub.s32 %s10, 1
    %s16 = ssub.s32 %s10, 2
    %s23 = sadd.s32 1, %s18
    %p24 = scmp.ge.s32.totalorder %s23, 1
    %s25 = scalar_select %p24, 0, %s23
    %s26 = sadd.s32 1, %s17
    %s27 = scalar_select %p24, %s26, %s17
    %p28 = scmp.ge.s32.totalorder %s27, 2
    %s29 = scalar_select %p28, 0, %s27
    %s30 = ssub.s32 %s17, %s29
    %s31 = ssub.s32 %s18, %s25
    %s32 = sor.u32 %s30, %s31
    %p33 = scmp.eq.s32.totalorder %s32, 0
    %s35 = sadd.s32 %s34, 1
    %s36 = scalar_select %p33, %s34, %s35
    %p39 = pneg %p33
    %p40 = scmp.eq.s32.totalorder %s10, 1
    %p41 = por %p39, %p40
    %p42 = scmp.ne.s32.totalorder %s34, %s37
    %p43 = scmp.eq.s32.totalorder %s10, 0
    %p44 = por %p42, %p43
    %p45 = scmp.ne.s32.totalorder %s34, %s37
    %p46 = scmp.eq.s32.totalorder %s15, 1
    %p47 = por %p45, %p46
    %p48 = scmp.ne.s32.totalorder %s37, %s38
    %p49 = scmp.eq.s32.totalorder %s15, 0
    %p50 = por %p48, %p49
    %p51 = scmp.ne.s32.totalorder %s37, %s38
    %p52 = scmp.eq.s32.totalorder %s16, 1
    %p53 = por %p51, %p52
    %p55 = scmp.ne.s32.totalorder %s38, %s54
    %p56 = scmp.eq.s32.totalorder %s16, 0
    %p57 = por %p55, %p56
    %s58 = ssub.s32 %s18, %s25
    %p59 = scmp.eq.s32.totalorder %s58, 0
    %s61 = sadd.s32 %s60, 1
    %s62 = scalar_select %p59, %s60, %s61
    %p65 = pneg %p59
    %p66 = scmp.eq.s32.totalorder %s10, 1
    %p67 = por %p65, %p66
    %p68 = scmp.ne.s32.totalorder %s60, %s63
    %p69 = scmp.eq.s32.totalorder %s10, 0
    %p70 = por %p68, %p69
    %p71 = scmp.ne.s32.totalorder %s60, %s63
    %p72 = scmp.eq.s32.totalorder %s15, 1
    %p73 = por %p71, %p72
    %p74 = scmp.ne.s32.totalorder %s63, %s64
    %p75 = scmp.eq.s32.totalorder %s15, 0
    %p76 = por %p74, %p75
    %p77 = scmp.ne.s32.totalorder %s63, %s64
    %p78 = scmp.eq.s32.totalorder %s16, 1
    %p79 = por %p77, %p78
    %p81 = scmp.ne.s32.totalorder %s64, %s80
    %p82 = scmp.eq.s32.totalorder %s16, 0
    %p83 = por %p81, %p82
    %s84 = ssub.s32 %s17, %s29
    %p85 = scmp.eq.s32.totalorder %s84, 0
    %s87 = sadd.s32 %s86, 1
    %s88 = scalar_select %p85, %s86, %s87
    %p91 = pneg %p85
    %p92 = scmp.eq.s32.totalorder %s10, 1
    %p93 = por %p91, %p92
    %p94 = scmp.ne.s32.totalorder %s86, %s89
    %p95 = scmp.eq.s32.totalorder %s10, 0
    %p96 = por %p94, %p95
    %p97 = scmp.ne.s32.totalorder %s86, %s89
    %p98 = scmp.eq.s32.totalorder %s15, 1
    %p99 = por %p97, %p98
    %p100 = scmp.ne.s32.totalorder %s89, %s90
    %p101 = scmp.eq.s32.totalorder %s15, 0
    %p102 = por %p100, %p101
    %p103 = scmp.ne.s32.totalorder %s89, %s90
    %p104 = scmp.eq.s32.totalorder %s16, 1
    %p105 = por %p103, %p104
    %p107 = scmp.ne.s32.totalorder %s90, %s106
    %p108 = scmp.eq.s32.totalorder %s16, 0
    %p109 = por %p107, %p108
    %s111 = sadd.s32 %s110, 1
    %p114 = scmp.eq.s32.totalorder %s10, 1
    %p115 = scmp.ne.s32.totalorder %s110, %s112
    %p116 = scmp.eq.s32.totalorder %s10, 0
    %p117 = por %p115, %p116
    %p118 = scmp.ne.s32.totalorder %s110, %s112
    %p119 = scmp.eq.s32.totalorder %s15, 1
    %p120 = por %p118, %p119
    %p121 = scmp.ne.s32.totalorder %s112, %s113
    %p122 = scmp.eq.s32.totalorder %s15, 0
    %p123 = por %p121, %p122
    %p124 = scmp.ne.s32.totalorder %s112, %s113
    %p125 = scmp.eq.s32.totalorder %s16, 1
    %p126 = por %p124, %p125
    %p128 = scmp.ne.s32.totalorder %s113, %s127
    %p129 = scmp.eq.s32.totalorder %s16, 0
    %p130 = por %p128, %p129
    %p131 = scmp.le.s32.totalorder 1, %s10
    %p132 = scmp.lt.s32.totalorder %s10, 3
    %p133 = pnand %p131, %p132
    %p134 = pneg %p133
    // Predicated region
    $region9: #{forward.13} parent=5 // pred_check
      _
    $region10: #{forward.13} parent=5 // pred_check_branch
      %136 = sbr.rel (%p133) target = $region12
    $region11: #{forward.13} parent=5 // pred_region
      %s137 = ssub.s32 %s10, 1
      // Predicated region
      $region13: #{forward.13} parent=11 // pred_check
        %p138 = pneg %p76
      $region14: #{forward.13} parent=11 // pred_check_branch
        %140 = sbr.rel (%p138) target = $region16
      $region15: #{forward.13} parent=11 // pred_region
        %s141 = smul.u32 16, %s20
        %p142 = scmp.lt.s32.totalorder %s141, 15
        %s143 = scalar_select %p142, %s141, 15
        %s144 = smul.addr %s143, 4
        %s145 = scalar_lea.vmem %s1, %s144
        %s146 = smul.u32 16, %s20
      $region16: #{forward.13} parent=11 // pred_fallthru
        _
    $region12: #{forward.13} parent=5 // pred_fallthru
      _
    %p147 = scmp.lt.s32.totalorder %s10, 2
    // Predicated region
    $region17: #{forward.13} parent=5 // pred_check
      %p148 = pneg %p147
    $region18: #{forward.13} parent=5 // pred_check_branch
      %150 = sbr.rel (%p148) target = $region20
    $region19: #{forward.13} parent=5 // pred_region
      // Predicated region
      $region21: #{forward.13} parent=19 // pred_check
        %p151 = pneg %p44
      $region22: #{forward.13} parent=19 // pred_check_branch
        %153 = sbr.rel (%p151) target = $region24
      $region23: #{forward.13} parent=19 // pred_region
        %s154 = smul.u32 32, %s17
        %p155 = scmp.lt.s32.totalorder %s154, 63
        %s156 = scalar_select %p155, %s154, 63
        %p157 = scmp.lt.s32.totalorder %s18, 0
        %s158 = scalar_select %p157, %s18, 0
        %s159 = sadd.s32 %s158, %s156
        %s160 = smul.addr %s159, 8
        %s161 = scalar_lea.vmem %s0, %s160
        %s162 = smul.u32 32, %s17
      $region24: #{forward.13} parent=19 // pred_fallthru
        _
    $region20: #{forward.13} parent=5 // pred_fallthru
      _
    %p163 = scmp.le.s32.totalorder 1, %s10
    %p164 = scmp.lt.s32.totalorder %s10, 3
    %p165 = pnand %p163, %p164
    %p166 = pneg %p165
    // Predicated region
    $region25: #{forward.13} parent=5 // pred_check
      _
    $region26: #{forward.13} parent=5 // pred_check_branch
      %168 = sbr.rel (%p165) target = $region28
    $region27: #{forward.13} parent=5 // pred_region
      %s169 = ssub.s32 %s10, 1
      %s170 = smul.u32 32, %s19
      %p171 = scmp.lt.s32.totalorder %s170, 63
      %s172 = scalar_select %p171, %s170, 63
      %p173 = scmp.lt.s32.totalorder %s20, 0
      %s174 = scalar_select %p173, %s20, 0
      %s175 = sadd.s32 %s174, %s172
      %s176 = smul.addr %s175, 8
      %s177 = scalar_lea.vmem %s0, %s176
      %p178 = pneg %p50
      %p179 = pneg %p47
      %s180 = smul.u32 16, %s20
      %p181 = scmp.lt.s32.totalorder %s180, 15
      %s182 = scalar_select %p181, %s180, 15
      %s183 = smul.addr %s182, 4
      %s184 = scalar_lea.vmem %s1, %s183
      %p185 = pneg %p76
      %p186 = pneg %p73
      %p187 = pneg %p102
      %p188 = pneg %p99
      %s189 = smul.u32 32, %s19
      %p190 = scmp.lt.s32.totalorder %s189, 63
      %s191 = scalar_select %p190, %s189, 63
      %s192 = smul.addr %s191, 8
      %s193 = scalar_lea.vmem %s2, %s192
      %p194 = pneg %p123
      %p195 = pneg %p120
      %s196 = smul.u32 32, %s19
      %p197 = scmp.lt.s32.totalorder %s196, 63
      %s198 = scalar_select %p197, %s196, 63
      %p199 = scmp.lt.s32.totalorder %s20, 0
      %s200 = scalar_select %p199, %s20, 0
      %s201 = sadd.s32 %s200, %s198
      %s202 = smul.addr %s201, 8
      %s203 = scalar_lea.vmem %s0, %s202
      %s204 = smul.u32 32, %s19
      %s205 = smul.u32 16, %s20
      %p206 = scmp.lt.s32.totalorder %s205, 15
      %s207 = scalar_select %p206, %s205, 15
      %s208 = smul.addr %s207, 4
      %s209 = scalar_lea.vmem %s1, %s208
      %s210 = smul.u32 16, %s20
      %s211 = smul.u32 32, %s19
      %p212 = scmp.lt.s32.totalorder %s211, 63
      %s213 = scalar_select %p212, %s211, 63
      %s214 = smul.addr %s213, 8
      %s215 = scalar_lea.vmem %s2, %s214
      %s216 = smul.u32 32, %s19
      %p217 = scmp.eq.s32.totalorder %s20, 0
      // Predicated region
      $region29: #{forward.13} parent=27 // pred_check
        %p218 = pneg %p217
      $region30: #{forward.13} parent=27 // pred_check_branch
        %220 = sbr.rel (%p218) target = $region32
      $region31: #{forward.13} parent=27 // pred_region
        %221 = vst [vmem:[#allocation2] sm:$0xff] 0.0
        %222 = vst [vmem:[#allocation2 + $0x8] sm:$0xff] 0.0
        %223 = vst [vmem:[#allocation2 + $0x10] sm:$0xff] 0.0
        %224 = vst [vmem:[#allocation2 + $0x18] sm:$0xff] 0.0
        %225 = vst [vmem:[#allocation2 + $0x20] sm:$0xff] 0.0
        %226 = vst [vmem:[#allocation2 + $0x28] sm:$0xff] 0.0
        %227 = vst [vmem:[#allocation2 + $0x30] sm:$0xff] 0.0
        %228 = vst [vmem:[#allocation2 + $0x38] sm:$0xff] 0.0
        %229 = vst [vmem:[#allocation2 + $0x40] sm:$0xff] 0.0
        %230 = vst [vmem:[#allocation2 + $0x48] sm:$0xff] 0.0
        %231 = vst [vmem:[#allocation2 + $0x50] sm:$0xff] 0.0
        %232 = vst [vmem:[#allocation2 + $0x58] sm:$0xff] 0.0
        %233 = vst [vmem:[#allocation2 + $0x60] sm:$0xff] 0.0
        %234 = vst [vmem:[#allocation2 + $0x68] sm:$0xff] 0.0
        %235 = vst [vmem:[#allocation2 + $0x70] sm:$0xff] 0.0
        %236 = vst [vmem:[#allocation2 + $0x78] sm:$0xff] 0.0
        %237 = vst [vmem:[#allocation2 + $0x80] sm:$0xff] 0.0
        %238 = vst [vmem:[#allocation2 + $0x88] sm:$0xff] 0.0
        %239 = vst [vmem:[#allocation2 + $0x90] sm:$0xff] 0.0
        %240 = vst [vmem:[#allocation2 + $0x98] sm:$0xff] 0.0
        %241 = vst [vmem:[#allocation2 + $0xa0] sm:$0xff] 0.0
        %242 = vst [vmem:[#allocation2 + $0xa8] sm:$0xff] 0.0
        %243 = vst [vmem:[#allocation2 + $0xb0] sm:$0xff] 0.0
        %244 = vst [vmem:[#allocation2 + $0xb8] sm:$0xff] 0.0
        %245 = vst [vmem:[#allocation2 + $0xc0] sm:$0xff] 0.0
        %246 = vst [vmem:[#allocation2 + $0xc8] sm:$0xff] 0.0
        %247 = vst [vmem:[#allocation2 + $0xd0] sm:$0xff] 0.0
        %248 = vst [vmem:[#allocation2 + $0xd8] sm:$0xff] 0.0
        %249 = vst [vmem:[#allocation2 + $0xe0] sm:$0xff] 0.0
        %250 = vst [vmem:[#allocation2 + $0xe8] sm:$0xff] 0.0
        %251 = vst [vmem:[#allocation2 + $0xf0] sm:$0xff] 0.0
        %252 = vst [vmem:[#allocation2 + $0xf8] sm:$0xff] 0.0
      $region32: #{forward.13} parent=27 // pred_fallthru
        _
      %p253 = scmp.eq.s32.totalorder %s19, 0
      %p254 = pnand %p253, %p217
      %p255 = pneg %p254
      // Predicated region
      $region33: #{forward.13} parent=27 // pred_check
        _
      $region34: #{forward.13} parent=27 // pred_check_branch
        %257 = sbr.rel (%p254) target = $region36
      $region35: #{forward.13} parent=27 // pred_region
        %258 = vst [vmem:[#allocation3] sm:$0x3] 0.0
      $region36: #{forward.13} parent=27 // pred_fallthru
        _
      %v259 = vld [vmem:[%s203] sm:$0xff]
      %v260 = vld [vmem:[%s203 + $0x8] sm:$0xff]
      %v261 = vld [vmem:[%s203 + $0x10] sm:$0xff]
      %v262 = vld [vmem:[%s203 + $0x18] sm:$0xff]
      %v263 = vld [vmem:[%s203 + $0x20] sm:$0xff]
      %v264 = vld [vmem:[%s203 + $0x28] sm:$0xff]
      %v265 = vld [vmem:[%s203 + $0x30] sm:$0xff]
      %v266 = vld [vmem:[%s203 + $0x38] sm:$0xff]
      %v267 = vld [vmem:[%s203 + $0x40] sm:$0xff]
      %v268 = vld [vmem:[%s203 + $0x48] sm:$0xff]
      %v269 = vld [vmem:[%s203 + $0x50] sm:$0xff]
      %v270 = vld [vmem:[%s203 + $0x58] sm:$0xff]
      %v271 = vld [vmem:[%s203 + $0x60] sm:$0xff]
      %v272 = vld [vmem:[%s203 + $0x68] sm:$0xff]
      %v273 = vld [vmem:[%s203 + $0x70] sm:$0xff]
      %v274 = vld [vmem:[%s203 + $0x78] sm:$0xff]
      %v275 = vld [vmem:[%s203 + $0x80] sm:$0xff]
      %v276 = vld [vmem:[%s203 + $0x88] sm:$0xff]
      %v277 = vld [vmem:[%s203 + $0x90] sm:$0xff]
      %v278 = vld [vmem:[%s203 + $0x98] sm:$0xff]
      %v279 = vld [vmem:[%s203 + $0xa0] sm:$0xff]
      %v280 = vld [vmem:[%s203 + $0xa8] sm:$0xff]
      %v281 = vld [vmem:[%s203 + $0xb0] sm:$0xff]
      %v282 = vld [vmem:[%s203 + $0xb8] sm:$0xff]
      %v283 = vld [vmem:[%s203 + $0xc0] sm:$0xff]
      %v284 = vld [vmem:[%s203 + $0xc8] sm:$0xff]
      %v285 = vld [vmem:[%s203 + $0xd0] sm:$0xff]
      %v286 = vld [vmem:[%s203 + $0xd8] sm:$0xff]
      %v287 = vld [vmem:[%s203 + $0xe0] sm:$0xff]
      %v288 = vld [vmem:[%s203 + $0xe8] sm:$0xff]
      %v289 = vld [vmem:[%s203 + $0xf0] sm:$0xff]
      %v290 = vld [vmem:[%s203 + $0xf8] sm:$0xff]
      %v291 = vld [vmem:[#allocation2] sm:$0xff]
      %v292 = vld [vmem:[#allocation2 + $0x8] sm:$0xff]
      %v293 = vld [vmem:[#allocation2 + $0x10] sm:$0xff]
      %v294 = vld [vmem:[#allocation2 + $0x18] sm:$0xff]
      %v295 = vld [vmem:[#allocation2 + $0x20] sm:$0xff]
      %v296 = vld [vmem:[#allocation2 + $0x28] sm:$0xff]
      %v297 = vld [vmem:[#allocation2 + $0x30] sm:$0xff]
      %v298 = vld [vmem:[#allocation2 + $0x38] sm:$0xff]
      %v299 = vld [vmem:[#allocation2 + $0x40] sm:$0xff]
      %v300 = vld [vmem:[#allocation2 + $0x48] sm:$0xff]
      %v301 = vld [vmem:[#allocation2 + $0x50] sm:$0xff]
      %v302 = vld [vmem:[#allocation2 + $0x58] sm:$0xff]
      %v303 = vld [vmem:[#allocation2 + $0x60] sm:$0xff]
      %v304 = vld [vmem:[#allocation2 + $0x68] sm:$0xff]
      %v305 = vld [vmem:[#allocation2 + $0x70] sm:$0xff]
      %v306 = vld [vmem:[#allocation2 + $0x78] sm:$0xff]
      %v307 = vld [vmem:[#allocation2 + $0x80] sm:$0xff]
      %v308 = vld [vmem:[#allocation2 + $0x88] sm:$0xff]
      %v309 = vld [vmem:[#allocation2 + $0x90] sm:$0xff]
      %v310 = vld [vmem:[#allocation2 + $0x98] sm:$0xff]
      %v311 = vld [vmem:[#allocation2 + $0xa0] sm:$0xff]
      %v312 = vld [vmem:[#allocation2 + $0xa8] sm:$0xff]
      %v313 = vld [vmem:[#allocation2 + $0xb0] sm:$0xff]
      %v314 = vld [vmem:[#allocation2 + $0xb8] sm:$0xff]
      %v315 = vld [vmem:[#allocation2 + $0xc0] sm:$0xff]
      %v316 = vld [vmem:[#allocation2 + $0xc8] sm:$0xff]
      %v317 = vld [vmem:[#allocation2 + $0xd0] sm:$0xff]
      %v318 = vld [vmem:[#allocation2 + $0xd8] sm:$0xff]
      %v319 = vld [vmem:[#allocation2 + $0xe0] sm:$0xff]
      %v320 = vld [vmem:[#allocation2 + $0xe8] sm:$0xff]
      %v321 = vld [vmem:[#allocation2 + $0xf0] sm:$0xff]
      %v322 = vld [vmem:[#allocation2 + $0xf8] sm:$0xff]
      %v323 = vpack.c.bf16 %v260, %v259
      %v324 = vpack.c.bf16 %v262, %v261
      %v325 = vpack.c.bf16 %v264, %v263
      %v326 = vpack.c.bf16 %v266, %v265
      %v327 = vpack.c.bf16 %v268, %v267
      %v328 = vpack.c.bf16 %v270, %v269
      %v329 = vpack.c.bf16 %v272, %v271
      %v330 = vpack.c.bf16 %v274, %v273
      %v331 = vpack.c.bf16 %v276, %v275
      %v332 = vpack.c.bf16 %v278, %v277
      %v333 = vpack.c.bf16 %v280, %v279
      %v334 = vpack.c.bf16 %v282, %v281
      %v335 = vpack.c.bf16 %v284, %v283
      %v336 = vpack.c.bf16 %v286, %v285
      %v337 = vpack.c.bf16 %v288, %v287
      %v338 = vpack.c.bf16 %v290, %v289
      %v339 = vld [vmem:[%s209] sm:$0xf]
      %v340 = vld [vmem:[%s209 + $0x4] sm:$0xf]
      %v341 = vld [vmem:[%s209 + $0x8] sm:$0xf]
      %v342 = vld [vmem:[%s209 + $0xc] sm:$0xf]
      %v343 = vld [vmem:[%s209 + $0x10] sm:$0xf]
      %v344 = vld [vmem:[%s209 + $0x14] sm:$0xf]
      %v345 = vld [vmem:[%s209 + $0x18] sm:$0xf]
      %v346 = vld [vmem:[%s209 + $0x1c] sm:$0xf]
      %v347 = vld [vmem:[%s209 + $0x20] sm:$0xf]
      %v348 = vld [vmem:[%s209 + $0x24] sm:$0xf]
      %v349 = vld [vmem:[%s209 + $0x28] sm:$0xf]
      %v350 = vld [vmem:[%s209 + $0x2c] sm:$0xf]
      %v351 = vld [vmem:[%s209 + $0x30] sm:$0xf]
      %v352 = vld [vmem:[%s209 + $0x34] sm:$0xf]
      %v353 = vld [vmem:[%s209 + $0x38] sm:$0xf]
      %v354 = vld [vmem:[%s209 + $0x3c] sm:$0xf]
      %v371 = vunpack.c.l.b16 %v339
      %v372 = vunpack.c.l.b16 %v340
      %v373 = vunpack.c.l.b16 %v341
      %v374 = vunpack.c.l.b16 %v342
      %v375 = vunpack.c.l.b16 %v343
      %v376 = vunpack.c.l.b16 %v344
      %v377 = vunpack.c.l.b16 %v345
      %v378 = vunpack.c.l.b16 %v346
      %v379 = vunpack.c.l.b16 %v347
      %v380 = vunpack.c.l.b16 %v348
      %v381 = vunpack.c.l.b16 %v349
      %v382 = vunpack.c.l.b16 %v350
      %v383 = vunpack.c.l.b16 %v351
      %v384 = vunpack.c.l.b16 %v352
      %v385 = vunpack.c.l.b16 %v353
      %v386 = vunpack.c.l.b16 %v354
      %v387 = vpack.c.b16 %v372, %v371
      %v388 = vpack.c.b16 %v374, %v373
      %v389 = vpack.c.b16 %v376, %v375
      %v390 = vpack.c.b16 %v378, %v377
      %v391 = vpack.c.b16 %v380, %v379
      %v392 = vpack.c.b16 %v382, %v381
      %v393 = vpack.c.b16 %v384, %v383
      %v394 = vpack.c.b16 %v386, %v385
      %403 = vmatpush.bf16.msra.mxu0 %v394
      %404 = vmatpush.bf16.msra.mxu0 %v393
      %405 = vmatpush.bf16.msra.mxu0 %v392
      %406 = vmatpush.bf16.msra.mxu0 %v391
      %407 = vmatpush.bf16.msra.mxu0 %v390
      %408 = vmatpush.bf16.msra.mxu0 %v389
      %409 = vmatpush.bf16.msra.mxu0 %v388
      %410 = vmatpush.bf16.msra.mxu0 %v387
      %411 = vmatmul.bf16.gmra.mxu0 %v323
      %v412 = vpop.f32.mrf.mxu0
      %v413 = vadd.f32 0.0, %v412
      %v414 = vpop.f32.mrf.mxu0
      %v415 = vadd.f32 0.0, %v414
      %416 = vmatmul.bf16.gmra.mxu0 %v324
      %v417 = vpop.f32.mrf.mxu0
      %v418 = vadd.f32 0.0, %v417
      %v419 = vpop.f32.mrf.mxu0
      %v420 = vadd.f32 0.0, %v419
      %421 = vmatmul.bf16.gmra.mxu0 %v325
      %v422 = vpop.f32.mrf.mxu0
      %v423 = vadd.f32 0.0, %v422
      %v424 = vpop.f32.mrf.mxu0
      %v425 = vadd.f32 0.0, %v424
      %426 = vmatmul.bf16.gmra.mxu0 %v326
      %v427 = vpop.f32.mrf.mxu0
      %v428 = vadd.f32 0.0, %v427
      %v429 = vpop.f32.mrf.mxu0
      %v430 = vadd.f32 0.0, %v429
      %431 = vmatmul.bf16.gmra.mxu0 %v327
      %v432 = vpop.f32.mrf.mxu0
      %v433 = vadd.f32 0.0, %v432
      %v434 = vpop.f32.mrf.mxu0
      %v435 = vadd.f32 0.0, %v434
      %436 = vmatmul.bf16.gmra.mxu0 %v328
      %v437 = vpop.f32.mrf.mxu0
      %v438 = vadd.f32 0.0, %v437
      %v439 = vpop.f32.mrf.mxu0
      %v440 = vadd.f32 0.0, %v439
      %441 = vmatmul.bf16.gmra.mxu0 %v329
      %v442 = vpop.f32.mrf.mxu0
      %v443 = vadd.f32 0.0, %v442
      %v444 = vpop.f32.mrf.mxu0
      %v445 = vadd.f32 0.0, %v444
      %446 = vmatmul.bf16.gmra.mxu0 %v330
      %v447 = vpop.f32.mrf.mxu0
      %v448 = vadd.f32 0.0, %v447
      %v449 = vpop.f32.mrf.mxu0
      %v450 = vadd.f32 0.0, %v449
      %451 = vmatmul.bf16.gmra.mxu0 %v331
      %v452 = vpop.f32.mrf.mxu0
      %v453 = vadd.f32 0.0, %v452
      %v454 = vpop.f32.mrf.mxu0
      %v455 = vadd.f32 0.0, %v454
      %456 = vmatmul.bf16.gmra.mxu0 %v332
      %v457 = vpop.f32.mrf.mxu0
      %v458 = vadd.f32 0.0, %v457
      %v459 = vpop.f32.mrf.mxu0
      %v460 = vadd.f32 0.0, %v459
      %461 = vmatmul.bf16.gmra.mxu0 %v333
      %v462 = vpop.f32.mrf.mxu0
      %v463 = vadd.f32 0.0, %v462
      %v464 = vpop.f32.mrf.mxu0
      %v465 = vadd.f32 0.0, %v464
      %466 = vmatmul.bf16.gmra.mxu0 %v334
      %v467 = vpop.f32.mrf.mxu0
      %v468 = vadd.f32 0.0, %v467
      %v469 = vpop.f32.mrf.mxu0
      %v470 = vadd.f32 0.0, %v469
      %471 = vmatmul.bf16.gmra.mxu0 %v335
      %v472 = vpop.f32.mrf.mxu0
      %v473 = vadd.f32 0.0, %v472
      %v474 = vpop.f32.mrf.mxu0
      %v475 = vadd.f32 0.0, %v474
      %476 = vmatmul.bf16.gmra.mxu0 %v336
      %v477 = vpop.f32.mrf.mxu0
      %v478 = vadd.f32 0.0, %v477
      %v479 = vpop.f32.mrf.mxu0
      %v480 = vadd.f32 0.0, %v479
      %481 = vmatmul.bf16.gmra.mxu0 %v337
      %v482 = vpop.f32.mrf.mxu0
      %v483 = vadd.f32 0.0, %v482
      %v484 = vpop.f32.mrf.mxu0
      %v485 = vadd.f32 0.0, %v484
      %486 = vmatmul.bf16.gmra.mxu0 %v338
      %v487 = vpop.f32.mrf.mxu0
      %v488 = vadd.f32 0.0, %v487
      %v489 = vpop.f32.mrf.mxu0
      %v490 = vadd.f32 0.0, %v489
      %491 = vdwg.mxu0
      %v492 = vadd.f32 %v291, %v413
      %v493 = vadd.f32 %v292, %v415
      %v494 = vadd.f32 %v293, %v418
      %v495 = vadd.f32 %v294, %v420
      %v496 = vadd.f32 %v295, %v423
      %v497 = vadd.f32 %v296, %v425
      %v498 = vadd.f32 %v297, %v428
      %v499 = vadd.f32 %v298, %v430
      %v500 = vadd.f32 %v299, %v433
      %v501 = vadd.f32 %v300, %v435
      %v502 = vadd.f32 %v301, %v438
      %v503 = vadd.f32 %v302, %v440
      %v504 = vadd.f32 %v303, %v443
      %v505 = vadd.f32 %v304, %v445
      %v506 = vadd.f32 %v305, %v448
      %v507 = vadd.f32 %v306, %v450
      %v508 = vadd.f32 %v307, %v453
      %v509 = vadd.f32 %v308, %v455
      %v510 = vadd.f32 %v309, %v458
      %v511 = vadd.f32 %v310, %v460
      %v512 = vadd.f32 %v311, %v463
      %v513 = vadd.f32 %v312, %v465
      %v514 = vadd.f32 %v313, %v468
      %v515 = vadd.f32 %v314, %v470
      %v516 = vadd.f32 %v315, %v473
      %v517 = vadd.f32 %v316, %v475
      %v518 = vadd.f32 %v317, %v478
      %v519 = vadd.f32 %v318, %v480
      %v520 = vadd.f32 %v319, %v483
      %v521 = vadd.f32 %v320, %v485
      %v522 = vadd.f32 %v321, %v488
      %v523 = vadd.f32 %v322, %v490
      %524 = vst [vmem:[#allocation2] sm:$0xff] %v492
      %525 = vst [vmem:[#allocation2 + $0x8] sm:$0xff] %v493
      %526 = vst [vmem:[#allocation2 + $0x10] sm:$0xff] %v494
      %527 = vst [vmem:[#allocation2 + $0x18] sm:$0xff] %v495
      %528 = vst [vmem:[#allocation2 + $0x20] sm:$0xff] %v496
      %529 = vst [vmem:[#allocation2 + $0x28] sm:$0xff] %v497
      %530 = vst [vmem:[#allocation2 + $0x30] sm:$0xff] %v498
      %531 = vst [vmem:[#allocation2 + $0x38] sm:$0xff] %v499
      %532 = vst [vmem:[#allocation2 + $0x40] sm:$0xff] %v500
      %533 = vst [vmem:[#allocation2 + $0x48] sm:$0xff] %v501
      %534 = vst [vmem:[#allocation2 + $0x50] sm:$0xff] %v502
      %535 = vst [vmem:[#allocation2 + $0x58] sm:$0xff] %v503
      %536 = vst [vmem:[#allocation2 + $0x60] sm:$0xff] %v504
      %537 = vst [vmem:[#allocation2 + $0x68] sm:$0xff] %v505
      %538 = vst [vmem:[#allocation2 + $0x70] sm:$0xff] %v506
      %539 = vst [vmem:[#allocation2 + $0x78] sm:$0xff] %v507
      %540 = vst [vmem:[#allocation2 + $0x80] sm:$0xff] %v508
      %541 = vst [vmem:[#allocation2 + $0x88] sm:$0xff] %v509
      %542 = vst [vmem:[#allocation2 + $0x90] sm:$0xff] %v510
      %543 = vst [vmem:[#allocation2 + $0x98] sm:$0xff] %v511
      %544 = vst [vmem:[#allocation2 + $0xa0] sm:$0xff] %v512
      %545 = vst [vmem:[#allocation2 + $0xa8] sm:$0xff] %v513
      %546 = vst [vmem:[#allocation2 + $0xb0] sm:$0xff] %v514
      %547 = vst [vmem:[#allocation2 + $0xb8] sm:$0xff] %v515
      %548 = vst [vmem:[#allocation2 + $0xc0] sm:$0xff] %v516
      %549 = vst [vmem:[#allocation2 + $0xc8] sm:$0xff] %v517
      %550 = vst [vmem:[#allocation2 + $0xd0] sm:$0xff] %v518
      %551 = vst [vmem:[#allocation2 + $0xd8] sm:$0xff] %v519
      %552 = vst [vmem:[#allocation2 + $0xe0] sm:$0xff] %v520
      %553 = vst [vmem:[#allocation2 + $0xe8] sm:$0xff] %v521
      %554 = vst [vmem:[#allocation2 + $0xf0] sm:$0xff] %v522
      %555 = vst [vmem:[#allocation2 + $0xf8] sm:$0xff] %v523
      // Predicated region
      $region37: #{forward.13} parent=27 // pred_check
        %p556 = pneg %p217
      $region38: #{forward.13} parent=27 // pred_check_branch
        %558 = sbr.rel (%p556) target = $region40
      $region39: #{forward.13} parent=27 // pred_region
        %v559 = vld [vmem:[#allocation2] sm:$0xff]
        %v560 = vld [vmem:[#allocation2 + $0x8] sm:$0xff]
        %v561 = vld [vmem:[#allocation2 + $0x10] sm:$0xff]
        %v562 = vld [vmem:[#allocation2 + $0x18] sm:$0xff]
        %v563 = vld [vmem:[#allocation2 + $0x20] sm:$0xff]
        %v564 = vld [vmem:[#allocation2 + $0x28] sm:$0xff]
        %v565 = vld [vmem:[#allocation2 + $0x30] sm:$0xff]
        %v566 = vld [vmem:[#allocation2 + $0x38] sm:$0xff]
        %v567 = vld [vmem:[#allocation2 + $0x40] sm:$0xff]
        %v568 = vld [vmem:[#allocation2 + $0x48] sm:$0xff]
        %v569 = vld [vmem:[#allocation2 + $0x50] sm:$0xff]
        %v570 = vld [vmem:[#allocation2 + $0x58] sm:$0xff]
        %v571 = vld [vmem:[#allocation2 + $0x60] sm:$0xff]
        %v572 = vld [vmem:[#allocation2 + $0x68] sm:$0xff]
        %v573 = vld [vmem:[#allocation2 + $0x70] sm:$0xff]
        %v574 = vld [vmem:[#allocation2 + $0x78] sm:$0xff]
        %v575 = vld [vmem:[#allocation2 + $0x80] sm:$0xff]
        %v576 = vld [vmem:[#allocation2 + $0x88] sm:$0xff]
        %v577 = vld [vmem:[#allocation2 + $0x90] sm:$0xff]
        %v578 = vld [vmem:[#allocation2 + $0x98] sm:$0xff]
        %v579 = vld [vmem:[#allocation2 + $0xa0] sm:$0xff]
        %v580 = vld [vmem:[#allocation2 + $0xa8] sm:$0xff]
        %v581 = vld [vmem:[#allocation2 + $0xb0] sm:$0xff]
        %v582 = vld [vmem:[#allocation2 + $0xb8] sm:$0xff]
        %v583 = vld [vmem:[#allocation2 + $0xc0] sm:$0xff]
        %v584 = vld [vmem:[#allocation2 + $0xc8] sm:$0xff]
        %v585 = vld [vmem:[#allocation2 + $0xd0] sm:$0xff]
        %v586 = vld [vmem:[#allocation2 + $0xd8] sm:$0xff]
        %v587 = vld [vmem:[#allocation2 + $0xe0] sm:$0xff]
        %v588 = vld [vmem:[#allocation2 + $0xe8] sm:$0xff]
        %v589 = vld [vmem:[#allocation2 + $0xf0] sm:$0xff]
        %v590 = vld [vmem:[#allocation2 + $0xf8] sm:$0xff]
        %591 = vst [vmem:[%s215] sm:$0xff] %v559
        %592 = vst [vmem:[%s215 + $0x8] sm:$0xff] %v560
        %593 = vst [vmem:[%s215 + $0x10] sm:$0xff] %v561
        %594 = vst [vmem:[%s215 + $0x18] sm:$0xff] %v562
        %595 = vst [vmem:[%s215 + $0x20] sm:$0xff] %v563
        %596 = vst [vmem:[%s215 + $0x28] sm:$0xff] %v564
        %597 = vst [vmem:[%s215 + $0x30] sm:$0xff] %v565
        %598 = vst [vmem:[%s215 + $0x38] sm:$0xff] %v566
        %599 = vst [vmem:[%s215 + $0x40] sm:$0xff] %v567
        %600 = vst [vmem:[%s215 + $0x48] sm:$0xff] %v568
        %601 = vst [vmem:[%s215 + $0x50] sm:$0xff] %v569
        %602 = vst [vmem:[%s215 + $0x58] sm:$0xff] %v570
        %603 = vst [vmem:[%s215 + $0x60] sm:$0xff] %v571
        %604 = vst [vmem:[%s215 + $0x68] sm:$0xff] %v572
        %605 = vst [vmem:[%s215 + $0x70] sm:$0xff] %v573
        %606 = vst [vmem:[%s215 + $0x78] sm:$0xff] %v574
        %607 = vst [vmem:[%s215 + $0x80] sm:$0xff] %v575
        %608 = vst [vmem:[%s215 + $0x88] sm:$0xff] %v576
        %609 = vst [vmem:[%s215 + $0x90] sm:$0xff] %v577
        %610 = vst [vmem:[%s215 + $0x98] sm:$0xff] %v578
        %611 = vst [vmem:[%s215 + $0xa0] sm:$0xff] %v579
        %612 = vst [vmem:[%s215 + $0xa8] sm:$0xff] %v580
        %613 = vst [vmem:[%s215 + $0xb0] sm:$0xff] %v581
        %614 = vst [vmem:[%s215 + $0xb8] sm:$0xff] %v582
        %615 = vst [vmem:[%s215 + $0xc0] sm:$0xff] %v583
        %616 = vst [vmem:[%s215 + $0xc8] sm:$0xff] %v584
        %617 = vst [vmem:[%s215 + $0xd0] sm:$0xff] %v585
        %618 = vst [vmem:[%s215 + $0xd8] sm:$0xff] %v586
        %619 = vst [vmem:[%s215 + $0xe0] sm:$0xff] %v587
        %620 = vst [vmem:[%s215 + $0xe8] sm:$0xff] %v588
        %621 = vst [vmem:[%s215 + $0xf0] sm:$0xff] %v589
        %622 = vst [vmem:[%s215 + $0xf8] sm:$0xff] %v590
        %v623 = vld [vmem:[#allocation3] sm:$0x1]
        %v624 = vadd.f32 %v559, %v560
        %v625 = vadd.f32 %v624, %v561
        %v626 = vadd.f32 %v625, %v562
        %v627 = vadd.f32 %v626, %v563
        %v628 = vadd.f32 %v627, %v564
        %v629 = vadd.f32 %v628, %v565
        %v630 = vadd.f32 %v629, %v566
        %v631 = vadd.f32 %v630, %v567
        %v632 = vadd.f32 %v631, %v568
        %v633 = vadd.f32 %v632, %v569
        %v634 = vadd.f32 %v633, %v570
        %v635 = vadd.f32 %v634, %v571
        %v636 = vadd.f32 %v635, %v572
        %v637 = vadd.f32 %v636, %v573
        %v638 = vadd.f32 %v637, %v574
        %v639 = vadd.f32 %v638, %v575
        %v640 = vadd.f32 %v639, %v576
        %v641 = vadd.f32 %v640, %v577
        %v642 = vadd.f32 %v641, %v578
        %v643 = vadd.f32 %v642, %v579
        %v644 = vadd.f32 %v643, %v580
        %v645 = vadd.f32 %v644, %v581
        %v646 = vadd.f32 %v645, %v582
        %v647 = vadd.f32 %v646, %v583
        %v648 = vadd.f32 %v647, %v584
        %v649 = vadd.f32 %v648, %v585
        %v650 = vadd.f32 %v649, %v586
        %v651 = vadd.f32 %v650, %v587
        %v652 = vadd.f32 %v651, %v588
        %v653 = vadd.f32 %v652, %v589
        %v654 = vadd.f32 %v653, %v590
        %v655 = vrot.slane %v654, 4
        %v656 = vadd.f32 %v654, %v655
        %v657 = vrot.slane %v656, 2
        %v658 = vadd.f32 %v656, %v657
        %v659 = vrot.slane %v658, 1
        %v660 = vadd.f32 %v658, %v659
        %v661 = vadd.f32 %v623, %v660
        %662 = vst [vmem:[#allocation3] sm:$0x1] %v661
        %v663 = vld [vmem:[#allocation3 + $0x1] sm:$0x1]
        %v664 = vmul.f32 %v559, %v559
        %v665 = vmul.f32 %v560, %v560
        %v666 = vmul.f32 %v561, %v561
        %v667 = vmul.f32 %v562, %v562
        %v668 = vmul.f32 %v563, %v563
        %v669 = vmul.f32 %v564, %v564
        %v670 = vmul.f32 %v565, %v565
        %v671 = vmul.f32 %v566, %v566
        %v672 = vmul.f32 %v567, %v567
        %v673 = vmul.f32 %v568, %v568
        %v674 = vmul.f32 %v569, %v569
        %v675 = vmul.f32 %v570, %v570
        %v676 = vmul.f32 %v571, %v571
        %v677 = vmul.f32 %v572, %v572
        %v678 = vmul.f32 %v573, %v573
        %v679 = vmul.f32 %v574, %v574
        %v680 = vmul.f32 %v575, %v575
        %v681 = vmul.f32 %v576, %v576
        %v682 = vmul.f32 %v577, %v577
        %v683 = vmul.f32 %v578, %v578
        %v684 = vmul.f32 %v579, %v579
        %v685 = vmul.f32 %v580, %v580
        %v686 = vmul.f32 %v581, %v581
        %v687 = vmul.f32 %v582, %v582
        %v688 = vmul.f32 %v583, %v583
        %v689 = vmul.f32 %v584, %v584
        %v690 = vmul.f32 %v585, %v585
        %v691 = vmul.f32 %v586, %v586
        %v692 = vmul.f32 %v587, %v587
        %v693 = vmul.f32 %v588, %v588
        %v694 = vmul.f32 %v589, %v589
        %v695 = vmul.f32 %v590, %v590
        %v696 = vadd.f32 %v664, %v665
        %v697 = vadd.f32 %v696, %v666
        %v698 = vadd.f32 %v697, %v667
        %v699 = vadd.f32 %v698, %v668
        %v700 = vadd.f32 %v699, %v669
        %v701 = vadd.f32 %v700, %v670
        %v702 = vadd.f32 %v701, %v671
        %v703 = vadd.f32 %v702, %v672
        %v704 = vadd.f32 %v703, %v673
        %v705 = vadd.f32 %v704, %v674
        %v706 = vadd.f32 %v705, %v675
        %v707 = vadd.f32 %v706, %v676
        %v708 = vadd.f32 %v707, %v677
        %v709 = vadd.f32 %v708, %v678
        %v710 = vadd.f32 %v709, %v679
        %v711 = vadd.f32 %v710, %v680
        %v712 = vadd.f32 %v711, %v681
        %v713 = vadd.f32 %v712, %v682
        %v714 = vadd.f32 %v713, %v683
        %v715 = vadd.f32 %v714, %v684
        %v716 = vadd.f32 %v715, %v685
        %v717 = vadd.f32 %v716, %v686
        %v718 = vadd.f32 %v717, %v687
        %v719 = vadd.f32 %v718, %v688
        %v720 = vadd.f32 %v719, %v689
        %v721 = vadd.f32 %v720, %v690
        %v722 = vadd.f32 %v721, %v691
        %v723 = vadd.f32 %v722, %v692
        %v724 = vadd.f32 %v723, %v693
        %v725 = vadd.f32 %v724, %v694
        %v726 = vadd.f32 %v725, %v695
        %v727 = vrot.slane %v726, 4
        %v728 = vadd.f32 %v726, %v727
        %v729 = vrot.slane %v728, 2
        %v730 = vadd.f32 %v728, %v729
        %v731 = vrot.slane %v730, 1
        %v732 = vadd.f32 %v730, %v731
        %v733 = vadd.f32 %v663, %v732
        %734 = vst [vmem:[#allocation3 + $0x1] sm:$0x1] %v733
        %p735 = scmp.eq.s32.totalorder %s19, 1
        // Predicated region
        $region41: #{forward.13} parent=39 // pred_check
          %p736 = pneg %p735
        $region42: #{forward.13} parent=39 // pred_check_branch
          %738 = sbr.rel (%p736) target = $region44
        $region43: #{forward.13} parent=39 // pred_region
          %v739 = vld [vmem:[#allocation3] sm:$0x1]
          %v740 = vmul.f32 %v739, 0.001953125
          %v741 = vld [vmem:[#allocation3 + $0x1] sm:$0x1]
          %v742 = vmul.f32 %v741, 0.001953125
          %v743 = vmul.f32 %v740, %v740
          %v744 = vsub.f32 %v742, %v743
          %745 = vst [vmem:[%s3] sm:$0x1] %v740
          %746 = vst [vmem:[%s3 + $0x1] sm:$0x1] %v744
        $region44: #{forward.13} parent=39 // pred_fallthru
          _
      $region40: #{forward.13} parent=27 // pred_fallthru
        _
      %s747 = smul.u32 32, %s19
      %p748 = scmp.lt.s32.totalorder %s747, 63
      %s749 = scalar_select %p748, %s747, 63
      %s750 = smul.addr %s749, 8
      %s751 = scalar_lea.vmem %s2, %s750
      // Predicated region
      $region45: #{forward.13} parent=27 // pred_check
        %p752 = pneg %p99
      $region46: #{forward.13} parent=27 // pred_check_branch
        %754 = sbr.rel (%p752) target = $region48
      $region47: #{forward.13} parent=27 // pred_region
        %s755 = smul.u32 32, %s19
      $region48: #{forward.13} parent=27 // pred_fallthru
        _
      // Predicated region
      $region49: #{forward.13} parent=27 // pred_check
        %p756 = pneg %p120
      $region50: #{forward.13} parent=27 // pred_check_branch
        %758 = sbr.rel (%p756) target = $region52
      $region51: #{forward.13} parent=27 // pred_region
        _
      $region52: #{forward.13} parent=27 // pred_fallthru
        _
      // Predicated region
      $region53: #{forward.13} parent=27 // pred_check
        %p759 = pneg %p120
      $region54: #{forward.13} parent=27 // pred_check_branch
        %761 = sbr.rel (%p759) target = $region56
      $region55: #{forward.13} parent=27 // pred_region
        _
      $region56: #{forward.13} parent=27 // pred_fallthru
        _
    $region28: #{forward.13} parent=5 // pred_fallthru
      _
    %p762 = scmp.le.s32.totalorder 2, %s10
    // Predicated region
    $region57: #{forward.13} parent=5 // pred_check
      %p763 = pneg %p762
    $region58: #{forward.13} parent=5 // pred_check_branch
      %765 = sbr.rel (%p763) target = $region60
    $region59: #{forward.13} parent=5 // pred_region
      %s766 = ssub.s32 %s10, 2
      // Predicated region
      $region61: #{forward.13} parent=59 // pred_check
        %p767 = pneg %p105
      $region62: #{forward.13} parent=59 // pred_check_branch
        %769 = sbr.rel (%p767) target = $region64
      $region63: #{forward.13} parent=59 // pred_region
        %s770 = smul.u32 32, %s21
        %p771 = scmp.lt.s32.totalorder %s770, 63
        %s772 = scalar_select %p771, %s770, 63
        %s773 = smul.addr %s772, 8
        %s774 = scalar_lea.vmem %s2, %s773
      $region64: #{forward.13} parent=59 // pred_fallthru
        _
    $region60: #{forward.13} parent=5 // pred_fallthru
      _
  $region6: #{forward.13} parent=0 // loop_footer
    %s14 = sadd.s32 1, %s10
  $region7: #{forward.13} parent=0 // loop_footer_branch
    %9 = sbr.rel target = $region3
  $region8: #{forward.13} parent=0 // loop_exit
    _

// kernel: forward.14
$region0: #{forward.14}
  #allocation0 [shape = 'u32[]', space=smem, size = 0x4, offset = 0x4, fixed_abs, tag = 'smem constant byte address 0x4 - core index']
  #allocation1 [shape = 'u32[72,128]{1,0:T(1,128)}', space=vmem, size = 0x9000, scoped, tag = 'internal scratch']
  #allocation2 [shape = 'f32[2,128]{1,0:T(2,128)}', space=vmem, size = 0x400, scoped, tag = 'scratch operand']
  %s0 = inlined_call_operand.vmem [shape: f32[2,128], index: 0, kind: input, shape index: {}]
  %s1 = inlined_call_operand.vmem [shape: f32[2,9,9,128], index: 1, kind: input, shape index: {}]
  %s2 = inlined_call_operand.vmem [shape: f32[2,9,9,128], index: 2, kind: input, shape index: {}]
  %s3 = inlined_call_operand.vmem [shape: f32[2,9,9,128], index: 3, kind: input, shape index: {}]
  %s4 = inlined_call_operand.vmem [shape: f32[2,9,9,128], index: 4, kind: input, shape index: {}]
  %s5 = inlined_call_operand.vmem [shape: f32[2,8,8,128], index: 5, kind: output, shape index: {0}]
  %s6 = inlined_call_operand.vmem [shape: f32[2,128], index: 6, kind: output, shape index: {1}]
  %7 = xla_tuple %s5, %s6
  %s8 = sld [smem:[#allocation0]]
  $region69: #{forward.14} parent=0
    _
  %s10 = ssub.s32 1, %s8
  %s11 = scalar_select 0, %s10, %s8
  loop: start=0, step=1, limit=4
  $region2: #{forward.14} parent=0 // loop_pre_header
    _
  $region3: #{forward.14} parent=0 // loop_header
    %s13 = sphi 0, %s17
    %p14 = scmp.ge.s32.totalorder %s13, 4
    %s21 = sphi 0, %s21
    %s23 = sphi 0, %s21
    %s24 = sphi 0, %s23
    %s38 = sphi 0, %s24
    %s44 = sphi 0, %s46
    %s47 = sphi 0, %s44
    %s48 = sphi 0, %s47
    %s64 = sphi 0, %s48
    %s70 = sphi 0, %s72
    %s73 = sphi 0, %s70
    %s74 = sphi 0, %s73
    %s90 = sphi 0, %s74
    %s96 = sphi 0, %s98
    %s99 = sphi 0, %s96
    %s100 = sphi 0, %s99
    %s116 = sphi 0, %s100
    %s122 = sphi 0, %s124
    %s125 = sphi 0, %s122
    %s126 = sphi 0, %s125
    %s142 = sphi 0, %s126
    %s148 = sphi 0, %s150
    %s151 = sphi 0, %s148
    %s152 = sphi 0, %s151
    %s168 = sphi 0, %s152
    %s172 = sphi 0, %s172
    %s174 = sphi 0, %s172
    %s175 = sphi 0, %s174
    %s189 = sphi 0, %s175
  $region4: #{forward.14} parent=0 // loop_header_branch
    %16 = sbr.rel (%p14) target = $region8
  $region5: #{forward.14} parent=0 // loop_body
    %s18 = ssub.s32 %s13, 1
    %s19 = ssub.s32 %s13, 2
    %s20 = sadd.s32 %s13, 1
    %s22 = sadd.s32 %s21, 1
    %p25 = scmp.eq.s32.totalorder %s13, 1
    %p26 = scmp.ne.s32.totalorder %s21, %s23
    %p27 = scmp.eq.s32.totalorder %s13, 0
    %p28 = por %p26, %p27
    %p29 = scmp.ne.s32.totalorder %s21, %s23
    %p30 = scmp.eq.s32.totalorder %s18, 1
    %p31 = por %p29, %p30
    %p32 = scmp.ne.s32.totalorder %s23, %s24
    %p33 = scmp.eq.s32.totalorder %s18, 0
    %p34 = por %p32, %p33
    %p35 = scmp.ne.s32.totalorder %s23, %s24
    %p36 = scmp.eq.s32.totalorder %s19, 1
    %p37 = por %p35, %p36
    %p39 = scmp.ne.s32.totalorder %s24, %s38
    %p40 = scmp.eq.s32.totalorder %s19, 0
    %p41 = por %p39, %p40
    %s42 = ssub.s32 %s13, %s20
    %p43 = scmp.eq.s32.totalorder %s42, 0
    %s45 = sadd.s32 %s44, 1
    %s46 = scalar_select %p43, %s44, %s45
    %p49 = pneg %p43
    %p50 = scmp.eq.s32.totalorder %s13, 1
    %p51 = por %p49, %p50
    %p52 = scmp.ne.s32.totalorder %s44, %s47
    %p53 = scmp.eq.s32.totalorder %s13, 0
    %p54 = por %p52, %p53
    %p55 = scmp.ne.s32.totalorder %s44, %s47
    %p56 = scmp.eq.s32.totalorder %s18, 1
    %p57 = por %p55, %p56
    %p58 = scmp.ne.s32.totalorder %s47, %s48
    %p59 = scmp.eq.s32.totalorder %s18, 0
    %p60 = por %p58, %p59
    %p61 = scmp.ne.s32.totalorder %s47, %s48
    %p62 = scmp.eq.s32.totalorder %s19, 1
    %p63 = por %p61, %p62
    %p65 = scmp.ne.s32.totalorder %s48, %s64
    %p66 = scmp.eq.s32.totalorder %s19, 0
    %p67 = por %p65, %p66
    %s68 = ssub.s32 %s13, %s20
    %p69 = scmp.eq.s32.totalorder %s68, 0
    %s71 = sadd.s32 %s70, 1
    %s72 = scalar_select %p69, %s70, %s71
    %p75 = pneg %p69
    %p76 = scmp.eq.s32.totalorder %s13, 1
    %p77 = por %p75, %p76
    %p78 = scmp.ne.s32.totalorder %s70, %s73
    %p79 = scmp.eq.s32.totalorder %s13, 0
    %p80 = por %p78, %p79
    %p81 = scmp.ne.s32.totalorder %s70, %s73
    %p82 = scmp.eq.s32.totalorder %s18, 1
    %p83 = por %p81, %p82
    %p84 = scmp.ne.s32.totalorder %s73, %s74
    %p85 = scmp.eq.s32.totalorder %s18, 0
    %p86 = por %p84, %p85
    %p87 = scmp.ne.s32.totalorder %s73, %s74
    %p88 = scmp.eq.s32.totalorder %s19, 1
    %p89 = por %p87, %p88
    %p91 = scmp.ne.s32.totalorder %s74, %s90
    %p92 = scmp.eq.s32.totalorder %s19, 0
    %p93 = por %p91, %p92
    %s94 = ssub.s32 %s13, %s20
    %p95 = scmp.eq.s32.totalorder %s94, 0
    %s97 = sadd.s32 %s96, 1
    %s98 = scalar_select %p95, %s96, %s97
    %p101 = pneg %p95
    %p102 = scmp.eq.s32.totalorder %s13, 1
    %p103 = por %p101, %p102
    %p104 = scmp.ne.s32.totalorder %s96, %s99
    %p105 = scmp.eq.s32.totalorder %s13, 0
    %p106 = por %p104, %p105
    %p107 = scmp.ne.s32.totalorder %s96, %s99
    %p108 = scmp.eq.s32.totalorder %s18, 1
    %p109 = por %p107, %p108
    %p110 = scmp.ne.s32.totalorder %s99, %s100
    %p111 = scmp.eq.s32.totalorder %s18, 0
    %p112 = por %p110, %p111
    %p113 = scmp.ne.s32.totalorder %s99, %s100
    %p114 = scmp.eq.s32.totalorder %s19, 1
    %p115 = por %p113, %p114
    %p117 = scmp.ne.s32.totalorder %s100, %s116
    %p118 = scmp.eq.s32.totalorder %s19, 0
    %p119 = por %p117, %p118
    %s120 = ssub.s32 %s13, %s20
    %p121 = scmp.eq.s32.totalorder %s120, 0
    %s123 = sadd.s32 %s122, 1
    %s124 = scalar_select %p121, %s122, %s123
    %p127 = pneg %p121
    %p128 = scmp.eq.s32.totalorder %s13, 1
    %p129 = por %p127, %p128
    %p130 = scmp.ne.s32.totalorder %s122, %s125
    %p131 = scmp.eq.s32.totalorder %s13, 0
    %p132 = por %p130, %p131
    %p133 = scmp.ne.s32.totalorder %s122, %s125
    %p134 = scmp.eq.s32.totalorder %s18, 1
    %p135 = por %p133, %p134
    %p136 = scmp.ne.s32.totalorder %s125, %s126
    %p137 = scmp.eq.s32.totalorder %s18, 0
    %p138 = por %p136, %p137
    %p139 = scmp.ne.s32.totalorder %s125, %s126
    %p140 = scmp.eq.s32.totalorder %s19, 1
    %p141 = por %p139, %p140
    %p143 = scmp.ne.s32.totalorder %s126, %s142
    %p144 = scmp.eq.s32.totalorder %s19, 0
    %p145 = por %p143, %p144
    %s146 = ssub.s32 %s13, %s20
    %p147 = scmp.eq.s32.totalorder %s146, 0
    %s149 = sadd.s32 %s148, 1
    %s150 = scalar_select %p147, %s148, %s149
    %p153 = pneg %p147
    %p154 = scmp.eq.s32.totalorder %s13, 1
    %p155 = por %p153, %p154
    %p156 = scmp.ne.s32.totalorder %s148, %s151
    %p157 = scmp.eq.s32.totalorder %s13, 0
    %p158 = por %p156, %p157
    %p159 = scmp.ne.s32.totalorder %s148, %s151
    %p160 = scmp.eq.s32.totalorder %s18, 1
    %p161 = por %p159, %p160
    %p162 = scmp.ne.s32.totalorder %s151, %s152
    %p163 = scmp.eq.s32.totalorder %s18, 0
    %p164 = por %p162, %p163
    %p165 = scmp.ne.s32.totalorder %s151, %s152
    %p166 = scmp.eq.s32.totalorder %s19, 1
    %p167 = por %p165, %p166
    %p169 = scmp.ne.s32.totalorder %s152, %s168
    %p170 = scmp.eq.s32.totalorder %s19, 0
    %p171 = por %p169, %p170
    %s173 = sadd.s32 %s172, 1
    %p176 = scmp.eq.s32.totalorder %s13, 1
    %p177 = scmp.ne.s32.totalorder %s172, %s174
    %p178 = scmp.eq.s32.totalorder %s13, 0
    %p179 = por %p177, %p178
    %p180 = scmp.ne.s32.totalorder %s172, %s174
    %p181 = scmp.eq.s32.totalorder %s18, 1
    %p182 = por %p180, %p181
    %p183 = scmp.ne.s32.totalorder %s174, %s175
    %p184 = scmp.eq.s32.totalorder %s18, 0
    %p185 = por %p183, %p184
    %p186 = scmp.ne.s32.totalorder %s174, %s175
    %p187 = scmp.eq.s32.totalorder %s19, 1
    %p188 = por %p186, %p187
    %p190 = scmp.ne.s32.totalorder %s175, %s189
    %p191 = scmp.eq.s32.totalorder %s19, 0
    %p192 = por %p190, %p191
    %p193 = scmp.le.s32.totalorder 1, %s13
    %p194 = scmp.lt.s32.totalorder %s13, 3
    %p195 = pnand %p193, %p194
    %p196 = pneg %p195
    // Predicated region
    $region9: #{forward.14} parent=5 // pred_check
      _
    $region10: #{forward.14} parent=5 // pred_check_branch
      %198 = sbr.rel (%p195) target = $region12
    $region11: #{forward.14} parent=5 // pred_region
      %s199 = ssub.s32 %s13, 1
      // Predicated region
      $region13: #{forward.14} parent=11 // pred_check
        %p200 = pneg %p34
      $region14: #{forward.14} parent=11 // pred_check_branch
        %202 = sbr.rel (%p200) target = $region16
      $region15: #{forward.14} parent=11 // pred_region
        _
      $region16: #{forward.14} parent=11 // pred_fallthru
        _
    $region12: #{forward.14} parent=5 // pred_fallthru
      _
    %p203 = scmp.lt.s32.totalorder %s13, 2
    // Predicated region
    $region17: #{forward.14} parent=5 // pred_check
      %p204 = pneg %p203
    $region18: #{forward.14} parent=5 // pred_check_branch
      %206 = sbr.rel (%p204) target = $region20
    $region19: #{forward.14} parent=5 // pred_region
      // Predicated region
      $region21: #{forward.14} parent=19 // pred_check
        %p207 = pneg %p54
      $region22: #{forward.14} parent=19 // pred_check_branch
        %209 = sbr.rel (%p207) target = $region24
      $region23: #{forward.14} parent=19 // pred_region
        %p210 = scmp.lt.s32.totalorder %s13, 1
        %s211 = scalar_select %p210, %s13, 1
        %s212 = smul.addr %s211, 18
        %s213 = smul.addr %s212, 8
        %s214 = scalar_lea.vmem %s1, %s213
      $region24: #{forward.14} parent=19 // pred_fallthru
        _
      // Predicated region
      $region25: #{forward.14} parent=19 // pred_check
        %p215 = pneg %p80
      $region26: #{forward.14} parent=19 // pred_check_branch
        %217 = sbr.rel (%p215) target = $region28
      $region27: #{forward.14} parent=19 // pred_region
        %p218 = scmp.lt.s32.totalorder %s13, 1
        %s219 = scalar_select %p218, %s13, 1
        %s220 = smul.addr %s219, 18
        %s221 = smul.addr %s220, 8
        %s222 = scalar_lea.vmem %s2, %s221
      $region28: #{forward.14} parent=19 // pred_fallthru
        _
      // Predicated region
      $region29: #{forward.14} parent=19 // pred_check
        %p223 = pneg %p106
      $region30: #{forward.14} parent=19 // pred_check_branch
        %225 = sbr.rel (%p223) target = $region32
      $region31: #{forward.14} parent=19 // pred_region
        %p226 = scmp.lt.s32.totalorder %s13, 1
        %s227 = scalar_select %p226, %s13, 1
        %s228 = smul.addr %s227, 18
        %s229 = smul.addr %s228, 8
        %s230 = scalar_lea.vmem %s3, %s229
      $region32: #{forward.14} parent=19 // pred_fallthru
        _
      // Predicated region
      $region33: #{forward.14} parent=19 // pred_check
        %p231 = pneg %p132
      $region34: #{forward.14} parent=19 // pred_check_branch
        %233 = sbr.rel (%p231) target = $region36
      $region35: #{forward.14} parent=19 // pred_region
        %p234 = scmp.lt.s32.totalorder %s13, 1
        %s235 = scalar_select %p234, %s13, 1
        %s236 = smul.addr %s235, 18
        %s237 = smul.addr %s236, 8
        %s238 = scalar_lea.vmem %s4, %s237
      $region36: #{forward.14} parent=19 // pred_fallthru
        _
    $region20: #{forward.14} parent=5 // pred_fallthru
      _
    %p239 = scmp.le.s32.totalorder 1, %s13
    %p240 = scmp.lt.s32.totalorder %s13, 3
    %p241 = pnand %p239, %p240
    %p242 = pneg %p241
    // Predicated region
    $region37: #{forward.14} parent=5 // pred_check
      _
    $region38: #{forward.14} parent=5 // pred_check_branch
      %244 = sbr.rel (%p241) target = $region40
    $region39: #{forward.14} parent=5 // pred_region
      %s245 = ssub.s32 %s13, 1
      %p246 = pneg %p34
      %p247 = pneg %p31
      %p248 = scmp.lt.s32.totalorder %s18, 1
      %s249 = scalar_select %p248, %s18, 1
      %s250 = smul.addr %s249, 18
      %s251 = smul.addr %s250, 8
      %s252 = scalar_lea.vmem %s1, %s251
      %p253 = pneg %p60
      %p254 = pneg %p57
      %p255 = scmp.lt.s32.totalorder %s18, 1
      %s256 = scalar_select %p255, %s18, 1
      %s257 = smul.addr %s256, 18
      %s258 = smul.addr %s257, 8
      %s259 = scalar_lea.vmem %s2, %s258
      %p260 = pneg %p86
      %p261 = pneg %p83
      %p262 = scmp.lt.s32.totalorder %s18, 1
      %s263 = scalar_select %p262, %s18, 1
      %s264 = smul.addr %s263, 18
      %s265 = smul.addr %s264, 8
      %s266 = scalar_lea.vmem %s3, %s265
      %p267 = pneg %p112
      %p268 = pneg %p109
      %p269 = scmp.lt.s32.totalorder %s18, 1
      %s270 = scalar_select %p269, %s18, 1
      %s271 = smul.addr %s270, 18
      %s272 = smul.addr %s271, 8
      %s273 = scalar_lea.vmem %s4, %s272
      %p274 = pneg %p138
      %p275 = pneg %p135
      %p276 = pneg %p164
      %p277 = pneg %p161
      %p278 = scmp.lt.s32.totalorder %s18, 1
      %s279 = scalar_select %p278, %s18, 1
      %s280 = smul.addr %s279, 8
      %s281 = smul.addr %s280, 8
      %s282 = scalar_lea.vmem %s5, %s281
      %p283 = pneg %p185
      %p284 = pneg %p182
      %p285 = scmp.lt.s32.totalorder %s18, 1
      %s286 = scalar_select %p285, %s18, 1
      %s287 = smul.addr %s286, 18
      %s288 = smul.addr %s287, 8
      %s289 = scalar_lea.vmem %s1, %s288
      %p290 = scmp.lt.s32.totalorder %s18, 1
      %s291 = scalar_select %p290, %s18, 1
      %s292 = smul.addr %s291, 18
      %s293 = smul.addr %s292, 8
      %s294 = scalar_lea.vmem %s2, %s293
      %p295 = scmp.lt.s32.totalorder %s18, 1
      %s296 = scalar_select %p295, %s18, 1
      %s297 = smul.addr %s296, 18
      %s298 = smul.addr %s297, 8
      %s299 = scalar_lea.vmem %s3, %s298
      %p300 = scmp.lt.s32.totalorder %s18, 1
      %s301 = scalar_select %p300, %s18, 1
      %s302 = smul.addr %s301, 18
      %s303 = smul.addr %s302, 8
      %s304 = scalar_lea.vmem %s4, %s303
      %p305 = scmp.lt.s32.totalorder %s18, 1
      %s306 = scalar_select %p305, %s18, 1
      %s307 = smul.addr %s306, 8
      %s308 = smul.addr %s307, 8
      %s309 = scalar_lea.vmem %s5, %s308
      %p310 = scmp.eq.s32.totalorder %s18, 0
      // Predicated region
      $region41: #{forward.14} parent=39 // pred_check
        %p311 = pneg %p310
      $region42: #{forward.14} parent=39 // pred_check_branch
        %313 = sbr.rel (%p311) target = $region44
      $region43: #{forward.14} parent=39 // pred_region
        %314 = vst [vmem:[#allocation2] sm:$0x3] 0.0
      $region44: #{forward.14} parent=39 // pred_fallthru
        _
      %v315 = vld [vmem:[%s0] sm:$0x1]
      %v316 = vld [vmem:[%s0 + $0x1] sm:$0x1]
      %v317 = vld [vmem:[%s289] sm:$0xff]
      %v318 = vld [vmem:[%s289 + $0x8] sm:$0x1]
      %v319 = vld [vmem:[%s289 + $0x10] sm:$0xff]
      %v320 = vld [vmem:[%s289 + $0x18] sm:$0x1]
      %v321 = vld [vmem:[%s289 + $0x20] sm:$0xff]
      %v322 = vld [vmem:[%s289 + $0x28] sm:$0x1]
      %v323 = vld [vmem:[%s289 + $0x30] sm:$0xff]
      %v324 = vld [vmem:[%s289 + $0x38] sm:$0x1]
      %v325 = vld [vmem:[%s289 + $0x40] sm:$0xff]
      %v326 = vld [vmem:[%s289 + $0x48] sm:$0x1]
      %v327 = vld [vmem:[%s289 + $0x50] sm:$0xff]
      %v328 = vld [vmem:[%s289 + $0x58] sm:$0x1]
      %v329 = vld [vmem:[%s289 + $0x60] sm:$0xff]
      %v330 = vld [vmem:[%s289 + $0x68] sm:$0x1]
      %v331 = vld [vmem:[%s289 + $0x70] sm:$0xff]
      %v332 = vld [vmem:[%s289 + $0x78] sm:$0x1]
      %v333 = vld [vmem:[%s289 + $0x80] sm:$0xff]
      %v334 = vld [vmem:[%s289 + $0x88] sm:$0x1]
      %v335 = vperm.slane %v315, 0
      %v336 = vmul.f32 %v317, %v335
      %v337 = vmul.f32 %v318, %v335
      %v338 = vmul.f32 %v319, %v335
      %v339 = vmul.f32 %v320, %v335
      %v340 = vmul.f32 %v321, %v335
      %v341 = vmul.f32 %v322, %v335
      %v342 = vmul.f32 %v323, %v335
      %v343 = vmul.f32 %v324, %v335
      %v344 = vmul.f32 %v325, %v335
      %v345 = vmul.f32 %v326, %v335
      %v346 = vmul.f32 %v327, %v335
      %v347 = vmul.f32 %v328, %v335
      %v348 = vmul.f32 %v329, %v335
      %v349 = vmul.f32 %v330, %v335
      %v350 = vmul.f32 %v331, %v335
      %v351 = vmul.f32 %v332, %v335
      %v352 = vmul.f32 %v333, %v335
      %v353 = vmul.f32 %v334, %v335
      %v354 = vperm.slane %v316, 0
      %v355 = vadd.f32 %v336, %v354
      %v356 = vadd.f32 %v337, %v354
      %v357 = vadd.f32 %v338, %v354
      %v358 = vadd.f32 %v339, %v354
      %v359 = vadd.f32 %v340, %v354
      %v360 = vadd.f32 %v341, %v354
      %v361 = vadd.f32 %v342, %v354
      %v362 = vadd.f32 %v343, %v354
      %v363 = vadd.f32 %v344, %v354
      %v364 = vadd.f32 %v345, %v354
      %v365 = vadd.f32 %v346, %v354
      %v366 = vadd.f32 %v347, %v354
      %v367 = vadd.f32 %v348, %v354
      %v368 = vadd.f32 %v349, %v354
      %v369 = vadd.f32 %v350, %v354
      %v370 = vadd.f32 %v351, %v354
      %v371 = vadd.f32 %v352, %v354
      %v372 = vadd.f32 %v353, %v354
      %v373 = vmax.f32 %v355, 0.0
      %v374 = vmax.f32 %v356, 0.0
      %v375 = vmax.f32 %v357, 0.0
      %v376 = vmax.f32 %v358, 0.0
      %v377 = vmax.f32 %v359, 0.0
      %v378 = vmax.f32 %v360, 0.0
      %v379 = vmax.f32 %v361, 0.0
      %v380 = vmax.f32 %v362, 0.0
      %v381 = vmax.f32 %v363, 0.0
      %v382 = vmax.f32 %v364, 0.0
      %v383 = vmax.f32 %v365, 0.0
      %v384 = vmax.f32 %v366, 0.0
      %v385 = vmax.f32 %v367, 0.0
      %v386 = vmax.f32 %v368, 0.0
      %v387 = vmax.f32 %v369, 0.0
      %v388 = vmax.f32 %v370, 0.0
      %v389 = vmax.f32 %v371, 0.0
      %v390 = vmax.f32 %v372, 0.0
      %v391 = vld [vmem:[%s294] sm:$0xff]
      %v392 = vld [vmem:[%s294 + $0x10] sm:$0xff]
      %v393 = vld [vmem:[%s294 + $0x20] sm:$0xff]
      %v394 = vld [vmem:[%s294 + $0x30] sm:$0xff]
      %v395 = vld [vmem:[%s294 + $0x40] sm:$0xff]
      %v396 = vld [vmem:[%s294 + $0x50] sm:$0xff]
      %v397 = vld [vmem:[%s294 + $0x60] sm:$0xff]
      %v398 = vld [vmem:[%s294 + $0x70] sm:$0xff]
      %v399 = vld [vmem:[%s294 + $0x80] sm:$0xff]
      %v400 = vmul.f32 %v391, %v335
      %v401 = vmul.f32 %v392, %v335
      %v402 = vmul.f32 %v393, %v335
      %v403 = vmul.f32 %v394, %v335
      %v404 = vmul.f32 %v395, %v335
      %v405 = vmul.f32 %v396, %v335
      %v406 = vmul.f32 %v397, %v335
      %v407 = vmul.f32 %v398, %v335
      %v408 = vmul.f32 %v399, %v335
      %v409 = vadd.f32 %v400, %v354
      %v410 = vadd.f32 %v401, %v354
      %v411 = vadd.f32 %v402, %v354
      %v412 = vadd.f32 %v403, %v354
      %v413 = vadd.f32 %v404, %v354
      %v414 = vadd.f32 %v405, %v354
      %v415 = vadd.f32 %v406, %v354
      %v416 = vadd.f32 %v407, %v354
      %v417 = vadd.f32 %v408, %v354
      %v418 = vmax.f32 %v409, 0.0
      %v419 = vmax.f32 %v410, 0.0
      %v420 = vmax.f32 %v411, 0.0
      %v421 = vmax.f32 %v412, 0.0
      %v422 = vmax.f32 %v413, 0.0
      %v423 = vmax.f32 %v414, 0.0
      %v424 = vmax.f32 %v415, 0.0
      %v425 = vmax.f32 %v416, 0.0
      %v426 = vmax.f32 %v417, 0.0
      %v427 = vld [vmem:[%s299] sm:$0xff]
      %v428 = vld [vmem:[%s299 + $0x8] sm:$0x1]
      %v429 = vld [vmem:[%s299 + $0x10] sm:$0xff]
      %v430 = vld [vmem:[%s299 + $0x18] sm:$0x1]
      %v431 = vld [vmem:[%s299 + $0x20] sm:$0xff]
      %v432 = vld [vmem:[%s299 + $0x28] sm:$0x1]
      %v433 = vld [vmem:[%s299 + $0x30] sm:$0xff]
      %v434 = vld [vmem:[%s299 + $0x38] sm:$0x1]
      %v435 = vld [vmem:[%s299 + $0x40] sm:$0xff]
      %v436 = vld [vmem:[%s299 + $0x48] sm:$0x1]
      %v437 = vld [vmem:[%s299 + $0x50] sm:$0xff]
      %v438 = vld [vmem:[%s299 + $0x58] sm:$0x1]
      %v439 = vld [vmem:[%s299 + $0x60] sm:$0xff]
      %v440 = vld [vmem:[%s299 + $0x68] sm:$0x1]
      %v441 = vld [vmem:[%s299 + $0x70] sm:$0xff]
      %v442 = vld [vmem:[%s299 + $0x78] sm:$0x1]
      %v443 = vmul.f32 %v427, %v335
      %v444 = vmul.f32 %v428, %v335
      %v445 = vmul.f32 %v429, %v335
      %v446 = vmul.f32 %v430, %v335
      %v447 = vmul.f32 %v431, %v335
      %v448 = vmul.f32 %v432, %v335
      %v449 = vmul.f32 %v433, %v335
      %v450 = vmul.f32 %v434, %v335
      %v451 = vmul.f32 %v435, %v335
      %v452 = vmul.f32 %v436, %v335
      %v453 = vmul.f32 %v437, %v335
      %v454 = vmul.f32 %v438, %v335
      %v455 = vmul.f32 %v439, %v335
      %v456 = vmul.f32 %v440, %v335
      %v457 = vmul.f32 %v441, %v335
      %v458 = vmul.f32 %v442, %v335
      %v459 = vadd.f32 %v443, %v354
      %v460 = vadd.f32 %v444, %v354
      %v461 = vadd.f32 %v445, %v354
      %v462 = vadd.f32 %v446, %v354
      %v463 = vadd.f32 %v447, %v354
      %v464 = vadd.f32 %v448, %v354
      %v465 = vadd.f32 %v449, %v354
      %v466 = vadd.f32 %v450, %v354
      %v467 = vadd.f32 %v451, %v354
      %v468 = vadd.f32 %v452, %v354
      %v469 = vadd.f32 %v453, %v354
      %v470 = vadd.f32 %v454, %v354
      %v471 = vadd.f32 %v455, %v354
      %v472 = vadd.f32 %v456, %v354
      %v473 = vadd.f32 %v457, %v354
      %v474 = vadd.f32 %v458, %v354
      %v475 = vmax.f32 %v459, 0.0
      %v476 = vmax.f32 %v460, 0.0
      %v477 = vmax.f32 %v461, 0.0
      %v478 = vmax.f32 %v462, 0.0
      %v479 = vmax.f32 %v463, 0.0
      %v480 = vmax.f32 %v464, 0.0
      %v481 = vmax.f32 %v465, 0.0
      %v482 = vmax.f32 %v466, 0.0
      %v483 = vmax.f32 %v467, 0.0
      %v484 = vmax.f32 %v468, 0.0
      %v485 = vmax.f32 %v469, 0.0
      %v486 = vmax.f32 %v470, 0.0
      %v487 = vmax.f32 %v471, 0.0
      %v488 = vmax.f32 %v472, 0.0
      %v489 = vmax.f32 %v473, 0.0
      %v490 = vmax.f32 %v474, 0.0
      %v491 = vld [vmem:[%s304] sm:$0xff]
      %v492 = vld [vmem:[%s304 + $0x10] sm:$0xff]
      %v493 = vld [vmem:[%s304 + $0x20] sm:$0xff]
      %v494 = vld [vmem:[%s304 + $0x30] sm:$0xff]
      %v495 = vld [vmem:[%s304 + $0x40] sm:$0xff]
      %v496 = vld [vmem:[%s304 + $0x50] sm:$0xff]
      %v497 = vld [vmem:[%s304 + $0x60] sm:$0xff]
      %v498 = vld [vmem:[%s304 + $0x70] sm:$0xff]
      %v499 = vmul.f32 %v491, %v335
      %v500 = vmul.f32 %v492, %v335
      %v501 = vmul.f32 %v493, %v335
      %v502 = vmul.f32 %v494, %v335
      %v503 = vmul.f32 %v495, %v335
      %v504 = vmul.f32 %v496, %v335
      %v505 = vmul.f32 %v497, %v335
      %v506 = vmul.f32 %v498, %v335
      %v507 = vadd.f32 %v499, %v354
      %v508 = vadd.f32 %v500, %v354
      %v509 = vadd.f32 %v501, %v354
      %v510 = vadd.f32 %v502, %v354
      %v511 = vadd.f32 %v503, %v354
      %v512 = vadd.f32 %v504, %v354
      %v513 = vadd.f32 %v505, %v354
      %v514 = vadd.f32 %v506, %v354
      %v515 = vmax.f32 %v507, 0.0
      %v516 = vmax.f32 %v508, 0.0
      %v517 = vmax.f32 %v509, 0.0
      %v518 = vmax.f32 %v510, 0.0
      %v519 = vmax.f32 %v511, 0.0
      %v520 = vmax.f32 %v512, 0.0
      %v521 = vmax.f32 %v513, 0.0
      %v522 = vmax.f32 %v514, 0.0
      %vm539 = vcmask 1046528
      %v540 = vrot.slane %v373, 1
      %v541 = vrot.slane %v374, 1
      %v542 = vsel %vm539, %v540, %v541
      %v543 = vrot.slane %v375, 1
      %v544 = vrot.slane %v376, 1
      %v545 = vsel %vm539, %v543, %v544
      %v546 = vrot.slane %v377, 1
      %v547 = vrot.slane %v378, 1
      %v548 = vsel %vm539, %v546, %v547
      %v549 = vrot.slane %v379, 1
      %v550 = vrot.slane %v380, 1
      %v551 = vsel %vm539, %v549, %v550
      %v552 = vrot.slane %v381, 1
      %v553 = vrot.slane %v382, 1
      %v554 = vsel %vm539, %v552, %v553
      %v555 = vrot.slane %v383, 1
      %v556 = vrot.slane %v384, 1
      %v557 = vsel %vm539, %v555, %v556
      %v558 = vrot.slane %v385, 1
      %v559 = vrot.slane %v386, 1
      %v560 = vsel %vm539, %v558, %v559
      %v561 = vrot.slane %v387, 1
      %v562 = vrot.slane %v388, 1
      %v563 = vsel %vm539, %v561, %v562
      %v572 = vmax.f32 %v373, %v542
      %v573 = vmax.f32 %v375, %v545
      %v574 = vmax.f32 %v377, %v548
      %v575 = vmax.f32 %v379, %v551
      %v576 = vmax.f32 %v381, %v554
      %v577 = vmax.f32 %v383, %v557
      %v578 = vmax.f32 %v385, %v560
      %v579 = vmax.f32 %v387, %v563
      %v582 = vrot.slane %v389, 1
      %v583 = vrot.slane %v390, 1
      %v584 = vsel %vm539, %v582, %v583
      %v586 = vmax.f32 %v389, %v584
      %v587 = vmax.f32 %v418, %v419
      %v588 = vmax.f32 %v419, %v420
      %v589 = vmax.f32 %v420, %v421
      %v590 = vmax.f32 %v421, %v422
      %v591 = vmax.f32 %v422, %v423
      %v592 = vmax.f32 %v423, %v424
      %v593 = vmax.f32 %v424, %v425
      %v594 = vmax.f32 %v425, %v426
      %v611 = vrot.slane %v475, 1
      %v612 = vrot.slane %v476, 1
      %v613 = vsel %vm539, %v611, %v612
      %v614 = vrot.slane %v477, 1
      %v615 = vrot.slane %v478, 1
      %v616 = vsel %vm539, %v614, %v615
      %v617 = vrot.slane %v479, 1
      %v618 = vrot.slane %v480, 1
      %v619 = vsel %vm539, %v617, %v618
      %v620 = vrot.slane %v481, 1
      %v621 = vrot.slane %v482, 1
      %v622 = vsel %vm539, %v620, %v621
      %v623 = vrot.slane %v483, 1
      %v624 = vrot.slane %v484, 1
      %v625 = vsel %vm539, %v623, %v624
      %v626 = vrot.slane %v485, 1
      %v627 = vrot.slane %v486, 1
      %v628 = vsel %vm539, %v626, %v627
      %v629 = vrot.slane %v487, 1
      %v630 = vrot.slane %v488, 1
      %v631 = vsel %vm539, %v629, %v630
      %v632 = vrot.slane %v489, 1
      %v633 = vrot.slane %v490, 1
      %v634 = vsel %vm539, %v632, %v633
      %v643 = vmax.f32 %v475, %v613
      %v644 = vmax.f32 %v477, %v616
      %v645 = vmax.f32 %v479, %v619
      %v646 = vmax.f32 %v481, %v622
      %v647 = vmax.f32 %v483, %v625
      %v648 = vmax.f32 %v485, %v628
      %v649 = vmax.f32 %v487, %v631
      %v650 = vmax.f32 %v489, %v634
      %v651 = vmax.f32 %v572, %v573
      %v652 = vmax.f32 %v573, %v574
      %v653 = vmax.f32 %v574, %v575
      %v654 = vmax.f32 %v575, %v576
      %v655 = vmax.f32 %v576, %v577
      %v656 = vmax.f32 %v577, %v578
      %v657 = vmax.f32 %v578, %v579
      %v658 = vmax.f32 %v579, %v586
      %v659 = vmax.f32 %v587, %v643
      %v660 = vmax.f32 %v588, %v644
      %v661 = vmax.f32 %v589, %v645
      %v662 = vmax.f32 %v590, %v646
      %v663 = vmax.f32 %v591, %v647
      %v664 = vmax.f32 %v592, %v648
      %v665 = vmax.f32 %v593, %v649
      %v666 = vmax.f32 %v594, %v650
      %v667 = vmax.f32 %v651, %v659
      %v668 = vmax.f32 %v652, %v660
      %v669 = vmax.f32 %v653, %v661
      %v670 = vmax.f32 %v654, %v662
      %v671 = vmax.f32 %v655, %v663
      %v672 = vmax.f32 %v656, %v664
      %v673 = vmax.f32 %v657, %v665
      %v674 = vmax.f32 %v658, %v666
      %v675 = vmax.f32 %v667, %v515
      %v676 = vmax.f32 %v668, %v516
      %v677 = vmax.f32 %v669, %v517
      %v678 = vmax.f32 %v670, %v518
      %v679 = vmax.f32 %v671, %v519
      %v680 = vmax.f32 %v672, %v520
      %v681 = vmax.f32 %v673, %v521
      %v682 = vmax.f32 %v674, %v522
      %683 = vst [vmem:[%s309] sm:$0xff] %v675
      %684 = vst [vmem:[%s309 + $0x8] sm:$0xff] %v676
      %685 = vst [vmem:[%s309 + $0x10] sm:$0xff] %v677
      %686 = vst [vmem:[%s309 + $0x18] sm:$0xff] %v678
      %687 = vst [vmem:[%s309 + $0x20] sm:$0xff] %v679
      %688 = vst [vmem:[%s309 + $0x28] sm:$0xff] %v680
      %689 = vst [vmem:[%s309 + $0x30] sm:$0xff] %v681
      %690 = vst [vmem:[%s309 + $0x38] sm:$0xff] %v682
      %v691 = vld [vmem:[#allocation2] sm:$0x1]
      %v692 = vadd.f32 %v675, %v676
      %v693 = vadd.f32 %v692, %v677
      %v694 = vadd.f32 %v693, %v678
      %v695 = vadd.f32 %v694, %v679
      %v696 = vadd.f32 %v695, %v680
      %v697 = vadd.f32 %v696, %v681
      %v698 = vadd.f32 %v697, %v682
      %v699 = vrot.slane %v698, 4
      %v700 = vadd.f32 %v698, %v699
      %v701 = vrot.slane %v700, 2
      %v702 = vadd.f32 %v700, %v701
      %v703 = vrot.slane %v702, 1
      %v704 = vadd.f32 %v702, %v703
      %v705 = vadd.f32 %v691, %v704
      %706 = vst [vmem:[#allocation2] sm:$0x1] %v705
      %v707 = vld [vmem:[#allocation2 + $0x1] sm:$0x1]
      %v708 = vmul.f32 %v675, %v675
      %v709 = vmul.f32 %v676, %v676
      %v710 = vmul.f32 %v677, %v677
      %v711 = vmul.f32 %v678, %v678
      %v712 = vmul.f32 %v679, %v679
      %v713 = vmul.f32 %v680, %v680
      %v714 = vmul.f32 %v681, %v681
      %v715 = vmul.f32 %v682, %v682
      %v716 = vadd.f32 %v708, %v709
      %v717 = vadd.f32 %v716, %v710
      %v718 = vadd.f32 %v717, %v711
      %v719 = vadd.f32 %v718, %v712
      %v720 = vadd.f32 %v719, %v713
      %v721 = vadd.f32 %v720, %v714
      %v722 = vadd.f32 %v721, %v715
      %v723 = vrot.slane %v722, 4
      %v724 = vadd.f32 %v722, %v723
      %v725 = vrot.slane %v724, 2
      %v726 = vadd.f32 %v724, %v725
      %v727 = vrot.slane %v726, 1
      %v728 = vadd.f32 %v726, %v727
      %v729 = vadd.f32 %v707, %v728
      %730 = vst [vmem:[#allocation2 + $0x1] sm:$0x1] %v729
      %p731 = scmp.eq.s32.totalorder %s18, 1
      // Predicated region
      $region45: #{forward.14} parent=39 // pred_check
        %p732 = pneg %p731
      $region46: #{forward.14} parent=39 // pred_check_branch
        %734 = sbr.rel (%p732) target = $region48
      $region47: #{forward.14} parent=39 // pred_region
        %v735 = vld [vmem:[#allocation2] sm:$0x1]
        %v736 = vmul.f32 %v735, 0.0078125
        %v737 = vld [vmem:[#allocation2 + $0x1] sm:$0x1]
        %v738 = vmul.f32 %v737, 0.0078125
        %v739 = vmul.f32 %v736, %v736
        %v740 = vsub.f32 %v738, %v739
        %741 = vst [vmem:[%s6] sm:$0x1] %v736
        %742 = vst [vmem:[%s6 + $0x1] sm:$0x1] %v740
      $region48: #{forward.14} parent=39 // pred_fallthru
        _
      %p743 = scmp.lt.s32.totalorder %s18, 1
      %s744 = scalar_select %p743, %s18, 1
      %s745 = smul.addr %s744, 8
      %s746 = smul.addr %s745, 8
      %s747 = scalar_lea.vmem %s5, %s746
      // Predicated region
      $region49: #{forward.14} parent=39 // pred_check
        %p748 = pneg %p161
      $region50: #{forward.14} parent=39 // pred_check_branch
        %750 = sbr.rel (%p748) target = $region52
      $region51: #{forward.14} parent=39 // pred_region
        _
      $region52: #{forward.14} parent=39 // pred_fallthru
        _
      // Predicated region
      $region53: #{forward.14} parent=39 // pred_check
        %p751 = pneg %p182
      $region54: #{forward.14} parent=39 // pred_check_branch
        %753 = sbr.rel (%p751) target = $region56
      $region55: #{forward.14} parent=39 // pred_region
        _
      $region56: #{forward.14} parent=39 // pred_fallthru
        _
      // Predicated region
      $region57: #{forward.14} parent=39 // pred_check
        %p754 = pneg %p182
      $region58: #{forward.14} parent=39 // pred_check_branch
        %756 = sbr.rel (%p754) target = $region60
      $region59: #{forward.14} parent=39 // pred_region
        _
      $region60: #{forward.14} parent=39 // pred_fallthru
        _
    $region40: #{forward.14} parent=5 // pred_fallthru
      _
    %p757 = scmp.le.s32.totalorder 2, %s13
    // Predicated region
    $region61: #{forward.14} parent=5 // pred_check
      %p758 = pneg %p757
    $region62: #{forward.14} parent=5 // pred_check_branch
      %760 = sbr.rel (%p758) target = $region64
    $region63: #{forward.14} parent=5 // pred_region
      %s761 = ssub.s32 %s13, 2
      // Predicated region
      $region65: #{forward.14} parent=63 // pred_check
        %p762 = pneg %p167
      $region66: #{forward.14} parent=63 // pred_check_branch
        %764 = sbr.rel (%p762) target = $region68
      $region67: #{forward.14} parent=63 // pred_region
        %p765 = scmp.lt.s32.totalorder %s19, 1
        %s766 = scalar_select %p765, %s19, 1
        %s767 = smul.addr %s766, 8
        %s768 = smul.addr %s767, 8
        %s769 = scalar_lea.vmem %s5, %s768
      $region68: #{forward.14} parent=63 // pred_fallthru
        _
    $region64: #{forward.14} parent=5 // pred_fallthru
      _
  $region6: #{forward.14} parent=0 // loop_footer
    %s17 = sadd.s32 1, %s13
  $region7: #{forward.14} parent=0 // loop_footer_branch
    %12 = sbr.rel target = $region3
  $region8: #{forward.14} parent=0 // loop_exit
    _

// kernel: forward.15
$region0: #{forward.15}
  #allocation0 [shape = 'u32[]', space=smem, size = 0x4, offset = 0x4, fixed_abs, tag = 'smem constant byte address 0x4 - core index']
  #allocation1 [shape = 'u32[72,128]{1,0:T(1,128)}', space=vmem, size = 0x9000, scoped, tag = 'internal scratch']
  #allocation2 [shape = 'f32[128,128]{1,0:T(8,128)}', space=vmem, size = 0x10000, scoped, tag = 'scratch operand']
  #allocation3 [shape = 'f32[2,128]{1,0:T(2,128)}', space=vmem, size = 0x400, scoped, tag = 'scratch operand']
  %s0 = inlined_call_operand.vmem [shape: f32[2,128], index: 0, kind: input, shape index: {}]
  %s1 = inlined_call_operand.vmem [shape: f32[128,128], index: 1, kind: input, shape index: {}]
  %s2 = inlined_call_operand.vmem [shape: bf16[128,128], index: 2, kind: input, shape index: {}]
  %s3 = inlined_call_operand.vmem [shape: f32[128,128], index: 3, kind: output, shape index: {0}]
  %s4 = inlined_call_operand.vmem [shape: f32[2,128], index: 4, kind: output, shape index: {1}]
  %5 = xla_tuple %s3, %s4
  %s6 = sld [smem:[#allocation0]]
  $region46: #{forward.15} parent=0
    _
  %s8 = ssub.s32 1, %s6
  %s9 = scalar_select 0, %s8, %s6
  // Predicated region
  $region2: #{forward.15} parent=0 // pred_check
    _
  $region3: #{forward.15} parent=0 // pred_check_branch
    %11 = sbr.rel (0) target = $region5
  $region4: #{forward.15} parent=0 // pred_region
    _
  $region5: #{forward.15} parent=0 // pred_fallthru
    _
  // Predicated region
  $region6: #{forward.15} parent=0 // pred_check
    _
  $region7: #{forward.15} parent=0 // pred_check_branch
    %13 = sbr.rel (0) target = $region9
  $region8: #{forward.15} parent=0 // pred_region
    _
  $region9: #{forward.15} parent=0 // pred_fallthru
    _
  // Predicated region
  $region10: #{forward.15} parent=0 // pred_check
    _
  $region11: #{forward.15} parent=0 // pred_check_branch
    %15 = sbr.rel (0) target = $region13
  $region12: #{forward.15} parent=0 // pred_region
    _
  $region13: #{forward.15} parent=0 // pred_fallthru
    _
  %p16 = scmp.eq.s32.totalorder 0, 0
  // Predicated region
  $region14: #{forward.15} parent=0 // pred_check
    %p17 = pneg %p16
  $region15: #{forward.15} parent=0 // pred_check_branch
    %19 = sbr.rel (%p17) target = $region17
  $region16: #{forward.15} parent=0 // pred_region
    %20 = vst [vmem:[#allocation2] sm:$0xff] 0.0
    %21 = vst [vmem:[#allocation2 + $0x8] sm:$0xff] 0.0
    %22 = vst [vmem:[#allocation2 + $0x10] sm:$0xff] 0.0
    %23 = vst [vmem:[#allocation2 + $0x18] sm:$0xff] 0.0
    %24 = vst [vmem:[#allocation2 + $0x20] sm:$0xff] 0.0
    %25 = vst [vmem:[#allocation2 + $0x28] sm:$0xff] 0.0
    %26 = vst [vmem:[#allocation2 + $0x30] sm:$0xff] 0.0
    %27 = vst [vmem:[#allocation2 + $0x38] sm:$0xff] 0.0
    %28 = vst [vmem:[#allocation2 + $0x40] sm:$0xff] 0.0
    %29 = vst [vmem:[#allocation2 + $0x48] sm:$0xff] 0.0
    %30 = vst [vmem:[#allocation2 + $0x50] sm:$0xff] 0.0
    %31 = vst [vmem:[#allocation2 + $0x58] sm:$0xff] 0.0
    %32 = vst [vmem:[#allocation2 + $0x60] sm:$0xff] 0.0
    %33 = vst [vmem:[#allocation2 + $0x68] sm:$0xff] 0.0
    %34 = vst [vmem:[#allocation2 + $0x70] sm:$0xff] 0.0
    %35 = vst [vmem:[#allocation2 + $0x78] sm:$0xff] 0.0
  $region17: #{forward.15} parent=0 // pred_fallthru
    _
  %p36 = scmp.eq.s32.totalorder 0, 0
  %p37 = pnand %p36, %p16
  %p38 = pneg %p37
  // Predicated region
  $region18: #{forward.15} parent=0 // pred_check
    _
  $region19: #{forward.15} parent=0 // pred_check_branch
    %40 = sbr.rel (%p37) target = $region21
  $region20: #{forward.15} parent=0 // pred_region
    %41 = vst [vmem:[#allocation3] sm:$0x3] 0.0
  $region21: #{forward.15} parent=0 // pred_fallthru
    _
  %v42 = vld [vmem:[%s1] sm:$0xff]
  %v43 = vld [vmem:[%s1 + $0x8] sm:$0xff]
  %v44 = vld [vmem:[%s1 + $0x10] sm:$0xff]
  %v45 = vld [vmem:[%s1 + $0x18] sm:$0xff]
  %v46 = vld [vmem:[%s1 + $0x20] sm:$0xff]
  %v47 = vld [vmem:[%s1 + $0x28] sm:$0xff]
  %v48 = vld [vmem:[%s1 + $0x30] sm:$0xff]
  %v49 = vld [vmem:[%s1 + $0x38] sm:$0xff]
  %v50 = vld [vmem:[%s1 + $0x40] sm:$0xff]
  %v51 = vld [vmem:[%s1 + $0x48] sm:$0xff]
  %v52 = vld [vmem:[%s1 + $0x50] sm:$0xff]
  %v53 = vld [vmem:[%s1 + $0x58] sm:$0xff]
  %v54 = vld [vmem:[%s1 + $0x60] sm:$0xff]
  %v55 = vld [vmem:[%s1 + $0x68] sm:$0xff]
  %v56 = vld [vmem:[%s1 + $0x70] sm:$0xff]
  %v57 = vld [vmem:[%s1 + $0x78] sm:$0xff]
  %v58 = vld [vmem:[%s0] sm:$0x1]
  %v59 = vperm.slane %v58, 0
  %v60 = vmul.f32 %v42, %v59
  %v61 = vmul.f32 %v43, %v59
  %v62 = vmul.f32 %v44, %v59
  %v63 = vmul.f32 %v45, %v59
  %v64 = vmul.f32 %v46, %v59
  %v65 = vmul.f32 %v47, %v59
  %v66 = vmul.f32 %v48, %v59
  %v67 = vmul.f32 %v49, %v59
  %v68 = vmul.f32 %v50, %v59
  %v69 = vmul.f32 %v51, %v59
  %v70 = vmul.f32 %v52, %v59
  %v71 = vmul.f32 %v53, %v59
  %v72 = vmul.f32 %v54, %v59
  %v73 = vmul.f32 %v55, %v59
  %v74 = vmul.f32 %v56, %v59
  %v75 = vmul.f32 %v57, %v59
  %v76 = vld [vmem:[%s0 + $0x1] sm:$0x1]
  %v77 = vperm.slane %v76, 0
  %v78 = vadd.f32 %v60, %v77
  %v79 = vadd.f32 %v61, %v77
  %v80 = vadd.f32 %v62, %v77
  %v81 = vadd.f32 %v63, %v77
  %v82 = vadd.f32 %v64, %v77
  %v83 = vadd.f32 %v65, %v77
  %v84 = vadd.f32 %v66, %v77
  %v85 = vadd.f32 %v67, %v77
  %v86 = vadd.f32 %v68, %v77
  %v87 = vadd.f32 %v69, %v77
  %v88 = vadd.f32 %v70, %v77
  %v89 = vadd.f32 %v71, %v77
  %v90 = vadd.f32 %v72, %v77
  %v91 = vadd.f32 %v73, %v77
  %v92 = vadd.f32 %v74, %v77
  %v93 = vadd.f32 %v75, %v77
  %v94 = vmax.f32 %v78, 0.0
  %v95 = vmax.f32 %v79, 0.0
  %v96 = vmax.f32 %v80, 0.0
  %v97 = vmax.f32 %v81, 0.0
  %v98 = vmax.f32 %v82, 0.0
  %v99 = vmax.f32 %v83, 0.0
  %v100 = vmax.f32 %v84, 0.0
  %v101 = vmax.f32 %v85, 0.0
  %v102 = vmax.f32 %v86, 0.0
  %v103 = vmax.f32 %v87, 0.0
  %v104 = vmax.f32 %v88, 0.0
  %v105 = vmax.f32 %v89, 0.0
  %v106 = vmax.f32 %v90, 0.0
  %v107 = vmax.f32 %v91, 0.0
  %v108 = vmax.f32 %v92, 0.0
  %v109 = vmax.f32 %v93, 0.0
  %v110 = vld [vmem:[#allocation2] sm:$0xff]
  %v111 = vld [vmem:[#allocation2 + $0x8] sm:$0xff]
  %v112 = vld [vmem:[#allocation2 + $0x10] sm:$0xff]
  %v113 = vld [vmem:[#allocation2 + $0x18] sm:$0xff]
  %v114 = vld [vmem:[#allocation2 + $0x20] sm:$0xff]
  %v115 = vld [vmem:[#allocation2 + $0x28] sm:$0xff]
  %v116 = vld [vmem:[#allocation2 + $0x30] sm:$0xff]
  %v117 = vld [vmem:[#allocation2 + $0x38] sm:$0xff]
  %v118 = vld [vmem:[#allocation2 + $0x40] sm:$0xff]
  %v119 = vld [vmem:[#allocation2 + $0x48] sm:$0xff]
  %v120 = vld [vmem:[#allocation2 + $0x50] sm:$0xff]
  %v121 = vld [vmem:[#allocation2 + $0x58] sm:$0xff]
  %v122 = vld [vmem:[#allocation2 + $0x60] sm:$0xff]
  %v123 = vld [vmem:[#allocation2 + $0x68] sm:$0xff]
  %v124 = vld [vmem:[#allocation2 + $0x70] sm:$0xff]
  %v125 = vld [vmem:[#allocation2 + $0x78] sm:$0xff]
  %v126 = vpack.c.bf16 %v95, %v94
  %v127 = vpack.c.bf16 %v97, %v96
  %v128 = vpack.c.bf16 %v99, %v98
  %v129 = vpack.c.bf16 %v101, %v100
  %v130 = vpack.c.bf16 %v103, %v102
  %v131 = vpack.c.bf16 %v105, %v104
  %v132 = vpack.c.bf16 %v107, %v106
  %v133 = vpack.c.bf16 %v109, %v108
  %v134 = vld [vmem:[%s2] sm:$0xf]
  %v135 = vld [vmem:[%s2 + $0x4] sm:$0xf]
  %v136 = vld [vmem:[%s2 + $0x8] sm:$0xf]
  %v137 = vld [vmem:[%s2 + $0xc] sm:$0xf]
  %v138 = vld [vmem:[%s2 + $0x10] sm:$0xf]
  %v139 = vld [vmem:[%s2 + $0x14] sm:$0xf]
  %v140 = vld [vmem:[%s2 + $0x18] sm:$0xf]
  %v141 = vld [vmem:[%s2 + $0x1c] sm:$0xf]
  %v142 = vld [vmem:[%s2 + $0x20] sm:$0xf]
  %v143 = vld [vmem:[%s2 + $0x24] sm:$0xf]
  %v144 = vld [vmem:[%s2 + $0x28] sm:$0xf]
  %v145 = vld [vmem:[%s2 + $0x2c] sm:$0xf]
  %v146 = vld [vmem:[%s2 + $0x30] sm:$0xf]
  %v147 = vld [vmem:[%s2 + $0x34] sm:$0xf]
  %v148 = vld [vmem:[%s2 + $0x38] sm:$0xf]
  %v149 = vld [vmem:[%s2 + $0x3c] sm:$0xf]
  %v166 = vunpack.c.l.b16 %v134
  %v167 = vunpack.c.l.b16 %v135
  %v168 = vunpack.c.l.b16 %v136
  %v169 = vunpack.c.l.b16 %v137
  %v170 = vunpack.c.l.b16 %v138
  %v171 = vunpack.c.l.b16 %v139
  %v172 = vunpack.c.l.b16 %v140
  %v173 = vunpack.c.l.b16 %v141
  %v174 = vunpack.c.l.b16 %v142
  %v175 = vunpack.c.l.b16 %v143
  %v176 = vunpack.c.l.b16 %v144
  %v177 = vunpack.c.l.b16 %v145
  %v178 = vunpack.c.l.b16 %v146
  %v179 = vunpack.c.l.b16 %v147
  %v180 = vunpack.c.l.b16 %v148
  %v181 = vunpack.c.l.b16 %v149
  %v182 = vpack.c.b16 %v167, %v166
  %v183 = vpack.c.b16 %v169, %v168
  %v184 = vpack.c.b16 %v171, %v170
  %v185 = vpack.c.b16 %v173, %v172
  %v186 = vpack.c.b16 %v175, %v174
  %v187 = vpack.c.b16 %v177, %v176
  %v188 = vpack.c.b16 %v179, %v178
  %v189 = vpack.c.b16 %v181, %v180
  %198 = vmatpush.bf16.msra.mxu0 %v189
  %199 = vmatpush.bf16.msra.mxu0 %v188
  %200 = vmatpush.bf16.msra.mxu0 %v187
  %201 = vmatpush.bf16.msra.mxu0 %v186
  %202 = vmatpush.bf16.msra.mxu0 %v185
  %203 = vmatpush.bf16.msra.mxu0 %v184
  %204 = vmatpush.bf16.msra.mxu0 %v183
  %205 = vmatpush.bf16.msra.mxu0 %v182
  %206 = vmatmul.bf16.gmra.mxu0 %v126
  %v207 = vpop.f32.mrf.mxu0
  %v208 = vadd.f32 0.0, %v207
  %v209 = vpop.f32.mrf.mxu0
  %v210 = vadd.f32 0.0, %v209
  %211 = vmatmul.bf16.gmra.mxu0 %v127
  %v212 = vpop.f32.mrf.mxu0
  %v213 = vadd.f32 0.0, %v212
  %v214 = vpop.f32.mrf.mxu0
  %v215 = vadd.f32 0.0, %v214
  %216 = vmatmul.bf16.gmra.mxu0 %v128
  %v217 = vpop.f32.mrf.mxu0
  %v218 = vadd.f32 0.0, %v217
  %v219 = vpop.f32.mrf.mxu0
  %v220 = vadd.f32 0.0, %v219
  %221 = vmatmul.bf16.gmra.mxu0 %v129
  %v222 = vpop.f32.mrf.mxu0
  %v223 = vadd.f32 0.0, %v222
  %v224 = vpop.f32.mrf.mxu0
  %v225 = vadd.f32 0.0, %v224
  %226 = vmatmul.bf16.gmra.mxu0 %v130
  %v227 = vpop.f32.mrf.mxu0
  %v228 = vadd.f32 0.0, %v227
  %v229 = vpop.f32.mrf.mxu0
  %v230 = vadd.f32 0.0, %v229
  %231 = vmatmul.bf16.gmra.mxu0 %v131
  %v232 = vpop.f32.mrf.mxu0
  %v233 = vadd.f32 0.0, %v232
  %v234 = vpop.f32.mrf.mxu0
  %v235 = vadd.f32 0.0, %v234
  %236 = vmatmul.bf16.gmra.mxu0 %v132
  %v237 = vpop.f32.mrf.mxu0
  %v238 = vadd.f32 0.0, %v237
  %v239 = vpop.f32.mrf.mxu0
  %v240 = vadd.f32 0.0, %v239
  %241 = vmatmul.bf16.gmra.mxu0 %v133
  %v242 = vpop.f32.mrf.mxu0
  %v243 = vadd.f32 0.0, %v242
  %v244 = vpop.f32.mrf.mxu0
  %v245 = vadd.f32 0.0, %v244
  %246 = vdwg.mxu0
  %v247 = vadd.f32 %v110, %v208
  %v248 = vadd.f32 %v111, %v210
  %v249 = vadd.f32 %v112, %v213
  %v250 = vadd.f32 %v113, %v215
  %v251 = vadd.f32 %v114, %v218
  %v252 = vadd.f32 %v115, %v220
  %v253 = vadd.f32 %v116, %v223
  %v254 = vadd.f32 %v117, %v225
  %v255 = vadd.f32 %v118, %v228
  %v256 = vadd.f32 %v119, %v230
  %v257 = vadd.f32 %v120, %v233
  %v258 = vadd.f32 %v121, %v235
  %v259 = vadd.f32 %v122, %v238
  %v260 = vadd.f32 %v123, %v240
  %v261 = vadd.f32 %v124, %v243
  %v262 = vadd.f32 %v125, %v245
  %263 = vst [vmem:[#allocation2] sm:$0xff] %v247
  %264 = vst [vmem:[#allocation2 + $0x8] sm:$0xff] %v248
  %265 = vst [vmem:[#allocation2 + $0x10] sm:$0xff] %v249
  %266 = vst [vmem:[#allocation2 + $0x18] sm:$0xff] %v250
  %267 = vst [vmem:[#allocation2 + $0x20] sm:$0xff] %v251
  %268 = vst [vmem:[#allocation2 + $0x28] sm:$0xff] %v252
  %269 = vst [vmem:[#allocation2 + $0x30] sm:$0xff] %v253
  %270 = vst [vmem:[#allocation2 + $0x38] sm:$0xff] %v254
  %271 = vst [vmem:[#allocation2 + $0x40] sm:$0xff] %v255
  %272 = vst [vmem:[#allocation2 + $0x48] sm:$0xff] %v256
  %273 = vst [vmem:[#allocation2 + $0x50] sm:$0xff] %v257
  %274 = vst [vmem:[#allocation2 + $0x58] sm:$0xff] %v258
  %275 = vst [vmem:[#allocation2 + $0x60] sm:$0xff] %v259
  %276 = vst [vmem:[#allocation2 + $0x68] sm:$0xff] %v260
  %277 = vst [vmem:[#allocation2 + $0x70] sm:$0xff] %v261
  %278 = vst [vmem:[#allocation2 + $0x78] sm:$0xff] %v262
  // Predicated region
  $region22: #{forward.15} parent=0 // pred_check
    %p279 = pneg %p16
  $region23: #{forward.15} parent=0 // pred_check_branch
    %281 = sbr.rel (%p279) target = $region25
  $region24: #{forward.15} parent=0 // pred_region
    %v282 = vld [vmem:[#allocation2] sm:$0xff]
    %v283 = vld [vmem:[#allocation2 + $0x8] sm:$0xff]
    %v284 = vld [vmem:[#allocation2 + $0x10] sm:$0xff]
    %v285 = vld [vmem:[#allocation2 + $0x18] sm:$0xff]
    %v286 = vld [vmem:[#allocation2 + $0x20] sm:$0xff]
    %v287 = vld [vmem:[#allocation2 + $0x28] sm:$0xff]
    %v288 = vld [vmem:[#allocation2 + $0x30] sm:$0xff]
    %v289 = vld [vmem:[#allocation2 + $0x38] sm:$0xff]
    %v290 = vld [vmem:[#allocation2 + $0x40] sm:$0xff]
    %v291 = vld [vmem:[#allocation2 + $0x48] sm:$0xff]
    %v292 = vld [vmem:[#allocation2 + $0x50] sm:$0xff]
    %v293 = vld [vmem:[#allocation2 + $0x58] sm:$0xff]
    %v294 = vld [vmem:[#allocation2 + $0x60] sm:$0xff]
    %v295 = vld [vmem:[#allocation2 + $0x68] sm:$0xff]
    %v296 = vld [vmem:[#allocation2 + $0x70] sm:$0xff]
    %v297 = vld [vmem:[#allocation2 + $0x78] sm:$0xff]
    %298 = vst [vmem:[%s3] sm:$0xff] %v282
    %299 = vst [vmem:[%s3 + $0x8] sm:$0xff] %v283
    %300 = vst [vmem:[%s3 + $0x10] sm:$0xff] %v284
    %301 = vst [vmem:[%s3 + $0x18] sm:$0xff] %v285
    %302 = vst [vmem:[%s3 + $0x20] sm:$0xff] %v286
    %303 = vst [vmem:[%s3 + $0x28] sm:$0xff] %v287
    %304 = vst [vmem:[%s3 + $0x30] sm:$0xff] %v288
    %305 = vst [vmem:[%s3 + $0x38] sm:$0xff] %v289
    %306 = vst [vmem:[%s3 + $0x40] sm:$0xff] %v290
    %307 = vst [vmem:[%s3 + $0x48] sm:$0xff] %v291
    %308 = vst [vmem:[%s3 + $0x50] sm:$0xff] %v292
    %309 = vst [vmem:[%s3 + $0x58] sm:$0xff] %v293
    %310 = vst [vmem:[%s3 + $0x60] sm:$0xff] %v294
    %311 = vst [vmem:[%s3 + $0x68] sm:$0xff] %v295
    %312 = vst [vmem:[%s3 + $0x70] sm:$0xff] %v296
    %313 = vst [vmem:[%s3 + $0x78] sm:$0xff] %v297
    %v314 = vld [vmem:[#allocation3] sm:$0x1]
    %v315 = vadd.f32 %v282, %v283
    %v316 = vadd.f32 %v315, %v284
    %v317 = vadd.f32 %v316, %v285
    %v318 = vadd.f32 %v317, %v286
    %v319 = vadd.f32 %v318, %v287
    %v320 = vadd.f32 %v319, %v288
    %v321 = vadd.f32 %v320, %v289
    %v322 = vadd.f32 %v321, %v290
    %v323 = vadd.f32 %v322, %v291
    %v324 = vadd.f32 %v323, %v292
    %v325 = vadd.f32 %v324, %v293
    %v326 = vadd.f32 %v325, %v294
    %v327 = vadd.f32 %v326, %v295
    %v328 = vadd.f32 %v327, %v296
    %v329 = vadd.f32 %v328, %v297
    %v330 = vrot.slane %v329, 4
    %v331 = vadd.f32 %v329, %v330
    %v332 = vrot.slane %v331, 2
    %v333 = vadd.f32 %v331, %v332
    %v334 = vrot.slane %v333, 1
    %v335 = vadd.f32 %v333, %v334
    %v336 = vadd.f32 %v314, %v335
    %337 = vst [vmem:[#allocation3] sm:$0x1] %v336
    %v338 = vld [vmem:[#allocation3 + $0x1] sm:$0x1]
    %v339 = vmul.f32 %v282, %v282
    %v340 = vmul.f32 %v283, %v283
    %v341 = vmul.f32 %v284, %v284
    %v342 = vmul.f32 %v285, %v285
    %v343 = vmul.f32 %v286, %v286
    %v344 = vmul.f32 %v287, %v287
    %v345 = vmul.f32 %v288, %v288
    %v346 = vmul.f32 %v289, %v289
    %v347 = vmul.f32 %v290, %v290
    %v348 = vmul.f32 %v291, %v291
    %v349 = vmul.f32 %v292, %v292
    %v350 = vmul.f32 %v293, %v293
    %v351 = vmul.f32 %v294, %v294
    %v352 = vmul.f32 %v295, %v295
    %v353 = vmul.f32 %v296, %v296
    %v354 = vmul.f32 %v297, %v297
    %v355 = vadd.f32 %v339, %v340
    %v356 = vadd.f32 %v355, %v341
    %v357 = vadd.f32 %v356, %v342
    %v358 = vadd.f32 %v357, %v343
    %v359 = vadd.f32 %v358, %v344
    %v360 = vadd.f32 %v359, %v345
    %v361 = vadd.f32 %v360, %v346
    %v362 = vadd.f32 %v361, %v347
    %v363 = vadd.f32 %v362, %v348
    %v364 = vadd.f32 %v363, %v349
    %v365 = vadd.f32 %v364, %v350
    %v366 = vadd.f32 %v365, %v351
    %v367 = vadd.f32 %v366, %v352
    %v368 = vadd.f32 %v367, %v353
    %v369 = vadd.f32 %v368, %v354
    %v370 = vrot.slane %v369, 4
    %v371 = vadd.f32 %v369, %v370
    %v372 = vrot.slane %v371, 2
    %v373 = vadd.f32 %v371, %v372
    %v374 = vrot.slane %v373, 1
    %v375 = vadd.f32 %v373, %v374
    %v376 = vadd.f32 %v338, %v375
    %377 = vst [vmem:[#allocation3 + $0x1] sm:$0x1] %v376
    // Predicated region
    $region26: #{forward.15} parent=24 // pred_check
      %p378 = pneg %p36
    $region27: #{forward.15} parent=24 // pred_check_branch
      %380 = sbr.rel (%p378) target = $region29
    $region28: #{forward.15} parent=24 // pred_region
      %v381 = vld [vmem:[#allocation3] sm:$0x1]
      %v382 = vmul.f32 %v381, 0.0078125
      %v383 = vld [vmem:[#allocation3 + $0x1] sm:$0x1]
      %v384 = vmul.f32 %v383, 0.0078125
      %v385 = vmul.f32 %v382, %v382
      %v386 = vsub.f32 %v384, %v385
      %387 = vst [vmem:[%s4] sm:$0x1] %v382
      %388 = vst [vmem:[%s4 + $0x1] sm:$0x1] %v386
    $region29: #{forward.15} parent=24 // pred_fallthru
      _
  $region25: #{forward.15} parent=0 // pred_fallthru
    _
  // Predicated region
  $region30: #{forward.15} parent=0 // pred_check
    _
  $region31: #{forward.15} parent=0 // pred_check_branch
    %390 = sbr.rel (0) target = $region33
  $region32: #{forward.15} parent=0 // pred_region
    _
  $region33: #{forward.15} parent=0 // pred_fallthru
    _
  // Predicated region
  $region34: #{forward.15} parent=0 // pred_check
    _
  $region35: #{forward.15} parent=0 // pred_check_branch
    %392 = sbr.rel (0) target = $region37
  $region36: #{forward.15} parent=0 // pred_region
    _
  $region37: #{forward.15} parent=0 // pred_fallthru
    _
  // Predicated region
  $region38: #{forward.15} parent=0 // pred_check
    _
  $region39: #{forward.15} parent=0 // pred_check_branch
    %394 = sbr.rel (0) target = $region41
  $region40: #{forward.15} parent=0 // pred_region
    _
  $region41: #{forward.15} parent=0 // pred_fallthru
    _
  // Predicated region
  $region42: #{forward.15} parent=0 // pred_check
    _
  $region43: #{forward.15} parent=0 // pred_check_branch
    %396 = sbr.rel (0) target = $region45
  $region44: #{forward.15} parent=0 // pred_region
    _
  $region45: #{forward.15} parent=0 // pred_fallthru
    _

// kernel: forward.19
$region0: #{forward.19}
  #allocation0 [shape = 'u32[]', space=smem, size = 0x4, offset = 0x4, fixed_abs, tag = 'smem constant byte address 0x4 - core index']
  #allocation1 [shape = 'u32[72,128]{1,0:T(1,128)}', space=vmem, size = 0x9000, scoped, tag = 'internal scratch']
  #allocation2 [shape = 'f32[128,128]{1,0:T(8,128)}', space=vmem, size = 0x10000, scoped, tag = 'scratch operand']
  %s0 = inlined_call_operand.vmem [shape: f32[2,128], index: 0, kind: input, shape index: {}]
  %s1 = inlined_call_operand.vmem [shape: f32[128,128], index: 1, kind: input, shape index: {}]
  %s2 = inlined_call_operand.vmem [shape: bf16[128,128], index: 2, kind: input, shape index: {}]
  %s3 = inlined_call_operand.vmem [shape: f32[128,128], index: 3, kind: output, shape index: {}]
  %s4 = sld [smem:[#allocation0]]
  $region30: #{forward.19} parent=0
    _
  %s6 = ssub.s32 1, %s4
  %s7 = scalar_select 0, %s6, %s4
  // Predicated region
  $region2: #{forward.19} parent=0 // pred_check
    _
  $region3: #{forward.19} parent=0 // pred_check_branch
    %9 = sbr.rel (0) target = $region5
  $region4: #{forward.19} parent=0 // pred_region
    _
  $region5: #{forward.19} parent=0 // pred_fallthru
    _
  // Predicated region
  $region6: #{forward.19} parent=0 // pred_check
    _
  $region7: #{forward.19} parent=0 // pred_check_branch
    %11 = sbr.rel (0) target = $region9
  $region8: #{forward.19} parent=0 // pred_region
    _
  $region9: #{forward.19} parent=0 // pred_fallthru
    _
  // Predicated region
  $region10: #{forward.19} parent=0 // pred_check
    _
  $region11: #{forward.19} parent=0 // pred_check_branch
    %13 = sbr.rel (0) target = $region13
  $region12: #{forward.19} parent=0 // pred_region
    _
  $region13: #{forward.19} parent=0 // pred_fallthru
    _
  %p14 = scmp.eq.s32.totalorder 0, 0
  // Predicated region
  $region14: #{forward.19} parent=0 // pred_check
    %p15 = pneg %p14
  $region15: #{forward.19} parent=0 // pred_check_branch
    %17 = sbr.rel (%p15) target = $region17
  $region16: #{forward.19} parent=0 // pred_region
    %18 = vst [vmem:[#allocation2] sm:$0xff] 0.0
    %19 = vst [vmem:[#allocation2 + $0x8] sm:$0xff] 0.0
    %20 = vst [vmem:[#allocation2 + $0x10] sm:$0xff] 0.0
    %21 = vst [vmem:[#allocation2 + $0x18] sm:$0xff] 0.0
    %22 = vst [vmem:[#allocation2 + $0x20] sm:$0xff] 0.0
    %23 = vst [vmem:[#allocation2 + $0x28] sm:$0xff] 0.0
    %24 = vst [vmem:[#allocation2 + $0x30] sm:$0xff] 0.0
    %25 = vst [vmem:[#allocation2 + $0x38] sm:$0xff] 0.0
    %26 = vst [vmem:[#allocation2 + $0x40] sm:$0xff] 0.0
    %27 = vst [vmem:[#allocation2 + $0x48] sm:$0xff] 0.0
    %28 = vst [vmem:[#allocation2 + $0x50] sm:$0xff] 0.0
    %29 = vst [vmem:[#allocation2 + $0x58] sm:$0xff] 0.0
    %30 = vst [vmem:[#allocation2 + $0x60] sm:$0xff] 0.0
    %31 = vst [vmem:[#allocation2 + $0x68] sm:$0xff] 0.0
    %32 = vst [vmem:[#allocation2 + $0x70] sm:$0xff] 0.0
    %33 = vst [vmem:[#allocation2 + $0x78] sm:$0xff] 0.0
  $region17: #{forward.19} parent=0 // pred_fallthru
    _
  %v34 = vld [vmem:[%s1] sm:$0xff]
  %v35 = vld [vmem:[%s1 + $0x8] sm:$0xff]
  %v36 = vld [vmem:[%s1 + $0x10] sm:$0xff]
  %v37 = vld [vmem:[%s1 + $0x18] sm:$0xff]
  %v38 = vld [vmem:[%s1 + $0x20] sm:$0xff]
  %v39 = vld [vmem:[%s1 + $0x28] sm:$0xff]
  %v40 = vld [vmem:[%s1 + $0x30] sm:$0xff]
  %v41 = vld [vmem:[%s1 + $0x38] sm:$0xff]
  %v42 = vld [vmem:[%s1 + $0x40] sm:$0xff]
  %v43 = vld [vmem:[%s1 + $0x48] sm:$0xff]
  %v44 = vld [vmem:[%s1 + $0x50] sm:$0xff]
  %v45 = vld [vmem:[%s1 + $0x58] sm:$0xff]
  %v46 = vld [vmem:[%s1 + $0x60] sm:$0xff]
  %v47 = vld [vmem:[%s1 + $0x68] sm:$0xff]
  %v48 = vld [vmem:[%s1 + $0x70] sm:$0xff]
  %v49 = vld [vmem:[%s1 + $0x78] sm:$0xff]
  %v50 = vld [vmem:[%s0] sm:$0x1]
  %v51 = vperm.slane %v50, 0
  %v52 = vmul.f32 %v34, %v51
  %v53 = vmul.f32 %v35, %v51
  %v54 = vmul.f32 %v36, %v51
  %v55 = vmul.f32 %v37, %v51
  %v56 = vmul.f32 %v38, %v51
  %v57 = vmul.f32 %v39, %v51
  %v58 = vmul.f32 %v40, %v51
  %v59 = vmul.f32 %v41, %v51
  %v60 = vmul.f32 %v42, %v51
  %v61 = vmul.f32 %v43, %v51
  %v62 = vmul.f32 %v44, %v51
  %v63 = vmul.f32 %v45, %v51
  %v64 = vmul.f32 %v46, %v51
  %v65 = vmul.f32 %v47, %v51
  %v66 = vmul.f32 %v48, %v51
  %v67 = vmul.f32 %v49, %v51
  %v68 = vld [vmem:[%s0 + $0x1] sm:$0x1]
  %v69 = vperm.slane %v68, 0
  %v70 = vadd.f32 %v52, %v69
  %v71 = vadd.f32 %v53, %v69
  %v72 = vadd.f32 %v54, %v69
  %v73 = vadd.f32 %v55, %v69
  %v74 = vadd.f32 %v56, %v69
  %v75 = vadd.f32 %v57, %v69
  %v76 = vadd.f32 %v58, %v69
  %v77 = vadd.f32 %v59, %v69
  %v78 = vadd.f32 %v60, %v69
  %v79 = vadd.f32 %v61, %v69
  %v80 = vadd.f32 %v62, %v69
  %v81 = vadd.f32 %v63, %v69
  %v82 = vadd.f32 %v64, %v69
  %v83 = vadd.f32 %v65, %v69
  %v84 = vadd.f32 %v66, %v69
  %v85 = vadd.f32 %v67, %v69
  %v86 = vmax.f32 %v70, 0.0
  %v87 = vmax.f32 %v71, 0.0
  %v88 = vmax.f32 %v72, 0.0
  %v89 = vmax.f32 %v73, 0.0
  %v90 = vmax.f32 %v74, 0.0
  %v91 = vmax.f32 %v75, 0.0
  %v92 = vmax.f32 %v76, 0.0
  %v93 = vmax.f32 %v77, 0.0
  %v94 = vmax.f32 %v78, 0.0
  %v95 = vmax.f32 %v79, 0.0
  %v96 = vmax.f32 %v80, 0.0
  %v97 = vmax.f32 %v81, 0.0
  %v98 = vmax.f32 %v82, 0.0
  %v99 = vmax.f32 %v83, 0.0
  %v100 = vmax.f32 %v84, 0.0
  %v101 = vmax.f32 %v85, 0.0
  %v102 = vld [vmem:[#allocation2] sm:$0xff]
  %v103 = vld [vmem:[#allocation2 + $0x8] sm:$0xff]
  %v104 = vld [vmem:[#allocation2 + $0x10] sm:$0xff]
  %v105 = vld [vmem:[#allocation2 + $0x18] sm:$0xff]
  %v106 = vld [vmem:[#allocation2 + $0x20] sm:$0xff]
  %v107 = vld [vmem:[#allocation2 + $0x28] sm:$0xff]
  %v108 = vld [vmem:[#allocation2 + $0x30] sm:$0xff]
  %v109 = vld [vmem:[#allocation2 + $0x38] sm:$0xff]
  %v110 = vld [vmem:[#allocation2 + $0x40] sm:$0xff]
  %v111 = vld [vmem:[#allocation2 + $0x48] sm:$0xff]
  %v112 = vld [vmem:[#allocation2 + $0x50] sm:$0xff]
  %v113 = vld [vmem:[#allocation2 + $0x58] sm:$0xff]
  %v114 = vld [vmem:[#allocation2 + $0x60] sm:$0xff]
  %v115 = vld [vmem:[#allocation2 + $0x68] sm:$0xff]
  %v116 = vld [vmem:[#allocation2 + $0x70] sm:$0xff]
  %v117 = vld [vmem:[#allocation2 + $0x78] sm:$0xff]
  %v118 = vpack.c.bf16 %v87, %v86
  %v119 = vpack.c.bf16 %v89, %v88
  %v120 = vpack.c.bf16 %v91, %v90
  %v121 = vpack.c.bf16 %v93, %v92
  %v122 = vpack.c.bf16 %v95, %v94
  %v123 = vpack.c.bf16 %v97, %v96
  %v124 = vpack.c.bf16 %v99, %v98
  %v125 = vpack.c.bf16 %v101, %v100
  %v126 = vld [vmem:[%s2] sm:$0xf]
  %v127 = vld [vmem:[%s2 + $0x4] sm:$0xf]
  %v128 = vld [vmem:[%s2 + $0x8] sm:$0xf]
  %v129 = vld [vmem:[%s2 + $0xc] sm:$0xf]
  %v130 = vld [vmem:[%s2 + $0x10] sm:$0xf]
  %v131 = vld [vmem:[%s2 + $0x14] sm:$0xf]
  %v132 = vld [vmem:[%s2 + $0x18] sm:$0xf]
  %v133 = vld [vmem:[%s2 + $0x1c] sm:$0xf]
  %v134 = vld [vmem:[%s2 + $0x20] sm:$0xf]
  %v135 = vld [vmem:[%s2 + $0x24] sm:$0xf]
  %v136 = vld [vmem:[%s2 + $0x28] sm:$0xf]
  %v137 = vld [vmem:[%s2 + $0x2c] sm:$0xf]
  %v138 = vld [vmem:[%s2 + $0x30] sm:$0xf]
  %v139 = vld [vmem:[%s2 + $0x34] sm:$0xf]
  %v140 = vld [vmem:[%s2 + $0x38] sm:$0xf]
  %v141 = vld [vmem:[%s2 + $0x3c] sm:$0xf]
  %v158 = vunpack.c.l.b16 %v126
  %v159 = vunpack.c.l.b16 %v127
  %v160 = vunpack.c.l.b16 %v128
  %v161 = vunpack.c.l.b16 %v129
  %v162 = vunpack.c.l.b16 %v130
  %v163 = vunpack.c.l.b16 %v131
  %v164 = vunpack.c.l.b16 %v132
  %v165 = vunpack.c.l.b16 %v133
  %v166 = vunpack.c.l.b16 %v134
  %v167 = vunpack.c.l.b16 %v135
  %v168 = vunpack.c.l.b16 %v136
  %v169 = vunpack.c.l.b16 %v137
  %v170 = vunpack.c.l.b16 %v138
  %v171 = vunpack.c.l.b16 %v139
  %v172 = vunpack.c.l.b16 %v140
  %v173 = vunpack.c.l.b16 %v141
  %v174 = vpack.c.b16 %v159, %v158
  %v175 = vpack.c.b16 %v161, %v160
  %v176 = vpack.c.b16 %v163, %v162
  %v177 = vpack.c.b16 %v165, %v164
  %v178 = vpack.c.b16 %v167, %v166
  %v179 = vpack.c.b16 %v169, %v168
  %v180 = vpack.c.b16 %v171, %v170
  %v181 = vpack.c.b16 %v173, %v172
  %190 = vmatpush.bf16.msra.mxu0 %v181
  %191 = vmatpush.bf16.msra.mxu0 %v180
  %192 = vmatpush.bf16.msra.mxu0 %v179
  %193 = vmatpush.bf16.msra.mxu0 %v178
  %194 = vmatpush.bf16.msra.mxu0 %v177
  %195 = vmatpush.bf16.msra.mxu0 %v176
  %196 = vmatpush.bf16.msra.mxu0 %v175
  %197 = vmatpush.bf16.msra.mxu0 %v174
  %198 = vmatmul.bf16.gmra.mxu0 %v118
  %v199 = vpop.f32.mrf.mxu0
  %v200 = vadd.f32 0.0, %v199
  %v201 = vpop.f32.mrf.mxu0
  %v202 = vadd.f32 0.0, %v201
  %203 = vmatmul.bf16.gmra.mxu0 %v119
  %v204 = vpop.f32.mrf.mxu0
  %v205 = vadd.f32 0.0, %v204
  %v206 = vpop.f32.mrf.mxu0
  %v207 = vadd.f32 0.0, %v206
  %208 = vmatmul.bf16.gmra.mxu0 %v120
  %v209 = vpop.f32.mrf.mxu0
  %v210 = vadd.f32 0.0, %v209
  %v211 = vpop.f32.mrf.mxu0
  %v212 = vadd.f32 0.0, %v211
  %213 = vmatmul.bf16.gmra.mxu0 %v121
  %v214 = vpop.f32.mrf.mxu0
  %v215 = vadd.f32 0.0, %v214
  %v216 = vpop.f32.mrf.mxu0
  %v217 = vadd.f32 0.0, %v216
  %218 = vmatmul.bf16.gmra.mxu0 %v122
  %v219 = vpop.f32.mrf.mxu0
  %v220 = vadd.f32 0.0, %v219
  %v221 = vpop.f32.mrf.mxu0
  %v222 = vadd.f32 0.0, %v221
  %223 = vmatmul.bf16.gmra.mxu0 %v123
  %v224 = vpop.f32.mrf.mxu0
  %v225 = vadd.f32 0.0, %v224
  %v226 = vpop.f32.mrf.mxu0
  %v227 = vadd.f32 0.0, %v226
  %228 = vmatmul.bf16.gmra.mxu0 %v124
  %v229 = vpop.f32.mrf.mxu0
  %v230 = vadd.f32 0.0, %v229
  %v231 = vpop.f32.mrf.mxu0
  %v232 = vadd.f32 0.0, %v231
  %233 = vmatmul.bf16.gmra.mxu0 %v125
  %v234 = vpop.f32.mrf.mxu0
  %v235 = vadd.f32 0.0, %v234
  %v236 = vpop.f32.mrf.mxu0
  %v237 = vadd.f32 0.0, %v236
  %238 = vdwg.mxu0
  %v239 = vadd.f32 %v102, %v200
  %v240 = vadd.f32 %v103, %v202
  %v241 = vadd.f32 %v104, %v205
  %v242 = vadd.f32 %v105, %v207
  %v243 = vadd.f32 %v106, %v210
  %v244 = vadd.f32 %v107, %v212
  %v245 = vadd.f32 %v108, %v215
  %v246 = vadd.f32 %v109, %v217
  %v247 = vadd.f32 %v110, %v220
  %v248 = vadd.f32 %v111, %v222
  %v249 = vadd.f32 %v112, %v225
  %v250 = vadd.f32 %v113, %v227
  %v251 = vadd.f32 %v114, %v230
  %v252 = vadd.f32 %v115, %v232
  %v253 = vadd.f32 %v116, %v235
  %v254 = vadd.f32 %v117, %v237
  %255 = vst [vmem:[#allocation2] sm:$0xff] %v239
  %256 = vst [vmem:[#allocation2 + $0x8] sm:$0xff] %v240
  %257 = vst [vmem:[#allocation2 + $0x10] sm:$0xff] %v241
  %258 = vst [vmem:[#allocation2 + $0x18] sm:$0xff] %v242
  %259 = vst [vmem:[#allocation2 + $0x20] sm:$0xff] %v243
  %260 = vst [vmem:[#allocation2 + $0x28] sm:$0xff] %v244
  %261 = vst [vmem:[#allocation2 + $0x30] sm:$0xff] %v245
  %262 = vst [vmem:[#allocation2 + $0x38] sm:$0xff] %v246
  %263 = vst [vmem:[#allocation2 + $0x40] sm:$0xff] %v247
  %264 = vst [vmem:[#allocation2 + $0x48] sm:$0xff] %v248
  %265 = vst [vmem:[#allocation2 + $0x50] sm:$0xff] %v249
  %266 = vst [vmem:[#allocation2 + $0x58] sm:$0xff] %v250
  %267 = vst [vmem:[#allocation2 + $0x60] sm:$0xff] %v251
  %268 = vst [vmem:[#allocation2 + $0x68] sm:$0xff] %v252
  %269 = vst [vmem:[#allocation2 + $0x70] sm:$0xff] %v253
  %270 = vst [vmem:[#allocation2 + $0x78] sm:$0xff] %v254
  // Predicated region
  $region18: #{forward.19} parent=0 // pred_check
    %p271 = pneg %p14
  $region19: #{forward.19} parent=0 // pred_check_branch
    %273 = sbr.rel (%p271) target = $region21
  $region20: #{forward.19} parent=0 // pred_region
    %v274 = vld [vmem:[#allocation2] sm:$0xff]
    %v275 = vld [vmem:[#allocation2 + $0x8] sm:$0xff]
    %v276 = vld [vmem:[#allocation2 + $0x10] sm:$0xff]
    %v277 = vld [vmem:[#allocation2 + $0x18] sm:$0xff]
    %v278 = vld [vmem:[#allocation2 + $0x20] sm:$0xff]
    %v279 = vld [vmem:[#allocation2 + $0x28] sm:$0xff]
    %v280 = vld [vmem:[#allocation2 + $0x30] sm:$0xff]
    %v281 = vld [vmem:[#allocation2 + $0x38] sm:$0xff]
    %v282 = vld [vmem:[#allocation2 + $0x40] sm:$0xff]
    %v283 = vld [vmem:[#allocation2 + $0x48] sm:$0xff]
    %v284 = vld [vmem:[#allocation2 + $0x50] sm:$0xff]
    %v285 = vld [vmem:[#allocation2 + $0x58] sm:$0xff]
    %v286 = vld [vmem:[#allocation2 + $0x60] sm:$0xff]
    %v287 = vld [vmem:[#allocation2 + $0x68] sm:$0xff]
    %v288 = vld [vmem:[#allocation2 + $0x70] sm:$0xff]
    %v289 = vld [vmem:[#allocation2 + $0x78] sm:$0xff]
    %290 = vst [vmem:[%s3] sm:$0xff] %v274
    %291 = vst [vmem:[%s3 + $0x8] sm:$0xff] %v275
    %292 = vst [vmem:[%s3 + $0x10] sm:$0xff] %v276
    %293 = vst [vmem:[%s3 + $0x18] sm:$0xff] %v277
    %294 = vst [vmem:[%s3 + $0x20] sm:$0xff] %v278
    %295 = vst [vmem:[%s3 + $0x28] sm:$0xff] %v279
    %296 = vst [vmem:[%s3 + $0x30] sm:$0xff] %v280
    %297 = vst [vmem:[%s3 + $0x38] sm:$0xff] %v281
    %298 = vst [vmem:[%s3 + $0x40] sm:$0xff] %v282
    %299 = vst [vmem:[%s3 + $0x48] sm:$0xff] %v283
    %300 = vst [vmem:[%s3 + $0x50] sm:$0xff] %v284
    %301 = vst [vmem:[%s3 + $0x58] sm:$0xff] %v285
    %302 = vst [vmem:[%s3 + $0x60] sm:$0xff] %v286
    %303 = vst [vmem:[%s3 + $0x68] sm:$0xff] %v287
    %304 = vst [vmem:[%s3 + $0x70] sm:$0xff] %v288
    %305 = vst [vmem:[%s3 + $0x78] sm:$0xff] %v289
  $region21: #{forward.19} parent=0 // pred_fallthru
    _
  // Predicated region
  $region22: #{forward.19} parent=0 // pred_check
    _
  $region23: #{forward.19} parent=0 // pred_check_branch
    %307 = sbr.rel (0) target = $region25
  $region24: #{forward.19} parent=0 // pred_region
    _
  $region25: #{forward.19} parent=0 // pred_fallthru
    _
  // Predicated region
  $region26: #{forward.19} parent=0 // pred_check
    _
  $region27: #{forward.19} parent=0 // pred_check_branch
    %309 = sbr.rel (0) target = $region29
  $region28: #{forward.19} parent=0 // pred_region
    _
  $region29: #{forward.19} parent=0 // pred_fallthru
    _

// kernel: forward.16
$region0: #{forward.16}
  #allocation0 [shape = 'u32[]', space=smem, size = 0x4, offset = 0x4, fixed_abs, tag = 'smem constant byte address 0x4 - core index']
  #allocation1 [shape = 'u32[72,128]{1,0:T(1,128)}', space=vmem, size = 0x9000, scoped, tag = 'internal scratch']
  #allocation2 [shape = 'f32[2,128]{1,0:T(2,128)}', space=vmem, size = 0x400, scoped, tag = 'scratch operand']
  %s0 = inlined_call_operand.vmem [shape: f32[2,128], index: 0, kind: input, shape index: {}]
  %s1 = inlined_call_operand.vmem [shape: f32[2,10,10,128], index: 1, kind: input, shape index: {}, may-alias: {1,2,3}]
  %s2 = inlined_call_operand.vmem [shape: f32[2,10,10,128], index: 2, kind: input, shape index: {}, may-alias: {1,2,3}]
  %s3 = inlined_call_operand.vmem [shape: f32[2,10,10,128], index: 3, kind: input, shape index: {}, may-alias: {1,2,3}]
  %s4 = inlined_call_operand.vmem [shape: bf16[3,384,128], index: 4, kind: input, shape index: {}]
  %s5 = inlined_call_operand.vmem [shape: f32[2,8,8,128], index: 5, kind: input, shape index: {}]
  %s6 = inlined_call_operand.vmem [shape: f32[2,8,8,128], index: 6, kind: output, shape index: {0}]
  %s7 = inlined_call_operand.vmem [shape: f32[2,128], index: 7, kind: output, shape index: {1}]
  %8 = xla_tuple %s6, %s7
  %s9 = sld [smem:[#allocation0]]
  $region73: #{forward.16} parent=0
    _
  %s11 = ssub.s32 1, %s9
  %s12 = scalar_select 0, %s11, %s9
  loop: start=0, step=1, limit=18
  $region2: #{forward.16} parent=0 // loop_pre_header
    _
  $region3: #{forward.16} parent=0 // loop_header
    %s14 = sphi 0, %s18
    %p15 = scmp.ge.s32.totalorder %s14, 18
    %s21 = sphi 0, %s33
    %s22 = sphi 0, %s29
    %s23 = sphi 0, %s21
    %s24 = sphi 0, %s22
    %s25 = sphi 0, %s23
    %s26 = sphi 0, %s24
    %s34 = sphi 0, %s34
    %s36 = sphi 0, %s34
    %s37 = sphi 0, %s36
    %s51 = sphi 0, %s37
    %s59 = sphi 0, %s61
    %s62 = sphi 0, %s59
    %s63 = sphi 0, %s62
    %s79 = sphi 0, %s63
    %s89 = sphi 0, %s91
    %s92 = sphi 0, %s89
    %s93 = sphi 0, %s92
    %s109 = sphi 0, %s93
    %s119 = sphi 0, %s121
    %s122 = sphi 0, %s119
    %s123 = sphi 0, %s122
    %s139 = sphi 0, %s123
    %s143 = sphi 0, %s143
    %s145 = sphi 0, %s143
    %s146 = sphi 0, %s145
    %s160 = sphi 0, %s146
    %s168 = sphi 0, %s170
    %s171 = sphi 0, %s168
    %s172 = sphi 0, %s171
    %s188 = sphi 0, %s172
    %s196 = sphi 0, %s198
    %s199 = sphi 0, %s196
    %s200 = sphi 0, %s199
    %s216 = sphi 0, %s200
    %s220 = sphi 0, %s220
    %s222 = sphi 0, %s220
    %s223 = sphi 0, %s222
    %s237 = sphi 0, %s223
  $region4: #{forward.16} parent=0 // loop_header_branch
    %17 = sbr.rel (%p15) target = $region8
  $region5: #{forward.16} parent=0 // loop_body
    %s19 = ssub.s32 %s14, 1
    %s20 = ssub.s32 %s14, 2
    %s27 = sadd.s32 1, %s22
    %p28 = scmp.ge.s32.totalorder %s27, 8
    %s29 = scalar_select %p28, 0, %s27
    %s30 = sadd.s32 1, %s21
    %s31 = scalar_select %p28, %s30, %s21
    %p32 = scmp.ge.s32.totalorder %s31, 2
    %s33 = scalar_select %p32, 0, %s31
    %s35 = sadd.s32 %s34, 1
    %p38 = scmp.eq.s32.totalorder %s14, 15
    %p39 = scmp.ne.s32.totalorder %s34, %s36
    %p40 = scmp.eq.s32.totalorder %s14, 0
    %p41 = por %p39, %p40
    %p42 = scmp.ne.s32.totalorder %s34, %s36
    %p43 = scmp.eq.s32.totalorder %s19, 15
    %p44 = por %p42, %p43
    %p45 = scmp.ne.s32.totalorder %s36, %s37
    %p46 = scmp.eq.s32.totalorder %s19, 0
    %p47 = por %p45, %p46
    %p48 = scmp.ne.s32.totalorder %s36, %s37
    %p49 = scmp.eq.s32.totalorder %s20, 15
    %p50 = por %p48, %p49
    %p52 = scmp.ne.s32.totalorder %s37, %s51
    %p53 = scmp.eq.s32.totalorder %s20, 0
    %p54 = por %p52, %p53
    %s55 = ssub.s32 %s21, %s33
    %s56 = ssub.s32 %s22, %s29
    %s57 = sor.u32 %s55, %s56
    %p58 = scmp.eq.s32.totalorder %s57, 0
    %s60 = sadd.s32 %s59, 1
    %s61 = scalar_select %p58, %s59, %s60
    %p64 = pneg %p58
    %p65 = scmp.eq.s32.totalorder %s14, 15
    %p66 = por %p64, %p65
    %p67 = scmp.ne.s32.totalorder %s59, %s62
    %p68 = scmp.eq.s32.totalorder %s14, 0
    %p69 = por %p67, %p68
    %p70 = scmp.ne.s32.totalorder %s59, %s62
    %p71 = scmp.eq.s32.totalorder %s19, 15
    %p72 = por %p70, %p71
    %p73 = scmp.ne.s32.totalorder %s62, %s63
    %p74 = scmp.eq.s32.totalorder %s19, 0
    %p75 = por %p73, %p74
    %p76 = scmp.ne.s32.totalorder %s62, %s63
    %p77 = scmp.eq.s32.totalorder %s20, 15
    %p78 = por %p76, %p77
    %p80 = scmp.ne.s32.totalorder %s63, %s79
    %p81 = scmp.eq.s32.totalorder %s20, 0
    %p82 = por %p80, %p81
    %s83 = sadd.s32 %s22, 1
    %s84 = sadd.s32 %s29, 1
    %s85 = ssub.s32 %s21, %s33
    %s86 = ssub.s32 %s83, %s84
    %s87 = sor.u32 %s85, %s86
    %p88 = scmp.eq.s32.totalorder %s87, 0
    %s90 = sadd.s32 %s89, 1
    %s91 = scalar_select %p88, %s89, %s90
    %p94 = pneg %p88
    %p95 = scmp.eq.s32.totalorder %s14, 15
    %p96 = por %p94, %p95
    %p97 = scmp.ne.s32.totalorder %s89, %s92
    %p98 = scmp.eq.s32.totalorder %s14, 0
    %p99 = por %p97, %p98
    %p100 = scmp.ne.s32.totalorder %s89, %s92
    %p101 = scmp.eq.s32.totalorder %s19, 15
    %p102 = por %p100, %p101
    %p103 = scmp.ne.s32.totalorder %s92, %s93
    %p104 = scmp.eq.s32.totalorder %s19, 0
    %p105 = por %p103, %p104
    %p106 = scmp.ne.s32.totalorder %s92, %s93
    %p107 = scmp.eq.s32.totalorder %s20, 15
    %p108 = por %p106, %p107
    %p110 = scmp.ne.s32.totalorder %s93, %s109
    %p111 = scmp.eq.s32.totalorder %s20, 0
    %p112 = por %p110, %p111
    %s113 = sadd.s32 %s22, 2
    %s114 = sadd.s32 %s29, 2
    %s115 = ssub.s32 %s21, %s33
    %s116 = ssub.s32 %s113, %s114
    %s117 = sor.u32 %s115, %s116
    %p118 = scmp.eq.s32.totalorder %s117, 0
    %s120 = sadd.s32 %s119, 1
    %s121 = scalar_select %p118, %s119, %s120
    %p124 = pneg %p118
    %p125 = scmp.eq.s32.totalorder %s14, 15
    %p126 = por %p124, %p125
    %p127 = scmp.ne.s32.totalorder %s119, %s122
    %p128 = scmp.eq.s32.totalorder %s14, 0
    %p129 = por %p127, %p128
    %p130 = scmp.ne.s32.totalorder %s119, %s122
    %p131 = scmp.eq.s32.totalorder %s19, 15
    %p132 = por %p130, %p131
    %p133 = scmp.ne.s32.totalorder %s122, %s123
    %p134 = scmp.eq.s32.totalorder %s19, 0
    %p135 = por %p133, %p134
    %p136 = scmp.ne.s32.totalorder %s122, %s123
    %p137 = scmp.eq.s32.totalorder %s20, 15
    %p138 = por %p136, %p137
    %p140 = scmp.ne.s32.totalorder %s123, %s139
    %p141 = scmp.eq.s32.totalorder %s20, 0
    %p142 = por %p140, %p141
    %s144 = sadd.s32 %s143, 1
    %p147 = scmp.eq.s32.totalorder %s14, 15
    %p148 = scmp.ne.s32.totalorder %s143, %s145
    %p149 = scmp.eq.s32.totalorder %s14, 0
    %p150 = por %p148, %p149
    %p151 = scmp.ne.s32.totalorder %s143, %s145
    %p152 = scmp.eq.s32.totalorder %s19, 15
    %p153 = por %p151, %p152
    %p154 = scmp.ne.s32.totalorder %s145, %s146
    %p155 = scmp.eq.s32.totalorder %s19, 0
    %p156 = por %p154, %p155
    %p157 = scmp.ne.s32.totalorder %s145, %s146
    %p158 = scmp.eq.s32.totalorder %s20, 15
    %p159 = por %p157, %p158
    %p161 = scmp.ne.s32.totalorder %s146, %s160
    %p162 = scmp.eq.s32.totalorder %s20, 0
    %p163 = por %p161, %p162
    %s164 = ssub.s32 %s21, %s33
    %s165 = ssub.s32 %s22, %s29
    %s166 = sor.u32 %s164, %s165
    %p167 = scmp.eq.s32.totalorder %s166, 0
    %s169 = sadd.s32 %s168, 1
    %s170 = scalar_select %p167, %s168, %s169
    %p173 = pneg %p167
    %p174 = scmp.eq.s32.totalorder %s14, 15
    %p175 = por %p173, %p174
    %p176 = scmp.ne.s32.totalorder %s168, %s171
    %p177 = scmp.eq.s32.totalorder %s14, 0
    %p178 = por %p176, %p177
    %p179 = scmp.ne.s32.totalorder %s168, %s171
    %p180 = scmp.eq.s32.totalorder %s19, 15
    %p181 = por %p179, %p180
    %p182 = scmp.ne.s32.totalorder %s171, %s172
    %p183 = scmp.eq.s32.totalorder %s19, 0
    %p184 = por %p182, %p183
    %p185 = scmp.ne.s32.totalorder %s171, %s172
    %p186 = scmp.eq.s32.totalorder %s20, 15
    %p187 = por %p185, %p186
    %p189 = scmp.ne.s32.totalorder %s172, %s188
    %p190 = scmp.eq.s32.totalorder %s20, 0
    %p191 = por %p189, %p190
    %s192 = ssub.s32 %s21, %s33
    %s193 = ssub.s32 %s22, %s29
    %s194 = sor.u32 %s192, %s193
    %p195 = scmp.eq.s32.totalorder %s194, 0
    %s197 = sadd.s32 %s196, 1
    %s198 = scalar_select %p195, %s196, %s197
    %p201 = pneg %p195
    %p202 = scmp.eq.s32.totalorder %s14, 15
    %p203 = por %p201, %p202
    %p204 = scmp.ne.s32.totalorder %s196, %s199
    %p205 = scmp.eq.s32.totalorder %s14, 0
    %p206 = por %p204, %p205
    %p207 = scmp.ne.s32.totalorder %s196, %s199
    %p208 = scmp.eq.s32.totalorder %s19, 15
    %p209 = por %p207, %p208
    %p210 = scmp.ne.s32.totalorder %s199, %s200
    %p211 = scmp.eq.s32.totalorder %s19, 0
    %p212 = por %p210, %p211
    %p213 = scmp.ne.s32.totalorder %s199, %s200
    %p214 = scmp.eq.s32.totalorder %s20, 15
    %p215 = por %p213, %p214
    %p217 = scmp.ne.s32.totalorder %s200, %s216
    %p218 = scmp.eq.s32.totalorder %s20, 0
    %p219 = por %p217, %p218
    %s221 = sadd.s32 %s220, 1
    %p224 = scmp.eq.s32.totalorder %s14, 15
    %p225 = scmp.ne.s32.totalorder %s220, %s222
    %p226 = scmp.eq.s32.totalorder %s14, 0
    %p227 = por %p225, %p226
    %p228 = scmp.ne.s32.totalorder %s220, %s222
    %p229 = scmp.eq.s32.totalorder %s19, 15
    %p230 = por %p228, %p229
    %p231 = scmp.ne.s32.totalorder %s222, %s223
    %p232 = scmp.eq.s32.totalorder %s19, 0
    %p233 = por %p231, %p232
    %p234 = scmp.ne.s32.totalorder %s222, %s223
    %p235 = scmp.eq.s32.totalorder %s20, 15
    %p236 = por %p234, %p235
    %p238 = scmp.ne.s32.totalorder %s223, %s237
    %p239 = scmp.eq.s32.totalorder %s20, 0
    %p240 = por %p238, %p239
    %p241 = scmp.le.s32.totalorder 1, %s14
    %p242 = scmp.lt.s32.totalorder %s14, 17
    %p243 = pnand %p241, %p242
    %p244 = pneg %p243
    // Predicated region
    $region9: #{forward.16} parent=5 // pred_check
      _
    $region10: #{forward.16} parent=5 // pred_check_branch
      %246 = sbr.rel (%p243) target = $region12
    $region11: #{forward.16} parent=5 // pred_region
      %s247 = ssub.s32 %s14, 1
      // Predicated region
      $region13: #{forward.16} parent=11 // pred_check
        %p248 = pneg %p47
      $region14: #{forward.16} parent=11 // pred_check_branch
        %250 = sbr.rel (%p248) target = $region16
      $region15: #{forward.16} parent=11 // pred_region
        _
      $region16: #{forward.16} parent=11 // pred_fallthru
        _
      // Predicated region
      $region17: #{forward.16} parent=11 // pred_check
        %p251 = pneg %p156
      $region18: #{forward.16} parent=11 // pred_check_branch
        %253 = sbr.rel (%p251) target = $region20
      $region19: #{forward.16} parent=11 // pred_region
        _
      $region20: #{forward.16} parent=11 // pred_fallthru
        _
    $region12: #{forward.16} parent=5 // pred_fallthru
      _
    %p254 = scmp.lt.s32.totalorder %s14, 16
    // Predicated region
    $region21: #{forward.16} parent=5 // pred_check
      %p255 = pneg %p254
    $region22: #{forward.16} parent=5 // pred_check_branch
      %257 = sbr.rel (%p255) target = $region24
    $region23: #{forward.16} parent=5 // pred_region
      // Predicated region
      $region25: #{forward.16} parent=23 // pred_check
        %p258 = pneg %p69
      $region26: #{forward.16} parent=23 // pred_check_branch
        %260 = sbr.rel (%p258) target = $region28
      $region27: #{forward.16} parent=23 // pred_region
        %p261 = scmp.lt.s32.totalorder %s21, 1
        %s262 = scalar_select %p261, %s21, 1
        %p263 = scmp.lt.s32.totalorder %s22, 9
        %s264 = scalar_select %p263, %s22, 9
        %s265 = smul.addr %s264, 2
        %s266 = smul.addr %s262, 20
        %s267 = sadd.s32 %s265, %s266
        %s268 = smul.addr %s267, 8
        %s269 = scalar_lea.vmem %s1, %s268
      $region28: #{forward.16} parent=23 // pred_fallthru
        _
      // Predicated region
      $region29: #{forward.16} parent=23 // pred_check
        %p270 = pneg %p99
      $region30: #{forward.16} parent=23 // pred_check_branch
        %272 = sbr.rel (%p270) target = $region32
      $region31: #{forward.16} parent=23 // pred_region
        %s273 = sadd.s32 %s22, 1
        %p274 = scmp.lt.s32.totalorder %s21, 1
        %s275 = scalar_select %p274, %s21, 1
        %p276 = scmp.lt.s32.totalorder %s273, 9
        %s277 = scalar_select %p276, %s273, 9
        %s278 = smul.addr %s277, 2
        %s279 = smul.addr %s275, 20
        %s280 = sadd.s32 %s278, %s279
        %s281 = smul.addr %s280, 8
        %s282 = scalar_lea.vmem %s2, %s281
        %s283 = sadd.s32 %s22, 1
      $region32: #{forward.16} parent=23 // pred_fallthru
        _
      // Predicated region
      $region33: #{forward.16} parent=23 // pred_check
        %p284 = pneg %p129
      $region34: #{forward.16} parent=23 // pred_check_branch
        %286 = sbr.rel (%p284) target = $region36
      $region35: #{forward.16} parent=23 // pred_region
        %s287 = sadd.s32 %s22, 2
        %p288 = scmp.lt.s32.totalorder %s21, 1
        %s289 = scalar_select %p288, %s21, 1
        %p290 = scmp.lt.s32.totalorder %s287, 9
        %s291 = scalar_select %p290, %s287, 9
        %s292 = smul.addr %s291, 2
        %s293 = smul.addr %s289, 20
        %s294 = sadd.s32 %s292, %s293
        %s295 = smul.addr %s294, 8
        %s296 = scalar_lea.vmem %s3, %s295
        %s297 = sadd.s32 %s22, 2
      $region36: #{forward.16} parent=23 // pred_fallthru
        _
      // Predicated region
      $region37: #{forward.16} parent=23 // pred_check
        %p298 = pneg %p178
      $region38: #{forward.16} parent=23 // pred_check_branch
        %300 = sbr.rel (%p298) target = $region40
      $region39: #{forward.16} parent=23 // pred_region
        %p301 = scmp.lt.s32.totalorder %s21, 1
        %s302 = scalar_select %p301, %s21, 1
        %p303 = scmp.lt.s32.totalorder %s22, 7
        %s304 = scalar_select %p303, %s22, 7
        %s305 = smul.addr %s302, 8
        %s306 = sadd.s32 %s304, %s305
        %s307 = smul.addr %s306, 8
        %s308 = scalar_lea.vmem %s5, %s307
      $region40: #{forward.16} parent=23 // pred_fallthru
        _
    $region24: #{forward.16} parent=5 // pred_fallthru
      _
    %p309 = scmp.le.s32.totalorder 1, %s14
    %p310 = scmp.lt.s32.totalorder %s14, 17
    %p311 = pnand %p309, %p310
    %p312 = pneg %p311
    // Predicated region
    $region41: #{forward.16} parent=5 // pred_check
      _
    $region42: #{forward.16} parent=5 // pred_check_branch
      %314 = sbr.rel (%p311) target = $region44
    $region43: #{forward.16} parent=5 // pred_region
      %s315 = ssub.s32 %s14, 1
      %p316 = pneg %p47
      %p317 = pneg %p44
      %p318 = scmp.lt.s32.totalorder %s23, 1
      %s319 = scalar_select %p318, %s23, 1
      %p320 = scmp.lt.s32.totalorder %s24, 9
      %s321 = scalar_select %p320, %s24, 9
      %s322 = smul.addr %s321, 2
      %s323 = smul.addr %s319, 20
      %s324 = sadd.s32 %s322, %s323
      %s325 = smul.addr %s324, 8
      %s326 = scalar_lea.vmem %s1, %s325
      %p327 = pneg %p75
      %p328 = pneg %p72
      %s329 = sadd.s32 %s24, 1
      %p330 = scmp.lt.s32.totalorder %s23, 1
      %s331 = scalar_select %p330, %s23, 1
      %p332 = scmp.lt.s32.totalorder %s329, 9
      %s333 = scalar_select %p332, %s329, 9
      %s334 = smul.addr %s333, 2
      %s335 = smul.addr %s331, 20
      %s336 = sadd.s32 %s334, %s335
      %s337 = smul.addr %s336, 8
      %s338 = scalar_lea.vmem %s2, %s337
      %p339 = pneg %p105
      %p340 = pneg %p102
      %s341 = sadd.s32 %s24, 2
      %p342 = scmp.lt.s32.totalorder %s23, 1
      %s343 = scalar_select %p342, %s23, 1
      %p344 = scmp.lt.s32.totalorder %s341, 9
      %s345 = scalar_select %p344, %s341, 9
      %s346 = smul.addr %s345, 2
      %s347 = smul.addr %s343, 20
      %s348 = sadd.s32 %s346, %s347
      %s349 = smul.addr %s348, 8
      %s350 = scalar_lea.vmem %s3, %s349
      %p351 = pneg %p135
      %p352 = pneg %p132
      %p353 = pneg %p156
      %p354 = pneg %p153
      %p355 = scmp.lt.s32.totalorder %s23, 1
      %s356 = scalar_select %p355, %s23, 1
      %p357 = scmp.lt.s32.totalorder %s24, 7
      %s358 = scalar_select %p357, %s24, 7
      %s359 = smul.addr %s356, 8
      %s360 = sadd.s32 %s358, %s359
      %s361 = smul.addr %s360, 8
      %s362 = scalar_lea.vmem %s5, %s361
      %p363 = pneg %p184
      %p364 = pneg %p181
      %p365 = pneg %p212
      %p366 = pneg %p209
      %p367 = scmp.lt.s32.totalorder %s23, 1
      %s368 = scalar_select %p367, %s23, 1
      %p369 = scmp.lt.s32.totalorder %s24, 7
      %s370 = scalar_select %p369, %s24, 7
      %s371 = smul.addr %s368, 8
      %s372 = sadd.s32 %s370, %s371
      %s373 = smul.addr %s372, 8
      %s374 = scalar_lea.vmem %s6, %s373
      %p375 = pneg %p233
      %p376 = pneg %p230
      %p377 = scmp.lt.s32.totalorder %s23, 1
      %s378 = scalar_select %p377, %s23, 1
      %p379 = scmp.lt.s32.totalorder %s24, 9
      %s380 = scalar_select %p379, %s24, 9
      %s381 = smul.addr %s380, 2
      %s382 = smul.addr %s378, 20
      %s383 = sadd.s32 %s381, %s382
      %s384 = smul.addr %s383, 8
      %s385 = scalar_lea.vmem %s1, %s384
      %s386 = sadd.s32 %s24, 1
      %p387 = scmp.lt.s32.totalorder %s23, 1
      %s388 = scalar_select %p387, %s23, 1
      %p389 = scmp.lt.s32.totalorder %s386, 9
      %s390 = scalar_select %p389, %s386, 9
      %s391 = smul.addr %s390, 2
      %s392 = smul.addr %s388, 20
      %s393 = sadd.s32 %s391, %s392
      %s394 = smul.addr %s393, 8
      %s395 = scalar_lea.vmem %s2, %s394
      %s396 = sadd.s32 %s24, 1
      %s397 = sadd.s32 %s24, 2
      %p398 = scmp.lt.s32.totalorder %s23, 1
      %s399 = scalar_select %p398, %s23, 1
      %p400 = scmp.lt.s32.totalorder %s397, 9
      %s401 = scalar_select %p400, %s397, 9
      %s402 = smul.addr %s401, 2
      %s403 = smul.addr %s399, 20
      %s404 = sadd.s32 %s402, %s403
      %s405 = smul.addr %s404, 8
      %s406 = scalar_lea.vmem %s3, %s405
      %s407 = sadd.s32 %s24, 2
      %p408 = scmp.lt.s32.totalorder %s23, 1
      %s409 = scalar_select %p408, %s23, 1
      %p410 = scmp.lt.s32.totalorder %s24, 7
      %s411 = scalar_select %p410, %s24, 7
      %s412 = smul.addr %s409, 8
      %s413 = sadd.s32 %s411, %s412
      %s414 = smul.addr %s413, 8
      %s415 = scalar_lea.vmem %s5, %s414
      %p416 = scmp.lt.s32.totalorder %s23, 1
      %s417 = scalar_select %p416, %s23, 1
      %p418 = scmp.lt.s32.totalorder %s24, 7
      %s419 = scalar_select %p418, %s24, 7
      %s420 = smul.addr %s417, 8
      %s421 = sadd.s32 %s419, %s420
      %s422 = smul.addr %s421, 8
      %s423 = scalar_lea.vmem %s6, %s422
      %p424 = scmp.eq.s32.totalorder %s23, 0
      %p425 = scmp.eq.s32.totalorder %s24, 0
      %p426 = pnand %p424, %p425
      %p427 = pneg %p426
      // Predicated region
      $region45: #{forward.16} parent=43 // pred_check
        _
      $region46: #{forward.16} parent=43 // pred_check_branch
        %429 = sbr.rel (%p426) target = $region48
      $region47: #{forward.16} parent=43 // pred_region
        %430 = vst [vmem:[#allocation2] sm:$0x3] 0.0
      $region48: #{forward.16} parent=43 // pred_fallthru
        _
      %v431 = vld [vmem:[%s0] sm:$0x1]
      %v432 = vld [vmem:[%s0 + $0x1] sm:$0x1]
      %v433 = vld [vmem:[%s415] sm:$0xff]
      %v434 = vld [vmem:[%s385] sm:$0xff]
      %v435 = vld [vmem:[%s385 + $0x8] sm:$0x3]
      %v436 = vperm.slane %v431, 0
      %v437 = vmul.f32 %v434, %v436
      %v438 = vmul.f32 %v435, %v436
      %v439 = vperm.slane %v432, 0
      %v440 = vadd.f32 %v437, %v439
      %v441 = vadd.f32 %v438, %v439
      %v442 = vmax.f32 %v440, 0.0
      %v443 = vmax.f32 %v441, 0.0
      %v444 = vpack.c.bf16 %v442, %v442
      %v445 = vpack.c.bf16 %v443, %v443
      %v446 = vld [vmem:[%s4] sm:$0xf]
      %v447 = vld [vmem:[%s4 + $0x4] sm:$0xf]
      %v448 = vld [vmem:[%s4 + $0x8] sm:$0xf]
      %v449 = vld [vmem:[%s4 + $0xc] sm:$0xf]
      %v450 = vld [vmem:[%s4 + $0x10] sm:$0xf]
      %v451 = vld [vmem:[%s4 + $0x14] sm:$0xf]
      %v452 = vld [vmem:[%s4 + $0x18] sm:$0xf]
      %v453 = vld [vmem:[%s4 + $0x1c] sm:$0xf]
      %v454 = vld [vmem:[%s4 + $0x20] sm:$0xf]
      %v455 = vld [vmem:[%s4 + $0x24] sm:$0xf]
      %v456 = vld [vmem:[%s4 + $0x28] sm:$0xf]
      %v457 = vld [vmem:[%s4 + $0x2c] sm:$0xf]
      %v458 = vld [vmem:[%s4 + $0x30] sm:$0xf]
      %v459 = vld [vmem:[%s4 + $0x34] sm:$0xf]
      %v460 = vld [vmem:[%s4 + $0x38] sm:$0xf]
      %v461 = vld [vmem:[%s4 + $0x3c] sm:$0xf]
      %v478 = vunpack.c.l.b16 %v446
      %v479 = vunpack.c.l.b16 %v447
      %v480 = vunpack.c.l.b16 %v448
      %v481 = vunpack.c.l.b16 %v449
      %v482 = vunpack.c.l.b16 %v450
      %v483 = vunpack.c.l.b16 %v451
      %v484 = vunpack.c.l.b16 %v452
      %v485 = vunpack.c.l.b16 %v453
      %v486 = vunpack.c.l.b16 %v454
      %v487 = vunpack.c.l.b16 %v455
      %v488 = vunpack.c.l.b16 %v456
      %v489 = vunpack.c.l.b16 %v457
      %v490 = vunpack.c.l.b16 %v458
      %v491 = vunpack.c.l.b16 %v459
      %v492 = vunpack.c.l.b16 %v460
      %v493 = vunpack.c.l.b16 %v461
      %v494 = vpack.c.b16 %v479, %v478
      %v495 = vpack.c.b16 %v481, %v480
      %v496 = vpack.c.b16 %v483, %v482
      %v497 = vpack.c.b16 %v485, %v484
      %v498 = vpack.c.b16 %v487, %v486
      %v499 = vpack.c.b16 %v489, %v488
      %v500 = vpack.c.b16 %v491, %v490
      %v501 = vpack.c.b16 %v493, %v492
      %510 = vmatpush.bf16.msra.mxu0 %v501
      %511 = vmatpush.bf16.msra.mxu0 %v500
      %512 = vmatpush.bf16.msra.mxu0 %v499
      %513 = vmatpush.bf16.msra.mxu0 %v498
      %514 = vmatpush.bf16.msra.mxu0 %v497
      %515 = vmatpush.bf16.msra.mxu0 %v496
      %516 = vmatpush.bf16.msra.mxu0 %v495
      %517 = vmatpush.bf16.msra.mxu0 %v494
      %518 = vmatmul.bf16.gmra.mxu0 %v444
      %v519 = vpop.f32.mrf.mxu0
      %v520 = vadd.f32 0.0, %v519
      %v521 = vpop.f32.mrf.mxu0
      %522 = vdwg.mxu0
      %v523 = vadd.f32 %v433, %v520
      %v524 = vld [vmem:[%s4 + $0x40] sm:$0xf]
      %v525 = vld [vmem:[%s4 + $0x44] sm:$0xf]
      %v526 = vld [vmem:[%s4 + $0x48] sm:$0xf]
      %v527 = vld [vmem:[%s4 + $0x4c] sm:$0xf]
      %v528 = vld [vmem:[%s4 + $0x50] sm:$0xf]
      %v529 = vld [vmem:[%s4 + $0x54] sm:$0xf]
      %v530 = vld [vmem:[%s4 + $0x58] sm:$0xf]
      %v531 = vld [vmem:[%s4 + $0x5c] sm:$0xf]
      %v532 = vld [vmem:[%s4 + $0x60] sm:$0xf]
      %v533 = vld [vmem:[%s4 + $0x64] sm:$0xf]
      %v534 = vld [vmem:[%s4 + $0x68] sm:$0xf]
      %v535 = vld [vmem:[%s4 + $0x6c] sm:$0xf]
      %v536 = vld [vmem:[%s4 + $0x70] sm:$0xf]
      %v537 = vld [vmem:[%s4 + $0x74] sm:$0xf]
      %v538 = vld [vmem:[%s4 + $0x78] sm:$0xf]
      %v539 = vld [vmem:[%s4 + $0x7c] sm:$0xf]
      %v542 = vunpack.c.l.b16 %v444
      %v543 = vunpack.c.l.b16 %v445
      %v544 = vpack.c.b16 %v543, %v542
      %v546 = vshrl.u32 %v544, 16
      %v548 = vshll.u32 %v544, 16
      %v550 = vrot.slane %v548, 1
      %v551 = vor.u32 %v546, %v550
      %v569 = vunpack.c.l.b16 %v524
      %v570 = vunpack.c.l.b16 %v525
      %v571 = vunpack.c.l.b16 %v526
      %v572 = vunpack.c.l.b16 %v527
      %v573 = vunpack.c.l.b16 %v528
      %v574 = vunpack.c.l.b16 %v529
      %v575 = vunpack.c.l.b16 %v530
      %v576 = vunpack.c.l.b16 %v531
      %v577 = vunpack.c.l.b16 %v532
      %v578 = vunpack.c.l.b16 %v533
      %v579 = vunpack.c.l.b16 %v534
      %v580 = vunpack.c.l.b16 %v535
      %v581 = vunpack.c.l.b16 %v536
      %v582 = vunpack.c.l.b16 %v537
      %v583 = vunpack.c.l.b16 %v538
      %v584 = vunpack.c.l.b16 %v539
      %v585 = vpack.c.b16 %v570, %v569
      %v586 = vpack.c.b16 %v572, %v571
      %v587 = vpack.c.b16 %v574, %v573
      %v588 = vpack.c.b16 %v576, %v575
      %v589 = vpack.c.b16 %v578, %v577
      %v590 = vpack.c.b16 %v580, %v579
      %v591 = vpack.c.b16 %v582, %v581
      %v592 = vpack.c.b16 %v584, %v583
      %601 = vmatpush.bf16.msra.mxu0 %v592
      %602 = vmatpush.bf16.msra.mxu0 %v591
      %603 = vmatpush.bf16.msra.mxu0 %v590
      %604 = vmatpush.bf16.msra.mxu0 %v589
      %605 = vmatpush.bf16.msra.mxu0 %v588
      %606 = vmatpush.bf16.msra.mxu0 %v587
      %607 = vmatpush.bf16.msra.mxu0 %v586
      %608 = vmatpush.bf16.msra.mxu0 %v585
      %609 = vmatmul.bf16.gmra.mxu0 %v551
      %v610 = vpop.f32.mrf.mxu0
      %v611 = vadd.f32 0.0, %v610
      %v612 = vpop.f32.mrf.mxu0
      %613 = vdwg.mxu0
      %v614 = vadd.f32 %v523, %v611
      %v615 = vld [vmem:[%s4 + $0x80] sm:$0xf]
      %v616 = vld [vmem:[%s4 + $0x84] sm:$0xf]
      %v617 = vld [vmem:[%s4 + $0x88] sm:$0xf]
      %v618 = vld [vmem:[%s4 + $0x8c] sm:$0xf]
      %v619 = vld [vmem:[%s4 + $0x90] sm:$0xf]
      %v620 = vld [vmem:[%s4 + $0x94] sm:$0xf]
      %v621 = vld [vmem:[%s4 + $0x98] sm:$0xf]
      %v622 = vld [vmem:[%s4 + $0x9c] sm:$0xf]
      %v623 = vld [vmem:[%s4 + $0xa0] sm:$0xf]
      %v624 = vld [vmem:[%s4 + $0xa4] sm:$0xf]
      %v625 = vld [vmem:[%s4 + $0xa8] sm:$0xf]
      %v626 = vld [vmem:[%s4 + $0xac] sm:$0xf]
      %v627 = vld [vmem:[%s4 + $0xb0] sm:$0xf]
      %v628 = vld [vmem:[%s4 + $0xb4] sm:$0xf]
      %v629 = vld [vmem:[%s4 + $0xb8] sm:$0xf]
      %v630 = vld [vmem:[%s4 + $0xbc] sm:$0xf]
      %v631 = vrot.slane %v544, 1
      %v649 = vunpack.c.l.b16 %v615
      %v650 = vunpack.c.l.b16 %v616
      %v651 = vunpack.c.l.b16 %v617
      %v652 = vunpack.c.l.b16 %v618
      %v653 = vunpack.c.l.b16 %v619
      %v654 = vunpack.c.l.b16 %v620
      %v655 = vunpack.c.l.b16 %v621
      %v656 = vunpack.c.l.b16 %v622
      %v657 = vunpack.c.l.b16 %v623
      %v658 = vunpack.c.l.b16 %v624
      %v659 = vunpack.c.l.b16 %v625
      %v660 = vunpack.c.l.b16 %v626
      %v661 = vunpack.c.l.b16 %v627
      %v662 = vunpack.c.l.b16 %v628
      %v663 = vunpack.c.l.b16 %v629
      %v664 = vunpack.c.l.b16 %v630
      %v665 = vpack.c.b16 %v650, %v649
      %v666 = vpack.c.b16 %v652, %v651
      %v667 = vpack.c.b16 %v654, %v653
      %v668 = vpack.c.b16 %v656, %v655
      %v669 = vpack.c.b16 %v658, %v657
      %v670 = vpack.c.b16 %v660, %v659
      %v671 = vpack.c.b16 %v662, %v661
      %v672 = vpack.c.b16 %v664, %v663
      %681 = vmatpush.bf16.msra.mxu0 %v672
      %682 = vmatpush.bf16.msra.mxu0 %v671
      %683 = vmatpush.bf16.msra.mxu0 %v670
      %684 = vmatpush.bf16.msra.mxu0 %v669
      %685 = vmatpush.bf16.msra.mxu0 %v668
      %686 = vmatpush.bf16.msra.mxu0 %v667
      %687 = vmatpush.bf16.msra.mxu0 %v666
      %688 = vmatpush.bf16.msra.mxu0 %v665
      %689 = vmatmul.bf16.gmra.mxu0 %v631
      %v690 = vpop.f32.mrf.mxu0
      %v691 = vadd.f32 0.0, %v690
      %v692 = vpop.f32.mrf.mxu0
      %693 = vdwg.mxu0
      %v694 = vadd.f32 %v614, %v691
      %v695 = vld [vmem:[%s395] sm:$0xff]
      %v696 = vld [vmem:[%s395 + $0x8] sm:$0x3]
      %v697 = vmul.f32 %v695, %v436
      %v698 = vmul.f32 %v696, %v436
      %v699 = vadd.f32 %v697, %v439
      %v700 = vadd.f32 %v698, %v439
      %v701 = vmax.f32 %v699, 0.0
      %v702 = vmax.f32 %v700, 0.0
      %v703 = vpack.c.bf16 %v701, %v701
      %v704 = vpack.c.bf16 %v702, %v702
      %s705 = scalar_lea.vmem %s4, 192
      %v706 = vld [vmem:[%s705] sm:$0xf]
      %v707 = vld [vmem:[%s705 + $0x4] sm:$0xf]
      %v708 = vld [vmem:[%s705 + $0x8] sm:$0xf]
      %v709 = vld [vmem:[%s705 + $0xc] sm:$0xf]
      %v710 = vld [vmem:[%s705 + $0x10] sm:$0xf]
      %v711 = vld [vmem:[%s705 + $0x14] sm:$0xf]
      %v712 = vld [vmem:[%s705 + $0x18] sm:$0xf]
      %v713 = vld [vmem:[%s705 + $0x1c] sm:$0xf]
      %v714 = vld [vmem:[%s705 + $0x20] sm:$0xf]
      %v715 = vld [vmem:[%s705 + $0x24] sm:$0xf]
      %v716 = vld [vmem:[%s705 + $0x28] sm:$0xf]
      %v717 = vld [vmem:[%s705 + $0x2c] sm:$0xf]
      %v718 = vld [vmem:[%s705 + $0x30] sm:$0xf]
      %v719 = vld [vmem:[%s705 + $0x34] sm:$0xf]
      %v720 = vld [vmem:[%s705 + $0x38] sm:$0xf]
      %v721 = vld [vmem:[%s705 + $0x3c] sm:$0xf]
      %v738 = vunpack.c.l.b16 %v706
      %v739 = vunpack.c.l.b16 %v707
      %v740 = vunpack.c.l.b16 %v708
      %v741 = vunpack.c.l.b16 %v709
      %v742 = vunpack.c.l.b16 %v710
      %v743 = vunpack.c.l.b16 %v711
      %v744 = vunpack.c.l.b16 %v712
      %v745 = vunpack.c.l.b16 %v713
      %v746 = vunpack.c.l.b16 %v714
      %v747 = vunpack.c.l.b16 %v715
      %v748 = vunpack.c.l.b16 %v716
      %v749 = vunpack.c.l.b16 %v717
      %v750 = vunpack.c.l.b16 %v718
      %v751 = vunpack.c.l.b16 %v719
      %v752 = vunpack.c.l.b16 %v720
      %v753 = vunpack.c.l.b16 %v721
      %v754 = vpack.c.b16 %v739, %v738
      %v755 = vpack.c.b16 %v741, %v740
      %v756 = vpack.c.b16 %v743, %v742
      %v757 = vpack.c.b16 %v745, %v744
      %v758 = vpack.c.b16 %v747, %v746
      %v759 = vpack.c.b16 %v749, %v748
      %v760 = vpack.c.b16 %v751, %v750
      %v761 = vpack.c.b16 %v753, %v752
      %770 = vmatpush.bf16.msra.mxu0 %v761
      %771 = vmatpush.bf16.msra.mxu0 %v760
      %772 = vmatpush.bf16.msra.mxu0 %v759
      %773 = vmatpush.bf16.msra.mxu0 %v758
      %774 = vmatpush.bf16.msra.mxu0 %v757
      %775 = vmatpush.bf16.msra.mxu0 %v756
      %776 = vmatpush.bf16.msra.mxu0 %v755
      %777 = vmatpush.bf16.msra.mxu0 %v754
      %778 = vmatmul.bf16.gmra.mxu0 %v703
      %v779 = vpop.f32.mrf.mxu0
      %v780 = vadd.f32 0.0, %v779
      %v781 = vpop.f32.mrf.mxu0
      %782 = vdwg.mxu0
      %v783 = vadd.f32 %v694, %v780
      %v784 = vld [vmem:[%s705 + $0x40] sm:$0xf]
      %v785 = vld [vmem:[%s705 + $0x44] sm:$0xf]
      %v786 = vld [vmem:[%s705 + $0x48] sm:$0xf]
      %v787 = vld [vmem:[%s705 + $0x4c] sm:$0xf]
      %v788 = vld [vmem:[%s705 + $0x50] sm:$0xf]
      %v789 = vld [vmem:[%s705 + $0x54] sm:$0xf]
      %v790 = vld [vmem:[%s705 + $0x58] sm:$0xf]
      %v791 = vld [vmem:[%s705 + $0x5c] sm:$0xf]
      %v792 = vld [vmem:[%s705 + $0x60] sm:$0xf]
      %v793 = vld [vmem:[%s705 + $0x64] sm:$0xf]
      %v794 = vld [vmem:[%s705 + $0x68] sm:$0xf]
      %v795 = vld [vmem:[%s705 + $0x6c] sm:$0xf]
      %v796 = vld [vmem:[%s705 + $0x70] sm:$0xf]
      %v797 = vld [vmem:[%s705 + $0x74] sm:$0xf]
      %v798 = vld [vmem:[%s705 + $0x78] sm:$0xf]
      %v799 = vld [vmem:[%s705 + $0x7c] sm:$0xf]
      %v802 = vunpack.c.l.b16 %v703
      %v803 = vunpack.c.l.b16 %v704
      %v804 = vpack.c.b16 %v803, %v802
      %v806 = vshrl.u32 %v804, 16
      %v808 = vshll.u32 %v804, 16
      %v810 = vrot.slane %v808, 1
      %v811 = vor.u32 %v806, %v810
      %v829 = vunpack.c.l.b16 %v784
      %v830 = vunpack.c.l.b16 %v785
      %v831 = vunpack.c.l.b16 %v786
      %v832 = vunpack.c.l.b16 %v787
      %v833 = vunpack.c.l.b16 %v788
      %v834 = vunpack.c.l.b16 %v789
      %v835 = vunpack.c.l.b16 %v790
      %v836 = vunpack.c.l.b16 %v791
      %v837 = vunpack.c.l.b16 %v792
      %v838 = vunpack.c.l.b16 %v793
      %v839 = vunpack.c.l.b16 %v794
      %v840 = vunpack.c.l.b16 %v795
      %v841 = vunpack.c.l.b16 %v796
      %v842 = vunpack.c.l.b16 %v797
      %v843 = vunpack.c.l.b16 %v798
      %v844 = vunpack.c.l.b16 %v799
      %v845 = vpack.c.b16 %v830, %v829
      %v846 = vpack.c.b16 %v832, %v831
      %v847 = vpack.c.b16 %v834, %v833
      %v848 = vpack.c.b16 %v836, %v835
      %v849 = vpack.c.b16 %v838, %v837
      %v850 = vpack.c.b16 %v840, %v839
      %v851 = vpack.c.b16 %v842, %v841
      %v852 = vpack.c.b16 %v844, %v843
      %861 = vmatpush.bf16.msra.mxu0 %v852
      %862 = vmatpush.bf16.msra.mxu0 %v851
      %863 = vmatpush.bf16.msra.mxu0 %v850
      %864 = vmatpush.bf16.msra.mxu0 %v849
      %865 = vmatpush.bf16.msra.mxu0 %v848
      %866 = vmatpush.bf16.msra.mxu0 %v847
      %867 = vmatpush.bf16.msra.mxu0 %v846
      %868 = vmatpush.bf16.msra.mxu0 %v845
      %869 = vmatmul.bf16.gmra.mxu0 %v811
      %v870 = vpop.f32.mrf.mxu0
      %v871 = vadd.f32 0.0, %v870
      %v872 = vpop.f32.mrf.mxu0
      %873 = vdwg.mxu0
      %v874 = vadd.f32 %v783, %v871
      %v875 = vld [vmem:[%s705 + $0x80] sm:$0xf]
      %v876 = vld [vmem:[%s705 + $0x84] sm:$0xf]
      %v877 = vld [vmem:[%s705 + $0x88] sm:$0xf]
      %v878 = vld [vmem:[%s705 + $0x8c] sm:$0xf]
      %v879 = vld [vmem:[%s705 + $0x90] sm:$0xf]
      %v880 = vld [vmem:[%s705 + $0x94] sm:$0xf]
      %v881 = vld [vmem:[%s705 + $0x98] sm:$0xf]
      %v882 = vld [vmem:[%s705 + $0x9c] sm:$0xf]
      %v883 = vld [vmem:[%s705 + $0xa0] sm:$0xf]
      %v884 = vld [vmem:[%s705 + $0xa4] sm:$0xf]
      %v885 = vld [vmem:[%s705 + $0xa8] sm:$0xf]
      %v886 = vld [vmem:[%s705 + $0xac] sm:$0xf]
      %v887 = vld [vmem:[%s705 + $0xb0] sm:$0xf]
      %v888 = vld [vmem:[%s705 + $0xb4] sm:$0xf]
      %v889 = vld [vmem:[%s705 + $0xb8] sm:$0xf]
      %v890 = vld [vmem:[%s705 + $0xbc] sm:$0xf]
      %v891 = vrot.slane %v804, 1
      %v909 = vunpack.c.l.b16 %v875
      %v910 = vunpack.c.l.b16 %v876
      %v911 = vunpack.c.l.b16 %v877
      %v912 = vunpack.c.l.b16 %v878
      %v913 = vunpack.c.l.b16 %v879
      %v914 = vunpack.c.l.b16 %v880
      %v915 = vunpack.c.l.b16 %v881
      %v916 = vunpack.c.l.b16 %v882
      %v917 = vunpack.c.l.b16 %v883
      %v918 = vunpack.c.l.b16 %v884
      %v919 = vunpack.c.l.b16 %v885
      %v920 = vunpack.c.l.b16 %v886
      %v921 = vunpack.c.l.b16 %v887
      %v922 = vunpack.c.l.b16 %v888
      %v923 = vunpack.c.l.b16 %v889
      %v924 = vunpack.c.l.b16 %v890
      %v925 = vpack.c.b16 %v910, %v909
      %v926 = vpack.c.b16 %v912, %v911
      %v927 = vpack.c.b16 %v914, %v913
      %v928 = vpack.c.b16 %v916, %v915
      %v929 = vpack.c.b16 %v918, %v917
      %v930 = vpack.c.b16 %v920, %v919
      %v931 = vpack.c.b16 %v922, %v921
      %v932 = vpack.c.b16 %v924, %v923
      %941 = vmatpush.bf16.msra.mxu0 %v932
      %942 = vmatpush.bf16.msra.mxu0 %v931
      %943 = vmatpush.bf16.msra.mxu0 %v930
      %944 = vmatpush.bf16.msra.mxu0 %v929
      %945 = vmatpush.bf16.msra.mxu0 %v928
      %946 = vmatpush.bf16.msra.mxu0 %v927
      %947 = vmatpush.bf16.msra.mxu0 %v926
      %948 = vmatpush.bf16.msra.mxu0 %v925
      %949 = vmatmul.bf16.gmra.mxu0 %v891
      %v950 = vpop.f32.mrf.mxu0
      %v951 = vadd.f32 0.0, %v950
      %v952 = vpop.f32.mrf.mxu0
      %953 = vdwg.mxu0
      %v954 = vadd.f32 %v874, %v951
      %v955 = vld [vmem:[%s406] sm:$0xff]
      %v956 = vld [vmem:[%s406 + $0x8] sm:$0x3]
      %v957 = vmul.f32 %v955, %v436
      %v958 = vmul.f32 %v956, %v436
      %v959 = vadd.f32 %v957, %v439
      %v960 = vadd.f32 %v958, %v439
      %v961 = vmax.f32 %v959, 0.0
      %v962 = vmax.f32 %v960, 0.0
      %v963 = vpack.c.bf16 %v961, %v961
      %v964 = vpack.c.bf16 %v962, %v962
      %s965 = scalar_lea.vmem %s4, 384
      %v966 = vld [vmem:[%s965] sm:$0xf]
      %v967 = vld [vmem:[%s965 + $0x4] sm:$0xf]
      %v968 = vld [vmem:[%s965 + $0x8] sm:$0xf]
      %v969 = vld [vmem:[%s965 + $0xc] sm:$0xf]
      %v970 = vld [vmem:[%s965 + $0x10] sm:$0xf]
      %v971 = vld [vmem:[%s965 + $0x14] sm:$0xf]
      %v972 = vld [vmem:[%s965 + $0x18] sm:$0xf]
      %v973 = vld [vmem:[%s965 + $0x1c] sm:$0xf]
      %v974 = vld [vmem:[%s965 + $0x20] sm:$0xf]
      %v975 = vld [vmem:[%s965 + $0x24] sm:$0xf]
      %v976 = vld [vmem:[%s965 + $0x28] sm:$0xf]
      %v977 = vld [vmem:[%s965 + $0x2c] sm:$0xf]
      %v978 = vld [vmem:[%s965 + $0x30] sm:$0xf]
      %v979 = vld [vmem:[%s965 + $0x34] sm:$0xf]
      %v980 = vld [vmem:[%s965 + $0x38] sm:$0xf]
      %v981 = vld [vmem:[%s965 + $0x3c] sm:$0xf]
      %v998 = vunpack.c.l.b16 %v966
      %v999 = vunpack.c.l.b16 %v967
      %v1000 = vunpack.c.l.b16 %v968
      %v1001 = vunpack.c.l.b16 %v969
      %v1002 = vunpack.c.l.b16 %v970
      %v1003 = vunpack.c.l.b16 %v971
      %v1004 = vunpack.c.l.b16 %v972
      %v1005 = vunpack.c.l.b16 %v973
      %v1006 = vunpack.c.l.b16 %v974
      %v1007 = vunpack.c.l.b16 %v975
      %v1008 = vunpack.c.l.b16 %v976
      %v1009 = vunpack.c.l.b16 %v977
      %v1010 = vunpack.c.l.b16 %v978
      %v1011 = vunpack.c.l.b16 %v979
      %v1012 = vunpack.c.l.b16 %v980
      %v1013 = vunpack.c.l.b16 %v981
      %v1014 = vpack.c.b16 %v999, %v998
      %v1015 = vpack.c.b16 %v1001, %v1000
      %v1016 = vpack.c.b16 %v1003, %v1002
      %v1017 = vpack.c.b16 %v1005, %v1004
      %v1018 = vpack.c.b16 %v1007, %v1006
      %v1019 = vpack.c.b16 %v1009, %v1008
      %v1020 = vpack.c.b16 %v1011, %v1010
      %v1021 = vpack.c.b16 %v1013, %v1012
      %1030 = vmatpush.bf16.msra.mxu0 %v1021
      %1031 = vmatpush.bf16.msra.mxu0 %v1020
      %1032 = vmatpush.bf16.msra.mxu0 %v1019
      %1033 = vmatpush.bf16.msra.mxu0 %v1018
      %1034 = vmatpush.bf16.msra.mxu0 %v1017
      %1035 = vmatpush.bf16.msra.mxu0 %v1016
      %1036 = vmatpush.bf16.msra.mxu0 %v1015
      %1037 = vmatpush.bf16.msra.mxu0 %v1014
      %1038 = vmatmul.bf16.gmra.mxu0 %v963
      %v1039 = vpop.f32.mrf.mxu0
      %v1040 = vadd.f32 0.0, %v1039
      %v1041 = vpop.f32.mrf.mxu0
      %1042 = vdwg.mxu0
      %v1043 = vadd.f32 %v954, %v1040
      %v1044 = vld [vmem:[%s965 + $0x40] sm:$0xf]
      %v1045 = vld [vmem:[%s965 + $0x44] sm:$0xf]
      %v1046 = vld [vmem:[%s965 + $0x48] sm:$0xf]
      %v1047 = vld [vmem:[%s965 + $0x4c] sm:$0xf]
      %v1048 = vld [vmem:[%s965 + $0x50] sm:$0xf]
      %v1049 = vld [vmem:[%s965 + $0x54] sm:$0xf]
      %v1050 = vld [vmem:[%s965 + $0x58] sm:$0xf]
      %v1051 = vld [vmem:[%s965 + $0x5c] sm:$0xf]
      %v1052 = vld [vmem:[%s965 + $0x60] sm:$0xf]
      %v1053 = vld [vmem:[%s965 + $0x64] sm:$0xf]
      %v1054 = vld [vmem:[%s965 + $0x68] sm:$0xf]
      %v1055 = vld [vmem:[%s965 + $0x6c] sm:$0xf]
      %v1056 = vld [vmem:[%s965 + $0x70] sm:$0xf]
      %v1057 = vld [vmem:[%s965 + $0x74] sm:$0xf]
      %v1058 = vld [vmem:[%s965 + $0x78] sm:$0xf]
      %v1059 = vld [vmem:[%s965 + $0x7c] sm:$0xf]
      %v1062 = vunpack.c.l.b16 %v963
      %v1063 = vunpack.c.l.b16 %v964
      %v1064 = vpack.c.b16 %v1063, %v1062
      %v1066 = vshrl.u32 %v1064, 16
      %v1068 = vshll.u32 %v1064, 16
      %v1070 = vrot.slane %v1068, 1
      %v1071 = vor.u32 %v1066, %v1070
      %v1089 = vunpack.c.l.b16 %v1044
      %v1090 = vunpack.c.l.b16 %v1045
      %v1091 = vunpack.c.l.b16 %v1046
      %v1092 = vunpack.c.l.b16 %v1047
      %v1093 = vunpack.c.l.b16 %v1048
      %v1094 = vunpack.c.l.b16 %v1049
      %v1095 = vunpack.c.l.b16 %v1050
      %v1096 = vunpack.c.l.b16 %v1051
      %v1097 = vunpack.c.l.b16 %v1052
      %v1098 = vunpack.c.l.b16 %v1053
      %v1099 = vunpack.c.l.b16 %v1054
      %v1100 = vunpack.c.l.b16 %v1055
      %v1101 = vunpack.c.l.b16 %v1056
      %v1102 = vunpack.c.l.b16 %v1057
      %v1103 = vunpack.c.l.b16 %v1058
      %v1104 = vunpack.c.l.b16 %v1059
      %v1105 = vpack.c.b16 %v1090, %v1089
      %v1106 = vpack.c.b16 %v1092, %v1091
      %v1107 = vpack.c.b16 %v1094, %v1093
      %v1108 = vpack.c.b16 %v1096, %v1095
      %v1109 = vpack.c.b16 %v1098, %v1097
      %v1110 = vpack.c.b16 %v1100, %v1099
      %v1111 = vpack.c.b16 %v1102, %v1101
      %v1112 = vpack.c.b16 %v1104, %v1103
      %1121 = vmatpush.bf16.msra.mxu0 %v1112
      %1122 = vmatpush.bf16.msra.mxu0 %v1111
      %1123 = vmatpush.bf16.msra.mxu0 %v1110
      %1124 = vmatpush.bf16.msra.mxu0 %v1109
      %1125 = vmatpush.bf16.msra.mxu0 %v1108
      %1126 = vmatpush.bf16.msra.mxu0 %v1107
      %1127 = vmatpush.bf16.msra.mxu0 %v1106
      %1128 = vmatpush.bf16.msra.mxu0 %v1105
      %1129 = vmatmul.bf16.gmra.mxu0 %v1071
      %v1130 = vpop.f32.mrf.mxu0
      %v1131 = vadd.f32 0.0, %v1130
      %v1132 = vpop.f32.mrf.mxu0
      %1133 = vdwg.mxu0
      %v1134 = vadd.f32 %v1043, %v1131
      %v1135 = vld [vmem:[%s965 + $0x80] sm:$0xf]
      %v1136 = vld [vmem:[%s965 + $0x84] sm:$0xf]
      %v1137 = vld [vmem:[%s965 + $0x88] sm:$0xf]
      %v1138 = vld [vmem:[%s965 + $0x8c] sm:$0xf]
      %v1139 = vld [vmem:[%s965 + $0x90] sm:$0xf]
      %v1140 = vld [vmem:[%s965 + $0x94] sm:$0xf]
      %v1141 = vld [vmem:[%s965 + $0x98] sm:$0xf]
      %v1142 = vld [vmem:[%s965 + $0x9c] sm:$0xf]
      %v1143 = vld [vmem:[%s965 + $0xa0] sm:$0xf]
      %v1144 = vld [vmem:[%s965 + $0xa4] sm:$0xf]
      %v1145 = vld [vmem:[%s965 + $0xa8] sm:$0xf]
      %v1146 = vld [vmem:[%s965 + $0xac] sm:$0xf]
      %v1147 = vld [vmem:[%s965 + $0xb0] sm:$0xf]
      %v1148 = vld [vmem:[%s965 + $0xb4] sm:$0xf]
      %v1149 = vld [vmem:[%s965 + $0xb8] sm:$0xf]
      %v1150 = vld [vmem:[%s965 + $0xbc] sm:$0xf]
      %v1151 = vrot.slane %v1064, 1
      %v1169 = vunpack.c.l.b16 %v1135
      %v1170 = vunpack.c.l.b16 %v1136
      %v1171 = vunpack.c.l.b16 %v1137
      %v1172 = vunpack.c.l.b16 %v1138
      %v1173 = vunpack.c.l.b16 %v1139
      %v1174 = vunpack.c.l.b16 %v1140
      %v1175 = vunpack.c.l.b16 %v1141
      %v1176 = vunpack.c.l.b16 %v1142
      %v1177 = vunpack.c.l.b16 %v1143
      %v1178 = vunpack.c.l.b16 %v1144
      %v1179 = vunpack.c.l.b16 %v1145
      %v1180 = vunpack.c.l.b16 %v1146
      %v1181 = vunpack.c.l.b16 %v1147
      %v1182 = vunpack.c.l.b16 %v1148
      %v1183 = vunpack.c.l.b16 %v1149
      %v1184 = vunpack.c.l.b16 %v1150
      %v1185 = vpack.c.b16 %v1170, %v1169
      %v1186 = vpack.c.b16 %v1172, %v1171
      %v1187 = vpack.c.b16 %v1174, %v1173
      %v1188 = vpack.c.b16 %v1176, %v1175
      %v1189 = vpack.c.b16 %v1178, %v1177
      %v1190 = vpack.c.b16 %v1180, %v1179
      %v1191 = vpack.c.b16 %v1182, %v1181
      %v1192 = vpack.c.b16 %v1184, %v1183
      %1201 = vmatpush.bf16.msra.mxu0 %v1192
      %1202 = vmatpush.bf16.msra.mxu0 %v1191
      %1203 = vmatpush.bf16.msra.mxu0 %v1190
      %1204 = vmatpush.bf16.msra.mxu0 %v1189
      %1205 = vmatpush.bf16.msra.mxu0 %v1188
      %1206 = vmatpush.bf16.msra.mxu0 %v1187
      %1207 = vmatpush.bf16.msra.mxu0 %v1186
      %1208 = vmatpush.bf16.msra.mxu0 %v1185
      %1209 = vmatmul.bf16.gmra.mxu0 %v1151
      %v1210 = vpop.f32.mrf.mxu0
      %v1211 = vadd.f32 0.0, %v1210
      %v1212 = vpop.f32.mrf.mxu0
      %1213 = vdwg.mxu0
      %v1214 = vadd.f32 %v1134, %v1211
      %1215 = vst [vmem:[%s423] sm:$0xff] %v1214
      %v1216 = vld [vmem:[#allocation2] sm:$0x1]
      %v1217 = vrot.slane %v1214, 4
      %v1218 = vadd.f32 %v1214, %v1217
      %v1219 = vrot.slane %v1218, 2
      %v1220 = vadd.f32 %v1218, %v1219
      %v1221 = vrot.slane %v1220, 1
      %v1222 = vadd.f32 %v1220, %v1221
      %v1223 = vadd.f32 %v1216, %v1222
      %1224 = vst [vmem:[#allocation2] sm:$0x1] %v1223
      %v1225 = vld [vmem:[#allocation2 + $0x1] sm:$0x1]
      %v1226 = vmul.f32 %v1214, %v1214
      %v1227 = vrot.slane %v1226, 4
      %v1228 = vadd.f32 %v1226, %v1227
      %v1229 = vrot.slane %v1228, 2
      %v1230 = vadd.f32 %v1228, %v1229
      %v1231 = vrot.slane %v1230, 1
      %v1232 = vadd.f32 %v1230, %v1231
      %v1233 = vadd.f32 %v1225, %v1232
      %1234 = vst [vmem:[#allocation2 + $0x1] sm:$0x1] %v1233
      %p1235 = scmp.eq.s32.totalorder %s23, 1
      %p1236 = scmp.eq.s32.totalorder %s24, 7
      %p1237 = pnand %p1235, %p1236
      %p1238 = pneg %p1237
      // Predicated region
      $region49: #{forward.16} parent=43 // pred_check
        _
      $region50: #{forward.16} parent=43 // pred_check_branch
        %1240 = sbr.rel (%p1237) target = $region52
      $region51: #{forward.16} parent=43 // pred_region
        %v1241 = vld [vmem:[#allocation2] sm:$0x1]
        %v1242 = vmul.f32 %v1241, 0.0078125
        %v1243 = vld [vmem:[#allocation2 + $0x1] sm:$0x1]
        %v1244 = vmul.f32 %v1243, 0.0078125
        %v1245 = vmul.f32 %v1242, %v1242
        %v1246 = vsub.f32 %v1244, %v1245
        %1247 = vst [vmem:[%s7] sm:$0x1] %v1242
        %1248 = vst [vmem:[%s7 + $0x1] sm:$0x1] %v1246
      $region52: #{forward.16} parent=43 // pred_fallthru
        _
      %p1249 = scmp.lt.s32.totalorder %s23, 1
      %s1250 = scalar_select %p1249, %s23, 1
      %p1251 = scmp.lt.s32.totalorder %s24, 7
      %s1252 = scalar_select %p1251, %s24, 7
      %s1253 = smul.addr %s1250, 8
      %s1254 = sadd.s32 %s1252, %s1253
      %s1255 = smul.addr %s1254, 8
      %s1256 = scalar_lea.vmem %s6, %s1255
      // Predicated region
      $region53: #{forward.16} parent=43 // pred_check
        %p1257 = pneg %p209
      $region54: #{forward.16} parent=43 // pred_check_branch
        %1259 = sbr.rel (%p1257) target = $region56
      $region55: #{forward.16} parent=43 // pred_region
        _
      $region56: #{forward.16} parent=43 // pred_fallthru
        _
      // Predicated region
      $region57: #{forward.16} parent=43 // pred_check
        %p1260 = pneg %p230
      $region58: #{forward.16} parent=43 // pred_check_branch
        %1262 = sbr.rel (%p1260) target = $region60
      $region59: #{forward.16} parent=43 // pred_region
        _
      $region60: #{forward.16} parent=43 // pred_fallthru
        _
      // Predicated region
      $region61: #{forward.16} parent=43 // pred_check
        %p1263 = pneg %p230
      $region62: #{forward.16} parent=43 // pred_check_branch
        %1265 = sbr.rel (%p1263) target = $region64
      $region63: #{forward.16} parent=43 // pred_region
        _
      $region64: #{forward.16} parent=43 // pred_fallthru
        _
    $region44: #{forward.16} parent=5 // pred_fallthru
      _
    %p1266 = scmp.le.s32.totalorder 2, %s14
    // Predicated region
    $region65: #{forward.16} parent=5 // pred_check
      %p1267 = pneg %p1266
    $region66: #{forward.16} parent=5 // pred_check_branch
      %1269 = sbr.rel (%p1267) target = $region68
    $region67: #{forward.16} parent=5 // pred_region
      %s1270 = ssub.s32 %s14, 2
      // Predicated region
      $region69: #{forward.16} parent=67 // pred_check
        %p1271 = pneg %p215
      $region70: #{forward.16} parent=67 // pred_check_branch
        %1273 = sbr.rel (%p1271) target = $region72
      $region71: #{forward.16} parent=67 // pred_region
        %p1274 = scmp.lt.s32.totalorder %s25, 1
        %s1275 = scalar_select %p1274, %s25, 1
        %p1276 = scmp.lt.s32.totalorder %s26, 7
        %s1277 = scalar_select %p1276, %s26, 7
        %s1278 = smul.addr %s1275, 8
        %s1279 = sadd.s32 %s1277, %s1278
        %s1280 = smul.addr %s1279, 8
        %s1281 = scalar_lea.vmem %s6, %s1280
      $region72: #{forward.16} parent=67 // pred_fallthru
        _
    $region68: #{forward.16} parent=5 // pred_fallthru
      _
  $region6: #{forward.16} parent=0 // loop_footer
    %s18 = sadd.s32 1, %s14
  $region7: #{forward.16} parent=0 // loop_footer_branch
    %13 = sbr.rel target = $region3
  $region8: #{forward.16} parent=0 // loop_exit
    _

// kernel: forward.20
$region0: #{forward.20}
  #allocation0 [shape = 'u32[]', space=smem, size = 0x4, offset = 0x4, fixed_abs, tag = 'smem constant byte address 0x4 - core index']
  #allocation1 [shape = 'u32[72,128]{1,0:T(1,128)}', space=vmem, size = 0x9000, scoped, tag = 'internal scratch']
  #allocation2 [shape = 'f32[2,128]{1,0:T(2,128)}', space=vmem, size = 0x400, scoped, tag = 'scratch operand']
  %s0 = inlined_call_operand.vmem [shape: f32[2,4,4,128], index: 0, kind: input, shape index: {}]
  %s1 = inlined_call_operand.vmem [shape: f32[2,4,4,128], index: 1, kind: input, shape index: {}]
  %s2 = inlined_call_operand.vmem [shape: f32[2,4,4,128], index: 2, kind: input, shape index: {}]
  %s3 = inlined_call_operand.vmem [shape: f32[2,4,4,128], index: 3, kind: input, shape index: {}]
  %s4 = inlined_call_operand.vmem [shape: f32[2,4,4,128], index: 4, kind: output, shape index: {0}]
  %s5 = inlined_call_operand.vmem [shape: f32[2,128], index: 5, kind: output, shape index: {1}]
  %6 = xla_tuple %s4, %s5
  %s7 = sld [smem:[#allocation0]]
  $region65: #{forward.20} parent=0
    _
  %s9 = ssub.s32 1, %s7
  %s10 = scalar_select 0, %s9, %s7
  loop: start=0, step=1, limit=4
  $region2: #{forward.20} parent=0 // loop_pre_header
    _
  $region3: #{forward.20} parent=0 // loop_header
    %s12 = sphi 0, %s16
    %p13 = scmp.ge.s32.totalorder %s12, 4
    %s22 = sphi 0, %s24
    %s25 = sphi 0, %s22
    %s26 = sphi 0, %s25
    %s42 = sphi 0, %s26
    %s48 = sphi 0, %s50
    %s51 = sphi 0, %s48
    %s52 = sphi 0, %s51
    %s68 = sphi 0, %s52
    %s74 = sphi 0, %s76
    %s77 = sphi 0, %s74
    %s78 = sphi 0, %s77
    %s94 = sphi 0, %s78
    %s100 = sphi 0, %s102
    %s103 = sphi 0, %s100
    %s104 = sphi 0, %s103
    %s120 = sphi 0, %s104
    %s126 = sphi 0, %s128
    %s129 = sphi 0, %s126
    %s130 = sphi 0, %s129
    %s146 = sphi 0, %s130
    %s150 = sphi 0, %s150
    %s152 = sphi 0, %s150
    %s153 = sphi 0, %s152
    %s167 = sphi 0, %s153
  $region4: #{forward.20} parent=0 // loop_header_branch
    %15 = sbr.rel (%p13) target = $region8
  $region5: #{forward.20} parent=0 // loop_body
    %s17 = ssub.s32 %s12, 1
    %s18 = ssub.s32 %s12, 2
    %s19 = sadd.s32 %s12, 1
    %s20 = ssub.s32 %s12, %s19
    %p21 = scmp.eq.s32.totalorder %s20, 0
    %s23 = sadd.s32 %s22, 1
    %s24 = scalar_select %p21, %s22, %s23
    %p27 = pneg %p21
    %p28 = scmp.eq.s32.totalorder %s12, 1
    %p29 = por %p27, %p28
    %p30 = scmp.ne.s32.totalorder %s22, %s25
    %p31 = scmp.eq.s32.totalorder %s12, 0
    %p32 = por %p30, %p31
    %p33 = scmp.ne.s32.totalorder %s22, %s25
    %p34 = scmp.eq.s32.totalorder %s17, 1
    %p35 = por %p33, %p34
    %p36 = scmp.ne.s32.totalorder %s25, %s26
    %p37 = scmp.eq.s32.totalorder %s17, 0
    %p38 = por %p36, %p37
    %p39 = scmp.ne.s32.totalorder %s25, %s26
    %p40 = scmp.eq.s32.totalorder %s18, 1
    %p41 = por %p39, %p40
    %p43 = scmp.ne.s32.totalorder %s26, %s42
    %p44 = scmp.eq.s32.totalorder %s18, 0
    %p45 = por %p43, %p44
    %s46 = ssub.s32 %s12, %s19
    %p47 = scmp.eq.s32.totalorder %s46, 0
    %s49 = sadd.s32 %s48, 1
    %s50 = scalar_select %p47, %s48, %s49
    %p53 = pneg %p47
    %p54 = scmp.eq.s32.totalorder %s12, 1
    %p55 = por %p53, %p54
    %p56 = scmp.ne.s32.totalorder %s48, %s51
    %p57 = scmp.eq.s32.totalorder %s12, 0
    %p58 = por %p56, %p57
    %p59 = scmp.ne.s32.totalorder %s48, %s51
    %p60 = scmp.eq.s32.totalorder %s17, 1
    %p61 = por %p59, %p60
    %p62 = scmp.ne.s32.totalorder %s51, %s52
    %p63 = scmp.eq.s32.totalorder %s17, 0
    %p64 = por %p62, %p63
    %p65 = scmp.ne.s32.totalorder %s51, %s52
    %p66 = scmp.eq.s32.totalorder %s18, 1
    %p67 = por %p65, %p66
    %p69 = scmp.ne.s32.totalorder %s52, %s68
    %p70 = scmp.eq.s32.totalorder %s18, 0
    %p71 = por %p69, %p70
    %s72 = ssub.s32 %s12, %s19
    %p73 = scmp.eq.s32.totalorder %s72, 0
    %s75 = sadd.s32 %s74, 1
    %s76 = scalar_select %p73, %s74, %s75
    %p79 = pneg %p73
    %p80 = scmp.eq.s32.totalorder %s12, 1
    %p81 = por %p79, %p80
    %p82 = scmp.ne.s32.totalorder %s74, %s77
    %p83 = scmp.eq.s32.totalorder %s12, 0
    %p84 = por %p82, %p83
    %p85 = scmp.ne.s32.totalorder %s74, %s77
    %p86 = scmp.eq.s32.totalorder %s17, 1
    %p87 = por %p85, %p86
    %p88 = scmp.ne.s32.totalorder %s77, %s78
    %p89 = scmp.eq.s32.totalorder %s17, 0
    %p90 = por %p88, %p89
    %p91 = scmp.ne.s32.totalorder %s77, %s78
    %p92 = scmp.eq.s32.totalorder %s18, 1
    %p93 = por %p91, %p92
    %p95 = scmp.ne.s32.totalorder %s78, %s94
    %p96 = scmp.eq.s32.totalorder %s18, 0
    %p97 = por %p95, %p96
    %s98 = ssub.s32 %s12, %s19
    %p99 = scmp.eq.s32.totalorder %s98, 0
    %s101 = sadd.s32 %s100, 1
    %s102 = scalar_select %p99, %s100, %s101
    %p105 = pneg %p99
    %p106 = scmp.eq.s32.totalorder %s12, 1
    %p107 = por %p105, %p106
    %p108 = scmp.ne.s32.totalorder %s100, %s103
    %p109 = scmp.eq.s32.totalorder %s12, 0
    %p110 = por %p108, %p109
    %p111 = scmp.ne.s32.totalorder %s100, %s103
    %p112 = scmp.eq.s32.totalorder %s17, 1
    %p113 = por %p111, %p112
    %p114 = scmp.ne.s32.totalorder %s103, %s104
    %p115 = scmp.eq.s32.totalorder %s17, 0
    %p116 = por %p114, %p115
    %p117 = scmp.ne.s32.totalorder %s103, %s104
    %p118 = scmp.eq.s32.totalorder %s18, 1
    %p119 = por %p117, %p118
    %p121 = scmp.ne.s32.totalorder %s104, %s120
    %p122 = scmp.eq.s32.totalorder %s18, 0
    %p123 = por %p121, %p122
    %s124 = ssub.s32 %s12, %s19
    %p125 = scmp.eq.s32.totalorder %s124, 0
    %s127 = sadd.s32 %s126, 1
    %s128 = scalar_select %p125, %s126, %s127
    %p131 = pneg %p125
    %p132 = scmp.eq.s32.totalorder %s12, 1
    %p133 = por %p131, %p132
    %p134 = scmp.ne.s32.totalorder %s126, %s129
    %p135 = scmp.eq.s32.totalorder %s12, 0
    %p136 = por %p134, %p135
    %p137 = scmp.ne.s32.totalorder %s126, %s129
    %p138 = scmp.eq.s32.totalorder %s17, 1
    %p139 = por %p137, %p138
    %p140 = scmp.ne.s32.totalorder %s129, %s130
    %p141 = scmp.eq.s32.totalorder %s17, 0
    %p142 = por %p140, %p141
    %p143 = scmp.ne.s32.totalorder %s129, %s130
    %p144 = scmp.eq.s32.totalorder %s18, 1
    %p145 = por %p143, %p144
    %p147 = scmp.ne.s32.totalorder %s130, %s146
    %p148 = scmp.eq.s32.totalorder %s18, 0
    %p149 = por %p147, %p148
    %s151 = sadd.s32 %s150, 1
    %p154 = scmp.eq.s32.totalorder %s12, 1
    %p155 = scmp.ne.s32.totalorder %s150, %s152
    %p156 = scmp.eq.s32.totalorder %s12, 0
    %p157 = por %p155, %p156
    %p158 = scmp.ne.s32.totalorder %s150, %s152
    %p159 = scmp.eq.s32.totalorder %s17, 1
    %p160 = por %p158, %p159
    %p161 = scmp.ne.s32.totalorder %s152, %s153
    %p162 = scmp.eq.s32.totalorder %s17, 0
    %p163 = por %p161, %p162
    %p164 = scmp.ne.s32.totalorder %s152, %s153
    %p165 = scmp.eq.s32.totalorder %s18, 1
    %p166 = por %p164, %p165
    %p168 = scmp.ne.s32.totalorder %s153, %s167
    %p169 = scmp.eq.s32.totalorder %s18, 0
    %p170 = por %p168, %p169
    %p171 = scmp.le.s32.totalorder 1, %s12
    %p172 = scmp.lt.s32.totalorder %s12, 3
    %p173 = pnand %p171, %p172
    %p174 = pneg %p173
    // Predicated region
    $region9: #{forward.20} parent=5 // pred_check
      _
    $region10: #{forward.20} parent=5 // pred_check_branch
      %176 = sbr.rel (%p173) target = $region12
    $region11: #{forward.20} parent=5 // pred_region
      %s177 = ssub.s32 %s12, 1
    $region12: #{forward.20} parent=5 // pred_fallthru
      _
    %p178 = scmp.lt.s32.totalorder %s12, 2
    // Predicated region
    $region13: #{forward.20} parent=5 // pred_check
      %p179 = pneg %p178
    $region14: #{forward.20} parent=5 // pred_check_branch
      %181 = sbr.rel (%p179) target = $region16
    $region15: #{forward.20} parent=5 // pred_region
      // Predicated region
      $region17: #{forward.20} parent=15 // pred_check
        %p182 = pneg %p32
      $region18: #{forward.20} parent=15 // pred_check_branch
        %184 = sbr.rel (%p182) target = $region20
      $region19: #{forward.20} parent=15 // pred_region
        %p185 = scmp.lt.s32.totalorder %s12, 1
        %s186 = scalar_select %p185, %s12, 1
        %s187 = smul.addr %s186, 4
        %s188 = smul.addr %s187, 4
        %s189 = scalar_lea.vmem %s0, %s188
      $region20: #{forward.20} parent=15 // pred_fallthru
        _
      // Predicated region
      $region21: #{forward.20} parent=15 // pred_check
        %p190 = pneg %p58
      $region22: #{forward.20} parent=15 // pred_check_branch
        %192 = sbr.rel (%p190) target = $region24
      $region23: #{forward.20} parent=15 // pred_region
        %p193 = scmp.lt.s32.totalorder %s12, 1
        %s194 = scalar_select %p193, %s12, 1
        %s195 = smul.addr %s194, 4
        %s196 = smul.addr %s195, 4
        %s197 = scalar_lea.vmem %s1, %s196
      $region24: #{forward.20} parent=15 // pred_fallthru
        _
      // Predicated region
      $region25: #{forward.20} parent=15 // pred_check
        %p198 = pneg %p84
      $region26: #{forward.20} parent=15 // pred_check_branch
        %200 = sbr.rel (%p198) target = $region28
      $region27: #{forward.20} parent=15 // pred_region
        %p201 = scmp.lt.s32.totalorder %s12, 1
        %s202 = scalar_select %p201, %s12, 1
        %s203 = smul.addr %s202, 4
        %s204 = smul.addr %s203, 4
        %s205 = scalar_lea.vmem %s2, %s204
      $region28: #{forward.20} parent=15 // pred_fallthru
        _
      // Predicated region
      $region29: #{forward.20} parent=15 // pred_check
        %p206 = pneg %p110
      $region30: #{forward.20} parent=15 // pred_check_branch
        %208 = sbr.rel (%p206) target = $region32
      $region31: #{forward.20} parent=15 // pred_region
        %p209 = scmp.lt.s32.totalorder %s12, 1
        %s210 = scalar_select %p209, %s12, 1
        %s211 = smul.addr %s210, 4
        %s212 = smul.addr %s211, 4
        %s213 = scalar_lea.vmem %s3, %s212
      $region32: #{forward.20} parent=15 // pred_fallthru
        _
    $region16: #{forward.20} parent=5 // pred_fallthru
      _
    %p214 = scmp.le.s32.totalorder 1, %s12
    %p215 = scmp.lt.s32.totalorder %s12, 3
    %p216 = pnand %p214, %p215
    %p217 = pneg %p216
    // Predicated region
    $region33: #{forward.20} parent=5 // pred_check
      _
    $region34: #{forward.20} parent=5 // pred_check_branch
      %219 = sbr.rel (%p216) target = $region36
    $region35: #{forward.20} parent=5 // pred_region
      %s220 = ssub.s32 %s12, 1
      %p221 = scmp.lt.s32.totalorder %s17, 1
      %s222 = scalar_select %p221, %s17, 1
      %s223 = smul.addr %s222, 4
      %s224 = smul.addr %s223, 4
      %s225 = scalar_lea.vmem %s0, %s224
      %p226 = pneg %p38
      %p227 = pneg %p35
      %p228 = scmp.lt.s32.totalorder %s17, 1
      %s229 = scalar_select %p228, %s17, 1
      %s230 = smul.addr %s229, 4
      %s231 = smul.addr %s230, 4
      %s232 = scalar_lea.vmem %s1, %s231
      %p233 = pneg %p64
      %p234 = pneg %p61
      %p235 = scmp.lt.s32.totalorder %s17, 1
      %s236 = scalar_select %p235, %s17, 1
      %s237 = smul.addr %s236, 4
      %s238 = smul.addr %s237, 4
      %s239 = scalar_lea.vmem %s2, %s238
      %p240 = pneg %p90
      %p241 = pneg %p87
      %p242 = scmp.lt.s32.totalorder %s17, 1
      %s243 = scalar_select %p242, %s17, 1
      %s244 = smul.addr %s243, 4
      %s245 = smul.addr %s244, 4
      %s246 = scalar_lea.vmem %s3, %s245
      %p247 = pneg %p116
      %p248 = pneg %p113
      %p249 = pneg %p142
      %p250 = pneg %p139
      %p251 = scmp.lt.s32.totalorder %s17, 1
      %s252 = scalar_select %p251, %s17, 1
      %s253 = smul.addr %s252, 4
      %s254 = smul.addr %s253, 4
      %s255 = scalar_lea.vmem %s4, %s254
      %p256 = pneg %p163
      %p257 = pneg %p160
      %p258 = scmp.lt.s32.totalorder %s17, 1
      %s259 = scalar_select %p258, %s17, 1
      %s260 = smul.addr %s259, 4
      %s261 = smul.addr %s260, 4
      %s262 = scalar_lea.vmem %s0, %s261
      %p263 = scmp.lt.s32.totalorder %s17, 1
      %s264 = scalar_select %p263, %s17, 1
      %s265 = smul.addr %s264, 4
      %s266 = smul.addr %s265, 4
      %s267 = scalar_lea.vmem %s1, %s266
      %p268 = scmp.lt.s32.totalorder %s17, 1
      %s269 = scalar_select %p268, %s17, 1
      %s270 = smul.addr %s269, 4
      %s271 = smul.addr %s270, 4
      %s272 = scalar_lea.vmem %s2, %s271
      %p273 = scmp.lt.s32.totalorder %s17, 1
      %s274 = scalar_select %p273, %s17, 1
      %s275 = smul.addr %s274, 4
      %s276 = smul.addr %s275, 4
      %s277 = scalar_lea.vmem %s3, %s276
      %p278 = scmp.lt.s32.totalorder %s17, 1
      %s279 = scalar_select %p278, %s17, 1
      %s280 = smul.addr %s279, 4
      %s281 = smul.addr %s280, 4
      %s282 = scalar_lea.vmem %s4, %s281
      %p283 = scmp.eq.s32.totalorder %s17, 0
      // Predicated region
      $region37: #{forward.20} parent=35 // pred_check
        %p284 = pneg %p283
      $region38: #{forward.20} parent=35 // pred_check_branch
        %286 = sbr.rel (%p284) target = $region40
      $region39: #{forward.20} parent=35 // pred_region
        %287 = vst [vmem:[#allocation2] sm:$0x3] 0.0
      $region40: #{forward.20} parent=35 // pred_fallthru
        _
      %v288 = vld [vmem:[%s262] sm:$0xf]
      %v289 = vld [vmem:[%s262 + $0x4] sm:$0xf]
      %v290 = vld [vmem:[%s262 + $0x8] sm:$0xf]
      %v291 = vld [vmem:[%s262 + $0xc] sm:$0xf]
      %v292 = vld [vmem:[%s267] sm:$0xf]
      %v293 = vld [vmem:[%s267 + $0x4] sm:$0xf]
      %v294 = vld [vmem:[%s267 + $0x8] sm:$0xf]
      %v295 = vld [vmem:[%s267 + $0xc] sm:$0xf]
      %v296 = vadd.f32 %v288, %v292
      %v297 = vadd.f32 %v289, %v293
      %v298 = vadd.f32 %v290, %v294
      %v299 = vadd.f32 %v291, %v295
      %v300 = vld [vmem:[%s272] sm:$0xf]
      %v301 = vld [vmem:[%s272 + $0x4] sm:$0xf]
      %v302 = vld [vmem:[%s272 + $0x8] sm:$0xf]
      %v303 = vld [vmem:[%s272 + $0xc] sm:$0xf]
      %v304 = vadd.f32 %v296, %v300
      %v305 = vadd.f32 %v297, %v301
      %v306 = vadd.f32 %v298, %v302
      %v307 = vadd.f32 %v299, %v303
      %v308 = vld [vmem:[%s277] sm:$0xf]
      %v309 = vld [vmem:[%s277 + $0x4] sm:$0xf]
      %v310 = vld [vmem:[%s277 + $0x8] sm:$0xf]
      %v311 = vld [vmem:[%s277 + $0xc] sm:$0xf]
      %v312 = vadd.f32 %v304, %v308
      %v313 = vadd.f32 %v305, %v309
      %v314 = vadd.f32 %v306, %v310
      %v315 = vadd.f32 %v307, %v311
      %v316 = vmul.f32 %v312, 0.25
      %v317 = vmul.f32 %v313, 0.25
      %v318 = vmul.f32 %v314, 0.25
      %v319 = vmul.f32 %v315, 0.25
      %320 = vst [vmem:[%s282] sm:$0xf] %v316
      %321 = vst [vmem:[%s282 + $0x4] sm:$0xf] %v317
      %322 = vst [vmem:[%s282 + $0x8] sm:$0xf] %v318
      %323 = vst [vmem:[%s282 + $0xc] sm:$0xf] %v319
      %v324 = vld [vmem:[#allocation2] sm:$0x1]
      %vm325 = vcmask 1043456
      %v326 = vsel %vm325, %v316, 0.0
      %v327 = vsel %vm325, %v317, 0.0
      %v328 = vadd.f32 %v326, %v327
      %v329 = vsel %vm325, %v318, 0.0
      %v330 = vadd.f32 %v328, %v329
      %v331 = vsel %vm325, %v319, 0.0
      %v332 = vadd.f32 %v330, %v331
      %v333 = vsel %vm325, %v332, 0.0
      %v334 = vrot.slane %v333, 4
      %v335 = vadd.f32 %v333, %v334
      %v336 = vrot.slane %v335, 2
      %v337 = vadd.f32 %v335, %v336
      %v338 = vrot.slane %v337, 1
      %v339 = vadd.f32 %v337, %v338
      %v340 = vadd.f32 %v324, %v339
      %341 = vst [vmem:[#allocation2] sm:$0x1] %v340
      %v342 = vld [vmem:[#allocation2 + $0x1] sm:$0x1]
      %v343 = vmul.f32 %v316, %v316
      %v344 = vmul.f32 %v317, %v317
      %v345 = vmul.f32 %v318, %v318
      %v346 = vmul.f32 %v319, %v319
      %v347 = vsel %vm325, %v343, 0.0
      %v348 = vsel %vm325, %v344, 0.0
      %v349 = vadd.f32 %v347, %v348
      %v350 = vsel %vm325, %v345, 0.0
      %v351 = vadd.f32 %v349, %v350
      %v352 = vsel %vm325, %v346, 0.0
      %v353 = vadd.f32 %v351, %v352
      %v354 = vsel %vm325, %v353, 0.0
      %v355 = vrot.slane %v354, 4
      %v356 = vadd.f32 %v354, %v355
      %v357 = vrot.slane %v356, 2
      %v358 = vadd.f32 %v356, %v357
      %v359 = vrot.slane %v358, 1
      %v360 = vadd.f32 %v358, %v359
      %v361 = vadd.f32 %v342, %v360
      %362 = vst [vmem:[#allocation2 + $0x1] sm:$0x1] %v361
      %p363 = scmp.eq.s32.totalorder %s17, 1
      // Predicated region
      $region41: #{forward.20} parent=35 // pred_check
        %p364 = pneg %p363
      $region42: #{forward.20} parent=35 // pred_check_branch
        %366 = sbr.rel (%p364) target = $region44
      $region43: #{forward.20} parent=35 // pred_region
        %v367 = vld [vmem:[#allocation2] sm:$0x1]
        %v368 = vmul.f32 %v367, 0.03125
        %v369 = vld [vmem:[#allocation2 + $0x1] sm:$0x1]
        %v370 = vmul.f32 %v369, 0.03125
        %v371 = vmul.f32 %v368, %v368
        %v372 = vsub.f32 %v370, %v371
        %373 = vst [vmem:[%s5] sm:$0x1] %v368
        %374 = vst [vmem:[%s5 + $0x1] sm:$0x1] %v372
      $region44: #{forward.20} parent=35 // pred_fallthru
        _
      %p375 = scmp.lt.s32.totalorder %s17, 1
      %s376 = scalar_select %p375, %s17, 1
      %s377 = smul.addr %s376, 4
      %s378 = smul.addr %s377, 4
      %s379 = scalar_lea.vmem %s4, %s378
      // Predicated region
      $region45: #{forward.20} parent=35 // pred_check
        %p380 = pneg %p139
      $region46: #{forward.20} parent=35 // pred_check_branch
        %382 = sbr.rel (%p380) target = $region48
      $region47: #{forward.20} parent=35 // pred_region
        _
      $region48: #{forward.20} parent=35 // pred_fallthru
        _
      // Predicated region
      $region49: #{forward.20} parent=35 // pred_check
        %p383 = pneg %p160
      $region50: #{forward.20} parent=35 // pred_check_branch
        %385 = sbr.rel (%p383) target = $region52
      $region51: #{forward.20} parent=35 // pred_region
        _
      $region52: #{forward.20} parent=35 // pred_fallthru
        _
      // Predicated region
      $region53: #{forward.20} parent=35 // pred_check
        %p386 = pneg %p160
      $region54: #{forward.20} parent=35 // pred_check_branch
        %388 = sbr.rel (%p386) target = $region56
      $region55: #{forward.20} parent=35 // pred_region
        _
      $region56: #{forward.20} parent=35 // pred_fallthru
        _
    $region36: #{forward.20} parent=5 // pred_fallthru
      _
    %p389 = scmp.le.s32.totalorder 2, %s12
    // Predicated region
    $region57: #{forward.20} parent=5 // pred_check
      %p390 = pneg %p389
    $region58: #{forward.20} parent=5 // pred_check_branch
      %392 = sbr.rel (%p390) target = $region60
    $region59: #{forward.20} parent=5 // pred_region
      %s393 = ssub.s32 %s12, 2
      // Predicated region
      $region61: #{forward.20} parent=59 // pred_check
        %p394 = pneg %p145
      $region62: #{forward.20} parent=59 // pred_check_branch
        %396 = sbr.rel (%p394) target = $region64
      $region63: #{forward.20} parent=59 // pred_region
        %p397 = scmp.lt.s32.totalorder %s18, 1
        %s398 = scalar_select %p397, %s18, 1
        %s399 = smul.addr %s398, 4
        %s400 = smul.addr %s399, 4
        %s401 = scalar_lea.vmem %s4, %s400
      $region64: #{forward.20} parent=59 // pred_fallthru
        _
    $region60: #{forward.20} parent=5 // pred_fallthru
      _
  $region6: #{forward.20} parent=0 // loop_footer
    %s16 = sadd.s32 1, %s12
  $region7: #{forward.20} parent=0 // loop_footer_branch
    %11 = sbr.rel target = $region3
  $region8: #{forward.20} parent=0 // loop_exit
    _

// kernel: forward.21
$region0: #{forward.21}
  #allocation0 [shape = 'u32[]', space=smem, size = 0x4, offset = 0x4, fixed_abs, tag = 'smem constant byte address 0x4 - core index']
  #allocation1 [shape = 'u32[72,128]{1,0:T(1,128)}', space=vmem, size = 0x9000, scoped, tag = 'internal scratch']
  #allocation2 [shape = 'f32[32,128]{1,0:T(8,128)}', space=vmem, size = 0x4000, scoped, tag = 'scratch operand']
  #allocation3 [shape = 'f32[2,128]{1,0:T(2,128)}', space=vmem, size = 0x400, scoped, tag = 'scratch operand']
  %s0 = inlined_call_operand.vmem [shape: f32[2,128], index: 0, kind: input, shape index: {}]
  %s1 = inlined_call_operand.vmem [shape: f32[32,128], index: 1, kind: input, shape index: {}]
  %s2 = inlined_call_operand.vmem [shape: bf16[128,128], index: 2, kind: input, shape index: {}]
  %s3 = inlined_call_operand.vmem [shape: f32[32,128], index: 3, kind: output, shape index: {0}]
  %s4 = inlined_call_operand.vmem [shape: f32[2,128], index: 4, kind: output, shape index: {1}]
  %5 = xla_tuple %s3, %s4
  %s6 = sld [smem:[#allocation0]]
  $region46: #{forward.21} parent=0
    _
  %s8 = ssub.s32 1, %s6
  %s9 = scalar_select 0, %s8, %s6
  // Predicated region
  $region2: #{forward.21} parent=0 // pred_check
    _
  $region3: #{forward.21} parent=0 // pred_check_branch
    %11 = sbr.rel (0) target = $region5
  $region4: #{forward.21} parent=0 // pred_region
    _
  $region5: #{forward.21} parent=0 // pred_fallthru
    _
  // Predicated region
  $region6: #{forward.21} parent=0 // pred_check
    _
  $region7: #{forward.21} parent=0 // pred_check_branch
    %13 = sbr.rel (0) target = $region9
  $region8: #{forward.21} parent=0 // pred_region
    _
  $region9: #{forward.21} parent=0 // pred_fallthru
    _
  // Predicated region
  $region10: #{forward.21} parent=0 // pred_check
    _
  $region11: #{forward.21} parent=0 // pred_check_branch
    %15 = sbr.rel (0) target = $region13
  $region12: #{forward.21} parent=0 // pred_region
    _
  $region13: #{forward.21} parent=0 // pred_fallthru
    _
  %p16 = scmp.eq.s32.totalorder 0, 0
  // Predicated region
  $region14: #{forward.21} parent=0 // pred_check
    %p17 = pneg %p16
  $region15: #{forward.21} parent=0 // pred_check_branch
    %19 = sbr.rel (%p17) target = $region17
  $region16: #{forward.21} parent=0 // pred_region
    %20 = vst [vmem:[#allocation2] sm:$0xff] 0.0
    %21 = vst [vmem:[#allocation2 + $0x8] sm:$0xff] 0.0
    %22 = vst [vmem:[#allocation2 + $0x10] sm:$0xff] 0.0
    %23 = vst [vmem:[#allocation2 + $0x18] sm:$0xff] 0.0
  $region17: #{forward.21} parent=0 // pred_fallthru
    _
  %p24 = scmp.eq.s32.totalorder 0, 0
  %p25 = pnand %p24, %p16
  %p26 = pneg %p25
  // Predicated region
  $region18: #{forward.21} parent=0 // pred_check
    _
  $region19: #{forward.21} parent=0 // pred_check_branch
    %28 = sbr.rel (%p25) target = $region21
  $region20: #{forward.21} parent=0 // pred_region
    %29 = vst [vmem:[#allocation3] sm:$0x3] 0.0
  $region21: #{forward.21} parent=0 // pred_fallthru
    _
  %v30 = vld [vmem:[%s1] sm:$0xff]
  %v31 = vld [vmem:[%s1 + $0x8] sm:$0xff]
  %v32 = vld [vmem:[%s1 + $0x10] sm:$0xff]
  %v33 = vld [vmem:[%s1 + $0x18] sm:$0xff]
  %v34 = vld [vmem:[%s0] sm:$0x1]
  %v35 = vperm.slane %v34, 0
  %v36 = vmul.f32 %v30, %v35
  %v37 = vmul.f32 %v31, %v35
  %v38 = vmul.f32 %v32, %v35
  %v39 = vmul.f32 %v33, %v35
  %v40 = vld [vmem:[%s0 + $0x1] sm:$0x1]
  %v41 = vperm.slane %v40, 0
  %v42 = vadd.f32 %v36, %v41
  %v43 = vadd.f32 %v37, %v41
  %v44 = vadd.f32 %v38, %v41
  %v45 = vadd.f32 %v39, %v41
  %v46 = vmax.f32 %v42, 0.0
  %v47 = vmax.f32 %v43, 0.0
  %v48 = vmax.f32 %v44, 0.0
  %v49 = vmax.f32 %v45, 0.0
  %v50 = vld [vmem:[#allocation2] sm:$0xff]
  %v51 = vld [vmem:[#allocation2 + $0x8] sm:$0xff]
  %v52 = vld [vmem:[#allocation2 + $0x10] sm:$0xff]
  %v53 = vld [vmem:[#allocation2 + $0x18] sm:$0xff]
  %v54 = vpack.c.bf16 %v47, %v46
  %v55 = vpack.c.bf16 %v49, %v48
  %v56 = vld [vmem:[%s2] sm:$0xf]
  %v57 = vld [vmem:[%s2 + $0x4] sm:$0xf]
  %v58 = vld [vmem:[%s2 + $0x8] sm:$0xf]
  %v59 = vld [vmem:[%s2 + $0xc] sm:$0xf]
  %v60 = vld [vmem:[%s2 + $0x10] sm:$0xf]
  %v61 = vld [vmem:[%s2 + $0x14] sm:$0xf]
  %v62 = vld [vmem:[%s2 + $0x18] sm:$0xf]
  %v63 = vld [vmem:[%s2 + $0x1c] sm:$0xf]
  %v64 = vld [vmem:[%s2 + $0x20] sm:$0xf]
  %v65 = vld [vmem:[%s2 + $0x24] sm:$0xf]
  %v66 = vld [vmem:[%s2 + $0x28] sm:$0xf]
  %v67 = vld [vmem:[%s2 + $0x2c] sm:$0xf]
  %v68 = vld [vmem:[%s2 + $0x30] sm:$0xf]
  %v69 = vld [vmem:[%s2 + $0x34] sm:$0xf]
  %v70 = vld [vmem:[%s2 + $0x38] sm:$0xf]
  %v71 = vld [vmem:[%s2 + $0x3c] sm:$0xf]
  %v88 = vunpack.c.l.b16 %v56
  %v89 = vunpack.c.l.b16 %v57
  %v90 = vunpack.c.l.b16 %v58
  %v91 = vunpack.c.l.b16 %v59
  %v92 = vunpack.c.l.b16 %v60
  %v93 = vunpack.c.l.b16 %v61
  %v94 = vunpack.c.l.b16 %v62
  %v95 = vunpack.c.l.b16 %v63
  %v96 = vunpack.c.l.b16 %v64
  %v97 = vunpack.c.l.b16 %v65
  %v98 = vunpack.c.l.b16 %v66
  %v99 = vunpack.c.l.b16 %v67
  %v100 = vunpack.c.l.b16 %v68
  %v101 = vunpack.c.l.b16 %v69
  %v102 = vunpack.c.l.b16 %v70
  %v103 = vunpack.c.l.b16 %v71
  %v104 = vpack.c.b16 %v89, %v88
  %v105 = vpack.c.b16 %v91, %v90
  %v106 = vpack.c.b16 %v93, %v92
  %v107 = vpack.c.b16 %v95, %v94
  %v108 = vpack.c.b16 %v97, %v96
  %v109 = vpack.c.b16 %v99, %v98
  %v110 = vpack.c.b16 %v101, %v100
  %v111 = vpack.c.b16 %v103, %v102
  %120 = vmatpush.bf16.msra.mxu0 %v111
  %121 = vmatpush.bf16.msra.mxu0 %v110
  %122 = vmatpush.bf16.msra.mxu0 %v109
  %123 = vmatpush.bf16.msra.mxu0 %v108
  %124 = vmatpush.bf16.msra.mxu0 %v107
  %125 = vmatpush.bf16.msra.mxu0 %v106
  %126 = vmatpush.bf16.msra.mxu0 %v105
  %127 = vmatpush.bf16.msra.mxu0 %v104
  %128 = vmatmul.bf16.gmra.mxu0 %v54
  %v129 = vpop.f32.mrf.mxu0
  %v130 = vadd.f32 0.0, %v129
  %v131 = vpop.f32.mrf.mxu0
  %v132 = vadd.f32 0.0, %v131
  %133 = vmatmul.bf16.gmra.mxu0 %v55
  %v134 = vpop.f32.mrf.mxu0
  %v135 = vadd.f32 0.0, %v134
  %v136 = vpop.f32.mrf.mxu0
  %v137 = vadd.f32 0.0, %v136
  %138 = vdwg.mxu0
  %v139 = vadd.f32 %v50, %v130
  %v140 = vadd.f32 %v51, %v132
  %v141 = vadd.f32 %v52, %v135
  %v142 = vadd.f32 %v53, %v137
  %143 = vst [vmem:[#allocation2] sm:$0xff] %v139
  %144 = vst [vmem:[#allocation2 + $0x8] sm:$0xff] %v140
  %145 = vst [vmem:[#allocation2 + $0x10] sm:$0xff] %v141
  %146 = vst [vmem:[#allocation2 + $0x18] sm:$0xff] %v142
  // Predicated region
  $region22: #{forward.21} parent=0 // pred_check
    %p147 = pneg %p16
  $region23: #{forward.21} parent=0 // pred_check_branch
    %149 = sbr.rel (%p147) target = $region25
  $region24: #{forward.21} parent=0 // pred_region
    %v150 = vld [vmem:[#allocation2] sm:$0xff]
    %v151 = vld [vmem:[#allocation2 + $0x8] sm:$0xff]
    %v152 = vld [vmem:[#allocation2 + $0x10] sm:$0xff]
    %v153 = vld [vmem:[#allocation2 + $0x18] sm:$0xff]
    %154 = vst [vmem:[%s3] sm:$0xff] %v150
    %155 = vst [vmem:[%s3 + $0x8] sm:$0xff] %v151
    %156 = vst [vmem:[%s3 + $0x10] sm:$0xff] %v152
    %157 = vst [vmem:[%s3 + $0x18] sm:$0xff] %v153
    %v158 = vld [vmem:[#allocation3] sm:$0x1]
    %v159 = vadd.f32 %v150, %v151
    %v160 = vadd.f32 %v159, %v152
    %v161 = vadd.f32 %v160, %v153
    %v162 = vrot.slane %v161, 4
    %v163 = vadd.f32 %v161, %v162
    %v164 = vrot.slane %v163, 2
    %v165 = vadd.f32 %v163, %v164
    %v166 = vrot.slane %v165, 1
    %v167 = vadd.f32 %v165, %v166
    %v168 = vadd.f32 %v158, %v167
    %169 = vst [vmem:[#allocation3] sm:$0x1] %v168
    %v170 = vld [vmem:[#allocation3 + $0x1] sm:$0x1]
    %v171 = vmul.f32 %v150, %v150
    %v172 = vmul.f32 %v151, %v151
    %v173 = vmul.f32 %v152, %v152
    %v174 = vmul.f32 %v153, %v153
    %v175 = vadd.f32 %v171, %v172
    %v176 = vadd.f32 %v175, %v173
    %v177 = vadd.f32 %v176, %v174
    %v178 = vrot.slane %v177, 4
    %v179 = vadd.f32 %v177, %v178
    %v180 = vrot.slane %v179, 2
    %v181 = vadd.f32 %v179, %v180
    %v182 = vrot.slane %v181, 1
    %v183 = vadd.f32 %v181, %v182
    %v184 = vadd.f32 %v170, %v183
    %185 = vst [vmem:[#allocation3 + $0x1] sm:$0x1] %v184
    // Predicated region
    $region26: #{forward.21} parent=24 // pred_check
      %p186 = pneg %p24
    $region27: #{forward.21} parent=24 // pred_check_branch
      %188 = sbr.rel (%p186) target = $region29
    $region28: #{forward.21} parent=24 // pred_region
      %v189 = vld [vmem:[#allocation3] sm:$0x1]
      %v190 = vmul.f32 %v189, 0.03125
      %v191 = vld [vmem:[#allocation3 + $0x1] sm:$0x1]
      %v192 = vmul.f32 %v191, 0.03125
      %v193 = vmul.f32 %v190, %v190
      %v194 = vsub.f32 %v192, %v193
      %195 = vst [vmem:[%s4] sm:$0x1] %v190
      %196 = vst [vmem:[%s4 + $0x1] sm:$0x1] %v194
    $region29: #{forward.21} parent=24 // pred_fallthru
      _
  $region25: #{forward.21} parent=0 // pred_fallthru
    _
  // Predicated region
  $region30: #{forward.21} parent=0 // pred_check
    _
  $region31: #{forward.21} parent=0 // pred_check_branch
    %198 = sbr.rel (0) target = $region33
  $region32: #{forward.21} parent=0 // pred_region
    _
  $region33: #{forward.21} parent=0 // pred_fallthru
    _
  // Predicated region
  $region34: #{forward.21} parent=0 // pred_check
    _
  $region35: #{forward.21} parent=0 // pred_check_branch
    %200 = sbr.rel (0) target = $region37
  $region36: #{forward.21} parent=0 // pred_region
    _
  $region37: #{forward.21} parent=0 // pred_fallthru
    _
  // Predicated region
  $region38: #{forward.21} parent=0 // pred_check
    _
  $region39: #{forward.21} parent=0 // pred_check_branch
    %202 = sbr.rel (0) target = $region41
  $region40: #{forward.21} parent=0 // pred_region
    _
  $region41: #{forward.21} parent=0 // pred_fallthru
    _
  // Predicated region
  $region42: #{forward.21} parent=0 // pred_check
    _
  $region43: #{forward.21} parent=0 // pred_check_branch
    %204 = sbr.rel (0) target = $region45
  $region44: #{forward.21} parent=0 // pred_region
    _
  $region45: #{forward.21} parent=0 // pred_fallthru
    _

// kernel: forward.25
$region0: #{forward.25}
  #allocation0 [shape = 'u32[]', space=smem, size = 0x4, offset = 0x4, fixed_abs, tag = 'smem constant byte address 0x4 - core index']
  #allocation1 [shape = 'u32[72,128]{1,0:T(1,128)}', space=vmem, size = 0x9000, scoped, tag = 'internal scratch']
  %s0 = inlined_call_operand.vmem [shape: f32[2,16,128], index: 0, kind: input, shape index: {}]
  %s1 = inlined_call_operand.vmem [shape: f32[2,128], index: 1, kind: input, shape index: {}]
  %s2 = inlined_call_operand.vmem [shape: bf16[128,128], index: 2, kind: input, shape index: {}]
  %s3 = inlined_call_operand.vmem [shape: f32[1,128], index: 3, kind: input, shape index: {}]
  %s4 = inlined_call_operand.hbm [shape: f32[2,128], index: 4, kind: output, shape index: {}]
  %s5 = sld [smem:[#allocation0]]
  $region26: #{forward.25} parent=0
    _
  %s7 = ssub.s32 1, %s5
  %s8 = scalar_select 0, %s7, %s5
  $region1: #{forward.25} parent=0
    #allocation2 [shape = 'u8[1024]{0}', space=vmem, size = 0x400, scoped, tag = 'output window, operand 0, single buffered']
    #allocation3 [shape = 's32[1]{0}', space=sflag, size = 0x4, scoped, tag = 'scoped memory for forward.25']
    %9 = vsyncpa [#allocation3], 0
    // Predicated region
    $region2: #{forward.25} parent=1 // pred_check
      _
    $region3: #{forward.25} parent=1 // pred_check_branch
      %11 = sbr.rel (0) target = $region5
    $region4: #{forward.25} parent=1 // pred_region
      _
    $region5: #{forward.25} parent=1 // pred_fallthru
      _
    // Predicated region
    $region6: #{forward.25} parent=1 // pred_check
      _
    $region7: #{forward.25} parent=1 // pred_check_branch
      %13 = sbr.rel (0) target = $region9
    $region8: #{forward.25} parent=1 // pred_region
      _
    $region9: #{forward.25} parent=1 // pred_fallthru
      _
    // Predicated region
    $region10: #{forward.25} parent=1 // pred_check
      _
    $region11: #{forward.25} parent=1 // pred_check_branch
      %15 = sbr.rel (0) target = $region13
    $region12: #{forward.25} parent=1 // pred_region
      _
    $region13: #{forward.25} parent=1 // pred_fallthru
      _
    // Predicated region
    $region14: #{forward.25} parent=1 // pred_check
      _
    $region15: #{forward.25} parent=1 // pred_check_branch
      %17 = sbr.rel (0) target = $region17
    $region16: #{forward.25} parent=1 // pred_region
      _
    $region17: #{forward.25} parent=1 // pred_fallthru
      _
    %v18 = vld [vmem:[%s0] sm:$0xff]
    %v19 = vld [vmem:[%s0 + $0x8] sm:$0xff]
    %v20 = vld [vmem:[%s0 + $0x10] sm:$0xff]
    %v21 = vld [vmem:[%s0 + $0x18] sm:$0xff]
    %v22 = vld [vmem:[%s1] sm:$0x1]
    %v23 = vperm.slane %v22, 0
    %v24 = vmul.f32 %v18, %v23
    %v25 = vmul.f32 %v19, %v23
    %v26 = vmul.f32 %v20, %v23
    %v27 = vmul.f32 %v21, %v23
    %v28 = vld [vmem:[%s1 + $0x1] sm:$0x1]
    %v29 = vperm.slane %v28, 0
    %v30 = vadd.f32 %v24, %v29
    %v31 = vadd.f32 %v25, %v29
    %v32 = vadd.f32 %v26, %v29
    %v33 = vadd.f32 %v27, %v29
    %v34 = vmax.f32 %v30, 0.0
    %v35 = vmax.f32 %v31, 0.0
    %v36 = vmax.f32 %v32, 0.0
    %v37 = vmax.f32 %v33, 0.0
    %v38 = vadd.f32 %v34, %v35
    %v39 = vrot.slane %v38, 4
    %v40 = vadd.f32 %v38, %v39
    %v41 = vrot.slane %v40, 2
    %v42 = vadd.f32 %v40, %v41
    %v43 = vrot.slane %v42, 1
    %v44 = vadd.f32 %v42, %v43
    %v45 = vadd.f32 %v36, %v37
    %v46 = vrot.slane %v45, 4
    %v47 = vadd.f32 %v45, %v46
    %v48 = vrot.slane %v47, 2
    %v49 = vadd.f32 %v47, %v48
    %v50 = vrot.slane %v49, 1
    %v51 = vadd.f32 %v49, %v50
    %v52 = vmul.f32 %v44, 0.0625
    %v53 = vmul.f32 %v51, 0.0625
    %v54 = vpack.c.bf16 %v52, %v52
    %v55 = vpack.c.bf16 %v53, %v53
    %v56 = vld [vmem:[%s2] sm:$0xf]
    %v57 = vld [vmem:[%s2 + $0x4] sm:$0xf]
    %v58 = vld [vmem:[%s2 + $0x8] sm:$0xf]
    %v59 = vld [vmem:[%s2 + $0xc] sm:$0xf]
    %v60 = vld [vmem:[%s2 + $0x10] sm:$0xf]
    %v61 = vld [vmem:[%s2 + $0x14] sm:$0xf]
    %v62 = vld [vmem:[%s2 + $0x18] sm:$0xf]
    %v63 = vld [vmem:[%s2 + $0x1c] sm:$0xf]
    %v64 = vld [vmem:[%s2 + $0x20] sm:$0xf]
    %v65 = vld [vmem:[%s2 + $0x24] sm:$0xf]
    %v66 = vld [vmem:[%s2 + $0x28] sm:$0xf]
    %v67 = vld [vmem:[%s2 + $0x2c] sm:$0xf]
    %v68 = vld [vmem:[%s2 + $0x30] sm:$0xf]
    %v69 = vld [vmem:[%s2 + $0x34] sm:$0xf]
    %v70 = vld [vmem:[%s2 + $0x38] sm:$0xf]
    %v71 = vld [vmem:[%s2 + $0x3c] sm:$0xf]
    %v72 = vld [vmem:[%s3] sm:$0x1]
    %v74 = vperm.slane %v72, 0
    %v78 = vunpack.c.l.b16 %v54
    %v79 = vunpack.c.l.b16 %v55
    %vm80 = vcmask 1041409
    %v81 = vsel %vm80, %v79, %v78
    %v82 = vpack.c.b16 %v81, %v81
    %v100 = vunpack.c.l.b16 %v56
    %v101 = vunpack.c.l.b16 %v57
    %v102 = vunpack.c.l.b16 %v58
    %v103 = vunpack.c.l.b16 %v59
    %v104 = vunpack.c.l.b16 %v60
    %v105 = vunpack.c.l.b16 %v61
    %v106 = vunpack.c.l.b16 %v62
    %v107 = vunpack.c.l.b16 %v63
    %v108 = vunpack.c.l.b16 %v64
    %v109 = vunpack.c.l.b16 %v65
    %v110 = vunpack.c.l.b16 %v66
    %v111 = vunpack.c.l.b16 %v67
    %v112 = vunpack.c.l.b16 %v68
    %v113 = vunpack.c.l.b16 %v69
    %v114 = vunpack.c.l.b16 %v70
    %v115 = vunpack.c.l.b16 %v71
    %v116 = vpack.c.b16 %v101, %v100
    %v117 = vpack.c.b16 %v103, %v102
    %v118 = vpack.c.b16 %v105, %v104
    %v119 = vpack.c.b16 %v107, %v106
    %v120 = vpack.c.b16 %v109, %v108
    %v121 = vpack.c.b16 %v111, %v110
    %v122 = vpack.c.b16 %v113, %v112
    %v123 = vpack.c.b16 %v115, %v114
    %132 = vmatpush.bf16.msra.mxu0 %v123
    %133 = vmatpush.bf16.msra.mxu0 %v122
    %134 = vmatpush.bf16.msra.mxu0 %v121
    %135 = vmatpush.bf16.msra.mxu0 %v120
    %136 = vmatpush.bf16.msra.mxu0 %v119
    %137 = vmatpush.bf16.msra.mxu0 %v118
    %138 = vmatpush.bf16.msra.mxu0 %v117
    %139 = vmatpush.bf16.msra.mxu0 %v116
    %140 = vmatmul.bf16.gmra.mxu0 %v82
    %v141 = vpop.f32.mrf.mxu0
    %v142 = vadd.f32 %v74, %v141
    %v143 = vpop.f32.mrf.mxu0
    %144 = vdwg.mxu0
    %145 = vst [vmem:[#allocation2] sm:$0x3] %v142
    // Predicated region
    $region18: #{forward.25} parent=1 // pred_check
      _
    $region19: #{forward.25} parent=1 // pred_check_branch
      %147 = sbr.rel (0) target = $region21
    $region20: #{forward.25} parent=1 // pred_region
      %149 = vsyncadd [#allocation3], 0
      %s151 = sshll.u32 [#allocation2], 4
      %s152 = int_to_ptr.vmem [resolvable:$true] %s151
      %s153 = sshll.u32 %s4, 4
      %s154 = int_to_ptr.hbm [resolvable:$true] %s153
      %156 = dma.vmem_to_hbm [thread:$0]  %s152, 32, %s154, [#allocation3]
    $region21: #{forward.25} parent=1 // pred_fallthru
      _
    // Predicated region
    $region22: #{forward.25} parent=1 // pred_check
      _
    $region23: #{forward.25} parent=1 // pred_check_branch
      %158 = sbr.rel (0) target = $region25
    $region24: #{forward.25} parent=1 // pred_region
      %160 = dma.done [#allocation3], 32
    $region25: #{forward.25} parent=1 // pred_fallthru
      _
    %161 = vsyncpa [#allocation3], 1

// kernel: forward.22
$region0: #{forward.22}
  #allocation0 [shape = 'u32[]', space=smem, size = 0x4, offset = 0x4, fixed_abs, tag = 'smem constant byte address 0x4 - core index']
  #allocation1 [shape = 'u32[72,128]{1,0:T(1,128)}', space=vmem, size = 0x9000, scoped, tag = 'internal scratch']
  #allocation2 [shape = 'f32[2,128]{1,0:T(2,128)}', space=vmem, size = 0x400, scoped, tag = 'scratch operand']
  %s0 = inlined_call_operand.vmem [shape: f32[2,128], index: 0, kind: input, shape index: {}]
  %s1 = inlined_call_operand.vmem [shape: f32[2,6,6,128], index: 1, kind: input, shape index: {}, may-alias: {1,2,3}]
  %s2 = inlined_call_operand.vmem [shape: f32[2,6,6,128], index: 2, kind: input, shape index: {}, may-alias: {1,2,3}]
  %s3 = inlined_call_operand.vmem [shape: f32[2,6,6,128], index: 3, kind: input, shape index: {}, may-alias: {1,2,3}]
  %s4 = inlined_call_operand.vmem [shape: bf16[3,384,128], index: 4, kind: input, shape index: {}]
  %s5 = inlined_call_operand.vmem [shape: f32[2,4,4,128], index: 5, kind: input, shape index: {}]
  %s6 = inlined_call_operand.vmem [shape: f32[2,4,4,128], index: 6, kind: output, shape index: {0}]
  %s7 = inlined_call_operand.vmem [shape: f32[2,128], index: 7, kind: output, shape index: {1}]
  %8 = xla_tuple %s6, %s7
  %s9 = sld [smem:[#allocation0]]
  $region73: #{forward.22} parent=0
    _
  %s11 = ssub.s32 1, %s9
  %s12 = scalar_select 0, %s11, %s9
  loop: start=0, step=1, limit=10
  $region2: #{forward.22} parent=0 // loop_pre_header
    _
  $region3: #{forward.22} parent=0 // loop_header
    %s14 = sphi 0, %s18
    %p15 = scmp.ge.s32.totalorder %s14, 10
    %s21 = sphi 0, %s33
    %s22 = sphi 0, %s29
    %s23 = sphi 0, %s21
    %s24 = sphi 0, %s22
    %s25 = sphi 0, %s23
    %s26 = sphi 0, %s24
    %s34 = sphi 0, %s34
    %s36 = sphi 0, %s34
    %s37 = sphi 0, %s36
    %s51 = sphi 0, %s37
    %s59 = sphi 0, %s61
    %s62 = sphi 0, %s59
    %s63 = sphi 0, %s62
    %s79 = sphi 0, %s63
    %s89 = sphi 0, %s91
    %s92 = sphi 0, %s89
    %s93 = sphi 0, %s92
    %s109 = sphi 0, %s93
    %s119 = sphi 0, %s121
    %s122 = sphi 0, %s119
    %s123 = sphi 0, %s122
    %s139 = sphi 0, %s123
    %s143 = sphi 0, %s143
    %s145 = sphi 0, %s143
    %s146 = sphi 0, %s145
    %s160 = sphi 0, %s146
    %s168 = sphi 0, %s170
    %s171 = sphi 0, %s168
    %s172 = sphi 0, %s171
    %s188 = sphi 0, %s172
    %s196 = sphi 0, %s198
    %s199 = sphi 0, %s196
    %s200 = sphi 0, %s199
    %s216 = sphi 0, %s200
    %s220 = sphi 0, %s220
    %s222 = sphi 0, %s220
    %s223 = sphi 0, %s222
    %s237 = sphi 0, %s223
  $region4: #{forward.22} parent=0 // loop_header_branch
    %17 = sbr.rel (%p15) target = $region8
  $region5: #{forward.22} parent=0 // loop_body
    %s19 = ssub.s32 %s14, 1
    %s20 = ssub.s32 %s14, 2
    %s27 = sadd.s32 1, %s22
    %p28 = scmp.ge.s32.totalorder %s27, 4
    %s29 = scalar_select %p28, 0, %s27
    %s30 = sadd.s32 1, %s21
    %s31 = scalar_select %p28, %s30, %s21
    %p32 = scmp.ge.s32.totalorder %s31, 2
    %s33 = scalar_select %p32, 0, %s31
    %s35 = sadd.s32 %s34, 1
    %p38 = scmp.eq.s32.totalorder %s14, 7
    %p39 = scmp.ne.s32.totalorder %s34, %s36
    %p40 = scmp.eq.s32.totalorder %s14, 0
    %p41 = por %p39, %p40
    %p42 = scmp.ne.s32.totalorder %s34, %s36
    %p43 = scmp.eq.s32.totalorder %s19, 7
    %p44 = por %p42, %p43
    %p45 = scmp.ne.s32.totalorder %s36, %s37
    %p46 = scmp.eq.s32.totalorder %s19, 0
    %p47 = por %p45, %p46
    %p48 = scmp.ne.s32.totalorder %s36, %s37
    %p49 = scmp.eq.s32.totalorder %s20, 7
    %p50 = por %p48, %p49
    %p52 = scmp.ne.s32.totalorder %s37, %s51
    %p53 = scmp.eq.s32.totalorder %s20, 0
    %p54 = por %p52, %p53
    %s55 = ssub.s32 %s21, %s33
    %s56 = ssub.s32 %s22, %s29
    %s57 = sor.u32 %s55, %s56
    %p58 = scmp.eq.s32.totalorder %s57, 0
    %s60 = sadd.s32 %s59, 1
    %s61 = scalar_select %p58, %s59, %s60
    %p64 = pneg %p58
    %p65 = scmp.eq.s32.totalorder %s14, 7
    %p66 = por %p64, %p65
    %p67 = scmp.ne.s32.totalorder %s59, %s62
    %p68 = scmp.eq.s32.totalorder %s14, 0
    %p69 = por %p67, %p68
    %p70 = scmp.ne.s32.totalorder %s59, %s62
    %p71 = scmp.eq.s32.totalorder %s19, 7
    %p72 = por %p70, %p71
    %p73 = scmp.ne.s32.totalorder %s62, %s63
    %p74 = scmp.eq.s32.totalorder %s19, 0
    %p75 = por %p73, %p74
    %p76 = scmp.ne.s32.totalorder %s62, %s63
    %p77 = scmp.eq.s32.totalorder %s20, 7
    %p78 = por %p76, %p77
    %p80 = scmp.ne.s32.totalorder %s63, %s79
    %p81 = scmp.eq.s32.totalorder %s20, 0
    %p82 = por %p80, %p81
    %s83 = sadd.s32 %s22, 1
    %s84 = sadd.s32 %s29, 1
    %s85 = ssub.s32 %s21, %s33
    %s86 = ssub.s32 %s83, %s84
    %s87 = sor.u32 %s85, %s86
    %p88 = scmp.eq.s32.totalorder %s87, 0
    %s90 = sadd.s32 %s89, 1
    %s91 = scalar_select %p88, %s89, %s90
    %p94 = pneg %p88
    %p95 = scmp.eq.s32.totalorder %s14, 7
    %p96 = por %p94, %p95
    %p97 = scmp.ne.s32.totalorder %s89, %s92
    %p98 = scmp.eq.s32.totalorder %s14, 0
    %p99 = por %p97, %p98
    %p100 = scmp.ne.s32.totalorder %s89, %s92
    %p101 = scmp.eq.s32.totalorder %s19, 7
    %p102 = por %p100, %p101
    %p103 = scmp.ne.s32.totalorder %s92, %s93
    %p104 = scmp.eq.s32.totalorder %s19, 0
    %p105 = por %p103, %p104
    %p106 = scmp.ne.s32.totalorder %s92, %s93
    %p107 = scmp.eq.s32.totalorder %s20, 7
    %p108 = por %p106, %p107
    %p110 = scmp.ne.s32.totalorder %s93, %s109
    %p111 = scmp.eq.s32.totalorder %s20, 0
    %p112 = por %p110, %p111
    %s113 = sadd.s32 %s22, 2
    %s114 = sadd.s32 %s29, 2
    %s115 = ssub.s32 %s21, %s33
    %s116 = ssub.s32 %s113, %s114
    %s117 = sor.u32 %s115, %s116
    %p118 = scmp.eq.s32.totalorder %s117, 0
    %s120 = sadd.s32 %s119, 1
    %s121 = scalar_select %p118, %s119, %s120
    %p124 = pneg %p118
    %p125 = scmp.eq.s32.totalorder %s14, 7
    %p126 = por %p124, %p125
    %p127 = scmp.ne.s32.totalorder %s119, %s122
    %p128 = scmp.eq.s32.totalorder %s14, 0
    %p129 = por %p127, %p128
    %p130 = scmp.ne.s32.totalorder %s119, %s122
    %p131 = scmp.eq.s32.totalorder %s19, 7
    %p132 = por %p130, %p131
    %p133 = scmp.ne.s32.totalorder %s122, %s123
    %p134 = scmp.eq.s32.totalorder %s19, 0
    %p135 = por %p133, %p134
    %p136 = scmp.ne.s32.totalorder %s122, %s123
    %p137 = scmp.eq.s32.totalorder %s20, 7
    %p138 = por %p136, %p137
    %p140 = scmp.ne.s32.totalorder %s123, %s139
    %p141 = scmp.eq.s32.totalorder %s20, 0
    %p142 = por %p140, %p141
    %s144 = sadd.s32 %s143, 1
    %p147 = scmp.eq.s32.totalorder %s14, 7
    %p148 = scmp.ne.s32.totalorder %s143, %s145
    %p149 = scmp.eq.s32.totalorder %s14, 0
    %p150 = por %p148, %p149
    %p151 = scmp.ne.s32.totalorder %s143, %s145
    %p152 = scmp.eq.s32.totalorder %s19, 7
    %p153 = por %p151, %p152
    %p154 = scmp.ne.s32.totalorder %s145, %s146
    %p155 = scmp.eq.s32.totalorder %s19, 0
    %p156 = por %p154, %p155
    %p157 = scmp.ne.s32.totalorder %s145, %s146
    %p158 = scmp.eq.s32.totalorder %s20, 7
    %p159 = por %p157, %p158
    %p161 = scmp.ne.s32.totalorder %s146, %s160
    %p162 = scmp.eq.s32.totalorder %s20, 0
    %p163 = por %p161, %p162
    %s164 = ssub.s32 %s21, %s33
    %s165 = ssub.s32 %s22, %s29
    %s166 = sor.u32 %s164, %s165
    %p167 = scmp.eq.s32.totalorder %s166, 0
    %s169 = sadd.s32 %s168, 1
    %s170 = scalar_select %p167, %s168, %s169
    %p173 = pneg %p167
    %p174 = scmp.eq.s32.totalorder %s14, 7
    %p175 = por %p173, %p174
    %p176 = scmp.ne.s32.totalorder %s168, %s171
    %p177 = scmp.eq.s32.totalorder %s14, 0
    %p178 = por %p176, %p177
    %p179 = scmp.ne.s32.totalorder %s168, %s171
    %p180 = scmp.eq.s32.totalorder %s19, 7
    %p181 = por %p179, %p180
    %p182 = scmp.ne.s32.totalorder %s171, %s172
    %p183 = scmp.eq.s32.totalorder %s19, 0
    %p184 = por %p182, %p183
    %p185 = scmp.ne.s32.totalorder %s171, %s172
    %p186 = scmp.eq.s32.totalorder %s20, 7
    %p187 = por %p185, %p186
    %p189 = scmp.ne.s32.totalorder %s172, %s188
    %p190 = scmp.eq.s32.totalorder %s20, 0
    %p191 = por %p189, %p190
    %s192 = ssub.s32 %s21, %s33
    %s193 = ssub.s32 %s22, %s29
    %s194 = sor.u32 %s192, %s193
    %p195 = scmp.eq.s32.totalorder %s194, 0
    %s197 = sadd.s32 %s196, 1
    %s198 = scalar_select %p195, %s196, %s197
    %p201 = pneg %p195
    %p202 = scmp.eq.s32.totalorder %s14, 7
    %p203 = por %p201, %p202
    %p204 = scmp.ne.s32.totalorder %s196, %s199
    %p205 = scmp.eq.s32.totalorder %s14, 0
    %p206 = por %p204, %p205
    %p207 = scmp.ne.s32.totalorder %s196, %s199
    %p208 = scmp.eq.s32.totalorder %s19, 7
    %p209 = por %p207, %p208
    %p210 = scmp.ne.s32.totalorder %s199, %s200
    %p211 = scmp.eq.s32.totalorder %s19, 0
    %p212 = por %p210, %p211
    %p213 = scmp.ne.s32.totalorder %s199, %s200
    %p214 = scmp.eq.s32.totalorder %s20, 7
    %p215 = por %p213, %p214
    %p217 = scmp.ne.s32.totalorder %s200, %s216
    %p218 = scmp.eq.s32.totalorder %s20, 0
    %p219 = por %p217, %p218
    %s221 = sadd.s32 %s220, 1
    %p224 = scmp.eq.s32.totalorder %s14, 7
    %p225 = scmp.ne.s32.totalorder %s220, %s222
    %p226 = scmp.eq.s32.totalorder %s14, 0
    %p227 = por %p225, %p226
    %p228 = scmp.ne.s32.totalorder %s220, %s222
    %p229 = scmp.eq.s32.totalorder %s19, 7
    %p230 = por %p228, %p229
    %p231 = scmp.ne.s32.totalorder %s222, %s223
    %p232 = scmp.eq.s32.totalorder %s19, 0
    %p233 = por %p231, %p232
    %p234 = scmp.ne.s32.totalorder %s222, %s223
    %p235 = scmp.eq.s32.totalorder %s20, 7
    %p236 = por %p234, %p235
    %p238 = scmp.ne.s32.totalorder %s223, %s237
    %p239 = scmp.eq.s32.totalorder %s20, 0
    %p240 = por %p238, %p239
    %p241 = scmp.le.s32.totalorder 1, %s14
    %p242 = scmp.lt.s32.totalorder %s14, 9
    %p243 = pnand %p241, %p242
    %p244 = pneg %p243
    // Predicated region
    $region9: #{forward.22} parent=5 // pred_check
      _
    $region10: #{forward.22} parent=5 // pred_check_branch
      %246 = sbr.rel (%p243) target = $region12
    $region11: #{forward.22} parent=5 // pred_region
      %s247 = ssub.s32 %s14, 1
      // Predicated region
      $region13: #{forward.22} parent=11 // pred_check
        %p248 = pneg %p47
      $region14: #{forward.22} parent=11 // pred_check_branch
        %250 = sbr.rel (%p248) target = $region16
      $region15: #{forward.22} parent=11 // pred_region
        _
      $region16: #{forward.22} parent=11 // pred_fallthru
        _
      // Predicated region
      $region17: #{forward.22} parent=11 // pred_check
        %p251 = pneg %p156
      $region18: #{forward.22} parent=11 // pred_check_branch
        %253 = sbr.rel (%p251) target = $region20
      $region19: #{forward.22} parent=11 // pred_region
        _
      $region20: #{forward.22} parent=11 // pred_fallthru
        _
    $region12: #{forward.22} parent=5 // pred_fallthru
      _
    %p254 = scmp.lt.s32.totalorder %s14, 8
    // Predicated region
    $region21: #{forward.22} parent=5 // pred_check
      %p255 = pneg %p254
    $region22: #{forward.22} parent=5 // pred_check_branch
      %257 = sbr.rel (%p255) target = $region24
    $region23: #{forward.22} parent=5 // pred_region
      // Predicated region
      $region25: #{forward.22} parent=23 // pred_check
        %p258 = pneg %p69
      $region26: #{forward.22} parent=23 // pred_check_branch
        %260 = sbr.rel (%p258) target = $region28
      $region27: #{forward.22} parent=23 // pred_region
        %p261 = scmp.lt.s32.totalorder %s21, 1
        %s262 = scalar_select %p261, %s21, 1
        %p263 = scmp.lt.s32.totalorder %s22, 5
        %s264 = scalar_select %p263, %s22, 5
        %s265 = smul.addr %s262, 6
        %s266 = sadd.s32 %s264, %s265
        %s267 = smul.addr %s266, 8
        %s268 = scalar_lea.vmem %s1, %s267
      $region28: #{forward.22} parent=23 // pred_fallthru
        _
      // Predicated region
      $region29: #{forward.22} parent=23 // pred_check
        %p269 = pneg %p99
      $region30: #{forward.22} parent=23 // pred_check_branch
        %271 = sbr.rel (%p269) target = $region32
      $region31: #{forward.22} parent=23 // pred_region
        %s272 = sadd.s32 %s22, 1
        %p273 = scmp.lt.s32.totalorder %s21, 1
        %s274 = scalar_select %p273, %s21, 1
        %p275 = scmp.lt.s32.totalorder %s272, 5
        %s276 = scalar_select %p275, %s272, 5
        %s277 = smul.addr %s274, 6
        %s278 = sadd.s32 %s276, %s277
        %s279 = smul.addr %s278, 8
        %s280 = scalar_lea.vmem %s2, %s279
        %s281 = sadd.s32 %s22, 1
      $region32: #{forward.22} parent=23 // pred_fallthru
        _
      // Predicated region
      $region33: #{forward.22} parent=23 // pred_check
        %p282 = pneg %p129
      $region34: #{forward.22} parent=23 // pred_check_branch
        %284 = sbr.rel (%p282) target = $region36
      $region35: #{forward.22} parent=23 // pred_region
        %s285 = sadd.s32 %s22, 2
        %p286 = scmp.lt.s32.totalorder %s21, 1
        %s287 = scalar_select %p286, %s21, 1
        %p288 = scmp.lt.s32.totalorder %s285, 5
        %s289 = scalar_select %p288, %s285, 5
        %s290 = smul.addr %s287, 6
        %s291 = sadd.s32 %s289, %s290
        %s292 = smul.addr %s291, 8
        %s293 = scalar_lea.vmem %s3, %s292
        %s294 = sadd.s32 %s22, 2
      $region36: #{forward.22} parent=23 // pred_fallthru
        _
      // Predicated region
      $region37: #{forward.22} parent=23 // pred_check
        %p295 = pneg %p178
      $region38: #{forward.22} parent=23 // pred_check_branch
        %297 = sbr.rel (%p295) target = $region40
      $region39: #{forward.22} parent=23 // pred_region
        %p298 = scmp.lt.s32.totalorder %s21, 1
        %s299 = scalar_select %p298, %s21, 1
        %p300 = scmp.lt.s32.totalorder %s22, 3
        %s301 = scalar_select %p300, %s22, 3
        %s302 = smul.addr %s299, 4
        %s303 = sadd.s32 %s301, %s302
        %s304 = smul.addr %s303, 4
        %s305 = scalar_lea.vmem %s5, %s304
      $region40: #{forward.22} parent=23 // pred_fallthru
        _
    $region24: #{forward.22} parent=5 // pred_fallthru
      _
    %p306 = scmp.le.s32.totalorder 1, %s14
    %p307 = scmp.lt.s32.totalorder %s14, 9
    %p308 = pnand %p306, %p307
    %p309 = pneg %p308
    // Predicated region
    $region41: #{forward.22} parent=5 // pred_check
      _
    $region42: #{forward.22} parent=5 // pred_check_branch
      %311 = sbr.rel (%p308) target = $region44
    $region43: #{forward.22} parent=5 // pred_region
      %s312 = ssub.s32 %s14, 1
      %p313 = pneg %p47
      %p314 = pneg %p44
      %p315 = scmp.lt.s32.totalorder %s23, 1
      %s316 = scalar_select %p315, %s23, 1
      %p317 = scmp.lt.s32.totalorder %s24, 5
      %s318 = scalar_select %p317, %s24, 5
      %s319 = smul.addr %s316, 6
      %s320 = sadd.s32 %s318, %s319
      %s321 = smul.addr %s320, 8
      %s322 = scalar_lea.vmem %s1, %s321
      %p323 = pneg %p75
      %p324 = pneg %p72
      %s325 = sadd.s32 %s24, 1
      %p326 = scmp.lt.s32.totalorder %s23, 1
      %s327 = scalar_select %p326, %s23, 1
      %p328 = scmp.lt.s32.totalorder %s325, 5
      %s329 = scalar_select %p328, %s325, 5
      %s330 = smul.addr %s327, 6
      %s331 = sadd.s32 %s329, %s330
      %s332 = smul.addr %s331, 8
      %s333 = scalar_lea.vmem %s2, %s332
      %p334 = pneg %p105
      %p335 = pneg %p102
      %s336 = sadd.s32 %s24, 2
      %p337 = scmp.lt.s32.totalorder %s23, 1
      %s338 = scalar_select %p337, %s23, 1
      %p339 = scmp.lt.s32.totalorder %s336, 5
      %s340 = scalar_select %p339, %s336, 5
      %s341 = smul.addr %s338, 6
      %s342 = sadd.s32 %s340, %s341
      %s343 = smul.addr %s342, 8
      %s344 = scalar_lea.vmem %s3, %s343
      %p345 = pneg %p135
      %p346 = pneg %p132
      %p347 = pneg %p156
      %p348 = pneg %p153
      %p349 = scmp.lt.s32.totalorder %s23, 1
      %s350 = scalar_select %p349, %s23, 1
      %p351 = scmp.lt.s32.totalorder %s24, 3
      %s352 = scalar_select %p351, %s24, 3
      %s353 = smul.addr %s350, 4
      %s354 = sadd.s32 %s352, %s353
      %s355 = smul.addr %s354, 4
      %s356 = scalar_lea.vmem %s5, %s355
      %p357 = pneg %p184
      %p358 = pneg %p181
      %p359 = pneg %p212
      %p360 = pneg %p209
      %p361 = scmp.lt.s32.totalorder %s23, 1
      %s362 = scalar_select %p361, %s23, 1
      %p363 = scmp.lt.s32.totalorder %s24, 3
      %s364 = scalar_select %p363, %s24, 3
      %s365 = smul.addr %s362, 4
      %s366 = sadd.s32 %s364, %s365
      %s367 = smul.addr %s366, 4
      %s368 = scalar_lea.vmem %s6, %s367
      %p369 = pneg %p233
      %p370 = pneg %p230
      %p371 = scmp.lt.s32.totalorder %s23, 1
      %s372 = scalar_select %p371, %s23, 1
      %p373 = scmp.lt.s32.totalorder %s24, 5
      %s374 = scalar_select %p373, %s24, 5
      %s375 = smul.addr %s372, 6
      %s376 = sadd.s32 %s374, %s375
      %s377 = smul.addr %s376, 8
      %s378 = scalar_lea.vmem %s1, %s377
      %s379 = sadd.s32 %s24, 1
      %p380 = scmp.lt.s32.totalorder %s23, 1
      %s381 = scalar_select %p380, %s23, 1
      %p382 = scmp.lt.s32.totalorder %s379, 5
      %s383 = scalar_select %p382, %s379, 5
      %s384 = smul.addr %s381, 6
      %s385 = sadd.s32 %s383, %s384
      %s386 = smul.addr %s385, 8
      %s387 = scalar_lea.vmem %s2, %s386
      %s388 = sadd.s32 %s24, 1
      %s389 = sadd.s32 %s24, 2
      %p390 = scmp.lt.s32.totalorder %s23, 1
      %s391 = scalar_select %p390, %s23, 1
      %p392 = scmp.lt.s32.totalorder %s389, 5
      %s393 = scalar_select %p392, %s389, 5
      %s394 = smul.addr %s391, 6
      %s395 = sadd.s32 %s393, %s394
      %s396 = smul.addr %s395, 8
      %s397 = scalar_lea.vmem %s3, %s396
      %s398 = sadd.s32 %s24, 2
      %p399 = scmp.lt.s32.totalorder %s23, 1
      %s400 = scalar_select %p399, %s23, 1
      %p401 = scmp.lt.s32.totalorder %s24, 3
      %s402 = scalar_select %p401, %s24, 3
      %s403 = smul.addr %s400, 4
      %s404 = sadd.s32 %s402, %s403
      %s405 = smul.addr %s404, 4
      %s406 = scalar_lea.vmem %s5, %s405
      %p407 = scmp.lt.s32.totalorder %s23, 1
      %s408 = scalar_select %p407, %s23, 1
      %p409 = scmp.lt.s32.totalorder %s24, 3
      %s410 = scalar_select %p409, %s24, 3
      %s411 = smul.addr %s408, 4
      %s412 = sadd.s32 %s410, %s411
      %s413 = smul.addr %s412, 4
      %s414 = scalar_lea.vmem %s6, %s413
      %p415 = scmp.eq.s32.totalorder %s23, 0
      %p416 = scmp.eq.s32.totalorder %s24, 0
      %p417 = pnand %p415, %p416
      %p418 = pneg %p417
      // Predicated region
      $region45: #{forward.22} parent=43 // pred_check
        _
      $region46: #{forward.22} parent=43 // pred_check_branch
        %420 = sbr.rel (%p417) target = $region48
      $region47: #{forward.22} parent=43 // pred_region
        %421 = vst [vmem:[#allocation2] sm:$0x3] 0.0
      $region48: #{forward.22} parent=43 // pred_fallthru
        _
      %v422 = vld [vmem:[%s0] sm:$0x1]
      %v423 = vld [vmem:[%s0 + $0x1] sm:$0x1]
      %v424 = vld [vmem:[%s406] sm:$0xf]
      %v425 = vld [vmem:[%s378] sm:$0x3f]
      %v426 = vperm.slane %v422, 0
      %v427 = vmul.f32 %v425, %v426
      %v428 = vperm.slane %v423, 0
      %v429 = vadd.f32 %v427, %v428
      %v430 = vmax.f32 %v429, 0.0
      %v431 = vpack.c.bf16 %v430, %v430
      %v432 = vld [vmem:[%s4] sm:$0xf]
      %v433 = vld [vmem:[%s4 + $0x4] sm:$0xf]
      %v434 = vld [vmem:[%s4 + $0x8] sm:$0xf]
      %v435 = vld [vmem:[%s4 + $0xc] sm:$0xf]
      %v436 = vld [vmem:[%s4 + $0x10] sm:$0xf]
      %v437 = vld [vmem:[%s4 + $0x14] sm:$0xf]
      %v438 = vld [vmem:[%s4 + $0x18] sm:$0xf]
      %v439 = vld [vmem:[%s4 + $0x1c] sm:$0xf]
      %v440 = vld [vmem:[%s4 + $0x20] sm:$0xf]
      %v441 = vld [vmem:[%s4 + $0x24] sm:$0xf]
      %v442 = vld [vmem:[%s4 + $0x28] sm:$0xf]
      %v443 = vld [vmem:[%s4 + $0x2c] sm:$0xf]
      %v444 = vld [vmem:[%s4 + $0x30] sm:$0xf]
      %v445 = vld [vmem:[%s4 + $0x34] sm:$0xf]
      %v446 = vld [vmem:[%s4 + $0x38] sm:$0xf]
      %v447 = vld [vmem:[%s4 + $0x3c] sm:$0xf]
      %v464 = vunpack.c.l.b16 %v432
      %v465 = vunpack.c.l.b16 %v433
      %v466 = vunpack.c.l.b16 %v434
      %v467 = vunpack.c.l.b16 %v435
      %v468 = vunpack.c.l.b16 %v436
      %v469 = vunpack.c.l.b16 %v437
      %v470 = vunpack.c.l.b16 %v438
      %v471 = vunpack.c.l.b16 %v439
      %v472 = vunpack.c.l.b16 %v440
      %v473 = vunpack.c.l.b16 %v441
      %v474 = vunpack.c.l.b16 %v442
      %v475 = vunpack.c.l.b16 %v443
      %v476 = vunpack.c.l.b16 %v444
      %v477 = vunpack.c.l.b16 %v445
      %v478 = vunpack.c.l.b16 %v446
      %v479 = vunpack.c.l.b16 %v447
      %v480 = vpack.c.b16 %v465, %v464
      %v481 = vpack.c.b16 %v467, %v466
      %v482 = vpack.c.b16 %v469, %v468
      %v483 = vpack.c.b16 %v471, %v470
      %v484 = vpack.c.b16 %v473, %v472
      %v485 = vpack.c.b16 %v475, %v474
      %v486 = vpack.c.b16 %v477, %v476
      %v487 = vpack.c.b16 %v479, %v478
      %496 = vmatpush.bf16.msra.mxu0 %v487
      %497 = vmatpush.bf16.msra.mxu0 %v486
      %498 = vmatpush.bf16.msra.mxu0 %v485
      %499 = vmatpush.bf16.msra.mxu0 %v484
      %500 = vmatpush.bf16.msra.mxu0 %v483
      %501 = vmatpush.bf16.msra.mxu0 %v482
      %502 = vmatpush.bf16.msra.mxu0 %v481
      %503 = vmatpush.bf16.msra.mxu0 %v480
      %504 = vmatmul.bf16.gmra.mxu0 %v431
      %v505 = vpop.f32.mrf.mxu0
      %v506 = vadd.f32 0.0, %v505
      %v507 = vpop.f32.mrf.mxu0
      %508 = vdwg.mxu0
      %v509 = vadd.f32 %v424, %v506
      %v510 = vld [vmem:[%s4 + $0x40] sm:$0xf]
      %v511 = vld [vmem:[%s4 + $0x44] sm:$0xf]
      %v512 = vld [vmem:[%s4 + $0x48] sm:$0xf]
      %v513 = vld [vmem:[%s4 + $0x4c] sm:$0xf]
      %v514 = vld [vmem:[%s4 + $0x50] sm:$0xf]
      %v515 = vld [vmem:[%s4 + $0x54] sm:$0xf]
      %v516 = vld [vmem:[%s4 + $0x58] sm:$0xf]
      %v517 = vld [vmem:[%s4 + $0x5c] sm:$0xf]
      %v518 = vld [vmem:[%s4 + $0x60] sm:$0xf]
      %v519 = vld [vmem:[%s4 + $0x64] sm:$0xf]
      %v520 = vld [vmem:[%s4 + $0x68] sm:$0xf]
      %v521 = vld [vmem:[%s4 + $0x6c] sm:$0xf]
      %v522 = vld [vmem:[%s4 + $0x70] sm:$0xf]
      %v523 = vld [vmem:[%s4 + $0x74] sm:$0xf]
      %v524 = vld [vmem:[%s4 + $0x78] sm:$0xf]
      %v525 = vld [vmem:[%s4 + $0x7c] sm:$0xf]
      %v527 = vunpack.c.l.b16 %v431
      %v528 = vpack.c.b16 %v527, %v527
      %v530 = vshrl.u32 %v528, 16
      %v532 = vshll.u32 %v528, 16
      %v534 = vrot.slane %v532, 1
      %v535 = vor.u32 %v530, %v534
      %v553 = vunpack.c.l.b16 %v510
      %v554 = vunpack.c.l.b16 %v511
      %v555 = vunpack.c.l.b16 %v512
      %v556 = vunpack.c.l.b16 %v513
      %v557 = vunpack.c.l.b16 %v514
      %v558 = vunpack.c.l.b16 %v515
      %v559 = vunpack.c.l.b16 %v516
      %v560 = vunpack.c.l.b16 %v517
      %v561 = vunpack.c.l.b16 %v518
      %v562 = vunpack.c.l.b16 %v519
      %v563 = vunpack.c.l.b16 %v520
      %v564 = vunpack.c.l.b16 %v521
      %v565 = vunpack.c.l.b16 %v522
      %v566 = vunpack.c.l.b16 %v523
      %v567 = vunpack.c.l.b16 %v524
      %v568 = vunpack.c.l.b16 %v525
      %v569 = vpack.c.b16 %v554, %v553
      %v570 = vpack.c.b16 %v556, %v555
      %v571 = vpack.c.b16 %v558, %v557
      %v572 = vpack.c.b16 %v560, %v559
      %v573 = vpack.c.b16 %v562, %v561
      %v574 = vpack.c.b16 %v564, %v563
      %v575 = vpack.c.b16 %v566, %v565
      %v576 = vpack.c.b16 %v568, %v567
      %585 = vmatpush.bf16.msra.mxu0 %v576
      %586 = vmatpush.bf16.msra.mxu0 %v575
      %587 = vmatpush.bf16.msra.mxu0 %v574
      %588 = vmatpush.bf16.msra.mxu0 %v573
      %589 = vmatpush.bf16.msra.mxu0 %v572
      %590 = vmatpush.bf16.msra.mxu0 %v571
      %591 = vmatpush.bf16.msra.mxu0 %v570
      %592 = vmatpush.bf16.msra.mxu0 %v569
      %593 = vmatmul.bf16.gmra.mxu0 %v535
      %v594 = vpop.f32.mrf.mxu0
      %v595 = vadd.f32 0.0, %v594
      %v596 = vpop.f32.mrf.mxu0
      %597 = vdwg.mxu0
      %v598 = vadd.f32 %v509, %v595
      %v599 = vld [vmem:[%s4 + $0x80] sm:$0xf]
      %v600 = vld [vmem:[%s4 + $0x84] sm:$0xf]
      %v601 = vld [vmem:[%s4 + $0x88] sm:$0xf]
      %v602 = vld [vmem:[%s4 + $0x8c] sm:$0xf]
      %v603 = vld [vmem:[%s4 + $0x90] sm:$0xf]
      %v604 = vld [vmem:[%s4 + $0x94] sm:$0xf]
      %v605 = vld [vmem:[%s4 + $0x98] sm:$0xf]
      %v606 = vld [vmem:[%s4 + $0x9c] sm:$0xf]
      %v607 = vld [vmem:[%s4 + $0xa0] sm:$0xf]
      %v608 = vld [vmem:[%s4 + $0xa4] sm:$0xf]
      %v609 = vld [vmem:[%s4 + $0xa8] sm:$0xf]
      %v610 = vld [vmem:[%s4 + $0xac] sm:$0xf]
      %v611 = vld [vmem:[%s4 + $0xb0] sm:$0xf]
      %v612 = vld [vmem:[%s4 + $0xb4] sm:$0xf]
      %v613 = vld [vmem:[%s4 + $0xb8] sm:$0xf]
      %v614 = vld [vmem:[%s4 + $0xbc] sm:$0xf]
      %v615 = vrot.slane %v528, 1
      %v633 = vunpack.c.l.b16 %v599
      %v634 = vunpack.c.l.b16 %v600
      %v635 = vunpack.c.l.b16 %v601
      %v636 = vunpack.c.l.b16 %v602
      %v637 = vunpack.c.l.b16 %v603
      %v638 = vunpack.c.l.b16 %v604
      %v639 = vunpack.c.l.b16 %v605
      %v640 = vunpack.c.l.b16 %v606
      %v641 = vunpack.c.l.b16 %v607
      %v642 = vunpack.c.l.b16 %v608
      %v643 = vunpack.c.l.b16 %v609
      %v644 = vunpack.c.l.b16 %v610
      %v645 = vunpack.c.l.b16 %v611
      %v646 = vunpack.c.l.b16 %v612
      %v647 = vunpack.c.l.b16 %v613
      %v648 = vunpack.c.l.b16 %v614
      %v649 = vpack.c.b16 %v634, %v633
      %v650 = vpack.c.b16 %v636, %v635
      %v651 = vpack.c.b16 %v638, %v637
      %v652 = vpack.c.b16 %v640, %v639
      %v653 = vpack.c.b16 %v642, %v641
      %v654 = vpack.c.b16 %v644, %v643
      %v655 = vpack.c.b16 %v646, %v645
      %v656 = vpack.c.b16 %v648, %v647
      %665 = vmatpush.bf16.msra.mxu0 %v656
      %666 = vmatpush.bf16.msra.mxu0 %v655
      %667 = vmatpush.bf16.msra.mxu0 %v654
      %668 = vmatpush.bf16.msra.mxu0 %v653
      %669 = vmatpush.bf16.msra.mxu0 %v652
      %670 = vmatpush.bf16.msra.mxu0 %v651
      %671 = vmatpush.bf16.msra.mxu0 %v650
      %672 = vmatpush.bf16.msra.mxu0 %v649
      %673 = vmatmul.bf16.gmra.mxu0 %v615
      %v674 = vpop.f32.mrf.mxu0
      %v675 = vadd.f32 0.0, %v674
      %v676 = vpop.f32.mrf.mxu0
      %677 = vdwg.mxu0
      %v678 = vadd.f32 %v598, %v675
      %v679 = vld [vmem:[%s387] sm:$0x3f]
      %v680 = vmul.f32 %v679, %v426
      %v681 = vadd.f32 %v680, %v428
      %v682 = vmax.f32 %v681, 0.0
      %v683 = vpack.c.bf16 %v682, %v682
      %s684 = scalar_lea.vmem %s4, 192
      %v685 = vld [vmem:[%s684] sm:$0xf]
      %v686 = vld [vmem:[%s684 + $0x4] sm:$0xf]
      %v687 = vld [vmem:[%s684 + $0x8] sm:$0xf]
      %v688 = vld [vmem:[%s684 + $0xc] sm:$0xf]
      %v689 = vld [vmem:[%s684 + $0x10] sm:$0xf]
      %v690 = vld [vmem:[%s684 + $0x14] sm:$0xf]
      %v691 = vld [vmem:[%s684 + $0x18] sm:$0xf]
      %v692 = vld [vmem:[%s684 + $0x1c] sm:$0xf]
      %v693 = vld [vmem:[%s684 + $0x20] sm:$0xf]
      %v694 = vld [vmem:[%s684 + $0x24] sm:$0xf]
      %v695 = vld [vmem:[%s684 + $0x28] sm:$0xf]
      %v696 = vld [vmem:[%s684 + $0x2c] sm:$0xf]
      %v697 = vld [vmem:[%s684 + $0x30] sm:$0xf]
      %v698 = vld [vmem:[%s684 + $0x34] sm:$0xf]
      %v699 = vld [vmem:[%s684 + $0x38] sm:$0xf]
      %v700 = vld [vmem:[%s684 + $0x3c] sm:$0xf]
      %v717 = vunpack.c.l.b16 %v685
      %v718 = vunpack.c.l.b16 %v686
      %v719 = vunpack.c.l.b16 %v687
      %v720 = vunpack.c.l.b16 %v688
      %v721 = vunpack.c.l.b16 %v689
      %v722 = vunpack.c.l.b16 %v690
      %v723 = vunpack.c.l.b16 %v691
      %v724 = vunpack.c.l.b16 %v692
      %v725 = vunpack.c.l.b16 %v693
      %v726 = vunpack.c.l.b16 %v694
      %v727 = vunpack.c.l.b16 %v695
      %v728 = vunpack.c.l.b16 %v696
      %v729 = vunpack.c.l.b16 %v697
      %v730 = vunpack.c.l.b16 %v698
      %v731 = vunpack.c.l.b16 %v699
      %v732 = vunpack.c.l.b16 %v700
      %v733 = vpack.c.b16 %v718, %v717
      %v734 = vpack.c.b16 %v720, %v719
      %v735 = vpack.c.b16 %v722, %v721
      %v736 = vpack.c.b16 %v724, %v723
      %v737 = vpack.c.b16 %v726, %v725
      %v738 = vpack.c.b16 %v728, %v727
      %v739 = vpack.c.b16 %v730, %v729
      %v740 = vpack.c.b16 %v732, %v731
      %749 = vmatpush.bf16.msra.mxu0 %v740
      %750 = vmatpush.bf16.msra.mxu0 %v739
      %751 = vmatpush.bf16.msra.mxu0 %v738
      %752 = vmatpush.bf16.msra.mxu0 %v737
      %753 = vmatpush.bf16.msra.mxu0 %v736
      %754 = vmatpush.bf16.msra.mxu0 %v735
      %755 = vmatpush.bf16.msra.mxu0 %v734
      %756 = vmatpush.bf16.msra.mxu0 %v733
      %757 = vmatmul.bf16.gmra.mxu0 %v683
      %v758 = vpop.f32.mrf.mxu0
      %v759 = vadd.f32 0.0, %v758
      %v760 = vpop.f32.mrf.mxu0
      %761 = vdwg.mxu0
      %v762 = vadd.f32 %v678, %v759
      %v763 = vld [vmem:[%s684 + $0x40] sm:$0xf]
      %v764 = vld [vmem:[%s684 + $0x44] sm:$0xf]
      %v765 = vld [vmem:[%s684 + $0x48] sm:$0xf]
      %v766 = vld [vmem:[%s684 + $0x4c] sm:$0xf]
      %v767 = vld [vmem:[%s684 + $0x50] sm:$0xf]
      %v768 = vld [vmem:[%s684 + $0x54] sm:$0xf]
      %v769 = vld [vmem:[%s684 + $0x58] sm:$0xf]
      %v770 = vld [vmem:[%s684 + $0x5c] sm:$0xf]
      %v771 = vld [vmem:[%s684 + $0x60] sm:$0xf]
      %v772 = vld [vmem:[%s684 + $0x64] sm:$0xf]
      %v773 = vld [vmem:[%s684 + $0x68] sm:$0xf]
      %v774 = vld [vmem:[%s684 + $0x6c] sm:$0xf]
      %v775 = vld [vmem:[%s684 + $0x70] sm:$0xf]
      %v776 = vld [vmem:[%s684 + $0x74] sm:$0xf]
      %v777 = vld [vmem:[%s684 + $0x78] sm:$0xf]
      %v778 = vld [vmem:[%s684 + $0x7c] sm:$0xf]
      %v780 = vunpack.c.l.b16 %v683
      %v781 = vpack.c.b16 %v780, %v780
      %v783 = vshrl.u32 %v781, 16
      %v785 = vshll.u32 %v781, 16
      %v787 = vrot.slane %v785, 1
      %v788 = vor.u32 %v783, %v787
      %v806 = vunpack.c.l.b16 %v763
      %v807 = vunpack.c.l.b16 %v764
      %v808 = vunpack.c.l.b16 %v765
      %v809 = vunpack.c.l.b16 %v766
      %v810 = vunpack.c.l.b16 %v767
      %v811 = vunpack.c.l.b16 %v768
      %v812 = vunpack.c.l.b16 %v769
      %v813 = vunpack.c.l.b16 %v770
      %v814 = vunpack.c.l.b16 %v771
      %v815 = vunpack.c.l.b16 %v772
      %v816 = vunpack.c.l.b16 %v773
      %v817 = vunpack.c.l.b16 %v774
      %v818 = vunpack.c.l.b16 %v775
      %v819 = vunpack.c.l.b16 %v776
      %v820 = vunpack.c.l.b16 %v777
      %v821 = vunpack.c.l.b16 %v778
      %v822 = vpack.c.b16 %v807, %v806
      %v823 = vpack.c.b16 %v809, %v808
      %v824 = vpack.c.b16 %v811, %v810
      %v825 = vpack.c.b16 %v813, %v812
      %v826 = vpack.c.b16 %v815, %v814
      %v827 = vpack.c.b16 %v817, %v816
      %v828 = vpack.c.b16 %v819, %v818
      %v829 = vpack.c.b16 %v821, %v820
      %838 = vmatpush.bf16.msra.mxu0 %v829
      %839 = vmatpush.bf16.msra.mxu0 %v828
      %840 = vmatpush.bf16.msra.mxu0 %v827
      %841 = vmatpush.bf16.msra.mxu0 %v826
      %842 = vmatpush.bf16.msra.mxu0 %v825
      %843 = vmatpush.bf16.msra.mxu0 %v824
      %844 = vmatpush.bf16.msra.mxu0 %v823
      %845 = vmatpush.bf16.msra.mxu0 %v822
      %846 = vmatmul.bf16.gmra.mxu0 %v788
      %v847 = vpop.f32.mrf.mxu0
      %v848 = vadd.f32 0.0, %v847
      %v849 = vpop.f32.mrf.mxu0
      %850 = vdwg.mxu0
      %v851 = vadd.f32 %v762, %v848
      %v852 = vld [vmem:[%s684 + $0x80] sm:$0xf]
      %v853 = vld [vmem:[%s684 + $0x84] sm:$0xf]
      %v854 = vld [vmem:[%s684 + $0x88] sm:$0xf]
      %v855 = vld [vmem:[%s684 + $0x8c] sm:$0xf]
      %v856 = vld [vmem:[%s684 + $0x90] sm:$0xf]
      %v857 = vld [vmem:[%s684 + $0x94] sm:$0xf]
      %v858 = vld [vmem:[%s684 + $0x98] sm:$0xf]
      %v859 = vld [vmem:[%s684 + $0x9c] sm:$0xf]
      %v860 = vld [vmem:[%s684 + $0xa0] sm:$0xf]
      %v861 = vld [vmem:[%s684 + $0xa4] sm:$0xf]
      %v862 = vld [vmem:[%s684 + $0xa8] sm:$0xf]
      %v863 = vld [vmem:[%s684 + $0xac] sm:$0xf]
      %v864 = vld [vmem:[%s684 + $0xb0] sm:$0xf]
      %v865 = vld [vmem:[%s684 + $0xb4] sm:$0xf]
      %v866 = vld [vmem:[%s684 + $0xb8] sm:$0xf]
      %v867 = vld [vmem:[%s684 + $0xbc] sm:$0xf]
      %v868 = vrot.slane %v781, 1
      %v886 = vunpack.c.l.b16 %v852
      %v887 = vunpack.c.l.b16 %v853
      %v888 = vunpack.c.l.b16 %v854
      %v889 = vunpack.c.l.b16 %v855
      %v890 = vunpack.c.l.b16 %v856
      %v891 = vunpack.c.l.b16 %v857
      %v892 = vunpack.c.l.b16 %v858
      %v893 = vunpack.c.l.b16 %v859
      %v894 = vunpack.c.l.b16 %v860
      %v895 = vunpack.c.l.b16 %v861
      %v896 = vunpack.c.l.b16 %v862
      %v897 = vunpack.c.l.b16 %v863
      %v898 = vunpack.c.l.b16 %v864
      %v899 = vunpack.c.l.b16 %v865
      %v900 = vunpack.c.l.b16 %v866
      %v901 = vunpack.c.l.b16 %v867
      %v902 = vpack.c.b16 %v887, %v886
      %v903 = vpack.c.b16 %v889, %v888
      %v904 = vpack.c.b16 %v891, %v890
      %v905 = vpack.c.b16 %v893, %v892
      %v906 = vpack.c.b16 %v895, %v894
      %v907 = vpack.c.b16 %v897, %v896
      %v908 = vpack.c.b16 %v899, %v898
      %v909 = vpack.c.b16 %v901, %v900
      %918 = vmatpush.bf16.msra.mxu0 %v909
      %919 = vmatpush.bf16.msra.mxu0 %v908
      %920 = vmatpush.bf16.msra.mxu0 %v907
      %921 = vmatpush.bf16.msra.mxu0 %v906
      %922 = vmatpush.bf16.msra.mxu0 %v905
      %923 = vmatpush.bf16.msra.mxu0 %v904
      %924 = vmatpush.bf16.msra.mxu0 %v903
      %925 = vmatpush.bf16.msra.mxu0 %v902
      %926 = vmatmul.bf16.gmra.mxu0 %v868
      %v927 = vpop.f32.mrf.mxu0
      %v928 = vadd.f32 0.0, %v927
      %v929 = vpop.f32.mrf.mxu0
      %930 = vdwg.mxu0
      %v931 = vadd.f32 %v851, %v928
      %v932 = vld [vmem:[%s397] sm:$0x3f]
      %v933 = vmul.f32 %v932, %v426
      %v934 = vadd.f32 %v933, %v428
      %v935 = vmax.f32 %v934, 0.0
      %v936 = vpack.c.bf16 %v935, %v935
      %s937 = scalar_lea.vmem %s4, 384
      %v938 = vld [vmem:[%s937] sm:$0xf]
      %v939 = vld [vmem:[%s937 + $0x4] sm:$0xf]
      %v940 = vld [vmem:[%s937 + $0x8] sm:$0xf]
      %v941 = vld [vmem:[%s937 + $0xc] sm:$0xf]
      %v942 = vld [vmem:[%s937 + $0x10] sm:$0xf]
      %v943 = vld [vmem:[%s937 + $0x14] sm:$0xf]
      %v944 = vld [vmem:[%s937 + $0x18] sm:$0xf]
      %v945 = vld [vmem:[%s937 + $0x1c] sm:$0xf]
      %v946 = vld [vmem:[%s937 + $0x20] sm:$0xf]
      %v947 = vld [vmem:[%s937 + $0x24] sm:$0xf]
      %v948 = vld [vmem:[%s937 + $0x28] sm:$0xf]
      %v949 = vld [vmem:[%s937 + $0x2c] sm:$0xf]
      %v950 = vld [vmem:[%s937 + $0x30] sm:$0xf]
      %v951 = vld [vmem:[%s937 + $0x34] sm:$0xf]
      %v952 = vld [vmem:[%s937 + $0x38] sm:$0xf]
      %v953 = vld [vmem:[%s937 + $0x3c] sm:$0xf]
      %v970 = vunpack.c.l.b16 %v938
      %v971 = vunpack.c.l.b16 %v939
      %v972 = vunpack.c.l.b16 %v940
      %v973 = vunpack.c.l.b16 %v941
      %v974 = vunpack.c.l.b16 %v942
      %v975 = vunpack.c.l.b16 %v943
      %v976 = vunpack.c.l.b16 %v944
      %v977 = vunpack.c.l.b16 %v945
      %v978 = vunpack.c.l.b16 %v946
      %v979 = vunpack.c.l.b16 %v947
      %v980 = vunpack.c.l.b16 %v948
      %v981 = vunpack.c.l.b16 %v949
      %v982 = vunpack.c.l.b16 %v950
      %v983 = vunpack.c.l.b16 %v951
      %v984 = vunpack.c.l.b16 %v952
      %v985 = vunpack.c.l.b16 %v953
      %v986 = vpack.c.b16 %v971, %v970
      %v987 = vpack.c.b16 %v973, %v972
      %v988 = vpack.c.b16 %v975, %v974
      %v989 = vpack.c.b16 %v977, %v976
      %v990 = vpack.c.b16 %v979, %v978
      %v991 = vpack.c.b16 %v981, %v980
      %v992 = vpack.c.b16 %v983, %v982
      %v993 = vpack.c.b16 %v985, %v984
      %1002 = vmatpush.bf16.msra.mxu0 %v993
      %1003 = vmatpush.bf16.msra.mxu0 %v992
      %1004 = vmatpush.bf16.msra.mxu0 %v991
      %1005 = vmatpush.bf16.msra.mxu0 %v990
      %1006 = vmatpush.bf16.msra.mxu0 %v989
      %1007 = vmatpush.bf16.msra.mxu0 %v988
      %1008 = vmatpush.bf16.msra.mxu0 %v987
      %1009 = vmatpush.bf16.msra.mxu0 %v986
      %1010 = vmatmul.bf16.gmra.mxu0 %v936
      %v1011 = vpop.f32.mrf.mxu0
      %v1012 = vadd.f32 0.0, %v1011
      %v1013 = vpop.f32.mrf.mxu0
      %1014 = vdwg.mxu0
      %v1015 = vadd.f32 %v931, %v1012
      %v1016 = vld [vmem:[%s937 + $0x40] sm:$0xf]
      %v1017 = vld [vmem:[%s937 + $0x44] sm:$0xf]
      %v1018 = vld [vmem:[%s937 + $0x48] sm:$0xf]
      %v1019 = vld [vmem:[%s937 + $0x4c] sm:$0xf]
      %v1020 = vld [vmem:[%s937 + $0x50] sm:$0xf]
      %v1021 = vld [vmem:[%s937 + $0x54] sm:$0xf]
      %v1022 = vld [vmem:[%s937 + $0x58] sm:$0xf]
      %v1023 = vld [vmem:[%s937 + $0x5c] sm:$0xf]
      %v1024 = vld [vmem:[%s937 + $0x60] sm:$0xf]
      %v1025 = vld [vmem:[%s937 + $0x64] sm:$0xf]
      %v1026 = vld [vmem:[%s937 + $0x68] sm:$0xf]
      %v1027 = vld [vmem:[%s937 + $0x6c] sm:$0xf]
      %v1028 = vld [vmem:[%s937 + $0x70] sm:$0xf]
      %v1029 = vld [vmem:[%s937 + $0x74] sm:$0xf]
      %v1030 = vld [vmem:[%s937 + $0x78] sm:$0xf]
      %v1031 = vld [vmem:[%s937 + $0x7c] sm:$0xf]
      %v1033 = vunpack.c.l.b16 %v936
      %v1034 = vpack.c.b16 %v1033, %v1033
      %v1036 = vshrl.u32 %v1034, 16
      %v1038 = vshll.u32 %v1034, 16
      %v1040 = vrot.slane %v1038, 1
      %v1041 = vor.u32 %v1036, %v1040
      %v1059 = vunpack.c.l.b16 %v1016
      %v1060 = vunpack.c.l.b16 %v1017
      %v1061 = vunpack.c.l.b16 %v1018
      %v1062 = vunpack.c.l.b16 %v1019
      %v1063 = vunpack.c.l.b16 %v1020
      %v1064 = vunpack.c.l.b16 %v1021
      %v1065 = vunpack.c.l.b16 %v1022
      %v1066 = vunpack.c.l.b16 %v1023
      %v1067 = vunpack.c.l.b16 %v1024
      %v1068 = vunpack.c.l.b16 %v1025
      %v1069 = vunpack.c.l.b16 %v1026
      %v1070 = vunpack.c.l.b16 %v1027
      %v1071 = vunpack.c.l.b16 %v1028
      %v1072 = vunpack.c.l.b16 %v1029
      %v1073 = vunpack.c.l.b16 %v1030
      %v1074 = vunpack.c.l.b16 %v1031
      %v1075 = vpack.c.b16 %v1060, %v1059
      %v1076 = vpack.c.b16 %v1062, %v1061
      %v1077 = vpack.c.b16 %v1064, %v1063
      %v1078 = vpack.c.b16 %v1066, %v1065
      %v1079 = vpack.c.b16 %v1068, %v1067
      %v1080 = vpack.c.b16 %v1070, %v1069
      %v1081 = vpack.c.b16 %v1072, %v1071
      %v1082 = vpack.c.b16 %v1074, %v1073
      %1091 = vmatpush.bf16.msra.mxu0 %v1082
      %1092 = vmatpush.bf16.msra.mxu0 %v1081
      %1093 = vmatpush.bf16.msra.mxu0 %v1080
      %1094 = vmatpush.bf16.msra.mxu0 %v1079
      %1095 = vmatpush.bf16.msra.mxu0 %v1078
      %1096 = vmatpush.bf16.msra.mxu0 %v1077
      %1097 = vmatpush.bf16.msra.mxu0 %v1076
      %1098 = vmatpush.bf16.msra.mxu0 %v1075
      %1099 = vmatmul.bf16.gmra.mxu0 %v1041
      %v1100 = vpop.f32.mrf.mxu0
      %v1101 = vadd.f32 0.0, %v1100
      %v1102 = vpop.f32.mrf.mxu0
      %1103 = vdwg.mxu0
      %v1104 = vadd.f32 %v1015, %v1101
      %v1105 = vld [vmem:[%s937 + $0x80] sm:$0xf]
      %v1106 = vld [vmem:[%s937 + $0x84] sm:$0xf]
      %v1107 = vld [vmem:[%s937 + $0x88] sm:$0xf]
      %v1108 = vld [vmem:[%s937 + $0x8c] sm:$0xf]
      %v1109 = vld [vmem:[%s937 + $0x90] sm:$0xf]
      %v1110 = vld [vmem:[%s937 + $0x94] sm:$0xf]
      %v1111 = vld [vmem:[%s937 + $0x98] sm:$0xf]
      %v1112 = vld [vmem:[%s937 + $0x9c] sm:$0xf]
      %v1113 = vld [vmem:[%s937 + $0xa0] sm:$0xf]
      %v1114 = vld [vmem:[%s937 + $0xa4] sm:$0xf]
      %v1115 = vld [vmem:[%s937 + $0xa8] sm:$0xf]
      %v1116 = vld [vmem:[%s937 + $0xac] sm:$0xf]
      %v1117 = vld [vmem:[%s937 + $0xb0] sm:$0xf]
      %v1118 = vld [vmem:[%s937 + $0xb4] sm:$0xf]
      %v1119 = vld [vmem:[%s937 + $0xb8] sm:$0xf]
      %v1120 = vld [vmem:[%s937 + $0xbc] sm:$0xf]
      %v1121 = vrot.slane %v1034, 1
      %v1139 = vunpack.c.l.b16 %v1105
      %v1140 = vunpack.c.l.b16 %v1106
      %v1141 = vunpack.c.l.b16 %v1107
      %v1142 = vunpack.c.l.b16 %v1108
      %v1143 = vunpack.c.l.b16 %v1109
      %v1144 = vunpack.c.l.b16 %v1110
      %v1145 = vunpack.c.l.b16 %v1111
      %v1146 = vunpack.c.l.b16 %v1112
      %v1147 = vunpack.c.l.b16 %v1113
      %v1148 = vunpack.c.l.b16 %v1114
      %v1149 = vunpack.c.l.b16 %v1115
      %v1150 = vunpack.c.l.b16 %v1116
      %v1151 = vunpack.c.l.b16 %v1117
      %v1152 = vunpack.c.l.b16 %v1118
      %v1153 = vunpack.c.l.b16 %v1119
      %v1154 = vunpack.c.l.b16 %v1120
      %v1155 = vpack.c.b16 %v1140, %v1139
      %v1156 = vpack.c.b16 %v1142, %v1141
      %v1157 = vpack.c.b16 %v1144, %v1143
      %v1158 = vpack.c.b16 %v1146, %v1145
      %v1159 = vpack.c.b16 %v1148, %v1147
      %v1160 = vpack.c.b16 %v1150, %v1149
      %v1161 = vpack.c.b16 %v1152, %v1151
      %v1162 = vpack.c.b16 %v1154, %v1153
      %1171 = vmatpush.bf16.msra.mxu0 %v1162
      %1172 = vmatpush.bf16.msra.mxu0 %v1161
      %1173 = vmatpush.bf16.msra.mxu0 %v1160
      %1174 = vmatpush.bf16.msra.mxu0 %v1159
      %1175 = vmatpush.bf16.msra.mxu0 %v1158
      %1176 = vmatpush.bf16.msra.mxu0 %v1157
      %1177 = vmatpush.bf16.msra.mxu0 %v1156
      %1178 = vmatpush.bf16.msra.mxu0 %v1155
      %1179 = vmatmul.bf16.gmra.mxu0 %v1121
      %v1180 = vpop.f32.mrf.mxu0
      %v1181 = vadd.f32 0.0, %v1180
      %v1182 = vpop.f32.mrf.mxu0
      %1183 = vdwg.mxu0
      %v1184 = vadd.f32 %v1104, %v1181
      %1185 = vst [vmem:[%s414] sm:$0xf] %v1184
      %v1186 = vld [vmem:[#allocation2] sm:$0x1]
      %vm1187 = vcmask 1043456
      %v1188 = vsel %vm1187, %v1184, 0.0
      %v1189 = vrot.slane %v1188, 4
      %v1190 = vadd.f32 %v1188, %v1189
      %v1191 = vrot.slane %v1190, 2
      %v1192 = vadd.f32 %v1190, %v1191
      %v1193 = vrot.slane %v1192, 1
      %v1194 = vadd.f32 %v1192, %v1193
      %v1195 = vadd.f32 %v1186, %v1194
      %1196 = vst [vmem:[#allocation2] sm:$0x1] %v1195
      %v1197 = vld [vmem:[#allocation2 + $0x1] sm:$0x1]
      %v1198 = vmul.f32 %v1184, %v1184
      %v1199 = vsel %vm1187, %v1198, 0.0
      %v1200 = vrot.slane %v1199, 4
      %v1201 = vadd.f32 %v1199, %v1200
      %v1202 = vrot.slane %v1201, 2
      %v1203 = vadd.f32 %v1201, %v1202
      %v1204 = vrot.slane %v1203, 1
      %v1205 = vadd.f32 %v1203, %v1204
      %v1206 = vadd.f32 %v1197, %v1205
      %1207 = vst [vmem:[#allocation2 + $0x1] sm:$0x1] %v1206
      %p1208 = scmp.eq.s32.totalorder %s23, 1
      %p1209 = scmp.eq.s32.totalorder %s24, 3
      %p1210 = pnand %p1208, %p1209
      %p1211 = pneg %p1210
      // Predicated region
      $region49: #{forward.22} parent=43 // pred_check
        _
      $region50: #{forward.22} parent=43 // pred_check_branch
        %1213 = sbr.rel (%p1210) target = $region52
      $region51: #{forward.22} parent=43 // pred_region
        %v1214 = vld [vmem:[#allocation2] sm:$0x1]
        %v1215 = vmul.f32 %v1214, 0.03125
        %v1216 = vld [vmem:[#allocation2 + $0x1] sm:$0x1]
        %v1217 = vmul.f32 %v1216, 0.03125
        %v1218 = vmul.f32 %v1215, %v1215
        %v1219 = vsub.f32 %v1217, %v1218
        %1220 = vst [vmem:[%s7] sm:$0x1] %v1215
        %1221 = vst [vmem:[%s7 + $0x1] sm:$0x1] %v1219
      $region52: #{forward.22} parent=43 // pred_fallthru
        _
      %p1222 = scmp.lt.s32.totalorder %s23, 1
      %s1223 = scalar_select %p1222, %s23, 1
      %p1224 = scmp.lt.s32.totalorder %s24, 3
      %s1225 = scalar_select %p1224, %s24, 3
      %s1226 = smul.addr %s1223, 4
      %s1227 = sadd.s32 %s1225, %s1226
      %s1228 = smul.addr %s1227, 4
      %s1229 = scalar_lea.vmem %s6, %s1228
      // Predicated region
      $region53: #{forward.22} parent=43 // pred_check
        %p1230 = pneg %p209
      $region54: #{forward.22} parent=43 // pred_check_branch
        %1232 = sbr.rel (%p1230) target = $region56
      $region55: #{forward.22} parent=43 // pred_region
        _
      $region56: #{forward.22} parent=43 // pred_fallthru
        _
      // Predicated region
      $region57: #{forward.22} parent=43 // pred_check
        %p1233 = pneg %p230
      $region58: #{forward.22} parent=43 // pred_check_branch
        %1235 = sbr.rel (%p1233) target = $region60
      $region59: #{forward.22} parent=43 // pred_region
        _
      $region60: #{forward.22} parent=43 // pred_fallthru
        _
      // Predicated region
      $region61: #{forward.22} parent=43 // pred_check
        %p1236 = pneg %p230
      $region62: #{forward.22} parent=43 // pred_check_branch
        %1238 = sbr.rel (%p1236) target = $region64
      $region63: #{forward.22} parent=43 // pred_region
        _
      $region64: #{forward.22} parent=43 // pred_fallthru
        _
    $region44: #{forward.22} parent=5 // pred_fallthru
      _
    %p1239 = scmp.le.s32.totalorder 2, %s14
    // Predicated region
    $region65: #{forward.22} parent=5 // pred_check
      %p1240 = pneg %p1239
    $region66: #{forward.22} parent=5 // pred_check_branch
      %1242 = sbr.rel (%p1240) target = $region68
    $region67: #{forward.22} parent=5 // pred_region
      %s1243 = ssub.s32 %s14, 2
      // Predicated region
      $region69: #{forward.22} parent=67 // pred_check
        %p1244 = pneg %p215
      $region70: #{forward.22} parent=67 // pred_check_branch
        %1246 = sbr.rel (%p1244) target = $region72
      $region71: #{forward.22} parent=67 // pred_region
        %p1247 = scmp.lt.s32.totalorder %s25, 1
        %s1248 = scalar_select %p1247, %s25, 1
        %p1249 = scmp.lt.s32.totalorder %s26, 3
        %s1250 = scalar_select %p1249, %s26, 3
        %s1251 = smul.addr %s1248, 4
        %s1252 = sadd.s32 %s1250, %s1251
        %s1253 = smul.addr %s1252, 4
        %s1254 = scalar_lea.vmem %s6, %s1253
      $region72: #{forward.22} parent=67 // pred_fallthru
        _
    $region68: #{forward.22} parent=5 // pred_fallthru
      _
  $region6: #{forward.22} parent=0 // loop_footer
    %s18 = sadd.s32 1, %s14
  $region7: #{forward.22} parent=0 // loop_footer_branch
    %13 = sbr.rel target = $region3
  $region8: #{forward.22} parent=0 // loop_exit
    _

</llo_original>
